<compile_context>
chip_gen: v6e
topology: v6e:2x2x1
jax: 0.10.0
libtpu: 0.0.40
codegen_flags: <defaults>
</compile_context>

<pallas_src>
import jax
import jax.numpy as jnp
from jax import lax
from jax.experimental import pallas as pl
from jax.experimental.pallas import tpu as pltpu

_EPS = 1e-5

# Activation data sits in each padded canvas at row offset 1 and column offset
# 8 (8 = f32 sublane tile, so the big interior store is tile-aligned while
# column 7 stays available as the zero left halo).
_COL0 = 8


def _pool2x2(y_flat, b, h, w, c):
    """2x2 stride-2 max pool of a (b*h*w, c) activation in (b, i, j) row order.

    H pairs are reduced first via an aligned row-group max (layout preserving
    whenever w is a multiple of the 8-row sublane tile, i.e. stages 1-2), so
    only the half-sized W reduction needs the re-tiling (.., 2, c) reshape.
    """
    h2, w2 = h // 2, w // 2
    y = y_flat.reshape(b * h2, 2, w, c)
    y = jnp.max(y, axis=1)                       # (b*h2, w, c)   H pairs
    y = y.reshape(b * h2 * w2, 2, c)
    y = jnp.max(y, axis=1)                       # (b*h2*w2, c)   W pairs
    return y.reshape(b, h2, w2, c)


def _conv_bn_relu_pool(canvas_ref, w_ref, s_ref, b_ref, b, h, w):
    """3x3 conv (pad=1 via zero halo) + folded BN + ReLU + 2x2 maxpool.

    canvas_ref: (b, h+2, w+9, cin) VMEM scratch; activation at
                [:, 1:1+h, 8:8+w, :], zero halo ring around it.
    w_ref:      (3, 3, cin, cout) HWIO conv weight.
    s/b_ref:    (1, cout) folded BatchNorm scale / bias (bias incl. conv bias).
    returns:    (b, h//2, w//2, cout) f32.
    """
    cin = canvas_ref.shape[-1]
    cout = w_ref.shape[-1]
    scale = s_ref[...]                            # (1, cout)
    bias = b_ref[...]                             # (1, cout)

    acc = None
    for dx in range(3):
        # Load only the dx column slab straight from the ref; the whole padded
        # canvas (incl. dead columns) is never materialized as a value.
        slab = canvas_ref[:, :, _COL0 - 1 + dx:_COL0 - 1 + dx + w, :]  # (b,h+2,w,cin)
        for dy in range(3):
            win = slab[:, dy:dy + h].reshape(b * h * w, cin)
            d = jnp.dot(win, w_ref[dy, dx], preferred_element_type=jnp.float32)
            acc = d if acc is None else acc + d   # first tap initializes acc
    y = jnp.maximum(acc * scale + bias, 0.0)      # (b*h*w, cout)
    return _pool2x2(y, b, h, w, cout)


def _zero_halo(c_ref, h, w):
    """Zero only the 1-pixel halo ring; the interior is overwritten anyway."""
    b = c_ref.shape[0]
    cw = c_ref.shape[2]
    cc = c_ref.shape[3]
    zr = jnp.zeros((b, 1, cw, cc), c_ref.dtype)
    c_ref[:, 0:1, :, :] = zr                                  # top halo row
    c_ref[:, h + 1:h + 2, :, :] = zr                          # bottom halo row
    zc = jnp.zeros((b, h + 2, 1, cc), c_ref.dtype)
    c_ref[:, :, _COL0 - 1:_COL0, :] = zc                      # left halo col
    c_ref[:, :, _COL0 + w:_COL0 + w + 1, :] = zc              # right halo col


def _encoder_kernel(p1_ref, w1_ref, w2_ref, w3_ref,
                    s1_ref, b1_ref, s2_ref, b2_ref, s3_ref, b3_ref,
                    o_ref, c1, c2, c3):
    b = p1_ref.shape[0]                           # images per grid step

    # Per-step halo zeroing (correct under any grid partitioning, incl. v7x
    # megacore sharding of the "parallel" batch axis).
    _zero_halo(c1, 8, 8)
    _zero_halo(c2, 4, 4)
    _zero_halo(c3, 2, 2)

    # Stage 1: (b,16,16,3) -> (b,8,8,64)   conv1 + bn1 + relu + pool
    # im2col done in the wrapper -> single (b*256, 32) x (32, 64) MXU dot.
    p = p1_ref[...].reshape(b * 256, 32)
    acc = jnp.dot(p, w1_ref[...], preferred_element_type=jnp.float32)
    y = jnp.maximum(acc * s1_ref[...] + b1_ref[...], 0.0)
    y = _pool2x2(y, b, 16, 16, 64)                # (b, 8, 8, 64)

    # Stage 2: (b,8,8,64) -> (b,4,4,64)    conv2 + bn1 + relu + pool
    c1[:, 1:9, _COL0:_COL0 + 8, :] = y
    y = _conv_bn_relu_pool(c1, w2_ref, s2_ref, b2_ref, b, 8, 8)

    # Stage 3: (b,4,4,64) -> (b,2,2,64)    conv2 + bn1 (shared) + relu + pool
    c2[:, 1:5, _COL0:_COL0 + 4, :] = y
    y = _conv_bn_relu_pool(c2, w2_ref, s2_ref, b2_ref, b, 4, 4)

    # Stage 4: (b,2,2,64) -> (b,1,1,128)   conv3 + bn2 + relu + pool
    # (Cout=1 zero-padded to 128 channels so the final store is lane-dense.)
    c3[:, 1:3, _COL0:_COL0 + 2, :] = y
    y = _conv_bn_relu_pool(c3, w3_ref, s3_ref, b3_ref, b, 2, 2)

    o_ref[...] = y.reshape(b, 1, 128)


def encoder_pallas(x_nhwc, w1, w2, w3p, s1, b1, s2, b2, s3p, b3p, *,
                   block_n=8):
    """Fully fused Encoder forward. x_nhwc: (N, 16, 16, 3) -> (N, 1)."""
    N, H, W, Cin = x_nhwc.shape
    assert (H, W, Cin) == (16, 16, 3), (H, W, Cin)

    # ---- Stage-1 im2col in the wrapper (XLA): (N,16,16,3) -> (N,256,32). ----
    # Feature order (dy, dx, cin) matches w1.reshape(27, 64); K padded 27->32.
    xpad = jnp.pad(x_nhwc, ((0, 0), (1, 1), (1, 1), (0, 0)))
    pats = jnp.concatenate(
        [xpad[:, dy:dy + 16, dx:dx + 16, :]
         for dy in range(3) for dx in range(3)], axis=-1)        # (N,16,16,27)
    pats = jnp.pad(pats, ((0, 0), (0, 0), (0, 0), (0, 5)))       # K -> 32
    pats = pats.reshape(N, 256, 32)
    w1f = jnp.pad(w1.reshape(27, 64), ((0, 5), (0, 0)))          # (32, 64)

    # ---- Batch-tile the grid (review item #1).  bn=8 keeps total VMEM at
    # ~6 MiB; raise to ~16 (v5e) / ~32 (v6e/v7x + vmem_limit_bytes) for large
    # N, and keep bn <= N/2 on v7x so both TensorCores get grid steps.
    bn = max(1, min(block_n, N))
    n_pad = (-N) % bn
    if n_pad:
        pats = jnp.pad(pats, ((0, n_pad), (0, 0), (0, 0)))
    n_total = N + n_pad

    out = pl.pallas_call(
        _encoder_kernel,
        out_shape=jax.ShapeDtypeStruct((n_total, 1, 128), jnp.float32),
        grid=(n_total // bn,),
        in_specs=[
            pl.BlockSpec((bn, 256, 32), lambda n: (n, 0, 0)),
            pl.BlockSpec((32, 64), lambda n: (0, 0)),
            pl.BlockSpec((3, 3, 64, 64), lambda n: (0, 0, 0, 0)),
            pl.BlockSpec((3, 3, 64, 128), lambda n: (0, 0, 0, 0)),
            pl.BlockSpec((1, 64), lambda n: (0, 0)),
            pl.BlockSpec((1, 64), lambda n: (0, 0)),
            pl.BlockSpec((1, 64), lambda n: (0, 0)),
            pl.BlockSpec((1, 64), lambda n: (0, 0)),
            pl.BlockSpec((1, 128), lambda n: (0, 0)),
            pl.BlockSpec((1, 128), lambda n: (0, 0)),
        ],
        out_specs=pl.BlockSpec((bn, 1, 128), lambda n: (n, 0, 0)),
        scratch_shapes=[
            # Batched zero-halo canvases; activation at [:, 1:1+h, 8:8+w, :].
            pltpu.VMEM((bn, 10, 17, 64), jnp.float32),   # stage-2 input (8x8)
            pltpu.VMEM((bn, 6, 13, 64), jnp.float32),    # stage-3 input (4x4)
            pltpu.VMEM((bn, 4, 11, 64), jnp.float32),    # stage-4 input (2x2)
        ],
        compiler_params=pltpu.CompilerParams(
            dimension_semantics=("parallel",)),
    )(pats, w1f, w2, w3p, s1, b1, s2, b2, s3p, b3p)

    # Lane-dense (n_total, 1, 128) result; the real value is channel 0.
    return out[:N, 0, :1]                                        # (N, 1)


# ----------------------------------------------------------------------------
# Parameter init (deterministic, synthetic), BN folding, forward pass.
# ----------------------------------------------------------------------------
def init_params(key):
    ks = jax.random.split(key, 16)

    def conv_w(k, cin, cout):
        return jax.random.normal(k, (3, 3, cin, cout), jnp.float32) / jnp.sqrt(
            9.0 * cin)

    p = {}
    p["w1"] = conv_w(ks[0], 3, 64)
    p["b1"] = 0.1 * jax.random.normal(ks[1], (64,), jnp.float32)
    p["w2"] = conv_w(ks[2], 64, 64)
    p["b2"] = 0.1 * jax.random.normal(ks[3], (64,), jnp.float32)
    p["w3"] = conv_w(ks[4], 64, 1)
    p["b3"] = 0.1 * jax.random.normal(ks[5], (1,), jnp.float32)
    # BatchNorm2d(64)  (shared by stages 1-3, like self.conv_bn1)
    p["bn1_gamma"] = 1.0 + 0.1 * jax.random.normal(ks[6], (64,), jnp.float32)
    p["bn1_beta"] = 0.1 * jax.random.normal(ks[7], (64,), jnp.float32)
    p["bn1_mean"] = 0.1 * jax.random.normal(ks[8], (64,), jnp.float32)
    p["bn1_var"] = 0.5 + jax.random.uniform(ks[9], (64,), jnp.float32)
    # BatchNorm2d(1)
    p["bn2_gamma"] = 1.0 + 0.1 * jax.random.normal(ks[10], (1,), jnp.float32)
    p["bn2_beta"] = 0.1 * jax.random.normal(ks[11], (1,), jnp.float32)
    p["bn2_mean"] = 0.1 * jax.random.normal(ks[12], (1,), jnp.float32)
    p["bn2_var"] = 0.5 + jax.random.uniform(ks[13], (1,), jnp.float32)
    return p


def _fold_bn(conv_bias, gamma, beta, mean, var):
    scale = gamma / jnp.sqrt(var + _EPS)
    bias = (conv_bias - mean) * scale + beta
    return scale.reshape(1, -1), bias.reshape(1, -1)


def encoder_forward(x_nhwc, p):
    """Equivalent of Encoder.forward (eval-mode BN). (N,16,16,3) -> (N,1)."""
    sc1, bi1 = _fold_bn(p["b1"], p["bn1_gamma"], p["bn1_beta"],
                        p["bn1_mean"], p["bn1_var"])
    sc2, bi2 = _fold_bn(p["b2"], p["bn1_gamma"], p["bn1_beta"],
                        p["bn1_mean"], p["bn1_var"])
    sc3, bi3 = _fold_bn(p["b3"], p["bn2_gamma"], p["bn2_beta"],
                        p["bn2_mean"], p["bn2_var"])

    # Zero-pad the Cout=1 last stage to 128 output channels so the kernel's
    # final store is lane-dense (padded channels stay exactly zero).
    w3p = jnp.pad(p["w3"], ((0, 0), (0, 0), (0, 0), (0, 127)))
    sc3p = jnp.pad(sc3, ((0, 0), (0, 127)))
    bi3p = jnp.pad(bi3, ((0, 0), (0, 127)))

    return encoder_pallas(x_nhwc, p["w1"], p["w2"], w3p,
                          sc1, bi1, sc2, bi2, sc3p, bi3p)


# Pure-JAX reference (for correctness check only).
def reference_forward(x_nhwc, p):
    def conv(x, w, b):
        y = lax.conv_general_dilated(
            x, w, window_strides=(1, 1), padding="SAME",
            dimension_numbers=("NHWC", "HWIO", "NHWC"))
        return y + b

    def bn(x, g, bt, m, v):
        return (x - m) / jnp.sqrt(v + _EPS) * g + bt

    def pool(x):
        return lax.reduce_window(x, -jnp.inf, lax.max,
                                 (1, 2, 2, 1), (1, 2, 2, 1), "VALID")

    bn1 = lambda x: bn(x, p["bn1_gamma"], p["bn1_beta"], p["bn1_mean"],
                       p["bn1_var"])
    bn2 = lambda x: bn(x, p["bn2_gamma"], p["bn2_beta"], p["bn2_mean"],
                       p["bn2_var"])

    x = pool(jax.nn.relu(bn1(conv(x_nhwc, p["w1"], p["b1"]))))
    x = pool(jax.nn.relu(bn1(conv(x, p["w2"], p["b2"]))))
    x = pool(jax.nn.relu(bn1(conv(x, p["w2"], p["b2"]))))
    x = pool(jax.nn.relu(bn2(conv(x, p["w3"], p["b3"]))))
    return x.reshape(x.shape[0], -1)


if __name__ == "__main__":
    key = jax.random.PRNGKey(0)
    kx, kp = jax.random.split(key)

    # PyTorch-style NCHW input, small shapes: batch=2, 3 channels, 16x16.
    x_nchw = jax.random.normal(kx, (2, 3, 16, 16), jnp.float32)
    x_nhwc = jnp.transpose(x_nchw, (0, 2, 3, 1))          # -> NHWC for kernel

    params = init_params(kp)

    out = jax.block_until_ready(encoder_forward(x_nhwc, params))
    assert out.shape == (2, 1), out.shape

    ref = reference_forward(x_nhwc, params)
    assert jnp.allclose(out, ref, rtol=2e-3, atol=2e-3), (out, ref)

    print("KERNEL_OK")
</pallas_src>

<mosaic_0001>
module attributes {stable_mosaic.version = 11 : i64} {
  func.func @_encoder_kernel(%arg0: i32, %arg1: memref<2x256x32xf32, #tpu.memory_space<vmem>>, %arg2: memref<32x64xf32, #tpu.memory_space<vmem>>, %arg3: memref<3x3x64x64xf32, #tpu.memory_space<vmem>>, %arg4: memref<3x3x64x128xf32, #tpu.memory_space<vmem>>, %arg5: memref<1x64xf32, #tpu.memory_space<vmem>>, %arg6: memref<1x64xf32, #tpu.memory_space<vmem>>, %arg7: memref<1x64xf32, #tpu.memory_space<vmem>>, %arg8: memref<1x64xf32, #tpu.memory_space<vmem>>, %arg9: memref<1x128xf32, #tpu.memory_space<vmem>>, %arg10: memref<1x128xf32, #tpu.memory_space<vmem>>, %arg11: memref<2x1x128xf32, #tpu.memory_space<vmem>>, %arg12: memref<2x10x17x64xf32, #tpu.memory_space<vmem>>, %arg13: memref<2x6x13x64xf32, #tpu.memory_space<vmem>>, %arg14: memref<2x4x11x64xf32, #tpu.memory_space<vmem>>) attributes {dimension_semantics = [#tpu.dimension_semantics<parallel>], iteration_bounds = array<i64: 1>, scalar_prefetch = 0 : i64, scratch_operands = 3 : i64, tpu.core_type = #tpu.core_type<tc>, window_params = [{transform_indices = @transform_0, window_bounds = array<i64: 2, 256, 32>}, {pipeline_mode = #tpu.pipeline_mode<synchronous>, transform_indices = @transform_1, window_bounds = array<i64: 32, 64>}, {pipeline_mode = #tpu.pipeline_mode<synchronous>, transform_indices = @transform_2, window_bounds = array<i64: 3, 3, 64, 64>}, {pipeline_mode = #tpu.pipeline_mode<synchronous>, transform_indices = @transform_3, window_bounds = array<i64: 3, 3, 64, 128>}, {pipeline_mode = #tpu.pipeline_mode<synchronous>, transform_indices = @transform_4, window_bounds = array<i64: 1, 64>}, {pipeline_mode = #tpu.pipeline_mode<synchronous>, transform_indices = @transform_5, window_bounds = array<i64: 1, 64>}, {pipeline_mode = #tpu.pipeline_mode<synchronous>, transform_indices = @transform_6, window_bounds = array<i64: 1, 64>}, {pipeline_mode = #tpu.pipeline_mode<synchronous>, transform_indices = @transform_7, window_bounds = array<i64: 1, 64>}, {pipeline_mode = #tpu.pipeline_mode<synchronous>, transform_indices = @transform_8, window_bounds = array<i64: 1, 128>}, {pipeline_mode = #tpu.pipeline_mode<synchronous>, transform_indices = @transform_9, window_bounds = array<i64: 1, 128>}, {transform_indices = @transform_10, window_bounds = array<i64: 2, 1, 128>}]} {
    %cst = arith.constant 0.000000e+00 : f32
    %0 = vector.broadcast %cst : f32 to vector<2x1x17x64xf32>
    %c0 = arith.constant 0 : index
    %c0_0 = arith.constant 0 : index
    %c0_1 = arith.constant 0 : index
    %c0_2 = arith.constant 0 : index
    %1 = vector.load %arg12[%c0, %c0_0, %c0_1, %c0_2] : memref<2x10x17x64xf32, #tpu.memory_space<vmem>>, vector<2x1x17x64xf32>
    tpu.vector_store %arg12[%c0, %c0_0, %c0_1, %c0_2], %0 {strides = array<i32>} : memref<2x10x17x64xf32, #tpu.memory_space<vmem>>, vector<2x1x17x64xf32>,
    %c0_3 = arith.constant 0 : index
    %c9 = arith.constant 9 : index
    %c0_4 = arith.constant 0 : index
    %c0_5 = arith.constant 0 : index
    %2 = vector.load %arg12[%c0_3, %c9, %c0_4, %c0_5] : memref<2x10x17x64xf32, #tpu.memory_space<vmem>>, vector<2x1x17x64xf32>
    tpu.vector_store %arg12[%c0_3, %c9, %c0_4, %c0_5], %0 {strides = array<i32>} : memref<2x10x17x64xf32, #tpu.memory_space<vmem>>, vector<2x1x17x64xf32>,
    %cst_6 = arith.constant 0.000000e+00 : f32
    %3 = vector.broadcast %cst_6 : f32 to vector<2x10x1x64xf32>
    %c0_7 = arith.constant 0 : index
    %c0_8 = arith.constant 0 : index
    %c7 = arith.constant 7 : index
    %c0_9 = arith.constant 0 : index
    %4 = vector.load %arg12[%c0_7, %c0_8, %c7, %c0_9] : memref<2x10x17x64xf32, #tpu.memory_space<vmem>>, vector<2x10x1x64xf32>
    tpu.vector_store %arg12[%c0_7, %c0_8, %c7, %c0_9], %3 {strides = array<i32>} : memref<2x10x17x64xf32, #tpu.memory_space<vmem>>, vector<2x10x1x64xf32>,
    %c0_10 = arith.constant 0 : index
    %c0_11 = arith.constant 0 : index
    %c16 = arith.constant 16 : index
    %c0_12 = arith.constant 0 : index
    %5 = vector.load %arg12[%c0_10, %c0_11, %c16, %c0_12] : memref<2x10x17x64xf32, #tpu.memory_space<vmem>>, vector<2x10x1x64xf32>
    tpu.vector_store %arg12[%c0_10, %c0_11, %c16, %c0_12], %3 {strides = array<i32>} : memref<2x10x17x64xf32, #tpu.memory_space<vmem>>, vector<2x10x1x64xf32>,
    %cst_13 = arith.constant 0.000000e+00 : f32
    %6 = vector.broadcast %cst_13 : f32 to vector<2x1x13x64xf32>
    %c0_14 = arith.constant 0 : index
    %c0_15 = arith.constant 0 : index
    %c0_16 = arith.constant 0 : index
    %c0_17 = arith.constant 0 : index
    %7 = vector.load %arg13[%c0_14, %c0_15, %c0_16, %c0_17] : memref<2x6x13x64xf32, #tpu.memory_space<vmem>>, vector<2x1x13x64xf32>
    tpu.vector_store %arg13[%c0_14, %c0_15, %c0_16, %c0_17], %6 {strides = array<i32>} : memref<2x6x13x64xf32, #tpu.memory_space<vmem>>, vector<2x1x13x64xf32>,
    %c0_18 = arith.constant 0 : index
    %c5 = arith.constant 5 : index
    %c0_19 = arith.constant 0 : index
    %c0_20 = arith.constant 0 : index
    %8 = vector.load %arg13[%c0_18, %c5, %c0_19, %c0_20] : memref<2x6x13x64xf32, #tpu.memory_space<vmem>>, vector<2x1x13x64xf32>
    tpu.vector_store %arg13[%c0_18, %c5, %c0_19, %c0_20], %6 {strides = array<i32>} : memref<2x6x13x64xf32, #tpu.memory_space<vmem>>, vector<2x1x13x64xf32>,
    %cst_21 = arith.constant 0.000000e+00 : f32
    %9 = vector.broadcast %cst_21 : f32 to vector<2x6x1x64xf32>
    %c0_22 = arith.constant 0 : index
    %c0_23 = arith.constant 0 : index
    %c7_24 = arith.constant 7 : index
    %c0_25 = arith.constant 0 : index
    %10 = vector.load %arg13[%c0_22, %c0_23, %c7_24, %c0_25] : memref<2x6x13x64xf32, #tpu.memory_space<vmem>>, vector<2x6x1x64xf32>
    tpu.vector_store %arg13[%c0_22, %c0_23, %c7_24, %c0_25], %9 {strides = array<i32>} : memref<2x6x13x64xf32, #tpu.memory_space<vmem>>, vector<2x6x1x64xf32>,
    %c0_26 = arith.constant 0 : index
    %c0_27 = arith.constant 0 : index
    %c12 = arith.constant 12 : index
    %c0_28 = arith.constant 0 : index
    %11 = vector.load %arg13[%c0_26, %c0_27, %c12, %c0_28] : memref<2x6x13x64xf32, #tpu.memory_space<vmem>>, vector<2x6x1x64xf32>
    tpu.vector_store %arg13[%c0_26, %c0_27, %c12, %c0_28], %9 {strides = array<i32>} : memref<2x6x13x64xf32, #tpu.memory_space<vmem>>, vector<2x6x1x64xf32>,
    %cst_29 = arith.constant 0.000000e+00 : f32
    %12 = vector.broadcast %cst_29 : f32 to vector<2x1x11x64xf32>
    %c0_30 = arith.constant 0 : index
    %c0_31 = arith.constant 0 : index
    %c0_32 = arith.constant 0 : index
    %c0_33 = arith.constant 0 : index
    %13 = vector.load %arg14[%c0_30, %c0_31, %c0_32, %c0_33] : memref<2x4x11x64xf32, #tpu.memory_space<vmem>>, vector<2x1x11x64xf32>
    tpu.vector_store %arg14[%c0_30, %c0_31, %c0_32, %c0_33], %12 {strides = array<i32>} : memref<2x4x11x64xf32, #tpu.memory_space<vmem>>, vector<2x1x11x64xf32>,
    %c0_34 = arith.constant 0 : index
    %c3 = arith.constant 3 : index
    %c0_35 = arith.constant 0 : index
    %c0_36 = arith.constant 0 : index
    %14 = vector.load %arg14[%c0_34, %c3, %c0_35, %c0_36] : memref<2x4x11x64xf32, #tpu.memory_space<vmem>>, vector<2x1x11x64xf32>
    tpu.vector_store %arg14[%c0_34, %c3, %c0_35, %c0_36], %12 {strides = array<i32>} : memref<2x4x11x64xf32, #tpu.memory_space<vmem>>, vector<2x1x11x64xf32>,
    %cst_37 = arith.constant 0.000000e+00 : f32
    %15 = vector.broadcast %cst_37 : f32 to vector<2x4x1x64xf32>
    %c0_38 = arith.constant 0 : index
    %c0_39 = arith.constant 0 : index
    %c7_40 = arith.constant 7 : index
    %c0_41 = arith.constant 0 : index
    %16 = vector.load %arg14[%c0_38, %c0_39, %c7_40, %c0_41] : memref<2x4x11x64xf32, #tpu.memory_space<vmem>>, vector<2x4x1x64xf32>
    tpu.vector_store %arg14[%c0_38, %c0_39, %c7_40, %c0_41], %15 {strides = array<i32>} : memref<2x4x11x64xf32, #tpu.memory_space<vmem>>, vector<2x4x1x64xf32>,
    %c0_42 = arith.constant 0 : index
    %c0_43 = arith.constant 0 : index
    %c10 = arith.constant 10 : index
    %c0_44 = arith.constant 0 : index
    %17 = vector.load %arg14[%c0_42, %c0_43, %c10, %c0_44] : memref<2x4x11x64xf32, #tpu.memory_space<vmem>>, vector<2x4x1x64xf32>
    tpu.vector_store %arg14[%c0_42, %c0_43, %c10, %c0_44], %15 {strides = array<i32>} : memref<2x4x11x64xf32, #tpu.memory_space<vmem>>, vector<2x4x1x64xf32>,
    %c0_45 = arith.constant 0 : index
    %c0_46 = arith.constant 0 : index
    %c0_47 = arith.constant 0 : index
    %18 = vector.load %arg1[%c0_45, %c0_46, %c0_47] : memref<2x256x32xf32, #tpu.memory_space<vmem>>, vector<2x256x32xf32>
    %19 = vector.shape_cast %18 : vector<2x256x32xf32> to vector<512x32xf32>
    %c0_48 = arith.constant 0 : index
    %c0_49 = arith.constant 0 : index
    %20 = vector.load %arg2[%c0_48, %c0_49] : memref<32x64xf32, #tpu.memory_space<vmem>>, vector<32x64xf32>
    %cst_50 = arith.constant dense<0.000000e+00> : vector<512x64xf32>
    %21 = tpu.matmul %19, %20, %cst_50 {dimension_numbers = #tpu.dot_dimension_numbers<[1], [0], [0], [1], [0, 0, 1, 1], [], []>} : vector<512x32xf32>, vector<32x64xf32>, vector<512x64xf32> -> vector<512x64xf32>
    %c0_51 = arith.constant 0 : index
    %c0_52 = arith.constant 0 : index
    %22 = vector.load %arg5[%c0_51, %c0_52] : memref<1x64xf32, #tpu.memory_space<vmem>>, vector<1x64xf32>
    %23 = vector.broadcast %22 : vector<1x64xf32> to vector<512x64xf32>
    %24 = arith.mulf %21, %23 : vector<512x64xf32>
    %c0_53 = arith.constant 0 : index
    %c0_54 = arith.constant 0 : index
    %25 = vector.load %arg6[%c0_53, %c0_54] : memref<1x64xf32, #tpu.memory_space<vmem>>, vector<1x64xf32>
    %26 = vector.broadcast %25 : vector<1x64xf32> to vector<512x64xf32>
    %27 = arith.addf %24, %26 : vector<512x64xf32>
    %cst_55 = arith.constant 0.000000e+00 : f32
    %28 = vector.broadcast %cst_55 : f32 to vector<512x64xf32>
    %29 = arith.maximumf %27, %28 : vector<512x64xf32>
    %30 = vector.shape_cast %29 : vector<512x64xf32> to vector<16x2x16x64xf32>
    %cst_56 = arith.constant dense<0xFF800000> : vector<16x16x64xf32>
    %31 = vector.multi_reduction <maximumf>, %30, %cst_56 [1] : vector<16x2x16x64xf32> to vector<16x16x64xf32>
    %32 = vector.shape_cast %31 : vector<16x16x64xf32> to vector<128x2x64xf32>
    %cst_57 = arith.constant dense<0xFF800000> : vector<128x64xf32>
    %33 = vector.multi_reduction <maximumf>, %32, %cst_57 [1] : vector<128x2x64xf32> to vector<128x64xf32>
    %34 = vector.shape_cast %33 : vector<128x64xf32> to vector<2x8x8x64xf32>
    %c0_58 = arith.constant 0 : index
    %c1 = arith.constant 1 : index
    %c8 = arith.constant 8 : index
    %c0_59 = arith.constant 0 : index
    %35 = vector.load %arg12[%c0_58, %c1, %c8, %c0_59] : memref<2x10x17x64xf32, #tpu.memory_space<vmem>>, vector<2x8x8x64xf32>
    tpu.vector_store %arg12[%c0_58, %c1, %c8, %c0_59], %34 {strides = array<i32>} : memref<2x10x17x64xf32, #tpu.memory_space<vmem>>, vector<2x8x8x64xf32>,
    %c0_60 = arith.constant 0 : index
    %c0_61 = arith.constant 0 : index
    %36 = vector.load %arg7[%c0_60, %c0_61] : memref<1x64xf32, #tpu.memory_space<vmem>>, vector<1x64xf32>
    %c0_62 = arith.constant 0 : index
    %c0_63 = arith.constant 0 : index
    %37 = vector.load %arg8[%c0_62, %c0_63] : memref<1x64xf32, #tpu.memory_space<vmem>>, vector<1x64xf32>
    %c0_64 = arith.constant 0 : index
    %c0_65 = arith.constant 0 : index
    %c7_66 = arith.constant 7 : index
    %c0_67 = arith.constant 0 : index
    %38 = vector.load %arg12[%c0_64, %c0_65, %c7_66, %c0_67] : memref<2x10x17x64xf32, #tpu.memory_space<vmem>>, vector<2x10x8x64xf32>
    %39 = vector.extract_strided_slice %38 {offsets = [0, 0, 0, 0], sizes = [2, 8, 8, 64], strides = [1, 1, 1, 1]} : vector<2x10x8x64xf32> to vector<2x8x8x64xf32>
    %40 = vector.shape_cast %39 : vector<2x8x8x64xf32> to vector<128x64xf32>
    %c0_68 = arith.constant 0 : index
    %c0_69 = arith.constant 0 : index
    %c0_70 = arith.constant 0 : index
    %c0_71 = arith.constant 0 : index
    %41 = vector.load %arg3[%c0_68, %c0_69, %c0_70, %c0_71] : memref<3x3x64x64xf32, #tpu.memory_space<vmem>>, vector<1x1x64x64xf32>
    %42 = vector.shape_cast %41 : vector<1x1x64x64xf32> to vector<64x64xf32>
    %cst_72 = arith.constant dense<0.000000e+00> : vector<128x64xf32>
    %43 = tpu.matmul %40, %42, %cst_72 {dimension_numbers = #tpu.dot_dimension_numbers<[1], [0], [0], [1], [0, 0, 1, 1], [], []>} : vector<128x64xf32>, vector<64x64xf32>, vector<128x64xf32> -> vector<128x64xf32>
    %44 = vector.extract_strided_slice %38 {offsets = [0, 1, 0, 0], sizes = [2, 8, 8, 64], strides = [1, 1, 1, 1]} : vector<2x10x8x64xf32> to vector<2x8x8x64xf32>
    %45 = vector.shape_cast %44 : vector<2x8x8x64xf32> to vector<128x64xf32>
    %c1_73 = arith.constant 1 : index
    %c0_74 = arith.constant 0 : index
    %c0_75 = arith.constant 0 : index
    %c0_76 = arith.constant 0 : index
    %46 = vector.load %arg3[%c1_73, %c0_74, %c0_75, %c0_76] : memref<3x3x64x64xf32, #tpu.memory_space<vmem>>, vector<1x1x64x64xf32>
    %47 = vector.shape_cast %46 : vector<1x1x64x64xf32> to vector<64x64xf32>
    %cst_77 = arith.constant dense<0.000000e+00> : vector<128x64xf32>
    %48 = tpu.matmul %45, %47, %cst_77 {dimension_numbers = #tpu.dot_dimension_numbers<[1], [0], [0], [1], [0, 0, 1, 1], [], []>} : vector<128x64xf32>, vector<64x64xf32>, vector<128x64xf32> -> vector<128x64xf32>
    %49 = arith.addf %43, %48 : vector<128x64xf32>
    %50 = vector.extract_strided_slice %38 {offsets = [0, 2, 0, 0], sizes = [2, 8, 8, 64], strides = [1, 1, 1, 1]} : vector<2x10x8x64xf32> to vector<2x8x8x64xf32>
    %51 = vector.shape_cast %50 : vector<2x8x8x64xf32> to vector<128x64xf32>
    %c2 = arith.constant 2 : index
    %c0_78 = arith.constant 0 : index
    %c0_79 = arith.constant 0 : index
    %c0_80 = arith.constant 0 : index
    %52 = vector.load %arg3[%c2, %c0_78, %c0_79, %c0_80] : memref<3x3x64x64xf32, #tpu.memory_space<vmem>>, vector<1x1x64x64xf32>
    %53 = vector.shape_cast %52 : vector<1x1x64x64xf32> to vector<64x64xf32>
    %cst_81 = arith.constant dense<0.000000e+00> : vector<128x64xf32>
    %54 = tpu.matmul %51, %53, %cst_81 {dimension_numbers = #tpu.dot_dimension_numbers<[1], [0], [0], [1], [0, 0, 1, 1], [], []>} : vector<128x64xf32>, vector<64x64xf32>, vector<128x64xf32> -> vector<128x64xf32>
    %55 = arith.addf %49, %54 : vector<128x64xf32>
    %c0_82 = arith.constant 0 : index
    %c0_83 = arith.constant 0 : index
    %c8_84 = arith.constant 8 : index
    %c0_85 = arith.constant 0 : index
    %56 = vector.load %arg12[%c0_82, %c0_83, %c8_84, %c0_85] : memref<2x10x17x64xf32, #tpu.memory_space<vmem>>, vector<2x10x8x64xf32>
    %57 = vector.extract_strided_slice %56 {offsets = [0, 0, 0, 0], sizes = [2, 8, 8, 64], strides = [1, 1, 1, 1]} : vector<2x10x8x64xf32> to vector<2x8x8x64xf32>
    %58 = vector.shape_cast %57 : vector<2x8x8x64xf32> to vector<128x64xf32>
    %c0_86 = arith.constant 0 : index
    %c1_87 = arith.constant 1 : index
    %c0_88 = arith.constant 0 : index
    %c0_89 = arith.constant 0 : index
    %59 = vector.load %arg3[%c0_86, %c1_87, %c0_88, %c0_89] : memref<3x3x64x64xf32, #tpu.memory_space<vmem>>, vector<1x1x64x64xf32>
    %60 = vector.shape_cast %59 : vector<1x1x64x64xf32> to vector<64x64xf32>
    %cst_90 = arith.constant dense<0.000000e+00> : vector<128x64xf32>
    %61 = tpu.matmul %58, %60, %cst_90 {dimension_numbers = #tpu.dot_dimension_numbers<[1], [0], [0], [1], [0, 0, 1, 1], [], []>} : vector<128x64xf32>, vector<64x64xf32>, vector<128x64xf32> -> vector<128x64xf32>
    %62 = arith.addf %55, %61 : vector<128x64xf32>
    %63 = vector.extract_strided_slice %56 {offsets = [0, 1, 0, 0], sizes = [2, 8, 8, 64], strides = [1, 1, 1, 1]} : vector<2x10x8x64xf32> to vector<2x8x8x64xf32>
    %64 = vector.shape_cast %63 : vector<2x8x8x64xf32> to vector<128x64xf32>
    %c1_91 = arith.constant 1 : index
    %c1_92 = arith.constant 1 : index
    %c0_93 = arith.constant 0 : index
    %c0_94 = arith.constant 0 : index
    %65 = vector.load %arg3[%c1_91, %c1_92, %c0_93, %c0_94] : memref<3x3x64x64xf32, #tpu.memory_space<vmem>>, vector<1x1x64x64xf32>
    %66 = vector.shape_cast %65 : vector<1x1x64x64xf32> to vector<64x64xf32>
    %cst_95 = arith.constant dense<0.000000e+00> : vector<128x64xf32>
    %67 = tpu.matmul %64, %66, %cst_95 {dimension_numbers = #tpu.dot_dimension_numbers<[1], [0], [0], [1], [0, 0, 1, 1], [], []>} : vector<128x64xf32>, vector<64x64xf32>, vector<128x64xf32> -> vector<128x64xf32>
    %68 = arith.addf %62, %67 : vector<128x64xf32>
    %69 = vector.extract_strided_slice %56 {offsets = [0, 2, 0, 0], sizes = [2, 8, 8, 64], strides = [1, 1, 1, 1]} : vector<2x10x8x64xf32> to vector<2x8x8x64xf32>
    %70 = vector.shape_cast %69 : vector<2x8x8x64xf32> to vector<128x64xf32>
    %c2_96 = arith.constant 2 : index
    %c1_97 = arith.constant 1 : index
    %c0_98 = arith.constant 0 : index
    %c0_99 = arith.constant 0 : index
    %71 = vector.load %arg3[%c2_96, %c1_97, %c0_98, %c0_99] : memref<3x3x64x64xf32, #tpu.memory_space<vmem>>, vector<1x1x64x64xf32>
    %72 = vector.shape_cast %71 : vector<1x1x64x64xf32> to vector<64x64xf32>
    %cst_100 = arith.constant dense<0.000000e+00> : vector<128x64xf32>
    %73 = tpu.matmul %70, %72, %cst_100 {dimension_numbers = #tpu.dot_dimension_numbers<[1], [0], [0], [1], [0, 0, 1, 1], [], []>} : vector<128x64xf32>, vector<64x64xf32>, vector<128x64xf32> -> vector<128x64xf32>
    %74 = arith.addf %68, %73 : vector<128x64xf32>
    %c0_101 = arith.constant 0 : index
    %c0_102 = arith.constant 0 : index
    %c9_103 = arith.constant 9 : index
    %c0_104 = arith.constant 0 : index
    %75 = vector.load %arg12[%c0_101, %c0_102, %c9_103, %c0_104] : memref<2x10x17x64xf32, #tpu.memory_space<vmem>>, vector<2x10x8x64xf32>
    %76 = vector.extract_strided_slice %75 {offsets = [0, 0, 0, 0], sizes = [2, 8, 8, 64], strides = [1, 1, 1, 1]} : vector<2x10x8x64xf32> to vector<2x8x8x64xf32>
    %77 = vector.shape_cast %76 : vector<2x8x8x64xf32> to vector<128x64xf32>
    %c0_105 = arith.constant 0 : index
    %c2_106 = arith.constant 2 : index
    %c0_107 = arith.constant 0 : index
    %c0_108 = arith.constant 0 : index
    %78 = vector.load %arg3[%c0_105, %c2_106, %c0_107, %c0_108] : memref<3x3x64x64xf32, #tpu.memory_space<vmem>>, vector<1x1x64x64xf32>
    %79 = vector.shape_cast %78 : vector<1x1x64x64xf32> to vector<64x64xf32>
    %cst_109 = arith.constant dense<0.000000e+00> : vector<128x64xf32>
    %80 = tpu.matmul %77, %79, %cst_109 {dimension_numbers = #tpu.dot_dimension_numbers<[1], [0], [0], [1], [0, 0, 1, 1], [], []>} : vector<128x64xf32>, vector<64x64xf32>, vector<128x64xf32> -> vector<128x64xf32>
    %81 = arith.addf %74, %80 : vector<128x64xf32>
    %82 = vector.extract_strided_slice %75 {offsets = [0, 1, 0, 0], sizes = [2, 8, 8, 64], strides = [1, 1, 1, 1]} : vector<2x10x8x64xf32> to vector<2x8x8x64xf32>
    %83 = vector.shape_cast %82 : vector<2x8x8x64xf32> to vector<128x64xf32>
    %c1_110 = arith.constant 1 : index
    %c2_111 = arith.constant 2 : index
    %c0_112 = arith.constant 0 : index
    %c0_113 = arith.constant 0 : index
    %84 = vector.load %arg3[%c1_110, %c2_111, %c0_112, %c0_113] : memref<3x3x64x64xf32, #tpu.memory_space<vmem>>, vector<1x1x64x64xf32>
    %85 = vector.shape_cast %84 : vector<1x1x64x64xf32> to vector<64x64xf32>
    %cst_114 = arith.constant dense<0.000000e+00> : vector<128x64xf32>
    %86 = tpu.matmul %83, %85, %cst_114 {dimension_numbers = #tpu.dot_dimension_numbers<[1], [0], [0], [1], [0, 0, 1, 1], [], []>} : vector<128x64xf32>, vector<64x64xf32>, vector<128x64xf32> -> vector<128x64xf32>
    %87 = arith.addf %81, %86 : vector<128x64xf32>
    %88 = vector.extract_strided_slice %75 {offsets = [0, 2, 0, 0], sizes = [2, 8, 8, 64], strides = [1, 1, 1, 1]} : vector<2x10x8x64xf32> to vector<2x8x8x64xf32>
    %89 = vector.shape_cast %88 : vector<2x8x8x64xf32> to vector<128x64xf32>
    %c2_115 = arith.constant 2 : index
    %c2_116 = arith.constant 2 : index
    %c0_117 = arith.constant 0 : index
    %c0_118 = arith.constant 0 : index
    %90 = vector.load %arg3[%c2_115, %c2_116, %c0_117, %c0_118] : memref<3x3x64x64xf32, #tpu.memory_space<vmem>>, vector<1x1x64x64xf32>
    %91 = vector.shape_cast %90 : vector<1x1x64x64xf32> to vector<64x64xf32>
    %cst_119 = arith.constant dense<0.000000e+00> : vector<128x64xf32>
    %92 = tpu.matmul %89, %91, %cst_119 {dimension_numbers = #tpu.dot_dimension_numbers<[1], [0], [0], [1], [0, 0, 1, 1], [], []>} : vector<128x64xf32>, vector<64x64xf32>, vector<128x64xf32> -> vector<128x64xf32>
    %93 = arith.addf %87, %92 : vector<128x64xf32>
    %94 = vector.broadcast %36 : vector<1x64xf32> to vector<128x64xf32>
    %95 = arith.mulf %93, %94 : vector<128x64xf32>
    %96 = vector.broadcast %37 : vector<1x64xf32> to vector<128x64xf32>
    %97 = arith.addf %95, %96 : vector<128x64xf32>
    %cst_120 = arith.constant 0.000000e+00 : f32
    %98 = vector.broadcast %cst_120 : f32 to vector<128x64xf32>
    %99 = arith.maximumf %97, %98 : vector<128x64xf32>
    %100 = vector.shape_cast %99 : vector<128x64xf32> to vector<8x2x8x64xf32>
    %cst_121 = arith.constant dense<0xFF800000> : vector<8x8x64xf32>
    %101 = vector.multi_reduction <maximumf>, %100, %cst_121 [1] : vector<8x2x8x64xf32> to vector<8x8x64xf32>
    %102 = vector.shape_cast %101 : vector<8x8x64xf32> to vector<32x2x64xf32>
    %cst_122 = arith.constant dense<0xFF800000> : vector<32x64xf32>
    %103 = vector.multi_reduction <maximumf>, %102, %cst_122 [1] : vector<32x2x64xf32> to vector<32x64xf32>
    %104 = vector.shape_cast %103 : vector<32x64xf32> to vector<2x4x4x64xf32>
    %c0_123 = arith.constant 0 : index
    %c1_124 = arith.constant 1 : index
    %c8_125 = arith.constant 8 : index
    %c0_126 = arith.constant 0 : index
    %105 = vector.load %arg13[%c0_123, %c1_124, %c8_125, %c0_126] : memref<2x6x13x64xf32, #tpu.memory_space<vmem>>, vector<2x4x4x64xf32>
    tpu.vector_store %arg13[%c0_123, %c1_124, %c8_125, %c0_126], %104 {strides = array<i32>} : memref<2x6x13x64xf32, #tpu.memory_space<vmem>>, vector<2x4x4x64xf32>,
    %c0_127 = arith.constant 0 : index
    %c0_128 = arith.constant 0 : index
    %106 = vector.load %arg7[%c0_127, %c0_128] : memref<1x64xf32, #tpu.memory_space<vmem>>, vector<1x64xf32>
    %c0_129 = arith.constant 0 : index
    %c0_130 = arith.constant 0 : index
    %107 = vector.load %arg8[%c0_129, %c0_130] : memref<1x64xf32, #tpu.memory_space<vmem>>, vector<1x64xf32>
    %c0_131 = arith.constant 0 : index
    %c0_132 = arith.constant 0 : index
    %c7_133 = arith.constant 7 : index
    %c0_134 = arith.constant 0 : index
    %108 = vector.load %arg13[%c0_131, %c0_132, %c7_133, %c0_134] : memref<2x6x13x64xf32, #tpu.memory_space<vmem>>, vector<2x6x4x64xf32>
    %109 = vector.extract_strided_slice %108 {offsets = [0, 0, 0, 0], sizes = [2, 4, 4, 64], strides = [1, 1, 1, 1]} : vector<2x6x4x64xf32> to vector<2x4x4x64xf32>
    %110 = vector.shape_cast %109 : vector<2x4x4x64xf32> to vector<32x64xf32>
    %c0_135 = arith.constant 0 : index
    %c0_136 = arith.constant 0 : index
    %c0_137 = arith.constant 0 : index
    %c0_138 = arith.constant 0 : index
    %111 = vector.load %arg3[%c0_135, %c0_136, %c0_137, %c0_138] : memref<3x3x64x64xf32, #tpu.memory_space<vmem>>, vector<1x1x64x64xf32>
    %112 = vector.shape_cast %111 : vector<1x1x64x64xf32> to vector<64x64xf32>
    %cst_139 = arith.constant dense<0.000000e+00> : vector<32x64xf32>
    %113 = tpu.matmul %110, %112, %cst_139 {dimension_numbers = #tpu.dot_dimension_numbers<[1], [0], [0], [1], [0, 0, 1, 1], [], []>} : vector<32x64xf32>, vector<64x64xf32>, vector<32x64xf32> -> vector<32x64xf32>
    %114 = vector.extract_strided_slice %108 {offsets = [0, 1, 0, 0], sizes = [2, 4, 4, 64], strides = [1, 1, 1, 1]} : vector<2x6x4x64xf32> to vector<2x4x4x64xf32>
    %115 = vector.shape_cast %114 : vector<2x4x4x64xf32> to vector<32x64xf32>
    %c1_140 = arith.constant 1 : index
    %c0_141 = arith.constant 0 : index
    %c0_142 = arith.constant 0 : index
    %c0_143 = arith.constant 0 : index
    %116 = vector.load %arg3[%c1_140, %c0_141, %c0_142, %c0_143] : memref<3x3x64x64xf32, #tpu.memory_space<vmem>>, vector<1x1x64x64xf32>
    %117 = vector.shape_cast %116 : vector<1x1x64x64xf32> to vector<64x64xf32>
    %cst_144 = arith.constant dense<0.000000e+00> : vector<32x64xf32>
    %118 = tpu.matmul %115, %117, %cst_144 {dimension_numbers = #tpu.dot_dimension_numbers<[1], [0], [0], [1], [0, 0, 1, 1], [], []>} : vector<32x64xf32>, vector<64x64xf32>, vector<32x64xf32> -> vector<32x64xf32>
    %119 = arith.addf %113, %118 : vector<32x64xf32>
    %120 = vector.extract_strided_slice %108 {offsets = [0, 2, 0, 0], sizes = [2, 4, 4, 64], strides = [1, 1, 1, 1]} : vector<2x6x4x64xf32> to vector<2x4x4x64xf32>
    %121 = vector.shape_cast %120 : vector<2x4x4x64xf32> to vector<32x64xf32>
    %c2_145 = arith.constant 2 : index
    %c0_146 = arith.constant 0 : index
    %c0_147 = arith.constant 0 : index
    %c0_148 = arith.constant 0 : index
    %122 = vector.load %arg3[%c2_145, %c0_146, %c0_147, %c0_148] : memref<3x3x64x64xf32, #tpu.memory_space<vmem>>, vector<1x1x64x64xf32>
    %123 = vector.shape_cast %122 : vector<1x1x64x64xf32> to vector<64x64xf32>
    %cst_149 = arith.constant dense<0.000000e+00> : vector<32x64xf32>
    %124 = tpu.matmul %121, %123, %cst_149 {dimension_numbers = #tpu.dot_dimension_numbers<[1], [0], [0], [1], [0, 0, 1, 1], [], []>} : vector<32x64xf32>, vector<64x64xf32>, vector<32x64xf32> -> vector<32x64xf32>
    %125 = arith.addf %119, %124 : vector<32x64xf32>
    %c0_150 = arith.constant 0 : index
    %c0_151 = arith.constant 0 : index
    %c8_152 = arith.constant 8 : index
    %c0_153 = arith.constant 0 : index
    %126 = vector.load %arg13[%c0_150, %c0_151, %c8_152, %c0_153] : memref<2x6x13x64xf32, #tpu.memory_space<vmem>>, vector<2x6x4x64xf32>
    %127 = vector.extract_strided_slice %126 {offsets = [0, 0, 0, 0], sizes = [2, 4, 4, 64], strides = [1, 1, 1, 1]} : vector<2x6x4x64xf32> to vector<2x4x4x64xf32>
    %128 = vector.shape_cast %127 : vector<2x4x4x64xf32> to vector<32x64xf32>
    %c0_154 = arith.constant 0 : index
    %c1_155 = arith.constant 1 : index
    %c0_156 = arith.constant 0 : index
    %c0_157 = arith.constant 0 : index
    %129 = vector.load %arg3[%c0_154, %c1_155, %c0_156, %c0_157] : memref<3x3x64x64xf32, #tpu.memory_space<vmem>>, vector<1x1x64x64xf32>
    %130 = vector.shape_cast %129 : vector<1x1x64x64xf32> to vector<64x64xf32>
    %cst_158 = arith.constant dense<0.000000e+00> : vector<32x64xf32>
    %131 = tpu.matmul %128, %130, %cst_158 {dimension_numbers = #tpu.dot_dimension_numbers<[1], [0], [0], [1], [0, 0, 1, 1], [], []>} : vector<32x64xf32>, vector<64x64xf32>, vector<32x64xf32> -> vector<32x64xf32>
    %132 = arith.addf %125, %131 : vector<32x64xf32>
    %133 = vector.extract_strided_slice %126 {offsets = [0, 1, 0, 0], sizes = [2, 4, 4, 64], strides = [1, 1, 1, 1]} : vector<2x6x4x64xf32> to vector<2x4x4x64xf32>
    %134 = vector.shape_cast %133 : vector<2x4x4x64xf32> to vector<32x64xf32>
    %c1_159 = arith.constant 1 : index
    %c1_160 = arith.constant 1 : index
    %c0_161 = arith.constant 0 : index
    %c0_162 = arith.constant 0 : index
    %135 = vector.load %arg3[%c1_159, %c1_160, %c0_161, %c0_162] : memref<3x3x64x64xf32, #tpu.memory_space<vmem>>, vector<1x1x64x64xf32>
    %136 = vector.shape_cast %135 : vector<1x1x64x64xf32> to vector<64x64xf32>
    %cst_163 = arith.constant dense<0.000000e+00> : vector<32x64xf32>
    %137 = tpu.matmul %134, %136, %cst_163 {dimension_numbers = #tpu.dot_dimension_numbers<[1], [0], [0], [1], [0, 0, 1, 1], [], []>} : vector<32x64xf32>, vector<64x64xf32>, vector<32x64xf32> -> vector<32x64xf32>
    %138 = arith.addf %132, %137 : vector<32x64xf32>
    %139 = vector.extract_strided_slice %126 {offsets = [0, 2, 0, 0], sizes = [2, 4, 4, 64], strides = [1, 1, 1, 1]} : vector<2x6x4x64xf32> to vector<2x4x4x64xf32>
    %140 = vector.shape_cast %139 : vector<2x4x4x64xf32> to vector<32x64xf32>
    %c2_164 = arith.constant 2 : index
    %c1_165 = arith.constant 1 : index
    %c0_166 = arith.constant 0 : index
    %c0_167 = arith.constant 0 : index
    %141 = vector.load %arg3[%c2_164, %c1_165, %c0_166, %c0_167] : memref<3x3x64x64xf32, #tpu.memory_space<vmem>>, vector<1x1x64x64xf32>
    %142 = vector.shape_cast %141 : vector<1x1x64x64xf32> to vector<64x64xf32>
    %cst_168 = arith.constant dense<0.000000e+00> : vector<32x64xf32>
    %143 = tpu.matmul %140, %142, %cst_168 {dimension_numbers = #tpu.dot_dimension_numbers<[1], [0], [0], [1], [0, 0, 1, 1], [], []>} : vector<32x64xf32>, vector<64x64xf32>, vector<32x64xf32> -> vector<32x64xf32>
    %144 = arith.addf %138, %143 : vector<32x64xf32>
    %c0_169 = arith.constant 0 : index
    %c0_170 = arith.constant 0 : index
    %c9_171 = arith.constant 9 : index
    %c0_172 = arith.constant 0 : index
    %145 = vector.load %arg13[%c0_169, %c0_170, %c9_171, %c0_172] : memref<2x6x13x64xf32, #tpu.memory_space<vmem>>, vector<2x6x4x64xf32>
    %146 = vector.extract_strided_slice %145 {offsets = [0, 0, 0, 0], sizes = [2, 4, 4, 64], strides = [1, 1, 1, 1]} : vector<2x6x4x64xf32> to vector<2x4x4x64xf32>
    %147 = vector.shape_cast %146 : vector<2x4x4x64xf32> to vector<32x64xf32>
    %c0_173 = arith.constant 0 : index
    %c2_174 = arith.constant 2 : index
    %c0_175 = arith.constant 0 : index
    %c0_176 = arith.constant 0 : index
    %148 = vector.load %arg3[%c0_173, %c2_174, %c0_175, %c0_176] : memref<3x3x64x64xf32, #tpu.memory_space<vmem>>, vector<1x1x64x64xf32>
    %149 = vector.shape_cast %148 : vector<1x1x64x64xf32> to vector<64x64xf32>
    %cst_177 = arith.constant dense<0.000000e+00> : vector<32x64xf32>
    %150 = tpu.matmul %147, %149, %cst_177 {dimension_numbers = #tpu.dot_dimension_numbers<[1], [0], [0], [1], [0, 0, 1, 1], [], []>} : vector<32x64xf32>, vector<64x64xf32>, vector<32x64xf32> -> vector<32x64xf32>
    %151 = arith.addf %144, %150 : vector<32x64xf32>
    %152 = vector.extract_strided_slice %145 {offsets = [0, 1, 0, 0], sizes = [2, 4, 4, 64], strides = [1, 1, 1, 1]} : vector<2x6x4x64xf32> to vector<2x4x4x64xf32>
    %153 = vector.shape_cast %152 : vector<2x4x4x64xf32> to vector<32x64xf32>
    %c1_178 = arith.constant 1 : index
    %c2_179 = arith.constant 2 : index
    %c0_180 = arith.constant 0 : index
    %c0_181 = arith.constant 0 : index
    %154 = vector.load %arg3[%c1_178, %c2_179, %c0_180, %c0_181] : memref<3x3x64x64xf32, #tpu.memory_space<vmem>>, vector<1x1x64x64xf32>
    %155 = vector.shape_cast %154 : vector<1x1x64x64xf32> to vector<64x64xf32>
    %cst_182 = arith.constant dense<0.000000e+00> : vector<32x64xf32>
    %156 = tpu.matmul %153, %155, %cst_182 {dimension_numbers = #tpu.dot_dimension_numbers<[1], [0], [0], [1], [0, 0, 1, 1], [], []>} : vector<32x64xf32>, vector<64x64xf32>, vector<32x64xf32> -> vector<32x64xf32>
    %157 = arith.addf %151, %156 : vector<32x64xf32>
    %158 = vector.extract_strided_slice %145 {offsets = [0, 2, 0, 0], sizes = [2, 4, 4, 64], strides = [1, 1, 1, 1]} : vector<2x6x4x64xf32> to vector<2x4x4x64xf32>
    %159 = vector.shape_cast %158 : vector<2x4x4x64xf32> to vector<32x64xf32>
    %c2_183 = arith.constant 2 : index
    %c2_184 = arith.constant 2 : index
    %c0_185 = arith.constant 0 : index
    %c0_186 = arith.constant 0 : index
    %160 = vector.load %arg3[%c2_183, %c2_184, %c0_185, %c0_186] : memref<3x3x64x64xf32, #tpu.memory_space<vmem>>, vector<1x1x64x64xf32>
    %161 = vector.shape_cast %160 : vector<1x1x64x64xf32> to vector<64x64xf32>
    %cst_187 = arith.constant dense<0.000000e+00> : vector<32x64xf32>
    %162 = tpu.matmul %159, %161, %cst_187 {dimension_numbers = #tpu.dot_dimension_numbers<[1], [0], [0], [1], [0, 0, 1, 1], [], []>} : vector<32x64xf32>, vector<64x64xf32>, vector<32x64xf32> -> vector<32x64xf32>
    %163 = arith.addf %157, %162 : vector<32x64xf32>
    %164 = vector.broadcast %106 : vector<1x64xf32> to vector<32x64xf32>
    %165 = arith.mulf %163, %164 : vector<32x64xf32>
    %166 = vector.broadcast %107 : vector<1x64xf32> to vector<32x64xf32>
    %167 = arith.addf %165, %166 : vector<32x64xf32>
    %cst_188 = arith.constant 0.000000e+00 : f32
    %168 = vector.broadcast %cst_188 : f32 to vector<32x64xf32>
    %169 = arith.maximumf %167, %168 : vector<32x64xf32>
    %170 = vector.shape_cast %169 : vector<32x64xf32> to vector<4x2x4x64xf32>
    %cst_189 = arith.constant dense<0xFF800000> : vector<4x4x64xf32>
    %171 = vector.multi_reduction <maximumf>, %170, %cst_189 [1] : vector<4x2x4x64xf32> to vector<4x4x64xf32>
    %172 = vector.shape_cast %171 : vector<4x4x64xf32> to vector<8x2x64xf32>
    %cst_190 = arith.constant dense<0xFF800000> : vector<8x64xf32>
    %173 = vector.multi_reduction <maximumf>, %172, %cst_190 [1] : vector<8x2x64xf32> to vector<8x64xf32>
    %174 = vector.shape_cast %173 : vector<8x64xf32> to vector<2x2x2x64xf32>
    %c0_191 = arith.constant 0 : index
    %c1_192 = arith.constant 1 : index
    %c8_193 = arith.constant 8 : index
    %c0_194 = arith.constant 0 : index
    %175 = vector.load %arg14[%c0_191, %c1_192, %c8_193, %c0_194] : memref<2x4x11x64xf32, #tpu.memory_space<vmem>>, vector<2x2x2x64xf32>
    tpu.vector_store %arg14[%c0_191, %c1_192, %c8_193, %c0_194], %174 {strides = array<i32>} : memref<2x4x11x64xf32, #tpu.memory_space<vmem>>, vector<2x2x2x64xf32>,
    %c0_195 = arith.constant 0 : index
    %c0_196 = arith.constant 0 : index
    %176 = vector.load %arg9[%c0_195, %c0_196] : memref<1x128xf32, #tpu.memory_space<vmem>>, vector<1x128xf32>
    %c0_197 = arith.constant 0 : index
    %c0_198 = arith.constant 0 : index
    %177 = vector.load %arg10[%c0_197, %c0_198] : memref<1x128xf32, #tpu.memory_space<vmem>>, vector<1x128xf32>
    %c0_199 = arith.constant 0 : index
    %c0_200 = arith.constant 0 : index
    %c7_201 = arith.constant 7 : index
    %c0_202 = arith.constant 0 : index
    %178 = vector.load %arg14[%c0_199, %c0_200, %c7_201, %c0_202] : memref<2x4x11x64xf32, #tpu.memory_space<vmem>>, vector<2x4x2x64xf32>
    %179 = vector.extract_strided_slice %178 {offsets = [0, 0, 0, 0], sizes = [2, 2, 2, 64], strides = [1, 1, 1, 1]} : vector<2x4x2x64xf32> to vector<2x2x2x64xf32>
    %180 = vector.shape_cast %179 : vector<2x2x2x64xf32> to vector<8x64xf32>
    %c0_203 = arith.constant 0 : index
    %c0_204 = arith.constant 0 : index
    %c0_205 = arith.constant 0 : index
    %c0_206 = arith.constant 0 : index
    %181 = vector.load %arg4[%c0_203, %c0_204, %c0_205, %c0_206] : memref<3x3x64x128xf32, #tpu.memory_space<vmem>>, vector<1x1x64x128xf32>
    %182 = vector.shape_cast %181 : vector<1x1x64x128xf32> to vector<64x128xf32>
    %cst_207 = arith.constant dense<0.000000e+00> : vector<8x128xf32>
    %183 = tpu.matmul %180, %182, %cst_207 {dimension_numbers = #tpu.dot_dimension_numbers<[1], [0], [0], [1], [0, 0, 1, 1], [], []>} : vector<8x64xf32>, vector<64x128xf32>, vector<8x128xf32> -> vector<8x128xf32>
    %184 = vector.extract_strided_slice %178 {offsets = [0, 1, 0, 0], sizes = [2, 2, 2, 64], strides = [1, 1, 1, 1]} : vector<2x4x2x64xf32> to vector<2x2x2x64xf32>
    %185 = vector.shape_cast %184 : vector<2x2x2x64xf32> to vector<8x64xf32>
    %c1_208 = arith.constant 1 : index
    %c0_209 = arith.constant 0 : index
    %c0_210 = arith.constant 0 : index
    %c0_211 = arith.constant 0 : index
    %186 = vector.load %arg4[%c1_208, %c0_209, %c0_210, %c0_211] : memref<3x3x64x128xf32, #tpu.memory_space<vmem>>, vector<1x1x64x128xf32>
    %187 = vector.shape_cast %186 : vector<1x1x64x128xf32> to vector<64x128xf32>
    %cst_212 = arith.constant dense<0.000000e+00> : vector<8x128xf32>
    %188 = tpu.matmul %185, %187, %cst_212 {dimension_numbers = #tpu.dot_dimension_numbers<[1], [0], [0], [1], [0, 0, 1, 1], [], []>} : vector<8x64xf32>, vector<64x128xf32>, vector<8x128xf32> -> vector<8x128xf32>
    %189 = arith.addf %183, %188 : vector<8x128xf32>
    %190 = vector.extract_strided_slice %178 {offsets = [0, 2, 0, 0], sizes = [2, 2, 2, 64], strides = [1, 1, 1, 1]} : vector<2x4x2x64xf32> to vector<2x2x2x64xf32>
    %191 = vector.shape_cast %190 : vector<2x2x2x64xf32> to vector<8x64xf32>
    %c2_213 = arith.constant 2 : index
    %c0_214 = arith.constant 0 : index
    %c0_215 = arith.constant 0 : index
    %c0_216 = arith.constant 0 : index
    %192 = vector.load %arg4[%c2_213, %c0_214, %c0_215, %c0_216] : memref<3x3x64x128xf32, #tpu.memory_space<vmem>>, vector<1x1x64x128xf32>
    %193 = vector.shape_cast %192 : vector<1x1x64x128xf32> to vector<64x128xf32>
    %cst_217 = arith.constant dense<0.000000e+00> : vector<8x128xf32>
    %194 = tpu.matmul %191, %193, %cst_217 {dimension_numbers = #tpu.dot_dimension_numbers<[1], [0], [0], [1], [0, 0, 1, 1], [], []>} : vector<8x64xf32>, vector<64x128xf32>, vector<8x128xf32> -> vector<8x128xf32>
    %195 = arith.addf %189, %194 : vector<8x128xf32>
    %c0_218 = arith.constant 0 : index
    %c0_219 = arith.constant 0 : index
    %c8_220 = arith.constant 8 : index
    %c0_221 = arith.constant 0 : index
    %196 = vector.load %arg14[%c0_218, %c0_219, %c8_220, %c0_221] : memref<2x4x11x64xf32, #tpu.memory_space<vmem>>, vector<2x4x2x64xf32>
    %197 = vector.extract_strided_slice %196 {offsets = [0, 0, 0, 0], sizes = [2, 2, 2, 64], strides = [1, 1, 1, 1]} : vector<2x4x2x64xf32> to vector<2x2x2x64xf32>
    %198 = vector.shape_cast %197 : vector<2x2x2x64xf32> to vector<8x64xf32>
    %c0_222 = arith.constant 0 : index
    %c1_223 = arith.constant 1 : index
    %c0_224 = arith.constant 0 : index
    %c0_225 = arith.constant 0 : index
    %199 = vector.load %arg4[%c0_222, %c1_223, %c0_224, %c0_225] : memref<3x3x64x128xf32, #tpu.memory_space<vmem>>, vector<1x1x64x128xf32>
    %200 = vector.shape_cast %199 : vector<1x1x64x128xf32> to vector<64x128xf32>
    %cst_226 = arith.constant dense<0.000000e+00> : vector<8x128xf32>
    %201 = tpu.matmul %198, %200, %cst_226 {dimension_numbers = #tpu.dot_dimension_numbers<[1], [0], [0], [1], [0, 0, 1, 1], [], []>} : vector<8x64xf32>, vector<64x128xf32>, vector<8x128xf32> -> vector<8x128xf32>
    %202 = arith.addf %195, %201 : vector<8x128xf32>
    %203 = vector.extract_strided_slice %196 {offsets = [0, 1, 0, 0], sizes = [2, 2, 2, 64], strides = [1, 1, 1, 1]} : vector<2x4x2x64xf32> to vector<2x2x2x64xf32>
    %204 = vector.shape_cast %203 : vector<2x2x2x64xf32> to vector<8x64xf32>
    %c1_227 = arith.constant 1 : index
    %c1_228 = arith.constant 1 : index
    %c0_229 = arith.constant 0 : index
    %c0_230 = arith.constant 0 : index
    %205 = vector.load %arg4[%c1_227, %c1_228, %c0_229, %c0_230] : memref<3x3x64x128xf32, #tpu.memory_space<vmem>>, vector<1x1x64x128xf32>
    %206 = vector.shape_cast %205 : vector<1x1x64x128xf32> to vector<64x128xf32>
    %cst_231 = arith.constant dense<0.000000e+00> : vector<8x128xf32>
    %207 = tpu.matmul %204, %206, %cst_231 {dimension_numbers = #tpu.dot_dimension_numbers<[1], [0], [0], [1], [0, 0, 1, 1], [], []>} : vector<8x64xf32>, vector<64x128xf32>, vector<8x128xf32> -> vector<8x128xf32>
    %208 = arith.addf %202, %207 : vector<8x128xf32>
    %209 = vector.extract_strided_slice %196 {offsets = [0, 2, 0, 0], sizes = [2, 2, 2, 64], strides = [1, 1, 1, 1]} : vector<2x4x2x64xf32> to vector<2x2x2x64xf32>
    %210 = vector.shape_cast %209 : vector<2x2x2x64xf32> to vector<8x64xf32>
    %c2_232 = arith.constant 2 : index
    %c1_233 = arith.constant 1 : index
    %c0_234 = arith.constant 0 : index
    %c0_235 = arith.constant 0 : index
    %211 = vector.load %arg4[%c2_232, %c1_233, %c0_234, %c0_235] : memref<3x3x64x128xf32, #tpu.memory_space<vmem>>, vector<1x1x64x128xf32>
    %212 = vector.shape_cast %211 : vector<1x1x64x128xf32> to vector<64x128xf32>
    %cst_236 = arith.constant dense<0.000000e+00> : vector<8x128xf32>
    %213 = tpu.matmul %210, %212, %cst_236 {dimension_numbers = #tpu.dot_dimension_numbers<[1], [0], [0], [1], [0, 0, 1, 1], [], []>} : vector<8x64xf32>, vector<64x128xf32>, vector<8x128xf32> -> vector<8x128xf32>
    %214 = arith.addf %208, %213 : vector<8x128xf32>
    %c0_237 = arith.constant 0 : index
    %c0_238 = arith.constant 0 : index
    %c9_239 = arith.constant 9 : index
    %c0_240 = arith.constant 0 : index
    %215 = vector.load %arg14[%c0_237, %c0_238, %c9_239, %c0_240] : memref<2x4x11x64xf32, #tpu.memory_space<vmem>>, vector<2x4x2x64xf32>
    %216 = vector.extract_strided_slice %215 {offsets = [0, 0, 0, 0], sizes = [2, 2, 2, 64], strides = [1, 1, 1, 1]} : vector<2x4x2x64xf32> to vector<2x2x2x64xf32>
    %217 = vector.shape_cast %216 : vector<2x2x2x64xf32> to vector<8x64xf32>
    %c0_241 = arith.constant 0 : index
    %c2_242 = arith.constant 2 : index
    %c0_243 = arith.constant 0 : index
    %c0_244 = arith.constant 0 : index
    %218 = vector.load %arg4[%c0_241, %c2_242, %c0_243, %c0_244] : memref<3x3x64x128xf32, #tpu.memory_space<vmem>>, vector<1x1x64x128xf32>
    %219 = vector.shape_cast %218 : vector<1x1x64x128xf32> to vector<64x128xf32>
    %cst_245 = arith.constant dense<0.000000e+00> : vector<8x128xf32>
    %220 = tpu.matmul %217, %219, %cst_245 {dimension_numbers = #tpu.dot_dimension_numbers<[1], [0], [0], [1], [0, 0, 1, 1], [], []>} : vector<8x64xf32>, vector<64x128xf32>, vector<8x128xf32> -> vector<8x128xf32>
    %221 = arith.addf %214, %220 : vector<8x128xf32>
    %222 = vector.extract_strided_slice %215 {offsets = [0, 1, 0, 0], sizes = [2, 2, 2, 64], strides = [1, 1, 1, 1]} : vector<2x4x2x64xf32> to vector<2x2x2x64xf32>
    %223 = vector.shape_cast %222 : vector<2x2x2x64xf32> to vector<8x64xf32>
    %c1_246 = arith.constant 1 : index
    %c2_247 = arith.constant 2 : index
    %c0_248 = arith.constant 0 : index
    %c0_249 = arith.constant 0 : index
    %224 = vector.load %arg4[%c1_246, %c2_247, %c0_248, %c0_249] : memref<3x3x64x128xf32, #tpu.memory_space<vmem>>, vector<1x1x64x128xf32>
    %225 = vector.shape_cast %224 : vector<1x1x64x128xf32> to vector<64x128xf32>
    %cst_250 = arith.constant dense<0.000000e+00> : vector<8x128xf32>
    %226 = tpu.matmul %223, %225, %cst_250 {dimension_numbers = #tpu.dot_dimension_numbers<[1], [0], [0], [1], [0, 0, 1, 1], [], []>} : vector<8x64xf32>, vector<64x128xf32>, vector<8x128xf32> -> vector<8x128xf32>
    %227 = arith.addf %221, %226 : vector<8x128xf32>
    %228 = vector.extract_strided_slice %215 {offsets = [0, 2, 0, 0], sizes = [2, 2, 2, 64], strides = [1, 1, 1, 1]} : vector<2x4x2x64xf32> to vector<2x2x2x64xf32>
    %229 = vector.shape_cast %228 : vector<2x2x2x64xf32> to vector<8x64xf32>
    %c2_251 = arith.constant 2 : index
    %c2_252 = arith.constant 2 : index
    %c0_253 = arith.constant 0 : index
    %c0_254 = arith.constant 0 : index
    %230 = vector.load %arg4[%c2_251, %c2_252, %c0_253, %c0_254] : memref<3x3x64x128xf32, #tpu.memory_space<vmem>>, vector<1x1x64x128xf32>
    %231 = vector.shape_cast %230 : vector<1x1x64x128xf32> to vector<64x128xf32>
    %cst_255 = arith.constant dense<0.000000e+00> : vector<8x128xf32>
    %232 = tpu.matmul %229, %231, %cst_255 {dimension_numbers = #tpu.dot_dimension_numbers<[1], [0], [0], [1], [0, 0, 1, 1], [], []>} : vector<8x64xf32>, vector<64x128xf32>, vector<8x128xf32> -> vector<8x128xf32>
    %233 = arith.addf %227, %232 : vector<8x128xf32>
    %234 = vector.broadcast %176 : vector<1x128xf32> to vector<8x128xf32>
    %235 = arith.mulf %233, %234 : vector<8x128xf32>
    %236 = vector.broadcast %177 : vector<1x128xf32> to vector<8x128xf32>
    %237 = arith.addf %235, %236 : vector<8x128xf32>
    %cst_256 = arith.constant 0.000000e+00 : f32
    %238 = vector.broadcast %cst_256 : f32 to vector<8x128xf32>
    %239 = arith.maximumf %237, %238 : vector<8x128xf32>
    %240 = vector.shape_cast %239 : vector<8x128xf32> to vector<2x2x2x128xf32>
    %cst_257 = arith.constant dense<0xFF800000> : vector<2x2x128xf32>
    %241 = vector.multi_reduction <maximumf>, %240, %cst_257 [1] : vector<2x2x2x128xf32> to vector<2x2x128xf32>
    %cst_258 = arith.constant dense<0xFF800000> : vector<2x128xf32>
    %242 = vector.multi_reduction <maximumf>, %241, %cst_258 [1] : vector<2x2x128xf32> to vector<2x128xf32>
    %243 = vector.shape_cast %242 : vector<2x128xf32> to vector<2x1x1x128xf32>
    %244 = vector.shape_cast %243 : vector<2x1x1x128xf32> to vector<2x1x128xf32>
    %c0_259 = arith.constant 0 : index
    %c0_260 = arith.constant 0 : index
    %c0_261 = arith.constant 0 : index
    %245 = vector.load %arg11[%c0_259, %c0_260, %c0_261] : memref<2x1x128xf32, #tpu.memory_space<vmem>>, vector<2x1x128xf32>
    tpu.vector_store %arg11[%c0_259, %c0_260, %c0_261], %244 {strides = array<i32>} : memref<2x1x128xf32, #tpu.memory_space<vmem>>, vector<2x1x128xf32>,
    return
  }
  func.func @transform_0(%arg0: i32) -> (i32, i32, i32) {
    %c0_i32 = arith.constant 0 : i32
    %c0_i32_0 = arith.constant 0 : i32
    %c0_i32_1 = arith.constant 0 : i32
    return %arg0, %c0_i32, %c0_i32_0 : i32, i32, i32
  }
  func.func @transform_1(%arg0: i32) -> (i32, i32) {
    %c0_i32 = arith.constant 0 : i32
    %c0_i32_0 = arith.constant 0 : i32
    %c0_i32_1 = arith.constant 0 : i32
    return %c0_i32, %c0_i32_0 : i32, i32
  }
  func.func @transform_2(%arg0: i32) -> (i32, i32, i32, i32) {
    %c0_i32 = arith.constant 0 : i32
    %c0_i32_0 = arith.constant 0 : i32
    %c0_i32_1 = arith.constant 0 : i32
    %c0_i32_2 = arith.constant 0 : i32
    %c0_i32_3 = arith.constant 0 : i32
    return %c0_i32, %c0_i32_0, %c0_i32_1, %c0_i32_2 : i32, i32, i32, i32
  }
  func.func @transform_3(%arg0: i32) -> (i32, i32, i32, i32) {
    %c0_i32 = arith.constant 0 : i32
    %c0_i32_0 = arith.constant 0 : i32
    %c0_i32_1 = arith.constant 0 : i32
    %c0_i32_2 = arith.constant 0 : i32
    %c0_i32_3 = arith.constant 0 : i32
    return %c0_i32, %c0_i32_0, %c0_i32_1, %c0_i32_2 : i32, i32, i32, i32
  }
  func.func @transform_4(%arg0: i32) -> (i32, i32) {
    %c0_i32 = arith.constant 0 : i32
    %c0_i32_0 = arith.constant 0 : i32
    %c0_i32_1 = arith.constant 0 : i32
    return %c0_i32, %c0_i32_0 : i32, i32
  }
  func.func @transform_5(%arg0: i32) -> (i32, i32) {
    %c0_i32 = arith.constant 0 : i32
    %c0_i32_0 = arith.constant 0 : i32
    %c0_i32_1 = arith.constant 0 : i32
    return %c0_i32, %c0_i32_0 : i32, i32
  }
  func.func @transform_6(%arg0: i32) -> (i32, i32) {
    %c0_i32 = arith.constant 0 : i32
    %c0_i32_0 = arith.constant 0 : i32
    %c0_i32_1 = arith.constant 0 : i32
    return %c0_i32, %c0_i32_0 : i32, i32
  }
  func.func @transform_7(%arg0: i32) -> (i32, i32) {
    %c0_i32 = arith.constant 0 : i32
    %c0_i32_0 = arith.constant 0 : i32
    %c0_i32_1 = arith.constant 0 : i32
    return %c0_i32, %c0_i32_0 : i32, i32
  }
  func.func @transform_8(%arg0: i32) -> (i32, i32) {
    %c0_i32 = arith.constant 0 : i32
    %c0_i32_0 = arith.constant 0 : i32
    %c0_i32_1 = arith.constant 0 : i32
    return %c0_i32, %c0_i32_0 : i32, i32
  }
  func.func @transform_9(%arg0: i32) -> (i32, i32) {
    %c0_i32 = arith.constant 0 : i32
    %c0_i32_0 = arith.constant 0 : i32
    %c0_i32_1 = arith.constant 0 : i32
    return %c0_i32, %c0_i32_0 : i32, i32
  }
  func.func @transform_10(%arg0: i32) -> (i32, i32, i32) {
    %c0_i32 = arith.constant 0 : i32
    %c0_i32_0 = arith.constant 0 : i32
    %c0_i32_1 = arith.constant 0 : i32
    return %arg0, %c0_i32, %c0_i32_0 : i32, i32, i32
  }
}

</mosaic_0001>

<llo_original>
// kernel: tpu_custom_call.1
$region0: #{tpu_custom_call.1}
  #allocation0 [shape = 'u32[]', space=smem, size = 0x4, offset = 0x4, fixed_abs, tag = 'smem constant byte address 0x4 - core index']
  #allocation1 [shape = 'u32[144,128]{1,0:T(1,128)}', space=vmem, size = 0x12000, scoped, tag = 'internal scratch']
  #allocation2 [shape = 'f32[2,10,17,64]{3,2,1,0:T(8,128)}', space=vmem, size = 0x3c000, scoped, tag = 'scratch operand']
  #allocation3 [shape = 'f32[2,6,13,64]{3,2,1,0:T(8,128)}', space=vmem, size = 0x18000, scoped, tag = 'scratch operand']
  #allocation4 [shape = 'f32[2,4,11,64]{3,2,1,0:T(8,128)}', space=vmem, size = 0x10000, scoped, tag = 'scratch operand']
  %s0 = inlined_call_operand.vmem [shape: f32[2,256,32], index: 0, kind: input, shape index: {}]
  %s1 = inlined_call_operand.vmem [shape: f32[32,64], index: 1, kind: input, shape index: {}]
  %s2 = inlined_call_operand.vmem [shape: f32[3,3,64,64], index: 2, kind: input, shape index: {}]
  %s3 = inlined_call_operand.hbm [shape: f32[3,3,64,128], index: 3, kind: input, shape index: {}]
  %s4 = inlined_call_operand.vmem [shape: f32[1,64], index: 4, kind: input, shape index: {}]
  %s5 = inlined_call_operand.vmem [shape: f32[1,64], index: 5, kind: input, shape index: {}]
  %s6 = inlined_call_operand.vmem [shape: f32[1,64], index: 6, kind: input, shape index: {}]
  %s7 = inlined_call_operand.vmem [shape: f32[1,64], index: 7, kind: input, shape index: {}]
  %s8 = inlined_call_operand.vmem [shape: f32[1,128], index: 8, kind: input, shape index: {}]
  %s9 = inlined_call_operand.vmem [shape: f32[1,128], index: 9, kind: input, shape index: {}]
  %s10 = inlined_call_operand.hbm [shape: f32[2,1,128], index: 10, kind: output, shape index: {}]
  %s11 = sld [smem:[#allocation0]]
  $region54: #{tpu_custom_call.1} parent=0
    _
  %s13 = ssub.s32 1, %s11
  %s14 = scalar_select 0, %s13, %s11
  $region1: #{tpu_custom_call.1} parent=0
    #allocation5 [shape = 'u8[294912]{0}', space=vmem, size = 0x48000, scoped, tag = 'input window, operand 3, single buffered']
    #allocation6 [shape = 's32[1]{0}', space=sflag, size = 0x4, scoped, tag = 'scoped memory for tpu_custom_call.1']
    #allocation7 [shape = 's32[1]{0}', space=sflag, size = 0x4, scoped, tag = 'scoped memory for tpu_custom_call.1']
    #allocation8 [shape = 'u8[1024]{0}', space=vmem, size = 0x400, scoped, tag = 'output window, operand 0, single buffered']
    %15 = vsyncpa [#allocation6], 0
    %16 = vsyncpa [#allocation7], 0
    // Predicated region
    $region2: #{tpu_custom_call.1} parent=1 // pred_check
      _
    $region3: #{tpu_custom_call.1} parent=1 // pred_check_branch
      %18 = sbr.rel (0) target = $region5
    $region4: #{tpu_custom_call.1} parent=1 // pred_region
      _
    $region5: #{tpu_custom_call.1} parent=1 // pred_fallthru
      _
    // Predicated region
    $region6: #{tpu_custom_call.1} parent=1 // pred_check
      _
    $region7: #{tpu_custom_call.1} parent=1 // pred_check_branch
      %20 = sbr.rel (0) target = $region9
    $region8: #{tpu_custom_call.1} parent=1 // pred_region
      _
    $region9: #{tpu_custom_call.1} parent=1 // pred_fallthru
      _
    // Predicated region
    $region10: #{tpu_custom_call.1} parent=1 // pred_check
      _
    $region11: #{tpu_custom_call.1} parent=1 // pred_check_branch
      %22 = sbr.rel (0) target = $region13
    $region12: #{tpu_custom_call.1} parent=1 // pred_region
      _
    $region13: #{tpu_custom_call.1} parent=1 // pred_fallthru
      _
    // Predicated region
    $region14: #{tpu_custom_call.1} parent=1 // pred_check
      _
    $region15: #{tpu_custom_call.1} parent=1 // pred_check_branch
      %24 = sbr.rel (0) target = $region17
    $region16: #{tpu_custom_call.1} parent=1 // pred_region
      %s26 = ssub.s32 9216, 9216
      %27 = vsyncadd [#allocation6], %s26
      %s28 = sshll.u32 [#allocation5], 4
      %s29 = int_to_ptr.vmem [resolvable:$true] %s28
      %34 = dma.hbm_to_vmem [thread:$0]  %s3, 9216, %s29, [#allocation6], 128, 128, 8
    $region17: #{tpu_custom_call.1} parent=1 // pred_fallthru
      _
    // Predicated region
    $region18: #{tpu_custom_call.1} parent=1 // pred_check
      _
    $region19: #{tpu_custom_call.1} parent=1 // pred_check_branch
      %36 = sbr.rel (0) target = $region21
    $region20: #{tpu_custom_call.1} parent=1 // pred_region
      _
    $region21: #{tpu_custom_call.1} parent=1 // pred_fallthru
      _
    // Predicated region
    $region22: #{tpu_custom_call.1} parent=1 // pred_check
      _
    $region23: #{tpu_custom_call.1} parent=1 // pred_check_branch
      %38 = sbr.rel (0) target = $region25
    $region24: #{tpu_custom_call.1} parent=1 // pred_region
      _
    $region25: #{tpu_custom_call.1} parent=1 // pred_fallthru
      _
    // Predicated region
    $region26: #{tpu_custom_call.1} parent=1 // pred_check
      _
    $region27: #{tpu_custom_call.1} parent=1 // pred_check_branch
      %40 = sbr.rel (0) target = $region29
    $region28: #{tpu_custom_call.1} parent=1 // pred_region
      _
    $region29: #{tpu_custom_call.1} parent=1 // pred_fallthru
      _
    // Predicated region
    $region30: #{tpu_custom_call.1} parent=1 // pred_check
      _
    $region31: #{tpu_custom_call.1} parent=1 // pred_check_branch
      %42 = sbr.rel (0) target = $region33
    $region32: #{tpu_custom_call.1} parent=1 // pred_region
      _
    $region33: #{tpu_custom_call.1} parent=1 // pred_fallthru
      _
    // Predicated region
    $region34: #{tpu_custom_call.1} parent=1 // pred_check
      _
    $region35: #{tpu_custom_call.1} parent=1 // pred_check_branch
      %44 = sbr.rel (0) target = $region37
    $region36: #{tpu_custom_call.1} parent=1 // pred_region
      _
    $region37: #{tpu_custom_call.1} parent=1 // pred_fallthru
      _
    // Predicated region
    $region38: #{tpu_custom_call.1} parent=1 // pred_check
      _
    $region39: #{tpu_custom_call.1} parent=1 // pred_check_branch
      %46 = sbr.rel (0) target = $region41
    $region40: #{tpu_custom_call.1} parent=1 // pred_region
      _
    $region41: #{tpu_custom_call.1} parent=1 // pred_fallthru
      _
    // Predicated region
    $region42: #{tpu_custom_call.1} parent=1 // pred_check
      _
    $region43: #{tpu_custom_call.1} parent=1 // pred_check_branch
      %48 = sbr.rel (0) target = $region45
    $region44: #{tpu_custom_call.1} parent=1 // pred_region
      %49 = dma.done [#allocation6], 9216
    $region45: #{tpu_custom_call.1} parent=1 // pred_fallthru
      _
    %vm50 = vcmask 523264
    %51 = vst.msk [vmem:[#allocation2] sm:$0xff] %vm50, 0.0
    %52 = vst.msk [vmem:[#allocation2 + $0x8] sm:$0xff] %vm50, 0.0
    %vm53 = vcmask 516096
    %54 = vst.msk [vmem:[#allocation2 + $0x10] sm:$0x1] %vm53, 0.0
    %55 = vst.msk [vmem:[#allocation2 + $0xf0] sm:$0xff] %vm50, 0.0
    %56 = vst.msk [vmem:[#allocation2 + $0xf8] sm:$0xff] %vm50, 0.0
    %57 = vst.msk [vmem:[#allocation2 + $0x100] sm:$0x1] %vm53, 0.0
    %s58 = scalar_lea.vmem [#allocation2], 216
    %59 = vst.msk [vmem:[%s58] sm:$0xff] %vm50, 0.0
    %60 = vst.msk [vmem:[%s58 + $0x8] sm:$0xff] %vm50, 0.0
    %61 = vst.msk [vmem:[%s58 + $0x10] sm:$0x1] %vm53, 0.0
    %62 = vst.msk [vmem:[%s58 + $0xf0] sm:$0xff] %vm50, 0.0
    %63 = vst.msk [vmem:[%s58 + $0xf8] sm:$0xff] %vm50, 0.0
    %64 = vst.msk [vmem:[%s58 + $0x100] sm:$0x1] %vm53, 0.0
    %65 = vst.msk [vmem:[#allocation2 + $0x7] sm:$0x1] %vm53, 0.0
    %66 = vst.msk [vmem:[#allocation2 + $0x1f] sm:$0x1] %vm53, 0.0
    %67 = vst.msk [vmem:[#allocation2 + $0x37] sm:$0x1] %vm53, 0.0
    %68 = vst.msk [vmem:[#allocation2 + $0x4f] sm:$0x1] %vm53, 0.0
    %69 = vst.msk [vmem:[#allocation2 + $0x67] sm:$0x1] %vm53, 0.0
    %70 = vst.msk [vmem:[#allocation2 + $0x7f] sm:$0x1] %vm53, 0.0
    %71 = vst.msk [vmem:[#allocation2 + $0x97] sm:$0x1] %vm53, 0.0
    %72 = vst.msk [vmem:[#allocation2 + $0xaf] sm:$0x1] %vm53, 0.0
    %73 = vst.msk [vmem:[#allocation2 + $0xc7] sm:$0x1] %vm53, 0.0
    %74 = vst.msk [vmem:[#allocation2 + $0xdf] sm:$0x1] %vm53, 0.0
    %75 = vst.msk [vmem:[#allocation2 + $0xf7] sm:$0x1] %vm53, 0.0
    %76 = vst.msk [vmem:[#allocation2 + $0x10f] sm:$0x1] %vm53, 0.0
    %77 = vst.msk [vmem:[#allocation2 + $0x127] sm:$0x1] %vm53, 0.0
    %78 = vst.msk [vmem:[#allocation2 + $0x13f] sm:$0x1] %vm53, 0.0
    %79 = vst.msk [vmem:[#allocation2 + $0x157] sm:$0x1] %vm53, 0.0
    %80 = vst.msk [vmem:[#allocation2 + $0x16f] sm:$0x1] %vm53, 0.0
    %81 = vst.msk [vmem:[#allocation2 + $0x187] sm:$0x1] %vm53, 0.0
    %82 = vst.msk [vmem:[#allocation2 + $0x19f] sm:$0x1] %vm53, 0.0
    %83 = vst.msk [vmem:[#allocation2 + $0x1b7] sm:$0x1] %vm53, 0.0
    %84 = vst.msk [vmem:[#allocation2 + $0x1cf] sm:$0x1] %vm53, 0.0
    %85 = vst.msk [vmem:[#allocation2 + $0x10] sm:$0x1] %vm53, 0.0
    %86 = vst.msk [vmem:[#allocation2 + $0x28] sm:$0x1] %vm53, 0.0
    %87 = vst.msk [vmem:[#allocation2 + $0x40] sm:$0x1] %vm53, 0.0
    %88 = vst.msk [vmem:[#allocation2 + $0x58] sm:$0x1] %vm53, 0.0
    %89 = vst.msk [vmem:[#allocation2 + $0x70] sm:$0x1] %vm53, 0.0
    %90 = vst.msk [vmem:[#allocation2 + $0x88] sm:$0x1] %vm53, 0.0
    %91 = vst.msk [vmem:[#allocation2 + $0xa0] sm:$0x1] %vm53, 0.0
    %92 = vst.msk [vmem:[#allocation2 + $0xb8] sm:$0x1] %vm53, 0.0
    %93 = vst.msk [vmem:[#allocation2 + $0xd0] sm:$0x1] %vm53, 0.0
    %94 = vst.msk [vmem:[#allocation2 + $0xe8] sm:$0x1] %vm53, 0.0
    %95 = vst.msk [vmem:[#allocation2 + $0x100] sm:$0x1] %vm53, 0.0
    %96 = vst.msk [vmem:[#allocation2 + $0x118] sm:$0x1] %vm53, 0.0
    %97 = vst.msk [vmem:[#allocation2 + $0x130] sm:$0x1] %vm53, 0.0
    %98 = vst.msk [vmem:[#allocation2 + $0x148] sm:$0x1] %vm53, 0.0
    %99 = vst.msk [vmem:[#allocation2 + $0x160] sm:$0x1] %vm53, 0.0
    %100 = vst.msk [vmem:[#allocation2 + $0x178] sm:$0x1] %vm53, 0.0
    %101 = vst.msk [vmem:[#allocation2 + $0x190] sm:$0x1] %vm53, 0.0
    %102 = vst.msk [vmem:[#allocation2 + $0x1a8] sm:$0x1] %vm53, 0.0
    %103 = vst.msk [vmem:[#allocation2 + $0x1c0] sm:$0x1] %vm53, 0.0
    %104 = vst.msk [vmem:[#allocation2 + $0x1d8] sm:$0x1] %vm53, 0.0
    %105 = vst.msk [vmem:[#allocation3] sm:$0xff] %vm50, 0.0
    %vm106 = vcmask 520192
    %107 = vst.msk [vmem:[#allocation3 + $0x8] sm:$0x1f] %vm106, 0.0
    %108 = vst.msk [vmem:[#allocation3 + $0x60] sm:$0xff] %vm50, 0.0
    %109 = vst.msk [vmem:[#allocation3 + $0x68] sm:$0x1f] %vm106, 0.0
    %s110 = scalar_lea.vmem [#allocation3], 80
    %111 = vst.msk [vmem:[%s110] sm:$0xff] %vm50, 0.0
    %112 = vst.msk [vmem:[%s110 + $0x8] sm:$0x1f] %vm106, 0.0
    %113 = vst.msk [vmem:[%s110 + $0x60] sm:$0xff] %vm50, 0.0
    %114 = vst.msk [vmem:[%s110 + $0x68] sm:$0x1f] %vm106, 0.0
    %115 = vst.msk [vmem:[#allocation3 + $0x7] sm:$0x1] %vm53, 0.0
    %116 = vst.msk [vmem:[#allocation3 + $0x17] sm:$0x1] %vm53, 0.0
    %117 = vst.msk [vmem:[#allocation3 + $0x27] sm:$0x1] %vm53, 0.0
    %118 = vst.msk [vmem:[#allocation3 + $0x37] sm:$0x1] %vm53, 0.0
    %119 = vst.msk [vmem:[#allocation3 + $0x47] sm:$0x1] %vm53, 0.0
    %120 = vst.msk [vmem:[#allocation3 + $0x57] sm:$0x1] %vm53, 0.0
    %121 = vst.msk [vmem:[#allocation3 + $0x67] sm:$0x1] %vm53, 0.0
    %122 = vst.msk [vmem:[#allocation3 + $0x77] sm:$0x1] %vm53, 0.0
    %123 = vst.msk [vmem:[#allocation3 + $0x87] sm:$0x1] %vm53, 0.0
    %124 = vst.msk [vmem:[#allocation3 + $0x97] sm:$0x1] %vm53, 0.0
    %125 = vst.msk [vmem:[#allocation3 + $0xa7] sm:$0x1] %vm53, 0.0
    %126 = vst.msk [vmem:[#allocation3 + $0xb7] sm:$0x1] %vm53, 0.0
    %127 = vst.msk [vmem:[#allocation3 + $0xc] sm:$0x1] %vm53, 0.0
    %128 = vst.msk [vmem:[#allocation3 + $0x1c] sm:$0x1] %vm53, 0.0
    %129 = vst.msk [vmem:[#allocation3 + $0x2c] sm:$0x1] %vm53, 0.0
    %130 = vst.msk [vmem:[#allocation3 + $0x3c] sm:$0x1] %vm53, 0.0
    %131 = vst.msk [vmem:[#allocation3 + $0x4c] sm:$0x1] %vm53, 0.0
    %132 = vst.msk [vmem:[#allocation3 + $0x5c] sm:$0x1] %vm53, 0.0
    %133 = vst.msk [vmem:[#allocation3 + $0x6c] sm:$0x1] %vm53, 0.0
    %134 = vst.msk [vmem:[#allocation3 + $0x7c] sm:$0x1] %vm53, 0.0
    %135 = vst.msk [vmem:[#allocation3 + $0x8c] sm:$0x1] %vm53, 0.0
    %136 = vst.msk [vmem:[#allocation3 + $0x9c] sm:$0x1] %vm53, 0.0
    %137 = vst.msk [vmem:[#allocation3 + $0xac] sm:$0x1] %vm53, 0.0
    %138 = vst.msk [vmem:[#allocation3 + $0xbc] sm:$0x1] %vm53, 0.0
    %139 = vst.msk [vmem:[#allocation4] sm:$0xff] %vm50, 0.0
    %vm140 = vcmask 518144
    %141 = vst.msk [vmem:[#allocation4 + $0x8] sm:$0x7] %vm140, 0.0
    %142 = vst.msk [vmem:[#allocation4 + $0x40] sm:$0xff] %vm50, 0.0
    %143 = vst.msk [vmem:[#allocation4 + $0x48] sm:$0x7] %vm140, 0.0
    %s144 = scalar_lea.vmem [#allocation4], 48
    %145 = vst.msk [vmem:[%s144] sm:$0xff] %vm50, 0.0
    %146 = vst.msk [vmem:[%s144 + $0x8] sm:$0x7] %vm140, 0.0
    %147 = vst.msk [vmem:[%s144 + $0x40] sm:$0xff] %vm50, 0.0
    %148 = vst.msk [vmem:[%s144 + $0x48] sm:$0x7] %vm140, 0.0
    %149 = vst.msk [vmem:[#allocation4 + $0x7] sm:$0x1] %vm53, 0.0
    %150 = vst.msk [vmem:[#allocation4 + $0x17] sm:$0x1] %vm53, 0.0
    %151 = vst.msk [vmem:[#allocation4 + $0x27] sm:$0x1] %vm53, 0.0
    %152 = vst.msk [vmem:[#allocation4 + $0x37] sm:$0x1] %vm53, 0.0
    %153 = vst.msk [vmem:[#allocation4 + $0x47] sm:$0x1] %vm53, 0.0
    %154 = vst.msk [vmem:[#allocation4 + $0x57] sm:$0x1] %vm53, 0.0
    %155 = vst.msk [vmem:[#allocation4 + $0x67] sm:$0x1] %vm53, 0.0
    %156 = vst.msk [vmem:[#allocation4 + $0x77] sm:$0x1] %vm53, 0.0
    %157 = vst.msk [vmem:[#allocation4 + $0xa] sm:$0x1] %vm53, 0.0
    %158 = vst.msk [vmem:[#allocation4 + $0x1a] sm:$0x1] %vm53, 0.0
    %159 = vst.msk [vmem:[#allocation4 + $0x2a] sm:$0x1] %vm53, 0.0
    %160 = vst.msk [vmem:[#allocation4 + $0x3a] sm:$0x1] %vm53, 0.0
    %161 = vst.msk [vmem:[#allocation4 + $0x4a] sm:$0x1] %vm53, 0.0
    %162 = vst.msk [vmem:[#allocation4 + $0x5a] sm:$0x1] %vm53, 0.0
    %163 = vst.msk [vmem:[#allocation4 + $0x6a] sm:$0x1] %vm53, 0.0
    %164 = vst.msk [vmem:[#allocation4 + $0x7a] sm:$0x1] %vm53, 0.0
    %v165 = vld [vmem:[%s0] sm:$0xff]
    %v166 = vld [vmem:[%s0 + $0x8] sm:$0xff]
    %v167 = vld [vmem:[%s0 + $0x10] sm:$0xff]
    %v168 = vld [vmem:[%s0 + $0x18] sm:$0xff]
    %v169 = vld [vmem:[%s0 + $0x20] sm:$0xff]
    %v170 = vld [vmem:[%s0 + $0x28] sm:$0xff]
    %v171 = vld [vmem:[%s0 + $0x30] sm:$0xff]
    %v172 = vld [vmem:[%s0 + $0x38] sm:$0xff]
    %v173 = vld [vmem:[%s0 + $0x40] sm:$0xff]
    %v174 = vld [vmem:[%s0 + $0x48] sm:$0xff]
    %v175 = vld [vmem:[%s0 + $0x50] sm:$0xff]
    %v176 = vld [vmem:[%s0 + $0x58] sm:$0xff]
    %v177 = vld [vmem:[%s0 + $0x60] sm:$0xff]
    %v178 = vld [vmem:[%s0 + $0x68] sm:$0xff]
    %v179 = vld [vmem:[%s0 + $0x70] sm:$0xff]
    %v180 = vld [vmem:[%s0 + $0x78] sm:$0xff]
    %v181 = vld [vmem:[%s0 + $0x80] sm:$0xff]
    %v182 = vld [vmem:[%s0 + $0x88] sm:$0xff]
    %v183 = vld [vmem:[%s0 + $0x90] sm:$0xff]
    %v184 = vld [vmem:[%s0 + $0x98] sm:$0xff]
    %v185 = vld [vmem:[%s0 + $0xa0] sm:$0xff]
    %v186 = vld [vmem:[%s0 + $0xa8] sm:$0xff]
    %v187 = vld [vmem:[%s0 + $0xb0] sm:$0xff]
    %v188 = vld [vmem:[%s0 + $0xb8] sm:$0xff]
    %v189 = vld [vmem:[%s0 + $0xc0] sm:$0xff]
    %v190 = vld [vmem:[%s0 + $0xc8] sm:$0xff]
    %v191 = vld [vmem:[%s0 + $0xd0] sm:$0xff]
    %v192 = vld [vmem:[%s0 + $0xd8] sm:$0xff]
    %v193 = vld [vmem:[%s0 + $0xe0] sm:$0xff]
    %v194 = vld [vmem:[%s0 + $0xe8] sm:$0xff]
    %v195 = vld [vmem:[%s0 + $0xf0] sm:$0xff]
    %v196 = vld [vmem:[%s0 + $0xf8] sm:$0xff]
    %v197 = vld [vmem:[%s0 + $0x100] sm:$0xff]
    %v198 = vld [vmem:[%s0 + $0x108] sm:$0xff]
    %v199 = vld [vmem:[%s0 + $0x110] sm:$0xff]
    %v200 = vld [vmem:[%s0 + $0x118] sm:$0xff]
    %v201 = vld [vmem:[%s0 + $0x120] sm:$0xff]
    %v202 = vld [vmem:[%s0 + $0x128] sm:$0xff]
    %v203 = vld [vmem:[%s0 + $0x130] sm:$0xff]
    %v204 = vld [vmem:[%s0 + $0x138] sm:$0xff]
    %v205 = vld [vmem:[%s0 + $0x140] sm:$0xff]
    %v206 = vld [vmem:[%s0 + $0x148] sm:$0xff]
    %v207 = vld [vmem:[%s0 + $0x150] sm:$0xff]
    %v208 = vld [vmem:[%s0 + $0x158] sm:$0xff]
    %v209 = vld [vmem:[%s0 + $0x160] sm:$0xff]
    %v210 = vld [vmem:[%s0 + $0x168] sm:$0xff]
    %v211 = vld [vmem:[%s0 + $0x170] sm:$0xff]
    %v212 = vld [vmem:[%s0 + $0x178] sm:$0xff]
    %v213 = vld [vmem:[%s0 + $0x180] sm:$0xff]
    %v214 = vld [vmem:[%s0 + $0x188] sm:$0xff]
    %v215 = vld [vmem:[%s0 + $0x190] sm:$0xff]
    %v216 = vld [vmem:[%s0 + $0x198] sm:$0xff]
    %v217 = vld [vmem:[%s0 + $0x1a0] sm:$0xff]
    %v218 = vld [vmem:[%s0 + $0x1a8] sm:$0xff]
    %v219 = vld [vmem:[%s0 + $0x1b0] sm:$0xff]
    %v220 = vld [vmem:[%s0 + $0x1b8] sm:$0xff]
    %v221 = vld [vmem:[%s0 + $0x1c0] sm:$0xff]
    %v222 = vld [vmem:[%s0 + $0x1c8] sm:$0xff]
    %v223 = vld [vmem:[%s0 + $0x1d0] sm:$0xff]
    %v224 = vld [vmem:[%s0 + $0x1d8] sm:$0xff]
    %v225 = vld [vmem:[%s0 + $0x1e0] sm:$0xff]
    %v226 = vld [vmem:[%s0 + $0x1e8] sm:$0xff]
    %v227 = vld [vmem:[%s0 + $0x1f0] sm:$0xff]
    %v228 = vld [vmem:[%s0 + $0x1f8] sm:$0xff]
    %v229 = vld [vmem:[%s1] sm:$0xff]
    %v230 = vld [vmem:[%s1 + $0x8] sm:$0xff]
    %v231 = vld [vmem:[%s1 + $0x10] sm:$0xff]
    %v232 = vld [vmem:[%s1 + $0x18] sm:$0xff]
    %vm233 = vcmask 261120
    %v235 = vsel %vm233, %v165, 0
    %v238 = vsel %vm233, %v166, 0
    %v241 = vsel %vm233, %v167, 0
    %v244 = vsel %vm233, %v168, 0
    %v247 = vsel %vm233, %v169, 0
    %v250 = vsel %vm233, %v170, 0
    %v253 = vsel %vm233, %v171, 0
    %v256 = vsel %vm233, %v172, 0
    %v259 = vsel %vm233, %v173, 0
    %v262 = vsel %vm233, %v174, 0
    %v265 = vsel %vm233, %v175, 0
    %v268 = vsel %vm233, %v176, 0
    %v271 = vsel %vm233, %v177, 0
    %v274 = vsel %vm233, %v178, 0
    %v277 = vsel %vm233, %v179, 0
    %v280 = vsel %vm233, %v180, 0
    %v283 = vsel %vm233, %v181, 0
    %v286 = vsel %vm233, %v182, 0
    %v289 = vsel %vm233, %v183, 0
    %v292 = vsel %vm233, %v184, 0
    %v295 = vsel %vm233, %v185, 0
    %v298 = vsel %vm233, %v186, 0
    %v301 = vsel %vm233, %v187, 0
    %v304 = vsel %vm233, %v188, 0
    %v307 = vsel %vm233, %v189, 0
    %v310 = vsel %vm233, %v190, 0
    %v313 = vsel %vm233, %v191, 0
    %v316 = vsel %vm233, %v192, 0
    %v319 = vsel %vm233, %v193, 0
    %v322 = vsel %vm233, %v194, 0
    %v325 = vsel %vm233, %v195, 0
    %v328 = vsel %vm233, %v196, 0
    %v331 = vsel %vm233, %v197, 0
    %v334 = vsel %vm233, %v198, 0
    %v337 = vsel %vm233, %v199, 0
    %v340 = vsel %vm233, %v200, 0
    %v343 = vsel %vm233, %v201, 0
    %v346 = vsel %vm233, %v202, 0
    %v349 = vsel %vm233, %v203, 0
    %v352 = vsel %vm233, %v204, 0
    %v355 = vsel %vm233, %v205, 0
    %v358 = vsel %vm233, %v206, 0
    %v361 = vsel %vm233, %v207, 0
    %v364 = vsel %vm233, %v208, 0
    %v367 = vsel %vm233, %v209, 0
    %v370 = vsel %vm233, %v210, 0
    %v373 = vsel %vm233, %v211, 0
    %v376 = vsel %vm233, %v212, 0
    %v379 = vsel %vm233, %v213, 0
    %v382 = vsel %vm233, %v214, 0
    %v385 = vsel %vm233, %v215, 0
    %v388 = vsel %vm233, %v216, 0
    %v391 = vsel %vm233, %v217, 0
    %v394 = vsel %vm233, %v218, 0
    %v397 = vsel %vm233, %v219, 0
    %v400 = vsel %vm233, %v220, 0
    %v403 = vsel %vm233, %v221, 0
    %v406 = vsel %vm233, %v222, 0
    %v409 = vsel %vm233, %v223, 0
    %v412 = vsel %vm233, %v224, 0
    %v415 = vsel %vm233, %v225, 0
    %v418 = vsel %vm233, %v226, 0
    %v421 = vsel %vm233, %v227, 0
    %v424 = vsel %vm233, %v228, 0
    %426 = vmatprep.subr.mxu0 0.0
    %427 = vmatpush1.msra.mxu0 0.0
    %428 = vmatprep.subr.mxu0 0.0
    %429 = vmatpush1.msra.mxu0 0.0
    %430 = vmatprep.subr.mxu0 0.0
    %431 = vmatpush1.msra.mxu0 0.0
    %432 = vmatprep.subr.mxu0 0.0
    %433 = vmatpush1.msra.mxu0 0.0
    %434 = vmatprep.subr.mxu0 0.0
    %435 = vmatpush1.msra.mxu0 0.0
    %436 = vmatprep.subr.mxu0 0.0
    %437 = vmatpush1.msra.mxu0 0.0
    %438 = vmatprep.subr.mxu0 0.0
    %439 = vmatpush1.msra.mxu0 0.0
    %440 = vmatprep.subr.mxu0 0.0
    %441 = vmatpush1.msra.mxu0 0.0
    %442 = vmatprep.subr.mxu0 0.0
    %443 = vmatpush1.msra.mxu0 0.0
    %444 = vmatprep.subr.mxu0 0.0
    %445 = vmatpush1.msra.mxu0 0.0
    %446 = vmatprep.subr.mxu0 0.0
    %447 = vmatpush1.msra.mxu0 0.0
    %448 = vmatprep.subr.mxu0 0.0
    %449 = vmatpush1.msra.mxu0 0.0
    %450 = vmatprep.subr.mxu0 0.0
    %451 = vmatpush1.msra.mxu0 %v232
    %452 = vmatprep.subr.mxu0 0.0
    %453 = vmatpush1.msra.mxu0 %v231
    %454 = vmatprep.subr.mxu0 0.0
    %455 = vmatpush1.msra.mxu0 %v230
    %456 = vmatprep.subr.mxu0 0.0
    %457 = vmatpush1.msra.mxu0 %v229
    %458 = vmatprep.subr.mxu0 0.0
    %459 = vmatpush2.msra.mxu0 0.0
    %460 = vmatprep.subr.mxu0 0.0
    %461 = vmatpush2.msra.mxu0 0.0
    %462 = vmatprep.subr.mxu0 0.0
    %463 = vmatpush2.msra.mxu0 0.0
    %464 = vmatprep.subr.mxu0 0.0
    %465 = vmatpush2.msra.mxu0 0.0
    %466 = vmatprep.subr.mxu0 0.0
    %467 = vmatpush2.msra.mxu0 0.0
    %468 = vmatprep.subr.mxu0 0.0
    %469 = vmatpush2.msra.mxu0 0.0
    %470 = vmatprep.subr.mxu0 0.0
    %471 = vmatpush2.msra.mxu0 0.0
    %472 = vmatprep.subr.mxu0 0.0
    %473 = vmatpush2.msra.mxu0 0.0
    %474 = vmatprep.subr.mxu0 0.0
    %475 = vmatpush2.msra.mxu0 0.0
    %476 = vmatprep.subr.mxu0 0.0
    %477 = vmatpush2.msra.mxu0 0.0
    %478 = vmatprep.subr.mxu0 0.0
    %479 = vmatpush2.msra.mxu0 0.0
    %480 = vmatprep.subr.mxu0 0.0
    %481 = vmatpush2.msra.mxu0 0.0
    %482 = vmatprep.subr.mxu0 0.0
    %483 = vmatpush2.msra.mxu0 0.0
    %484 = vmatprep.subr.mxu0 0.0
    %485 = vmatpush2.msra.mxu0 0.0
    %486 = vmatprep.subr.mxu0 0.0
    %487 = vmatpush2.msra.mxu0 0.0
    %488 = vmatprep.subr.mxu0 0.0
    %489 = vmatpush2.msra.mxu0 0.0
    %490 = vmatprep.mubr.f32.mxu0 0.0
    %491 = vmatmul.mubr.f32.gmra.mxu0 %v235
    %v492 = vpop.f32.mrf.mxu0
    %v493 = vadd.f32 0.0, %v492
    %v494 = vpop.f32.mrf.mxu0
    %495 = vmatprep.mubr.f32.mxu0 0.0
    %496 = vmatmul.mubr.f32.gmra.mxu0 %v238
    %v497 = vpop.f32.mrf.mxu0
    %v498 = vadd.f32 0.0, %v497
    %v499 = vpop.f32.mrf.mxu0
    %500 = vmatprep.mubr.f32.mxu0 0.0
    %501 = vmatmul.mubr.f32.gmra.mxu0 %v241
    %v502 = vpop.f32.mrf.mxu0
    %v503 = vadd.f32 0.0, %v502
    %v504 = vpop.f32.mrf.mxu0
    %505 = vmatprep.mubr.f32.mxu0 0.0
    %506 = vmatmul.mubr.f32.gmra.mxu0 %v244
    %v507 = vpop.f32.mrf.mxu0
    %v508 = vadd.f32 0.0, %v507
    %v509 = vpop.f32.mrf.mxu0
    %510 = vmatprep.mubr.f32.mxu0 0.0
    %511 = vmatmul.mubr.f32.gmra.mxu0 %v247
    %v512 = vpop.f32.mrf.mxu0
    %v513 = vadd.f32 0.0, %v512
    %v514 = vpop.f32.mrf.mxu0
    %515 = vmatprep.mubr.f32.mxu0 0.0
    %516 = vmatmul.mubr.f32.gmra.mxu0 %v250
    %v517 = vpop.f32.mrf.mxu0
    %v518 = vadd.f32 0.0, %v517
    %v519 = vpop.f32.mrf.mxu0
    %520 = vmatprep.mubr.f32.mxu0 0.0
    %521 = vmatmul.mubr.f32.gmra.mxu0 %v253
    %v522 = vpop.f32.mrf.mxu0
    %v523 = vadd.f32 0.0, %v522
    %v524 = vpop.f32.mrf.mxu0
    %525 = vmatprep.mubr.f32.mxu0 0.0
    %526 = vmatmul.mubr.f32.gmra.mxu0 %v256
    %v527 = vpop.f32.mrf.mxu0
    %v528 = vadd.f32 0.0, %v527
    %v529 = vpop.f32.mrf.mxu0
    %530 = vmatprep.mubr.f32.mxu0 0.0
    %531 = vmatmul.mubr.f32.gmra.mxu0 %v259
    %v532 = vpop.f32.mrf.mxu0
    %v533 = vadd.f32 0.0, %v532
    %v534 = vpop.f32.mrf.mxu0
    %535 = vmatprep.mubr.f32.mxu0 0.0
    %536 = vmatmul.mubr.f32.gmra.mxu0 %v262
    %v537 = vpop.f32.mrf.mxu0
    %v538 = vadd.f32 0.0, %v537
    %v539 = vpop.f32.mrf.mxu0
    %540 = vmatprep.mubr.f32.mxu0 0.0
    %541 = vmatmul.mubr.f32.gmra.mxu0 %v265
    %v542 = vpop.f32.mrf.mxu0
    %v543 = vadd.f32 0.0, %v542
    %v544 = vpop.f32.mrf.mxu0
    %545 = vmatprep.mubr.f32.mxu0 0.0
    %546 = vmatmul.mubr.f32.gmra.mxu0 %v268
    %v547 = vpop.f32.mrf.mxu0
    %v548 = vadd.f32 0.0, %v547
    %v549 = vpop.f32.mrf.mxu0
    %550 = vmatprep.mubr.f32.mxu0 0.0
    %551 = vmatmul.mubr.f32.gmra.mxu0 %v271
    %v552 = vpop.f32.mrf.mxu0
    %v553 = vadd.f32 0.0, %v552
    %v554 = vpop.f32.mrf.mxu0
    %555 = vmatprep.mubr.f32.mxu0 0.0
    %556 = vmatmul.mubr.f32.gmra.mxu0 %v274
    %v557 = vpop.f32.mrf.mxu0
    %v558 = vadd.f32 0.0, %v557
    %v559 = vpop.f32.mrf.mxu0
    %560 = vmatprep.mubr.f32.mxu0 0.0
    %561 = vmatmul.mubr.f32.gmra.mxu0 %v277
    %v562 = vpop.f32.mrf.mxu0
    %v563 = vadd.f32 0.0, %v562
    %v564 = vpop.f32.mrf.mxu0
    %565 = vmatprep.mubr.f32.mxu0 0.0
    %566 = vmatmul.mubr.f32.gmra.mxu0 %v280
    %v567 = vpop.f32.mrf.mxu0
    %v568 = vadd.f32 0.0, %v567
    %v569 = vpop.f32.mrf.mxu0
    %570 = vmatprep.mubr.f32.mxu0 0.0
    %571 = vmatmul.mubr.f32.gmra.mxu0 %v283
    %v572 = vpop.f32.mrf.mxu0
    %v573 = vadd.f32 0.0, %v572
    %v574 = vpop.f32.mrf.mxu0
    %575 = vmatprep.mubr.f32.mxu0 0.0
    %576 = vmatmul.mubr.f32.gmra.mxu0 %v286
    %v577 = vpop.f32.mrf.mxu0
    %v578 = vadd.f32 0.0, %v577
    %v579 = vpop.f32.mrf.mxu0
    %580 = vmatprep.mubr.f32.mxu0 0.0
    %581 = vmatmul.mubr.f32.gmra.mxu0 %v289
    %v582 = vpop.f32.mrf.mxu0
    %v583 = vadd.f32 0.0, %v582
    %v584 = vpop.f32.mrf.mxu0
    %585 = vmatprep.mubr.f32.mxu0 0.0
    %586 = vmatmul.mubr.f32.gmra.mxu0 %v292
    %v587 = vpop.f32.mrf.mxu0
    %v588 = vadd.f32 0.0, %v587
    %v589 = vpop.f32.mrf.mxu0
    %590 = vmatprep.mubr.f32.mxu0 0.0
    %591 = vmatmul.mubr.f32.gmra.mxu0 %v295
    %v592 = vpop.f32.mrf.mxu0
    %v593 = vadd.f32 0.0, %v592
    %v594 = vpop.f32.mrf.mxu0
    %595 = vmatprep.mubr.f32.mxu0 0.0
    %596 = vmatmul.mubr.f32.gmra.mxu0 %v298
    %v597 = vpop.f32.mrf.mxu0
    %v598 = vadd.f32 0.0, %v597
    %v599 = vpop.f32.mrf.mxu0
    %600 = vmatprep.mubr.f32.mxu0 0.0
    %601 = vmatmul.mubr.f32.gmra.mxu0 %v301
    %v602 = vpop.f32.mrf.mxu0
    %v603 = vadd.f32 0.0, %v602
    %v604 = vpop.f32.mrf.mxu0
    %605 = vmatprep.mubr.f32.mxu0 0.0
    %606 = vmatmul.mubr.f32.gmra.mxu0 %v304
    %v607 = vpop.f32.mrf.mxu0
    %v608 = vadd.f32 0.0, %v607
    %v609 = vpop.f32.mrf.mxu0
    %610 = vmatprep.mubr.f32.mxu0 0.0
    %611 = vmatmul.mubr.f32.gmra.mxu0 %v307
    %v612 = vpop.f32.mrf.mxu0
    %v613 = vadd.f32 0.0, %v612
    %v614 = vpop.f32.mrf.mxu0
    %615 = vmatprep.mubr.f32.mxu0 0.0
    %616 = vmatmul.mubr.f32.gmra.mxu0 %v310
    %v617 = vpop.f32.mrf.mxu0
    %v618 = vadd.f32 0.0, %v617
    %v619 = vpop.f32.mrf.mxu0
    %620 = vmatprep.mubr.f32.mxu0 0.0
    %621 = vmatmul.mubr.f32.gmra.mxu0 %v313
    %v622 = vpop.f32.mrf.mxu0
    %v623 = vadd.f32 0.0, %v622
    %v624 = vpop.f32.mrf.mxu0
    %625 = vmatprep.mubr.f32.mxu0 0.0
    %626 = vmatmul.mubr.f32.gmra.mxu0 %v316
    %v627 = vpop.f32.mrf.mxu0
    %v628 = vadd.f32 0.0, %v627
    %v629 = vpop.f32.mrf.mxu0
    %630 = vmatprep.mubr.f32.mxu0 0.0
    %631 = vmatmul.mubr.f32.gmra.mxu0 %v319
    %v632 = vpop.f32.mrf.mxu0
    %v633 = vadd.f32 0.0, %v632
    %v634 = vpop.f32.mrf.mxu0
    %635 = vmatprep.mubr.f32.mxu0 0.0
    %636 = vmatmul.mubr.f32.gmra.mxu0 %v322
    %v637 = vpop.f32.mrf.mxu0
    %v638 = vadd.f32 0.0, %v637
    %v639 = vpop.f32.mrf.mxu0
    %640 = vmatprep.mubr.f32.mxu0 0.0
    %641 = vmatmul.mubr.f32.gmra.mxu0 %v325
    %v642 = vpop.f32.mrf.mxu0
    %v643 = vadd.f32 0.0, %v642
    %v644 = vpop.f32.mrf.mxu0
    %645 = vmatprep.mubr.f32.mxu0 0.0
    %646 = vmatmul.mubr.f32.gmra.mxu0 %v328
    %v647 = vpop.f32.mrf.mxu0
    %v648 = vadd.f32 0.0, %v647
    %v649 = vpop.f32.mrf.mxu0
    %650 = vmatprep.mubr.f32.mxu0 0.0
    %651 = vmatmul.mubr.f32.gmra.mxu0 %v331
    %v652 = vpop.f32.mrf.mxu0
    %v653 = vadd.f32 0.0, %v652
    %v654 = vpop.f32.mrf.mxu0
    %655 = vmatprep.mubr.f32.mxu0 0.0
    %656 = vmatmul.mubr.f32.gmra.mxu0 %v334
    %v657 = vpop.f32.mrf.mxu0
    %v658 = vadd.f32 0.0, %v657
    %v659 = vpop.f32.mrf.mxu0
    %660 = vmatprep.mubr.f32.mxu0 0.0
    %661 = vmatmul.mubr.f32.gmra.mxu0 %v337
    %v662 = vpop.f32.mrf.mxu0
    %v663 = vadd.f32 0.0, %v662
    %v664 = vpop.f32.mrf.mxu0
    %665 = vmatprep.mubr.f32.mxu0 0.0
    %666 = vmatmul.mubr.f32.gmra.mxu0 %v340
    %v667 = vpop.f32.mrf.mxu0
    %v668 = vadd.f32 0.0, %v667
    %v669 = vpop.f32.mrf.mxu0
    %670 = vmatprep.mubr.f32.mxu0 0.0
    %671 = vmatmul.mubr.f32.gmra.mxu0 %v343
    %v672 = vpop.f32.mrf.mxu0
    %v673 = vadd.f32 0.0, %v672
    %v674 = vpop.f32.mrf.mxu0
    %675 = vmatprep.mubr.f32.mxu0 0.0
    %676 = vmatmul.mubr.f32.gmra.mxu0 %v346
    %v677 = vpop.f32.mrf.mxu0
    %v678 = vadd.f32 0.0, %v677
    %v679 = vpop.f32.mrf.mxu0
    %680 = vmatprep.mubr.f32.mxu0 0.0
    %681 = vmatmul.mubr.f32.gmra.mxu0 %v349
    %v682 = vpop.f32.mrf.mxu0
    %v683 = vadd.f32 0.0, %v682
    %v684 = vpop.f32.mrf.mxu0
    %685 = vmatprep.mubr.f32.mxu0 0.0
    %686 = vmatmul.mubr.f32.gmra.mxu0 %v352
    %v687 = vpop.f32.mrf.mxu0
    %v688 = vadd.f32 0.0, %v687
    %v689 = vpop.f32.mrf.mxu0
    %690 = vmatprep.mubr.f32.mxu0 0.0
    %691 = vmatmul.mubr.f32.gmra.mxu0 %v355
    %v692 = vpop.f32.mrf.mxu0
    %v693 = vadd.f32 0.0, %v692
    %v694 = vpop.f32.mrf.mxu0
    %695 = vmatprep.mubr.f32.mxu0 0.0
    %696 = vmatmul.mubr.f32.gmra.mxu0 %v358
    %v697 = vpop.f32.mrf.mxu0
    %v698 = vadd.f32 0.0, %v697
    %v699 = vpop.f32.mrf.mxu0
    %700 = vmatprep.mubr.f32.mxu0 0.0
    %701 = vmatmul.mubr.f32.gmra.mxu0 %v361
    %v702 = vpop.f32.mrf.mxu0
    %v703 = vadd.f32 0.0, %v702
    %v704 = vpop.f32.mrf.mxu0
    %705 = vmatprep.mubr.f32.mxu0 0.0
    %706 = vmatmul.mubr.f32.gmra.mxu0 %v364
    %v707 = vpop.f32.mrf.mxu0
    %v708 = vadd.f32 0.0, %v707
    %v709 = vpop.f32.mrf.mxu0
    %710 = vmatprep.mubr.f32.mxu0 0.0
    %711 = vmatmul.mubr.f32.gmra.mxu0 %v367
    %v712 = vpop.f32.mrf.mxu0
    %v713 = vadd.f32 0.0, %v712
    %v714 = vpop.f32.mrf.mxu0
    %715 = vmatprep.mubr.f32.mxu0 0.0
    %716 = vmatmul.mubr.f32.gmra.mxu0 %v370
    %v717 = vpop.f32.mrf.mxu0
    %v718 = vadd.f32 0.0, %v717
    %v719 = vpop.f32.mrf.mxu0
    %720 = vmatprep.mubr.f32.mxu0 0.0
    %721 = vmatmul.mubr.f32.gmra.mxu0 %v373
    %v722 = vpop.f32.mrf.mxu0
    %v723 = vadd.f32 0.0, %v722
    %v724 = vpop.f32.mrf.mxu0
    %725 = vmatprep.mubr.f32.mxu0 0.0
    %726 = vmatmul.mubr.f32.gmra.mxu0 %v376
    %v727 = vpop.f32.mrf.mxu0
    %v728 = vadd.f32 0.0, %v727
    %v729 = vpop.f32.mrf.mxu0
    %730 = vmatprep.mubr.f32.mxu0 0.0
    %731 = vmatmul.mubr.f32.gmra.mxu0 %v379
    %v732 = vpop.f32.mrf.mxu0
    %v733 = vadd.f32 0.0, %v732
    %v734 = vpop.f32.mrf.mxu0
    %735 = vmatprep.mubr.f32.mxu0 0.0
    %736 = vmatmul.mubr.f32.gmra.mxu0 %v382
    %v737 = vpop.f32.mrf.mxu0
    %v738 = vadd.f32 0.0, %v737
    %v739 = vpop.f32.mrf.mxu0
    %740 = vmatprep.mubr.f32.mxu0 0.0
    %741 = vmatmul.mubr.f32.gmra.mxu0 %v385
    %v742 = vpop.f32.mrf.mxu0
    %v743 = vadd.f32 0.0, %v742
    %v744 = vpop.f32.mrf.mxu0
    %745 = vmatprep.mubr.f32.mxu0 0.0
    %746 = vmatmul.mubr.f32.gmra.mxu0 %v388
    %v747 = vpop.f32.mrf.mxu0
    %v748 = vadd.f32 0.0, %v747
    %v749 = vpop.f32.mrf.mxu0
    %750 = vmatprep.mubr.f32.mxu0 0.0
    %751 = vmatmul.mubr.f32.gmra.mxu0 %v391
    %v752 = vpop.f32.mrf.mxu0
    %v753 = vadd.f32 0.0, %v752
    %v754 = vpop.f32.mrf.mxu0
    %755 = vmatprep.mubr.f32.mxu0 0.0
    %756 = vmatmul.mubr.f32.gmra.mxu0 %v394
    %v757 = vpop.f32.mrf.mxu0
    %v758 = vadd.f32 0.0, %v757
    %v759 = vpop.f32.mrf.mxu0
    %760 = vmatprep.mubr.f32.mxu0 0.0
    %761 = vmatmul.mubr.f32.gmra.mxu0 %v397
    %v762 = vpop.f32.mrf.mxu0
    %v763 = vadd.f32 0.0, %v762
    %v764 = vpop.f32.mrf.mxu0
    %765 = vmatprep.mubr.f32.mxu0 0.0
    %766 = vmatmul.mubr.f32.gmra.mxu0 %v400
    %v767 = vpop.f32.mrf.mxu0
    %v768 = vadd.f32 0.0, %v767
    %v769 = vpop.f32.mrf.mxu0
    %770 = vmatprep.mubr.f32.mxu0 0.0
    %771 = vmatmul.mubr.f32.gmra.mxu0 %v403
    %v772 = vpop.f32.mrf.mxu0
    %v773 = vadd.f32 0.0, %v772
    %v774 = vpop.f32.mrf.mxu0
    %775 = vmatprep.mubr.f32.mxu0 0.0
    %776 = vmatmul.mubr.f32.gmra.mxu0 %v406
    %v777 = vpop.f32.mrf.mxu0
    %v778 = vadd.f32 0.0, %v777
    %v779 = vpop.f32.mrf.mxu0
    %780 = vmatprep.mubr.f32.mxu0 0.0
    %781 = vmatmul.mubr.f32.gmra.mxu0 %v409
    %v782 = vpop.f32.mrf.mxu0
    %v783 = vadd.f32 0.0, %v782
    %v784 = vpop.f32.mrf.mxu0
    %785 = vmatprep.mubr.f32.mxu0 0.0
    %786 = vmatmul.mubr.f32.gmra.mxu0 %v412
    %v787 = vpop.f32.mrf.mxu0
    %v788 = vadd.f32 0.0, %v787
    %v789 = vpop.f32.mrf.mxu0
    %790 = vmatprep.mubr.f32.mxu0 0.0
    %791 = vmatmul.mubr.f32.gmra.mxu0 %v415
    %v792 = vpop.f32.mrf.mxu0
    %v793 = vadd.f32 0.0, %v792
    %v794 = vpop.f32.mrf.mxu0
    %795 = vmatprep.mubr.f32.mxu0 0.0
    %796 = vmatmul.mubr.f32.gmra.mxu0 %v418
    %v797 = vpop.f32.mrf.mxu0
    %v798 = vadd.f32 0.0, %v797
    %v799 = vpop.f32.mrf.mxu0
    %800 = vmatprep.mubr.f32.mxu0 0.0
    %801 = vmatmul.mubr.f32.gmra.mxu0 %v421
    %v802 = vpop.f32.mrf.mxu0
    %v803 = vadd.f32 0.0, %v802
    %v804 = vpop.f32.mrf.mxu0
    %805 = vmatprep.mubr.f32.mxu0 0.0
    %806 = vmatmul.mubr.f32.gmra.mxu0 %v424
    %v807 = vpop.f32.mrf.mxu0
    %v808 = vadd.f32 0.0, %v807
    %v809 = vpop.f32.mrf.mxu0
    %810 = vdwg.mxu0
    %v811 = vld [vmem:[%s4] sm:$0x1]
    %v813 = vlaneseq
    %v814 = vshrl.u32 %v813, 7
    %v815 = vsub.s32 0, %v814
    %v816 = vrot.slane %v811, %v815
    %v818 = vmul.f32 %v493, %v816
    %v819 = vmul.f32 %v498, %v816
    %v820 = vmul.f32 %v503, %v816
    %v821 = vmul.f32 %v508, %v816
    %v822 = vmul.f32 %v513, %v816
    %v823 = vmul.f32 %v518, %v816
    %v824 = vmul.f32 %v523, %v816
    %v825 = vmul.f32 %v528, %v816
    %v826 = vmul.f32 %v533, %v816
    %v827 = vmul.f32 %v538, %v816
    %v828 = vmul.f32 %v543, %v816
    %v829 = vmul.f32 %v548, %v816
    %v830 = vmul.f32 %v553, %v816
    %v831 = vmul.f32 %v558, %v816
    %v832 = vmul.f32 %v563, %v816
    %v833 = vmul.f32 %v568, %v816
    %v834 = vmul.f32 %v573, %v816
    %v835 = vmul.f32 %v578, %v816
    %v836 = vmul.f32 %v583, %v816
    %v837 = vmul.f32 %v588, %v816
    %v838 = vmul.f32 %v593, %v816
    %v839 = vmul.f32 %v598, %v816
    %v840 = vmul.f32 %v603, %v816
    %v841 = vmul.f32 %v608, %v816
    %v842 = vmul.f32 %v613, %v816
    %v843 = vmul.f32 %v618, %v816
    %v844 = vmul.f32 %v623, %v816
    %v845 = vmul.f32 %v628, %v816
    %v846 = vmul.f32 %v633, %v816
    %v847 = vmul.f32 %v638, %v816
    %v848 = vmul.f32 %v643, %v816
    %v849 = vmul.f32 %v648, %v816
    %v850 = vmul.f32 %v653, %v816
    %v851 = vmul.f32 %v658, %v816
    %v852 = vmul.f32 %v663, %v816
    %v853 = vmul.f32 %v668, %v816
    %v854 = vmul.f32 %v673, %v816
    %v855 = vmul.f32 %v678, %v816
    %v856 = vmul.f32 %v683, %v816
    %v857 = vmul.f32 %v688, %v816
    %v858 = vmul.f32 %v693, %v816
    %v859 = vmul.f32 %v698, %v816
    %v860 = vmul.f32 %v703, %v816
    %v861 = vmul.f32 %v708, %v816
    %v862 = vmul.f32 %v713, %v816
    %v863 = vmul.f32 %v718, %v816
    %v864 = vmul.f32 %v723, %v816
    %v865 = vmul.f32 %v728, %v816
    %v866 = vmul.f32 %v733, %v816
    %v867 = vmul.f32 %v738, %v816
    %v868 = vmul.f32 %v743, %v816
    %v869 = vmul.f32 %v748, %v816
    %v870 = vmul.f32 %v753, %v816
    %v871 = vmul.f32 %v758, %v816
    %v872 = vmul.f32 %v763, %v816
    %v873 = vmul.f32 %v768, %v816
    %v874 = vmul.f32 %v773, %v816
    %v875 = vmul.f32 %v778, %v816
    %v876 = vmul.f32 %v783, %v816
    %v877 = vmul.f32 %v788, %v816
    %v878 = vmul.f32 %v793, %v816
    %v879 = vmul.f32 %v798, %v816
    %v880 = vmul.f32 %v803, %v816
    %v881 = vmul.f32 %v808, %v816
    %v882 = vld [vmem:[%s5] sm:$0x1]
    %v884 = vlaneseq
    %v885 = vshrl.u32 %v884, 7
    %v886 = vsub.s32 0, %v885
    %v887 = vrot.slane %v882, %v886
    %v889 = vadd.f32 %v818, %v887
    %v890 = vadd.f32 %v819, %v887
    %v891 = vadd.f32 %v820, %v887
    %v892 = vadd.f32 %v821, %v887
    %v893 = vadd.f32 %v822, %v887
    %v894 = vadd.f32 %v823, %v887
    %v895 = vadd.f32 %v824, %v887
    %v896 = vadd.f32 %v825, %v887
    %v897 = vadd.f32 %v826, %v887
    %v898 = vadd.f32 %v827, %v887
    %v899 = vadd.f32 %v828, %v887
    %v900 = vadd.f32 %v829, %v887
    %v901 = vadd.f32 %v830, %v887
    %v902 = vadd.f32 %v831, %v887
    %v903 = vadd.f32 %v832, %v887
    %v904 = vadd.f32 %v833, %v887
    %v905 = vadd.f32 %v834, %v887
    %v906 = vadd.f32 %v835, %v887
    %v907 = vadd.f32 %v836, %v887
    %v908 = vadd.f32 %v837, %v887
    %v909 = vadd.f32 %v838, %v887
    %v910 = vadd.f32 %v839, %v887
    %v911 = vadd.f32 %v840, %v887
    %v912 = vadd.f32 %v841, %v887
    %v913 = vadd.f32 %v842, %v887
    %v914 = vadd.f32 %v843, %v887
    %v915 = vadd.f32 %v844, %v887
    %v916 = vadd.f32 %v845, %v887
    %v917 = vadd.f32 %v846, %v887
    %v918 = vadd.f32 %v847, %v887
    %v919 = vadd.f32 %v848, %v887
    %v920 = vadd.f32 %v849, %v887
    %v921 = vadd.f32 %v850, %v887
    %v922 = vadd.f32 %v851, %v887
    %v923 = vadd.f32 %v852, %v887
    %v924 = vadd.f32 %v853, %v887
    %v925 = vadd.f32 %v854, %v887
    %v926 = vadd.f32 %v855, %v887
    %v927 = vadd.f32 %v856, %v887
    %v928 = vadd.f32 %v857, %v887
    %v929 = vadd.f32 %v858, %v887
    %v930 = vadd.f32 %v859, %v887
    %v931 = vadd.f32 %v860, %v887
    %v932 = vadd.f32 %v861, %v887
    %v933 = vadd.f32 %v862, %v887
    %v934 = vadd.f32 %v863, %v887
    %v935 = vadd.f32 %v864, %v887
    %v936 = vadd.f32 %v865, %v887
    %v937 = vadd.f32 %v866, %v887
    %v938 = vadd.f32 %v867, %v887
    %v939 = vadd.f32 %v868, %v887
    %v940 = vadd.f32 %v869, %v887
    %v941 = vadd.f32 %v870, %v887
    %v942 = vadd.f32 %v871, %v887
    %v943 = vadd.f32 %v872, %v887
    %v944 = vadd.f32 %v873, %v887
    %v945 = vadd.f32 %v874, %v887
    %v946 = vadd.f32 %v875, %v887
    %v947 = vadd.f32 %v876, %v887
    %v948 = vadd.f32 %v877, %v887
    %v949 = vadd.f32 %v878, %v887
    %v950 = vadd.f32 %v879, %v887
    %v951 = vadd.f32 %v880, %v887
    %v952 = vadd.f32 %v881, %v887
    %v953 = vmax.f32 %v889, 0.0
    %v954 = vmax.f32 %v890, 0.0
    %v955 = vmax.f32 %v891, 0.0
    %v956 = vmax.f32 %v892, 0.0
    %v957 = vmax.f32 %v893, 0.0
    %v958 = vmax.f32 %v894, 0.0
    %v959 = vmax.f32 %v895, 0.0
    %v960 = vmax.f32 %v896, 0.0
    %v961 = vmax.f32 %v897, 0.0
    %v962 = vmax.f32 %v898, 0.0
    %v963 = vmax.f32 %v899, 0.0
    %v964 = vmax.f32 %v900, 0.0
    %v965 = vmax.f32 %v901, 0.0
    %v966 = vmax.f32 %v902, 0.0
    %v967 = vmax.f32 %v903, 0.0
    %v968 = vmax.f32 %v904, 0.0
    %v969 = vmax.f32 %v905, 0.0
    %v970 = vmax.f32 %v906, 0.0
    %v971 = vmax.f32 %v907, 0.0
    %v972 = vmax.f32 %v908, 0.0
    %v973 = vmax.f32 %v909, 0.0
    %v974 = vmax.f32 %v910, 0.0
    %v975 = vmax.f32 %v911, 0.0
    %v976 = vmax.f32 %v912, 0.0
    %v977 = vmax.f32 %v913, 0.0
    %v978 = vmax.f32 %v914, 0.0
    %v979 = vmax.f32 %v915, 0.0
    %v980 = vmax.f32 %v916, 0.0
    %v981 = vmax.f32 %v917, 0.0
    %v982 = vmax.f32 %v918, 0.0
    %v983 = vmax.f32 %v919, 0.0
    %v984 = vmax.f32 %v920, 0.0
    %v985 = vmax.f32 %v921, 0.0
    %v986 = vmax.f32 %v922, 0.0
    %v987 = vmax.f32 %v923, 0.0
    %v988 = vmax.f32 %v924, 0.0
    %v989 = vmax.f32 %v925, 0.0
    %v990 = vmax.f32 %v926, 0.0
    %v991 = vmax.f32 %v927, 0.0
    %v992 = vmax.f32 %v928, 0.0
    %v993 = vmax.f32 %v929, 0.0
    %v994 = vmax.f32 %v930, 0.0
    %v995 = vmax.f32 %v931, 0.0
    %v996 = vmax.f32 %v932, 0.0
    %v997 = vmax.f32 %v933, 0.0
    %v998 = vmax.f32 %v934, 0.0
    %v999 = vmax.f32 %v935, 0.0
    %v1000 = vmax.f32 %v936, 0.0
    %v1001 = vmax.f32 %v937, 0.0
    %v1002 = vmax.f32 %v938, 0.0
    %v1003 = vmax.f32 %v939, 0.0
    %v1004 = vmax.f32 %v940, 0.0
    %v1005 = vmax.f32 %v941, 0.0
    %v1006 = vmax.f32 %v942, 0.0
    %v1007 = vmax.f32 %v943, 0.0
    %v1008 = vmax.f32 %v944, 0.0
    %v1009 = vmax.f32 %v945, 0.0
    %v1010 = vmax.f32 %v946, 0.0
    %v1011 = vmax.f32 %v947, 0.0
    %v1012 = vmax.f32 %v948, 0.0
    %v1013 = vmax.f32 %v949, 0.0
    %v1014 = vmax.f32 %v950, 0.0
    %v1015 = vmax.f32 %v951, 0.0
    %v1016 = vmax.f32 %v952, 0.0
    %v1017 = vsel %vm50, %v953, -inf
    %v1018 = vsel %vm50, %v955, -inf
    %v1019 = vmax.f32 %v1017, %v1018
    %v1020 = vsel %vm50, %v954, -inf
    %v1021 = vsel %vm50, %v956, -inf
    %v1022 = vmax.f32 %v1020, %v1021
    %v1023 = vsel %vm50, %v957, -inf
    %v1024 = vsel %vm50, %v959, -inf
    %v1025 = vmax.f32 %v1023, %v1024
    %v1026 = vsel %vm50, %v958, -inf
    %v1027 = vsel %vm50, %v960, -inf
    %v1028 = vmax.f32 %v1026, %v1027
    %v1029 = vsel %vm50, %v961, -inf
    %v1030 = vsel %vm50, %v963, -inf
    %v1031 = vmax.f32 %v1029, %v1030
    %v1032 = vsel %vm50, %v962, -inf
    %v1033 = vsel %vm50, %v964, -inf
    %v1034 = vmax.f32 %v1032, %v1033
    %v1035 = vsel %vm50, %v965, -inf
    %v1036 = vsel %vm50, %v967, -inf
    %v1037 = vmax.f32 %v1035, %v1036
    %v1038 = vsel %vm50, %v966, -inf
    %v1039 = vsel %vm50, %v968, -inf
    %v1040 = vmax.f32 %v1038, %v1039
    %v1041 = vsel %vm50, %v969, -inf
    %v1042 = vsel %vm50, %v971, -inf
    %v1043 = vmax.f32 %v1041, %v1042
    %v1044 = vsel %vm50, %v970, -inf
    %v1045 = vsel %vm50, %v972, -inf
    %v1046 = vmax.f32 %v1044, %v1045
    %v1047 = vsel %vm50, %v973, -inf
    %v1048 = vsel %vm50, %v975, -inf
    %v1049 = vmax.f32 %v1047, %v1048
    %v1050 = vsel %vm50, %v974, -inf
    %v1051 = vsel %vm50, %v976, -inf
    %v1052 = vmax.f32 %v1050, %v1051
    %v1053 = vsel %vm50, %v977, -inf
    %v1054 = vsel %vm50, %v979, -inf
    %v1055 = vmax.f32 %v1053, %v1054
    %v1056 = vsel %vm50, %v978, -inf
    %v1057 = vsel %vm50, %v980, -inf
    %v1058 = vmax.f32 %v1056, %v1057
    %v1059 = vsel %vm50, %v981, -inf
    %v1060 = vsel %vm50, %v983, -inf
    %v1061 = vmax.f32 %v1059, %v1060
    %v1062 = vsel %vm50, %v982, -inf
    %v1063 = vsel %vm50, %v984, -inf
    %v1064 = vmax.f32 %v1062, %v1063
    %v1065 = vsel %vm50, %v985, -inf
    %v1066 = vsel %vm50, %v987, -inf
    %v1067 = vmax.f32 %v1065, %v1066
    %v1068 = vsel %vm50, %v986, -inf
    %v1069 = vsel %vm50, %v988, -inf
    %v1070 = vmax.f32 %v1068, %v1069
    %v1071 = vsel %vm50, %v989, -inf
    %v1072 = vsel %vm50, %v991, -inf
    %v1073 = vmax.f32 %v1071, %v1072
    %v1074 = vsel %vm50, %v990, -inf
    %v1075 = vsel %vm50, %v992, -inf
    %v1076 = vmax.f32 %v1074, %v1075
    %v1077 = vsel %vm50, %v993, -inf
    %v1078 = vsel %vm50, %v995, -inf
    %v1079 = vmax.f32 %v1077, %v1078
    %v1080 = vsel %vm50, %v994, -inf
    %v1081 = vsel %vm50, %v996, -inf
    %v1082 = vmax.f32 %v1080, %v1081
    %v1083 = vsel %vm50, %v997, -inf
    %v1084 = vsel %vm50, %v999, -inf
    %v1085 = vmax.f32 %v1083, %v1084
    %v1086 = vsel %vm50, %v998, -inf
    %v1087 = vsel %vm50, %v1000, -inf
    %v1088 = vmax.f32 %v1086, %v1087
    %v1089 = vsel %vm50, %v1001, -inf
    %v1090 = vsel %vm50, %v1003, -inf
    %v1091 = vmax.f32 %v1089, %v1090
    %v1092 = vsel %vm50, %v1002, -inf
    %v1093 = vsel %vm50, %v1004, -inf
    %v1094 = vmax.f32 %v1092, %v1093
    %v1095 = vsel %vm50, %v1005, -inf
    %v1096 = vsel %vm50, %v1007, -inf
    %v1097 = vmax.f32 %v1095, %v1096
    %v1098 = vsel %vm50, %v1006, -inf
    %v1099 = vsel %vm50, %v1008, -inf
    %v1100 = vmax.f32 %v1098, %v1099
    %v1101 = vsel %vm50, %v1009, -inf
    %v1102 = vsel %vm50, %v1011, -inf
    %v1103 = vmax.f32 %v1101, %v1102
    %v1104 = vsel %vm50, %v1010, -inf
    %v1105 = vsel %vm50, %v1012, -inf
    %v1106 = vmax.f32 %v1104, %v1105
    %v1107 = vsel %vm50, %v1013, -inf
    %v1108 = vsel %vm50, %v1015, -inf
    %v1109 = vmax.f32 %v1107, %v1108
    %v1110 = vsel %vm50, %v1014, -inf
    %v1111 = vsel %vm50, %v1016, -inf
    %v1112 = vmax.f32 %v1110, %v1111
    %v1145 = vcombine.high %v1019, %v1019
    %v1147 = vunpack.c.l.s4 1983009808
    %v1148 = vunpack.c.0.s8 %v1147
    %v1149 = vlaneseq
    %v1150 = vshrl.u32 %v1149, 7
    %v1151 = vsub.s32 %v1148, %v1150
    %v1152 = vrot.slane %v1019, %v1151
    %v1154 = vunpack.c.l.s4 1983009808
    %v1155 = vunpack.c.0.s8 %v1154
    %v1156 = vlaneseq
    %v1157 = vshrl.u32 %v1156, 7
    %v1158 = vsub.s32 %v1155, %v1157
    %v1159 = vrot.slane %v1145, %v1158
    %v1160 = vcombine.high %v1152, %v1152
    %v1161 = vcombine.high %v1159, %v1159
    %v1162 = vcombine.high %v1022, %v1022
    %v1164 = vunpack.c.l.s4 1983009808
    %v1165 = vunpack.c.0.s8 %v1164
    %v1166 = vlaneseq
    %v1167 = vshrl.u32 %v1166, 7
    %v1168 = vsub.s32 %v1165, %v1167
    %v1169 = vrot.slane %v1022, %v1168
    %v1171 = vunpack.c.l.s4 1983009808
    %v1172 = vunpack.c.0.s8 %v1171
    %v1173 = vlaneseq
    %v1174 = vshrl.u32 %v1173, 7
    %v1175 = vsub.s32 %v1172, %v1174
    %v1176 = vrot.slane %v1162, %v1175
    %v1177 = vcombine.high %v1169, %v1169
    %v1178 = vcombine.high %v1176, %v1176
    %v1179 = vcombine.high %v1025, %v1025
    %v1181 = vunpack.c.l.s4 1983009808
    %v1182 = vunpack.c.0.s8 %v1181
    %v1183 = vlaneseq
    %v1184 = vshrl.u32 %v1183, 7
    %v1185 = vsub.s32 %v1182, %v1184
    %v1186 = vrot.slane %v1025, %v1185
    %v1188 = vunpack.c.l.s4 1983009808
    %v1189 = vunpack.c.0.s8 %v1188
    %v1190 = vlaneseq
    %v1191 = vshrl.u32 %v1190, 7
    %v1192 = vsub.s32 %v1189, %v1191
    %v1193 = vrot.slane %v1179, %v1192
    %v1194 = vcombine.high %v1186, %v1186
    %v1195 = vcombine.high %v1193, %v1193
    %v1196 = vcombine.high %v1028, %v1028
    %v1198 = vunpack.c.l.s4 1983009808
    %v1199 = vunpack.c.0.s8 %v1198
    %v1200 = vlaneseq
    %v1201 = vshrl.u32 %v1200, 7
    %v1202 = vsub.s32 %v1199, %v1201
    %v1203 = vrot.slane %v1028, %v1202
    %v1205 = vunpack.c.l.s4 1983009808
    %v1206 = vunpack.c.0.s8 %v1205
    %v1207 = vlaneseq
    %v1208 = vshrl.u32 %v1207, 7
    %v1209 = vsub.s32 %v1206, %v1208
    %v1210 = vrot.slane %v1196, %v1209
    %v1211 = vcombine.high %v1203, %v1203
    %v1212 = vcombine.high %v1210, %v1210
    %v1213 = vcombine.high %v1031, %v1031
    %v1215 = vunpack.c.l.s4 1983009808
    %v1216 = vunpack.c.0.s8 %v1215
    %v1217 = vlaneseq
    %v1218 = vshrl.u32 %v1217, 7
    %v1219 = vsub.s32 %v1216, %v1218
    %v1220 = vrot.slane %v1031, %v1219
    %v1222 = vunpack.c.l.s4 1983009808
    %v1223 = vunpack.c.0.s8 %v1222
    %v1224 = vlaneseq
    %v1225 = vshrl.u32 %v1224, 7
    %v1226 = vsub.s32 %v1223, %v1225
    %v1227 = vrot.slane %v1213, %v1226
    %v1228 = vcombine.high %v1220, %v1220
    %v1229 = vcombine.high %v1227, %v1227
    %v1230 = vcombine.high %v1034, %v1034
    %v1232 = vunpack.c.l.s4 1983009808
    %v1233 = vunpack.c.0.s8 %v1232
    %v1234 = vlaneseq
    %v1235 = vshrl.u32 %v1234, 7
    %v1236 = vsub.s32 %v1233, %v1235
    %v1237 = vrot.slane %v1034, %v1236
    %v1239 = vunpack.c.l.s4 1983009808
    %v1240 = vunpack.c.0.s8 %v1239
    %v1241 = vlaneseq
    %v1242 = vshrl.u32 %v1241, 7
    %v1243 = vsub.s32 %v1240, %v1242
    %v1244 = vrot.slane %v1230, %v1243
    %v1245 = vcombine.high %v1237, %v1237
    %v1246 = vcombine.high %v1244, %v1244
    %v1247 = vcombine.high %v1037, %v1037
    %v1249 = vunpack.c.l.s4 1983009808
    %v1250 = vunpack.c.0.s8 %v1249
    %v1251 = vlaneseq
    %v1252 = vshrl.u32 %v1251, 7
    %v1253 = vsub.s32 %v1250, %v1252
    %v1254 = vrot.slane %v1037, %v1253
    %v1256 = vunpack.c.l.s4 1983009808
    %v1257 = vunpack.c.0.s8 %v1256
    %v1258 = vlaneseq
    %v1259 = vshrl.u32 %v1258, 7
    %v1260 = vsub.s32 %v1257, %v1259
    %v1261 = vrot.slane %v1247, %v1260
    %v1262 = vcombine.high %v1254, %v1254
    %v1263 = vcombine.high %v1261, %v1261
    %v1264 = vcombine.high %v1040, %v1040
    %v1266 = vunpack.c.l.s4 1983009808
    %v1267 = vunpack.c.0.s8 %v1266
    %v1268 = vlaneseq
    %v1269 = vshrl.u32 %v1268, 7
    %v1270 = vsub.s32 %v1267, %v1269
    %v1271 = vrot.slane %v1040, %v1270
    %v1273 = vunpack.c.l.s4 1983009808
    %v1274 = vunpack.c.0.s8 %v1273
    %v1275 = vlaneseq
    %v1276 = vshrl.u32 %v1275, 7
    %v1277 = vsub.s32 %v1274, %v1276
    %v1278 = vrot.slane %v1264, %v1277
    %v1279 = vcombine.high %v1271, %v1271
    %v1280 = vcombine.high %v1278, %v1278
    %v1281 = vcombine.high %v1043, %v1043
    %v1283 = vunpack.c.l.s4 1983009808
    %v1284 = vunpack.c.0.s8 %v1283
    %v1285 = vlaneseq
    %v1286 = vshrl.u32 %v1285, 7
    %v1287 = vsub.s32 %v1284, %v1286
    %v1288 = vrot.slane %v1043, %v1287
    %v1290 = vunpack.c.l.s4 1983009808
    %v1291 = vunpack.c.0.s8 %v1290
    %v1292 = vlaneseq
    %v1293 = vshrl.u32 %v1292, 7
    %v1294 = vsub.s32 %v1291, %v1293
    %v1295 = vrot.slane %v1281, %v1294
    %v1296 = vcombine.high %v1288, %v1288
    %v1297 = vcombine.high %v1295, %v1295
    %v1298 = vcombine.high %v1046, %v1046
    %v1300 = vunpack.c.l.s4 1983009808
    %v1301 = vunpack.c.0.s8 %v1300
    %v1302 = vlaneseq
    %v1303 = vshrl.u32 %v1302, 7
    %v1304 = vsub.s32 %v1301, %v1303
    %v1305 = vrot.slane %v1046, %v1304
    %v1307 = vunpack.c.l.s4 1983009808
    %v1308 = vunpack.c.0.s8 %v1307
    %v1309 = vlaneseq
    %v1310 = vshrl.u32 %v1309, 7
    %v1311 = vsub.s32 %v1308, %v1310
    %v1312 = vrot.slane %v1298, %v1311
    %v1313 = vcombine.high %v1305, %v1305
    %v1314 = vcombine.high %v1312, %v1312
    %v1315 = vcombine.high %v1049, %v1049
    %v1317 = vunpack.c.l.s4 1983009808
    %v1318 = vunpack.c.0.s8 %v1317
    %v1319 = vlaneseq
    %v1320 = vshrl.u32 %v1319, 7
    %v1321 = vsub.s32 %v1318, %v1320
    %v1322 = vrot.slane %v1049, %v1321
    %v1324 = vunpack.c.l.s4 1983009808
    %v1325 = vunpack.c.0.s8 %v1324
    %v1326 = vlaneseq
    %v1327 = vshrl.u32 %v1326, 7
    %v1328 = vsub.s32 %v1325, %v1327
    %v1329 = vrot.slane %v1315, %v1328
    %v1330 = vcombine.high %v1322, %v1322
    %v1331 = vcombine.high %v1329, %v1329
    %v1332 = vcombine.high %v1052, %v1052
    %v1334 = vunpack.c.l.s4 1983009808
    %v1335 = vunpack.c.0.s8 %v1334
    %v1336 = vlaneseq
    %v1337 = vshrl.u32 %v1336, 7
    %v1338 = vsub.s32 %v1335, %v1337
    %v1339 = vrot.slane %v1052, %v1338
    %v1341 = vunpack.c.l.s4 1983009808
    %v1342 = vunpack.c.0.s8 %v1341
    %v1343 = vlaneseq
    %v1344 = vshrl.u32 %v1343, 7
    %v1345 = vsub.s32 %v1342, %v1344
    %v1346 = vrot.slane %v1332, %v1345
    %v1347 = vcombine.high %v1339, %v1339
    %v1348 = vcombine.high %v1346, %v1346
    %v1349 = vcombine.high %v1055, %v1055
    %v1351 = vunpack.c.l.s4 1983009808
    %v1352 = vunpack.c.0.s8 %v1351
    %v1353 = vlaneseq
    %v1354 = vshrl.u32 %v1353, 7
    %v1355 = vsub.s32 %v1352, %v1354
    %v1356 = vrot.slane %v1055, %v1355
    %v1358 = vunpack.c.l.s4 1983009808
    %v1359 = vunpack.c.0.s8 %v1358
    %v1360 = vlaneseq
    %v1361 = vshrl.u32 %v1360, 7
    %v1362 = vsub.s32 %v1359, %v1361
    %v1363 = vrot.slane %v1349, %v1362
    %v1364 = vcombine.high %v1356, %v1356
    %v1365 = vcombine.high %v1363, %v1363
    %v1366 = vcombine.high %v1058, %v1058
    %v1368 = vunpack.c.l.s4 1983009808
    %v1369 = vunpack.c.0.s8 %v1368
    %v1370 = vlaneseq
    %v1371 = vshrl.u32 %v1370, 7
    %v1372 = vsub.s32 %v1369, %v1371
    %v1373 = vrot.slane %v1058, %v1372
    %v1375 = vunpack.c.l.s4 1983009808
    %v1376 = vunpack.c.0.s8 %v1375
    %v1377 = vlaneseq
    %v1378 = vshrl.u32 %v1377, 7
    %v1379 = vsub.s32 %v1376, %v1378
    %v1380 = vrot.slane %v1366, %v1379
    %v1381 = vcombine.high %v1373, %v1373
    %v1382 = vcombine.high %v1380, %v1380
    %v1383 = vcombine.high %v1061, %v1061
    %v1385 = vunpack.c.l.s4 1983009808
    %v1386 = vunpack.c.0.s8 %v1385
    %v1387 = vlaneseq
    %v1388 = vshrl.u32 %v1387, 7
    %v1389 = vsub.s32 %v1386, %v1388
    %v1390 = vrot.slane %v1061, %v1389
    %v1392 = vunpack.c.l.s4 1983009808
    %v1393 = vunpack.c.0.s8 %v1392
    %v1394 = vlaneseq
    %v1395 = vshrl.u32 %v1394, 7
    %v1396 = vsub.s32 %v1393, %v1395
    %v1397 = vrot.slane %v1383, %v1396
    %v1398 = vcombine.high %v1390, %v1390
    %v1399 = vcombine.high %v1397, %v1397
    %v1400 = vcombine.high %v1064, %v1064
    %v1402 = vunpack.c.l.s4 1983009808
    %v1403 = vunpack.c.0.s8 %v1402
    %v1404 = vlaneseq
    %v1405 = vshrl.u32 %v1404, 7
    %v1406 = vsub.s32 %v1403, %v1405
    %v1407 = vrot.slane %v1064, %v1406
    %v1409 = vunpack.c.l.s4 1983009808
    %v1410 = vunpack.c.0.s8 %v1409
    %v1411 = vlaneseq
    %v1412 = vshrl.u32 %v1411, 7
    %v1413 = vsub.s32 %v1410, %v1412
    %v1414 = vrot.slane %v1400, %v1413
    %v1415 = vcombine.high %v1407, %v1407
    %v1416 = vcombine.high %v1414, %v1414
    %v1417 = vcombine.high %v1067, %v1067
    %v1419 = vunpack.c.l.s4 1983009808
    %v1420 = vunpack.c.0.s8 %v1419
    %v1421 = vlaneseq
    %v1422 = vshrl.u32 %v1421, 7
    %v1423 = vsub.s32 %v1420, %v1422
    %v1424 = vrot.slane %v1067, %v1423
    %v1426 = vunpack.c.l.s4 1983009808
    %v1427 = vunpack.c.0.s8 %v1426
    %v1428 = vlaneseq
    %v1429 = vshrl.u32 %v1428, 7
    %v1430 = vsub.s32 %v1427, %v1429
    %v1431 = vrot.slane %v1417, %v1430
    %v1432 = vcombine.high %v1424, %v1424
    %v1433 = vcombine.high %v1431, %v1431
    %v1434 = vcombine.high %v1070, %v1070
    %v1436 = vunpack.c.l.s4 1983009808
    %v1437 = vunpack.c.0.s8 %v1436
    %v1438 = vlaneseq
    %v1439 = vshrl.u32 %v1438, 7
    %v1440 = vsub.s32 %v1437, %v1439
    %v1441 = vrot.slane %v1070, %v1440
    %v1443 = vunpack.c.l.s4 1983009808
    %v1444 = vunpack.c.0.s8 %v1443
    %v1445 = vlaneseq
    %v1446 = vshrl.u32 %v1445, 7
    %v1447 = vsub.s32 %v1444, %v1446
    %v1448 = vrot.slane %v1434, %v1447
    %v1449 = vcombine.high %v1441, %v1441
    %v1450 = vcombine.high %v1448, %v1448
    %v1451 = vcombine.high %v1073, %v1073
    %v1453 = vunpack.c.l.s4 1983009808
    %v1454 = vunpack.c.0.s8 %v1453
    %v1455 = vlaneseq
    %v1456 = vshrl.u32 %v1455, 7
    %v1457 = vsub.s32 %v1454, %v1456
    %v1458 = vrot.slane %v1073, %v1457
    %v1460 = vunpack.c.l.s4 1983009808
    %v1461 = vunpack.c.0.s8 %v1460
    %v1462 = vlaneseq
    %v1463 = vshrl.u32 %v1462, 7
    %v1464 = vsub.s32 %v1461, %v1463
    %v1465 = vrot.slane %v1451, %v1464
    %v1466 = vcombine.high %v1458, %v1458
    %v1467 = vcombine.high %v1465, %v1465
    %v1468 = vcombine.high %v1076, %v1076
    %v1470 = vunpack.c.l.s4 1983009808
    %v1471 = vunpack.c.0.s8 %v1470
    %v1472 = vlaneseq
    %v1473 = vshrl.u32 %v1472, 7
    %v1474 = vsub.s32 %v1471, %v1473
    %v1475 = vrot.slane %v1076, %v1474
    %v1477 = vunpack.c.l.s4 1983009808
    %v1478 = vunpack.c.0.s8 %v1477
    %v1479 = vlaneseq
    %v1480 = vshrl.u32 %v1479, 7
    %v1481 = vsub.s32 %v1478, %v1480
    %v1482 = vrot.slane %v1468, %v1481
    %v1483 = vcombine.high %v1475, %v1475
    %v1484 = vcombine.high %v1482, %v1482
    %v1485 = vcombine.high %v1079, %v1079
    %v1487 = vunpack.c.l.s4 1983009808
    %v1488 = vunpack.c.0.s8 %v1487
    %v1489 = vlaneseq
    %v1490 = vshrl.u32 %v1489, 7
    %v1491 = vsub.s32 %v1488, %v1490
    %v1492 = vrot.slane %v1079, %v1491
    %v1494 = vunpack.c.l.s4 1983009808
    %v1495 = vunpack.c.0.s8 %v1494
    %v1496 = vlaneseq
    %v1497 = vshrl.u32 %v1496, 7
    %v1498 = vsub.s32 %v1495, %v1497
    %v1499 = vrot.slane %v1485, %v1498
    %v1500 = vcombine.high %v1492, %v1492
    %v1501 = vcombine.high %v1499, %v1499
    %v1502 = vcombine.high %v1082, %v1082
    %v1504 = vunpack.c.l.s4 1983009808
    %v1505 = vunpack.c.0.s8 %v1504
    %v1506 = vlaneseq
    %v1507 = vshrl.u32 %v1506, 7
    %v1508 = vsub.s32 %v1505, %v1507
    %v1509 = vrot.slane %v1082, %v1508
    %v1511 = vunpack.c.l.s4 1983009808
    %v1512 = vunpack.c.0.s8 %v1511
    %v1513 = vlaneseq
    %v1514 = vshrl.u32 %v1513, 7
    %v1515 = vsub.s32 %v1512, %v1514
    %v1516 = vrot.slane %v1502, %v1515
    %v1517 = vcombine.high %v1509, %v1509
    %v1518 = vcombine.high %v1516, %v1516
    %v1519 = vcombine.high %v1085, %v1085
    %v1521 = vunpack.c.l.s4 1983009808
    %v1522 = vunpack.c.0.s8 %v1521
    %v1523 = vlaneseq
    %v1524 = vshrl.u32 %v1523, 7
    %v1525 = vsub.s32 %v1522, %v1524
    %v1526 = vrot.slane %v1085, %v1525
    %v1528 = vunpack.c.l.s4 1983009808
    %v1529 = vunpack.c.0.s8 %v1528
    %v1530 = vlaneseq
    %v1531 = vshrl.u32 %v1530, 7
    %v1532 = vsub.s32 %v1529, %v1531
    %v1533 = vrot.slane %v1519, %v1532
    %v1534 = vcombine.high %v1526, %v1526
    %v1535 = vcombine.high %v1533, %v1533
    %v1536 = vcombine.high %v1088, %v1088
    %v1538 = vunpack.c.l.s4 1983009808
    %v1539 = vunpack.c.0.s8 %v1538
    %v1540 = vlaneseq
    %v1541 = vshrl.u32 %v1540, 7
    %v1542 = vsub.s32 %v1539, %v1541
    %v1543 = vrot.slane %v1088, %v1542
    %v1545 = vunpack.c.l.s4 1983009808
    %v1546 = vunpack.c.0.s8 %v1545
    %v1547 = vlaneseq
    %v1548 = vshrl.u32 %v1547, 7
    %v1549 = vsub.s32 %v1546, %v1548
    %v1550 = vrot.slane %v1536, %v1549
    %v1551 = vcombine.high %v1543, %v1543
    %v1552 = vcombine.high %v1550, %v1550
    %v1553 = vcombine.high %v1091, %v1091
    %v1555 = vunpack.c.l.s4 1983009808
    %v1556 = vunpack.c.0.s8 %v1555
    %v1557 = vlaneseq
    %v1558 = vshrl.u32 %v1557, 7
    %v1559 = vsub.s32 %v1556, %v1558
    %v1560 = vrot.slane %v1091, %v1559
    %v1562 = vunpack.c.l.s4 1983009808
    %v1563 = vunpack.c.0.s8 %v1562
    %v1564 = vlaneseq
    %v1565 = vshrl.u32 %v1564, 7
    %v1566 = vsub.s32 %v1563, %v1565
    %v1567 = vrot.slane %v1553, %v1566
    %v1568 = vcombine.high %v1560, %v1560
    %v1569 = vcombine.high %v1567, %v1567
    %v1570 = vcombine.high %v1094, %v1094
    %v1572 = vunpack.c.l.s4 1983009808
    %v1573 = vunpack.c.0.s8 %v1572
    %v1574 = vlaneseq
    %v1575 = vshrl.u32 %v1574, 7
    %v1576 = vsub.s32 %v1573, %v1575
    %v1577 = vrot.slane %v1094, %v1576
    %v1579 = vunpack.c.l.s4 1983009808
    %v1580 = vunpack.c.0.s8 %v1579
    %v1581 = vlaneseq
    %v1582 = vshrl.u32 %v1581, 7
    %v1583 = vsub.s32 %v1580, %v1582
    %v1584 = vrot.slane %v1570, %v1583
    %v1585 = vcombine.high %v1577, %v1577
    %v1586 = vcombine.high %v1584, %v1584
    %v1587 = vcombine.high %v1097, %v1097
    %v1589 = vunpack.c.l.s4 1983009808
    %v1590 = vunpack.c.0.s8 %v1589
    %v1591 = vlaneseq
    %v1592 = vshrl.u32 %v1591, 7
    %v1593 = vsub.s32 %v1590, %v1592
    %v1594 = vrot.slane %v1097, %v1593
    %v1596 = vunpack.c.l.s4 1983009808
    %v1597 = vunpack.c.0.s8 %v1596
    %v1598 = vlaneseq
    %v1599 = vshrl.u32 %v1598, 7
    %v1600 = vsub.s32 %v1597, %v1599
    %v1601 = vrot.slane %v1587, %v1600
    %v1602 = vcombine.high %v1594, %v1594
    %v1603 = vcombine.high %v1601, %v1601
    %v1604 = vcombine.high %v1100, %v1100
    %v1606 = vunpack.c.l.s4 1983009808
    %v1607 = vunpack.c.0.s8 %v1606
    %v1608 = vlaneseq
    %v1609 = vshrl.u32 %v1608, 7
    %v1610 = vsub.s32 %v1607, %v1609
    %v1611 = vrot.slane %v1100, %v1610
    %v1613 = vunpack.c.l.s4 1983009808
    %v1614 = vunpack.c.0.s8 %v1613
    %v1615 = vlaneseq
    %v1616 = vshrl.u32 %v1615, 7
    %v1617 = vsub.s32 %v1614, %v1616
    %v1618 = vrot.slane %v1604, %v1617
    %v1619 = vcombine.high %v1611, %v1611
    %v1620 = vcombine.high %v1618, %v1618
    %v1621 = vcombine.high %v1103, %v1103
    %v1623 = vunpack.c.l.s4 1983009808
    %v1624 = vunpack.c.0.s8 %v1623
    %v1625 = vlaneseq
    %v1626 = vshrl.u32 %v1625, 7
    %v1627 = vsub.s32 %v1624, %v1626
    %v1628 = vrot.slane %v1103, %v1627
    %v1630 = vunpack.c.l.s4 1983009808
    %v1631 = vunpack.c.0.s8 %v1630
    %v1632 = vlaneseq
    %v1633 = vshrl.u32 %v1632, 7
    %v1634 = vsub.s32 %v1631, %v1633
    %v1635 = vrot.slane %v1621, %v1634
    %v1636 = vcombine.high %v1628, %v1628
    %v1637 = vcombine.high %v1635, %v1635
    %v1638 = vcombine.high %v1106, %v1106
    %v1640 = vunpack.c.l.s4 1983009808
    %v1641 = vunpack.c.0.s8 %v1640
    %v1642 = vlaneseq
    %v1643 = vshrl.u32 %v1642, 7
    %v1644 = vsub.s32 %v1641, %v1643
    %v1645 = vrot.slane %v1106, %v1644
    %v1647 = vunpack.c.l.s4 1983009808
    %v1648 = vunpack.c.0.s8 %v1647
    %v1649 = vlaneseq
    %v1650 = vshrl.u32 %v1649, 7
    %v1651 = vsub.s32 %v1648, %v1650
    %v1652 = vrot.slane %v1638, %v1651
    %v1653 = vcombine.high %v1645, %v1645
    %v1654 = vcombine.high %v1652, %v1652
    %v1655 = vcombine.high %v1109, %v1109
    %v1657 = vunpack.c.l.s4 1983009808
    %v1658 = vunpack.c.0.s8 %v1657
    %v1659 = vlaneseq
    %v1660 = vshrl.u32 %v1659, 7
    %v1661 = vsub.s32 %v1658, %v1660
    %v1662 = vrot.slane %v1109, %v1661
    %v1664 = vunpack.c.l.s4 1983009808
    %v1665 = vunpack.c.0.s8 %v1664
    %v1666 = vlaneseq
    %v1667 = vshrl.u32 %v1666, 7
    %v1668 = vsub.s32 %v1665, %v1667
    %v1669 = vrot.slane %v1655, %v1668
    %v1670 = vcombine.high %v1662, %v1662
    %v1671 = vcombine.high %v1669, %v1669
    %v1672 = vcombine.high %v1112, %v1112
    %v1674 = vunpack.c.l.s4 1983009808
    %v1675 = vunpack.c.0.s8 %v1674
    %v1676 = vlaneseq
    %v1677 = vshrl.u32 %v1676, 7
    %v1678 = vsub.s32 %v1675, %v1677
    %v1679 = vrot.slane %v1112, %v1678
    %v1681 = vunpack.c.l.s4 1983009808
    %v1682 = vunpack.c.0.s8 %v1681
    %v1683 = vlaneseq
    %v1684 = vshrl.u32 %v1683, 7
    %v1685 = vsub.s32 %v1682, %v1684
    %v1686 = vrot.slane %v1672, %v1685
    %v1687 = vcombine.high %v1679, %v1679
    %v1688 = vcombine.high %v1686, %v1686
    %vm1817 = vcmask 517120
    %v1818 = vsel %vm1817, %v1152, -inf
    %v1819 = vrot.slane %v1818, 4
    %v1820 = vmax.f32 %v1818, %v1819
    %v1821 = vrot.slane %v1820, 2
    %v1822 = vmax.f32 %v1820, %v1821
    %v1823 = vrot.slane %v1822, 1
    %v1824 = vmax.f32 %v1822, %v1823
    %v1825 = vsel %vm1817, %v1160, -inf
    %v1826 = vrot.slane %v1825, 4
    %v1827 = vmax.f32 %v1825, %v1826
    %v1828 = vrot.slane %v1827, 2
    %v1829 = vmax.f32 %v1827, %v1828
    %v1830 = vrot.slane %v1829, 1
    %v1831 = vmax.f32 %v1829, %v1830
    %v1832 = vsel %vm1817, %v1159, -inf
    %v1833 = vrot.slane %v1832, 4
    %v1834 = vmax.f32 %v1832, %v1833
    %v1835 = vrot.slane %v1834, 2
    %v1836 = vmax.f32 %v1834, %v1835
    %v1837 = vrot.slane %v1836, 1
    %v1838 = vmax.f32 %v1836, %v1837
    %v1839 = vsel %vm1817, %v1161, -inf
    %v1840 = vrot.slane %v1839, 4
    %v1841 = vmax.f32 %v1839, %v1840
    %v1842 = vrot.slane %v1841, 2
    %v1843 = vmax.f32 %v1841, %v1842
    %v1844 = vrot.slane %v1843, 1
    %v1845 = vmax.f32 %v1843, %v1844
    %v1846 = vsel %vm1817, %v1169, -inf
    %v1847 = vrot.slane %v1846, 4
    %v1848 = vmax.f32 %v1846, %v1847
    %v1849 = vrot.slane %v1848, 2
    %v1850 = vmax.f32 %v1848, %v1849
    %v1851 = vrot.slane %v1850, 1
    %v1852 = vmax.f32 %v1850, %v1851
    %v1853 = vsel %vm1817, %v1177, -inf
    %v1854 = vrot.slane %v1853, 4
    %v1855 = vmax.f32 %v1853, %v1854
    %v1856 = vrot.slane %v1855, 2
    %v1857 = vmax.f32 %v1855, %v1856
    %v1858 = vrot.slane %v1857, 1
    %v1859 = vmax.f32 %v1857, %v1858
    %v1860 = vsel %vm1817, %v1176, -inf
    %v1861 = vrot.slane %v1860, 4
    %v1862 = vmax.f32 %v1860, %v1861
    %v1863 = vrot.slane %v1862, 2
    %v1864 = vmax.f32 %v1862, %v1863
    %v1865 = vrot.slane %v1864, 1
    %v1866 = vmax.f32 %v1864, %v1865
    %v1867 = vsel %vm1817, %v1178, -inf
    %v1868 = vrot.slane %v1867, 4
    %v1869 = vmax.f32 %v1867, %v1868
    %v1870 = vrot.slane %v1869, 2
    %v1871 = vmax.f32 %v1869, %v1870
    %v1872 = vrot.slane %v1871, 1
    %v1873 = vmax.f32 %v1871, %v1872
    %v1874 = vsel %vm1817, %v1186, -inf
    %v1875 = vrot.slane %v1874, 4
    %v1876 = vmax.f32 %v1874, %v1875
    %v1877 = vrot.slane %v1876, 2
    %v1878 = vmax.f32 %v1876, %v1877
    %v1879 = vrot.slane %v1878, 1
    %v1880 = vmax.f32 %v1878, %v1879
    %v1881 = vsel %vm1817, %v1194, -inf
    %v1882 = vrot.slane %v1881, 4
    %v1883 = vmax.f32 %v1881, %v1882
    %v1884 = vrot.slane %v1883, 2
    %v1885 = vmax.f32 %v1883, %v1884
    %v1886 = vrot.slane %v1885, 1
    %v1887 = vmax.f32 %v1885, %v1886
    %v1888 = vsel %vm1817, %v1193, -inf
    %v1889 = vrot.slane %v1888, 4
    %v1890 = vmax.f32 %v1888, %v1889
    %v1891 = vrot.slane %v1890, 2
    %v1892 = vmax.f32 %v1890, %v1891
    %v1893 = vrot.slane %v1892, 1
    %v1894 = vmax.f32 %v1892, %v1893
    %v1895 = vsel %vm1817, %v1195, -inf
    %v1896 = vrot.slane %v1895, 4
    %v1897 = vmax.f32 %v1895, %v1896
    %v1898 = vrot.slane %v1897, 2
    %v1899 = vmax.f32 %v1897, %v1898
    %v1900 = vrot.slane %v1899, 1
    %v1901 = vmax.f32 %v1899, %v1900
    %v1902 = vsel %vm1817, %v1203, -inf
    %v1903 = vrot.slane %v1902, 4
    %v1904 = vmax.f32 %v1902, %v1903
    %v1905 = vrot.slane %v1904, 2
    %v1906 = vmax.f32 %v1904, %v1905
    %v1907 = vrot.slane %v1906, 1
    %v1908 = vmax.f32 %v1906, %v1907
    %v1909 = vsel %vm1817, %v1211, -inf
    %v1910 = vrot.slane %v1909, 4
    %v1911 = vmax.f32 %v1909, %v1910
    %v1912 = vrot.slane %v1911, 2
    %v1913 = vmax.f32 %v1911, %v1912
    %v1914 = vrot.slane %v1913, 1
    %v1915 = vmax.f32 %v1913, %v1914
    %v1916 = vsel %vm1817, %v1210, -inf
    %v1917 = vrot.slane %v1916, 4
    %v1918 = vmax.f32 %v1916, %v1917
    %v1919 = vrot.slane %v1918, 2
    %v1920 = vmax.f32 %v1918, %v1919
    %v1921 = vrot.slane %v1920, 1
    %v1922 = vmax.f32 %v1920, %v1921
    %v1923 = vsel %vm1817, %v1212, -inf
    %v1924 = vrot.slane %v1923, 4
    %v1925 = vmax.f32 %v1923, %v1924
    %v1926 = vrot.slane %v1925, 2
    %v1927 = vmax.f32 %v1925, %v1926
    %v1928 = vrot.slane %v1927, 1
    %v1929 = vmax.f32 %v1927, %v1928
    %v1930 = vsel %vm1817, %v1220, -inf
    %v1931 = vrot.slane %v1930, 4
    %v1932 = vmax.f32 %v1930, %v1931
    %v1933 = vrot.slane %v1932, 2
    %v1934 = vmax.f32 %v1932, %v1933
    %v1935 = vrot.slane %v1934, 1
    %v1936 = vmax.f32 %v1934, %v1935
    %v1937 = vsel %vm1817, %v1228, -inf
    %v1938 = vrot.slane %v1937, 4
    %v1939 = vmax.f32 %v1937, %v1938
    %v1940 = vrot.slane %v1939, 2
    %v1941 = vmax.f32 %v1939, %v1940
    %v1942 = vrot.slane %v1941, 1
    %v1943 = vmax.f32 %v1941, %v1942
    %v1944 = vsel %vm1817, %v1227, -inf
    %v1945 = vrot.slane %v1944, 4
    %v1946 = vmax.f32 %v1944, %v1945
    %v1947 = vrot.slane %v1946, 2
    %v1948 = vmax.f32 %v1946, %v1947
    %v1949 = vrot.slane %v1948, 1
    %v1950 = vmax.f32 %v1948, %v1949
    %v1951 = vsel %vm1817, %v1229, -inf
    %v1952 = vrot.slane %v1951, 4
    %v1953 = vmax.f32 %v1951, %v1952
    %v1954 = vrot.slane %v1953, 2
    %v1955 = vmax.f32 %v1953, %v1954
    %v1956 = vrot.slane %v1955, 1
    %v1957 = vmax.f32 %v1955, %v1956
    %v1958 = vsel %vm1817, %v1237, -inf
    %v1959 = vrot.slane %v1958, 4
    %v1960 = vmax.f32 %v1958, %v1959
    %v1961 = vrot.slane %v1960, 2
    %v1962 = vmax.f32 %v1960, %v1961
    %v1963 = vrot.slane %v1962, 1
    %v1964 = vmax.f32 %v1962, %v1963
    %v1965 = vsel %vm1817, %v1245, -inf
    %v1966 = vrot.slane %v1965, 4
    %v1967 = vmax.f32 %v1965, %v1966
    %v1968 = vrot.slane %v1967, 2
    %v1969 = vmax.f32 %v1967, %v1968
    %v1970 = vrot.slane %v1969, 1
    %v1971 = vmax.f32 %v1969, %v1970
    %v1972 = vsel %vm1817, %v1244, -inf
    %v1973 = vrot.slane %v1972, 4
    %v1974 = vmax.f32 %v1972, %v1973
    %v1975 = vrot.slane %v1974, 2
    %v1976 = vmax.f32 %v1974, %v1975
    %v1977 = vrot.slane %v1976, 1
    %v1978 = vmax.f32 %v1976, %v1977
    %v1979 = vsel %vm1817, %v1246, -inf
    %v1980 = vrot.slane %v1979, 4
    %v1981 = vmax.f32 %v1979, %v1980
    %v1982 = vrot.slane %v1981, 2
    %v1983 = vmax.f32 %v1981, %v1982
    %v1984 = vrot.slane %v1983, 1
    %v1985 = vmax.f32 %v1983, %v1984
    %v1986 = vsel %vm1817, %v1254, -inf
    %v1987 = vrot.slane %v1986, 4
    %v1988 = vmax.f32 %v1986, %v1987
    %v1989 = vrot.slane %v1988, 2
    %v1990 = vmax.f32 %v1988, %v1989
    %v1991 = vrot.slane %v1990, 1
    %v1992 = vmax.f32 %v1990, %v1991
    %v1993 = vsel %vm1817, %v1262, -inf
    %v1994 = vrot.slane %v1993, 4
    %v1995 = vmax.f32 %v1993, %v1994
    %v1996 = vrot.slane %v1995, 2
    %v1997 = vmax.f32 %v1995, %v1996
    %v1998 = vrot.slane %v1997, 1
    %v1999 = vmax.f32 %v1997, %v1998
    %v2000 = vsel %vm1817, %v1261, -inf
    %v2001 = vrot.slane %v2000, 4
    %v2002 = vmax.f32 %v2000, %v2001
    %v2003 = vrot.slane %v2002, 2
    %v2004 = vmax.f32 %v2002, %v2003
    %v2005 = vrot.slane %v2004, 1
    %v2006 = vmax.f32 %v2004, %v2005
    %v2007 = vsel %vm1817, %v1263, -inf
    %v2008 = vrot.slane %v2007, 4
    %v2009 = vmax.f32 %v2007, %v2008
    %v2010 = vrot.slane %v2009, 2
    %v2011 = vmax.f32 %v2009, %v2010
    %v2012 = vrot.slane %v2011, 1
    %v2013 = vmax.f32 %v2011, %v2012
    %v2014 = vsel %vm1817, %v1271, -inf
    %v2015 = vrot.slane %v2014, 4
    %v2016 = vmax.f32 %v2014, %v2015
    %v2017 = vrot.slane %v2016, 2
    %v2018 = vmax.f32 %v2016, %v2017
    %v2019 = vrot.slane %v2018, 1
    %v2020 = vmax.f32 %v2018, %v2019
    %v2021 = vsel %vm1817, %v1279, -inf
    %v2022 = vrot.slane %v2021, 4
    %v2023 = vmax.f32 %v2021, %v2022
    %v2024 = vrot.slane %v2023, 2
    %v2025 = vmax.f32 %v2023, %v2024
    %v2026 = vrot.slane %v2025, 1
    %v2027 = vmax.f32 %v2025, %v2026
    %v2028 = vsel %vm1817, %v1278, -inf
    %v2029 = vrot.slane %v2028, 4
    %v2030 = vmax.f32 %v2028, %v2029
    %v2031 = vrot.slane %v2030, 2
    %v2032 = vmax.f32 %v2030, %v2031
    %v2033 = vrot.slane %v2032, 1
    %v2034 = vmax.f32 %v2032, %v2033
    %v2035 = vsel %vm1817, %v1280, -inf
    %v2036 = vrot.slane %v2035, 4
    %v2037 = vmax.f32 %v2035, %v2036
    %v2038 = vrot.slane %v2037, 2
    %v2039 = vmax.f32 %v2037, %v2038
    %v2040 = vrot.slane %v2039, 1
    %v2041 = vmax.f32 %v2039, %v2040
    %v2042 = vsel %vm1817, %v1288, -inf
    %v2043 = vrot.slane %v2042, 4
    %v2044 = vmax.f32 %v2042, %v2043
    %v2045 = vrot.slane %v2044, 2
    %v2046 = vmax.f32 %v2044, %v2045
    %v2047 = vrot.slane %v2046, 1
    %v2048 = vmax.f32 %v2046, %v2047
    %v2049 = vsel %vm1817, %v1296, -inf
    %v2050 = vrot.slane %v2049, 4
    %v2051 = vmax.f32 %v2049, %v2050
    %v2052 = vrot.slane %v2051, 2
    %v2053 = vmax.f32 %v2051, %v2052
    %v2054 = vrot.slane %v2053, 1
    %v2055 = vmax.f32 %v2053, %v2054
    %v2056 = vsel %vm1817, %v1295, -inf
    %v2057 = vrot.slane %v2056, 4
    %v2058 = vmax.f32 %v2056, %v2057
    %v2059 = vrot.slane %v2058, 2
    %v2060 = vmax.f32 %v2058, %v2059
    %v2061 = vrot.slane %v2060, 1
    %v2062 = vmax.f32 %v2060, %v2061
    %v2063 = vsel %vm1817, %v1297, -inf
    %v2064 = vrot.slane %v2063, 4
    %v2065 = vmax.f32 %v2063, %v2064
    %v2066 = vrot.slane %v2065, 2
    %v2067 = vmax.f32 %v2065, %v2066
    %v2068 = vrot.slane %v2067, 1
    %v2069 = vmax.f32 %v2067, %v2068
    %v2070 = vsel %vm1817, %v1305, -inf
    %v2071 = vrot.slane %v2070, 4
    %v2072 = vmax.f32 %v2070, %v2071
    %v2073 = vrot.slane %v2072, 2
    %v2074 = vmax.f32 %v2072, %v2073
    %v2075 = vrot.slane %v2074, 1
    %v2076 = vmax.f32 %v2074, %v2075
    %v2077 = vsel %vm1817, %v1313, -inf
    %v2078 = vrot.slane %v2077, 4
    %v2079 = vmax.f32 %v2077, %v2078
    %v2080 = vrot.slane %v2079, 2
    %v2081 = vmax.f32 %v2079, %v2080
    %v2082 = vrot.slane %v2081, 1
    %v2083 = vmax.f32 %v2081, %v2082
    %v2084 = vsel %vm1817, %v1312, -inf
    %v2085 = vrot.slane %v2084, 4
    %v2086 = vmax.f32 %v2084, %v2085
    %v2087 = vrot.slane %v2086, 2
    %v2088 = vmax.f32 %v2086, %v2087
    %v2089 = vrot.slane %v2088, 1
    %v2090 = vmax.f32 %v2088, %v2089
    %v2091 = vsel %vm1817, %v1314, -inf
    %v2092 = vrot.slane %v2091, 4
    %v2093 = vmax.f32 %v2091, %v2092
    %v2094 = vrot.slane %v2093, 2
    %v2095 = vmax.f32 %v2093, %v2094
    %v2096 = vrot.slane %v2095, 1
    %v2097 = vmax.f32 %v2095, %v2096
    %v2098 = vsel %vm1817, %v1322, -inf
    %v2099 = vrot.slane %v2098, 4
    %v2100 = vmax.f32 %v2098, %v2099
    %v2101 = vrot.slane %v2100, 2
    %v2102 = vmax.f32 %v2100, %v2101
    %v2103 = vrot.slane %v2102, 1
    %v2104 = vmax.f32 %v2102, %v2103
    %v2105 = vsel %vm1817, %v1330, -inf
    %v2106 = vrot.slane %v2105, 4
    %v2107 = vmax.f32 %v2105, %v2106
    %v2108 = vrot.slane %v2107, 2
    %v2109 = vmax.f32 %v2107, %v2108
    %v2110 = vrot.slane %v2109, 1
    %v2111 = vmax.f32 %v2109, %v2110
    %v2112 = vsel %vm1817, %v1329, -inf
    %v2113 = vrot.slane %v2112, 4
    %v2114 = vmax.f32 %v2112, %v2113
    %v2115 = vrot.slane %v2114, 2
    %v2116 = vmax.f32 %v2114, %v2115
    %v2117 = vrot.slane %v2116, 1
    %v2118 = vmax.f32 %v2116, %v2117
    %v2119 = vsel %vm1817, %v1331, -inf
    %v2120 = vrot.slane %v2119, 4
    %v2121 = vmax.f32 %v2119, %v2120
    %v2122 = vrot.slane %v2121, 2
    %v2123 = vmax.f32 %v2121, %v2122
    %v2124 = vrot.slane %v2123, 1
    %v2125 = vmax.f32 %v2123, %v2124
    %v2126 = vsel %vm1817, %v1339, -inf
    %v2127 = vrot.slane %v2126, 4
    %v2128 = vmax.f32 %v2126, %v2127
    %v2129 = vrot.slane %v2128, 2
    %v2130 = vmax.f32 %v2128, %v2129
    %v2131 = vrot.slane %v2130, 1
    %v2132 = vmax.f32 %v2130, %v2131
    %v2133 = vsel %vm1817, %v1347, -inf
    %v2134 = vrot.slane %v2133, 4
    %v2135 = vmax.f32 %v2133, %v2134
    %v2136 = vrot.slane %v2135, 2
    %v2137 = vmax.f32 %v2135, %v2136
    %v2138 = vrot.slane %v2137, 1
    %v2139 = vmax.f32 %v2137, %v2138
    %v2140 = vsel %vm1817, %v1346, -inf
    %v2141 = vrot.slane %v2140, 4
    %v2142 = vmax.f32 %v2140, %v2141
    %v2143 = vrot.slane %v2142, 2
    %v2144 = vmax.f32 %v2142, %v2143
    %v2145 = vrot.slane %v2144, 1
    %v2146 = vmax.f32 %v2144, %v2145
    %v2147 = vsel %vm1817, %v1348, -inf
    %v2148 = vrot.slane %v2147, 4
    %v2149 = vmax.f32 %v2147, %v2148
    %v2150 = vrot.slane %v2149, 2
    %v2151 = vmax.f32 %v2149, %v2150
    %v2152 = vrot.slane %v2151, 1
    %v2153 = vmax.f32 %v2151, %v2152
    %v2154 = vsel %vm1817, %v1356, -inf
    %v2155 = vrot.slane %v2154, 4
    %v2156 = vmax.f32 %v2154, %v2155
    %v2157 = vrot.slane %v2156, 2
    %v2158 = vmax.f32 %v2156, %v2157
    %v2159 = vrot.slane %v2158, 1
    %v2160 = vmax.f32 %v2158, %v2159
    %v2161 = vsel %vm1817, %v1364, -inf
    %v2162 = vrot.slane %v2161, 4
    %v2163 = vmax.f32 %v2161, %v2162
    %v2164 = vrot.slane %v2163, 2
    %v2165 = vmax.f32 %v2163, %v2164
    %v2166 = vrot.slane %v2165, 1
    %v2167 = vmax.f32 %v2165, %v2166
    %v2168 = vsel %vm1817, %v1363, -inf
    %v2169 = vrot.slane %v2168, 4
    %v2170 = vmax.f32 %v2168, %v2169
    %v2171 = vrot.slane %v2170, 2
    %v2172 = vmax.f32 %v2170, %v2171
    %v2173 = vrot.slane %v2172, 1
    %v2174 = vmax.f32 %v2172, %v2173
    %v2175 = vsel %vm1817, %v1365, -inf
    %v2176 = vrot.slane %v2175, 4
    %v2177 = vmax.f32 %v2175, %v2176
    %v2178 = vrot.slane %v2177, 2
    %v2179 = vmax.f32 %v2177, %v2178
    %v2180 = vrot.slane %v2179, 1
    %v2181 = vmax.f32 %v2179, %v2180
    %v2182 = vsel %vm1817, %v1373, -inf
    %v2183 = vrot.slane %v2182, 4
    %v2184 = vmax.f32 %v2182, %v2183
    %v2185 = vrot.slane %v2184, 2
    %v2186 = vmax.f32 %v2184, %v2185
    %v2187 = vrot.slane %v2186, 1
    %v2188 = vmax.f32 %v2186, %v2187
    %v2189 = vsel %vm1817, %v1381, -inf
    %v2190 = vrot.slane %v2189, 4
    %v2191 = vmax.f32 %v2189, %v2190
    %v2192 = vrot.slane %v2191, 2
    %v2193 = vmax.f32 %v2191, %v2192
    %v2194 = vrot.slane %v2193, 1
    %v2195 = vmax.f32 %v2193, %v2194
    %v2196 = vsel %vm1817, %v1380, -inf
    %v2197 = vrot.slane %v2196, 4
    %v2198 = vmax.f32 %v2196, %v2197
    %v2199 = vrot.slane %v2198, 2
    %v2200 = vmax.f32 %v2198, %v2199
    %v2201 = vrot.slane %v2200, 1
    %v2202 = vmax.f32 %v2200, %v2201
    %v2203 = vsel %vm1817, %v1382, -inf
    %v2204 = vrot.slane %v2203, 4
    %v2205 = vmax.f32 %v2203, %v2204
    %v2206 = vrot.slane %v2205, 2
    %v2207 = vmax.f32 %v2205, %v2206
    %v2208 = vrot.slane %v2207, 1
    %v2209 = vmax.f32 %v2207, %v2208
    %v2210 = vsel %vm1817, %v1390, -inf
    %v2211 = vrot.slane %v2210, 4
    %v2212 = vmax.f32 %v2210, %v2211
    %v2213 = vrot.slane %v2212, 2
    %v2214 = vmax.f32 %v2212, %v2213
    %v2215 = vrot.slane %v2214, 1
    %v2216 = vmax.f32 %v2214, %v2215
    %v2217 = vsel %vm1817, %v1398, -inf
    %v2218 = vrot.slane %v2217, 4
    %v2219 = vmax.f32 %v2217, %v2218
    %v2220 = vrot.slane %v2219, 2
    %v2221 = vmax.f32 %v2219, %v2220
    %v2222 = vrot.slane %v2221, 1
    %v2223 = vmax.f32 %v2221, %v2222
    %v2224 = vsel %vm1817, %v1397, -inf
    %v2225 = vrot.slane %v2224, 4
    %v2226 = vmax.f32 %v2224, %v2225
    %v2227 = vrot.slane %v2226, 2
    %v2228 = vmax.f32 %v2226, %v2227
    %v2229 = vrot.slane %v2228, 1
    %v2230 = vmax.f32 %v2228, %v2229
    %v2231 = vsel %vm1817, %v1399, -inf
    %v2232 = vrot.slane %v2231, 4
    %v2233 = vmax.f32 %v2231, %v2232
    %v2234 = vrot.slane %v2233, 2
    %v2235 = vmax.f32 %v2233, %v2234
    %v2236 = vrot.slane %v2235, 1
    %v2237 = vmax.f32 %v2235, %v2236
    %v2238 = vsel %vm1817, %v1407, -inf
    %v2239 = vrot.slane %v2238, 4
    %v2240 = vmax.f32 %v2238, %v2239
    %v2241 = vrot.slane %v2240, 2
    %v2242 = vmax.f32 %v2240, %v2241
    %v2243 = vrot.slane %v2242, 1
    %v2244 = vmax.f32 %v2242, %v2243
    %v2245 = vsel %vm1817, %v1415, -inf
    %v2246 = vrot.slane %v2245, 4
    %v2247 = vmax.f32 %v2245, %v2246
    %v2248 = vrot.slane %v2247, 2
    %v2249 = vmax.f32 %v2247, %v2248
    %v2250 = vrot.slane %v2249, 1
    %v2251 = vmax.f32 %v2249, %v2250
    %v2252 = vsel %vm1817, %v1414, -inf
    %v2253 = vrot.slane %v2252, 4
    %v2254 = vmax.f32 %v2252, %v2253
    %v2255 = vrot.slane %v2254, 2
    %v2256 = vmax.f32 %v2254, %v2255
    %v2257 = vrot.slane %v2256, 1
    %v2258 = vmax.f32 %v2256, %v2257
    %v2259 = vsel %vm1817, %v1416, -inf
    %v2260 = vrot.slane %v2259, 4
    %v2261 = vmax.f32 %v2259, %v2260
    %v2262 = vrot.slane %v2261, 2
    %v2263 = vmax.f32 %v2261, %v2262
    %v2264 = vrot.slane %v2263, 1
    %v2265 = vmax.f32 %v2263, %v2264
    %v2266 = vsel %vm1817, %v1424, -inf
    %v2267 = vrot.slane %v2266, 4
    %v2268 = vmax.f32 %v2266, %v2267
    %v2269 = vrot.slane %v2268, 2
    %v2270 = vmax.f32 %v2268, %v2269
    %v2271 = vrot.slane %v2270, 1
    %v2272 = vmax.f32 %v2270, %v2271
    %v2273 = vsel %vm1817, %v1432, -inf
    %v2274 = vrot.slane %v2273, 4
    %v2275 = vmax.f32 %v2273, %v2274
    %v2276 = vrot.slane %v2275, 2
    %v2277 = vmax.f32 %v2275, %v2276
    %v2278 = vrot.slane %v2277, 1
    %v2279 = vmax.f32 %v2277, %v2278
    %v2280 = vsel %vm1817, %v1431, -inf
    %v2281 = vrot.slane %v2280, 4
    %v2282 = vmax.f32 %v2280, %v2281
    %v2283 = vrot.slane %v2282, 2
    %v2284 = vmax.f32 %v2282, %v2283
    %v2285 = vrot.slane %v2284, 1
    %v2286 = vmax.f32 %v2284, %v2285
    %v2287 = vsel %vm1817, %v1433, -inf
    %v2288 = vrot.slane %v2287, 4
    %v2289 = vmax.f32 %v2287, %v2288
    %v2290 = vrot.slane %v2289, 2
    %v2291 = vmax.f32 %v2289, %v2290
    %v2292 = vrot.slane %v2291, 1
    %v2293 = vmax.f32 %v2291, %v2292
    %v2294 = vsel %vm1817, %v1441, -inf
    %v2295 = vrot.slane %v2294, 4
    %v2296 = vmax.f32 %v2294, %v2295
    %v2297 = vrot.slane %v2296, 2
    %v2298 = vmax.f32 %v2296, %v2297
    %v2299 = vrot.slane %v2298, 1
    %v2300 = vmax.f32 %v2298, %v2299
    %v2301 = vsel %vm1817, %v1449, -inf
    %v2302 = vrot.slane %v2301, 4
    %v2303 = vmax.f32 %v2301, %v2302
    %v2304 = vrot.slane %v2303, 2
    %v2305 = vmax.f32 %v2303, %v2304
    %v2306 = vrot.slane %v2305, 1
    %v2307 = vmax.f32 %v2305, %v2306
    %v2308 = vsel %vm1817, %v1448, -inf
    %v2309 = vrot.slane %v2308, 4
    %v2310 = vmax.f32 %v2308, %v2309
    %v2311 = vrot.slane %v2310, 2
    %v2312 = vmax.f32 %v2310, %v2311
    %v2313 = vrot.slane %v2312, 1
    %v2314 = vmax.f32 %v2312, %v2313
    %v2315 = vsel %vm1817, %v1450, -inf
    %v2316 = vrot.slane %v2315, 4
    %v2317 = vmax.f32 %v2315, %v2316
    %v2318 = vrot.slane %v2317, 2
    %v2319 = vmax.f32 %v2317, %v2318
    %v2320 = vrot.slane %v2319, 1
    %v2321 = vmax.f32 %v2319, %v2320
    %v2322 = vsel %vm1817, %v1458, -inf
    %v2323 = vrot.slane %v2322, 4
    %v2324 = vmax.f32 %v2322, %v2323
    %v2325 = vrot.slane %v2324, 2
    %v2326 = vmax.f32 %v2324, %v2325
    %v2327 = vrot.slane %v2326, 1
    %v2328 = vmax.f32 %v2326, %v2327
    %v2329 = vsel %vm1817, %v1466, -inf
    %v2330 = vrot.slane %v2329, 4
    %v2331 = vmax.f32 %v2329, %v2330
    %v2332 = vrot.slane %v2331, 2
    %v2333 = vmax.f32 %v2331, %v2332
    %v2334 = vrot.slane %v2333, 1
    %v2335 = vmax.f32 %v2333, %v2334
    %v2336 = vsel %vm1817, %v1465, -inf
    %v2337 = vrot.slane %v2336, 4
    %v2338 = vmax.f32 %v2336, %v2337
    %v2339 = vrot.slane %v2338, 2
    %v2340 = vmax.f32 %v2338, %v2339
    %v2341 = vrot.slane %v2340, 1
    %v2342 = vmax.f32 %v2340, %v2341
    %v2343 = vsel %vm1817, %v1467, -inf
    %v2344 = vrot.slane %v2343, 4
    %v2345 = vmax.f32 %v2343, %v2344
    %v2346 = vrot.slane %v2345, 2
    %v2347 = vmax.f32 %v2345, %v2346
    %v2348 = vrot.slane %v2347, 1
    %v2349 = vmax.f32 %v2347, %v2348
    %v2350 = vsel %vm1817, %v1475, -inf
    %v2351 = vrot.slane %v2350, 4
    %v2352 = vmax.f32 %v2350, %v2351
    %v2353 = vrot.slane %v2352, 2
    %v2354 = vmax.f32 %v2352, %v2353
    %v2355 = vrot.slane %v2354, 1
    %v2356 = vmax.f32 %v2354, %v2355
    %v2357 = vsel %vm1817, %v1483, -inf
    %v2358 = vrot.slane %v2357, 4
    %v2359 = vmax.f32 %v2357, %v2358
    %v2360 = vrot.slane %v2359, 2
    %v2361 = vmax.f32 %v2359, %v2360
    %v2362 = vrot.slane %v2361, 1
    %v2363 = vmax.f32 %v2361, %v2362
    %v2364 = vsel %vm1817, %v1482, -inf
    %v2365 = vrot.slane %v2364, 4
    %v2366 = vmax.f32 %v2364, %v2365
    %v2367 = vrot.slane %v2366, 2
    %v2368 = vmax.f32 %v2366, %v2367
    %v2369 = vrot.slane %v2368, 1
    %v2370 = vmax.f32 %v2368, %v2369
    %v2371 = vsel %vm1817, %v1484, -inf
    %v2372 = vrot.slane %v2371, 4
    %v2373 = vmax.f32 %v2371, %v2372
    %v2374 = vrot.slane %v2373, 2
    %v2375 = vmax.f32 %v2373, %v2374
    %v2376 = vrot.slane %v2375, 1
    %v2377 = vmax.f32 %v2375, %v2376
    %v2378 = vsel %vm1817, %v1492, -inf
    %v2379 = vrot.slane %v2378, 4
    %v2380 = vmax.f32 %v2378, %v2379
    %v2381 = vrot.slane %v2380, 2
    %v2382 = vmax.f32 %v2380, %v2381
    %v2383 = vrot.slane %v2382, 1
    %v2384 = vmax.f32 %v2382, %v2383
    %v2385 = vsel %vm1817, %v1500, -inf
    %v2386 = vrot.slane %v2385, 4
    %v2387 = vmax.f32 %v2385, %v2386
    %v2388 = vrot.slane %v2387, 2
    %v2389 = vmax.f32 %v2387, %v2388
    %v2390 = vrot.slane %v2389, 1
    %v2391 = vmax.f32 %v2389, %v2390
    %v2392 = vsel %vm1817, %v1499, -inf
    %v2393 = vrot.slane %v2392, 4
    %v2394 = vmax.f32 %v2392, %v2393
    %v2395 = vrot.slane %v2394, 2
    %v2396 = vmax.f32 %v2394, %v2395
    %v2397 = vrot.slane %v2396, 1
    %v2398 = vmax.f32 %v2396, %v2397
    %v2399 = vsel %vm1817, %v1501, -inf
    %v2400 = vrot.slane %v2399, 4
    %v2401 = vmax.f32 %v2399, %v2400
    %v2402 = vrot.slane %v2401, 2
    %v2403 = vmax.f32 %v2401, %v2402
    %v2404 = vrot.slane %v2403, 1
    %v2405 = vmax.f32 %v2403, %v2404
    %v2406 = vsel %vm1817, %v1509, -inf
    %v2407 = vrot.slane %v2406, 4
    %v2408 = vmax.f32 %v2406, %v2407
    %v2409 = vrot.slane %v2408, 2
    %v2410 = vmax.f32 %v2408, %v2409
    %v2411 = vrot.slane %v2410, 1
    %v2412 = vmax.f32 %v2410, %v2411
    %v2413 = vsel %vm1817, %v1517, -inf
    %v2414 = vrot.slane %v2413, 4
    %v2415 = vmax.f32 %v2413, %v2414
    %v2416 = vrot.slane %v2415, 2
    %v2417 = vmax.f32 %v2415, %v2416
    %v2418 = vrot.slane %v2417, 1
    %v2419 = vmax.f32 %v2417, %v2418
    %v2420 = vsel %vm1817, %v1516, -inf
    %v2421 = vrot.slane %v2420, 4
    %v2422 = vmax.f32 %v2420, %v2421
    %v2423 = vrot.slane %v2422, 2
    %v2424 = vmax.f32 %v2422, %v2423
    %v2425 = vrot.slane %v2424, 1
    %v2426 = vmax.f32 %v2424, %v2425
    %v2427 = vsel %vm1817, %v1518, -inf
    %v2428 = vrot.slane %v2427, 4
    %v2429 = vmax.f32 %v2427, %v2428
    %v2430 = vrot.slane %v2429, 2
    %v2431 = vmax.f32 %v2429, %v2430
    %v2432 = vrot.slane %v2431, 1
    %v2433 = vmax.f32 %v2431, %v2432
    %v2434 = vsel %vm1817, %v1526, -inf
    %v2435 = vrot.slane %v2434, 4
    %v2436 = vmax.f32 %v2434, %v2435
    %v2437 = vrot.slane %v2436, 2
    %v2438 = vmax.f32 %v2436, %v2437
    %v2439 = vrot.slane %v2438, 1
    %v2440 = vmax.f32 %v2438, %v2439
    %v2441 = vsel %vm1817, %v1534, -inf
    %v2442 = vrot.slane %v2441, 4
    %v2443 = vmax.f32 %v2441, %v2442
    %v2444 = vrot.slane %v2443, 2
    %v2445 = vmax.f32 %v2443, %v2444
    %v2446 = vrot.slane %v2445, 1
    %v2447 = vmax.f32 %v2445, %v2446
    %v2448 = vsel %vm1817, %v1533, -inf
    %v2449 = vrot.slane %v2448, 4
    %v2450 = vmax.f32 %v2448, %v2449
    %v2451 = vrot.slane %v2450, 2
    %v2452 = vmax.f32 %v2450, %v2451
    %v2453 = vrot.slane %v2452, 1
    %v2454 = vmax.f32 %v2452, %v2453
    %v2455 = vsel %vm1817, %v1535, -inf
    %v2456 = vrot.slane %v2455, 4
    %v2457 = vmax.f32 %v2455, %v2456
    %v2458 = vrot.slane %v2457, 2
    %v2459 = vmax.f32 %v2457, %v2458
    %v2460 = vrot.slane %v2459, 1
    %v2461 = vmax.f32 %v2459, %v2460
    %v2462 = vsel %vm1817, %v1543, -inf
    %v2463 = vrot.slane %v2462, 4
    %v2464 = vmax.f32 %v2462, %v2463
    %v2465 = vrot.slane %v2464, 2
    %v2466 = vmax.f32 %v2464, %v2465
    %v2467 = vrot.slane %v2466, 1
    %v2468 = vmax.f32 %v2466, %v2467
    %v2469 = vsel %vm1817, %v1551, -inf
    %v2470 = vrot.slane %v2469, 4
    %v2471 = vmax.f32 %v2469, %v2470
    %v2472 = vrot.slane %v2471, 2
    %v2473 = vmax.f32 %v2471, %v2472
    %v2474 = vrot.slane %v2473, 1
    %v2475 = vmax.f32 %v2473, %v2474
    %v2476 = vsel %vm1817, %v1550, -inf
    %v2477 = vrot.slane %v2476, 4
    %v2478 = vmax.f32 %v2476, %v2477
    %v2479 = vrot.slane %v2478, 2
    %v2480 = vmax.f32 %v2478, %v2479
    %v2481 = vrot.slane %v2480, 1
    %v2482 = vmax.f32 %v2480, %v2481
    %v2483 = vsel %vm1817, %v1552, -inf
    %v2484 = vrot.slane %v2483, 4
    %v2485 = vmax.f32 %v2483, %v2484
    %v2486 = vrot.slane %v2485, 2
    %v2487 = vmax.f32 %v2485, %v2486
    %v2488 = vrot.slane %v2487, 1
    %v2489 = vmax.f32 %v2487, %v2488
    %v2490 = vsel %vm1817, %v1560, -inf
    %v2491 = vrot.slane %v2490, 4
    %v2492 = vmax.f32 %v2490, %v2491
    %v2493 = vrot.slane %v2492, 2
    %v2494 = vmax.f32 %v2492, %v2493
    %v2495 = vrot.slane %v2494, 1
    %v2496 = vmax.f32 %v2494, %v2495
    %v2497 = vsel %vm1817, %v1568, -inf
    %v2498 = vrot.slane %v2497, 4
    %v2499 = vmax.f32 %v2497, %v2498
    %v2500 = vrot.slane %v2499, 2
    %v2501 = vmax.f32 %v2499, %v2500
    %v2502 = vrot.slane %v2501, 1
    %v2503 = vmax.f32 %v2501, %v2502
    %v2504 = vsel %vm1817, %v1567, -inf
    %v2505 = vrot.slane %v2504, 4
    %v2506 = vmax.f32 %v2504, %v2505
    %v2507 = vrot.slane %v2506, 2
    %v2508 = vmax.f32 %v2506, %v2507
    %v2509 = vrot.slane %v2508, 1
    %v2510 = vmax.f32 %v2508, %v2509
    %v2511 = vsel %vm1817, %v1569, -inf
    %v2512 = vrot.slane %v2511, 4
    %v2513 = vmax.f32 %v2511, %v2512
    %v2514 = vrot.slane %v2513, 2
    %v2515 = vmax.f32 %v2513, %v2514
    %v2516 = vrot.slane %v2515, 1
    %v2517 = vmax.f32 %v2515, %v2516
    %v2518 = vsel %vm1817, %v1577, -inf
    %v2519 = vrot.slane %v2518, 4
    %v2520 = vmax.f32 %v2518, %v2519
    %v2521 = vrot.slane %v2520, 2
    %v2522 = vmax.f32 %v2520, %v2521
    %v2523 = vrot.slane %v2522, 1
    %v2524 = vmax.f32 %v2522, %v2523
    %v2525 = vsel %vm1817, %v1585, -inf
    %v2526 = vrot.slane %v2525, 4
    %v2527 = vmax.f32 %v2525, %v2526
    %v2528 = vrot.slane %v2527, 2
    %v2529 = vmax.f32 %v2527, %v2528
    %v2530 = vrot.slane %v2529, 1
    %v2531 = vmax.f32 %v2529, %v2530
    %v2532 = vsel %vm1817, %v1584, -inf
    %v2533 = vrot.slane %v2532, 4
    %v2534 = vmax.f32 %v2532, %v2533
    %v2535 = vrot.slane %v2534, 2
    %v2536 = vmax.f32 %v2534, %v2535
    %v2537 = vrot.slane %v2536, 1
    %v2538 = vmax.f32 %v2536, %v2537
    %v2539 = vsel %vm1817, %v1586, -inf
    %v2540 = vrot.slane %v2539, 4
    %v2541 = vmax.f32 %v2539, %v2540
    %v2542 = vrot.slane %v2541, 2
    %v2543 = vmax.f32 %v2541, %v2542
    %v2544 = vrot.slane %v2543, 1
    %v2545 = vmax.f32 %v2543, %v2544
    %v2546 = vsel %vm1817, %v1594, -inf
    %v2547 = vrot.slane %v2546, 4
    %v2548 = vmax.f32 %v2546, %v2547
    %v2549 = vrot.slane %v2548, 2
    %v2550 = vmax.f32 %v2548, %v2549
    %v2551 = vrot.slane %v2550, 1
    %v2552 = vmax.f32 %v2550, %v2551
    %v2553 = vsel %vm1817, %v1602, -inf
    %v2554 = vrot.slane %v2553, 4
    %v2555 = vmax.f32 %v2553, %v2554
    %v2556 = vrot.slane %v2555, 2
    %v2557 = vmax.f32 %v2555, %v2556
    %v2558 = vrot.slane %v2557, 1
    %v2559 = vmax.f32 %v2557, %v2558
    %v2560 = vsel %vm1817, %v1601, -inf
    %v2561 = vrot.slane %v2560, 4
    %v2562 = vmax.f32 %v2560, %v2561
    %v2563 = vrot.slane %v2562, 2
    %v2564 = vmax.f32 %v2562, %v2563
    %v2565 = vrot.slane %v2564, 1
    %v2566 = vmax.f32 %v2564, %v2565
    %v2567 = vsel %vm1817, %v1603, -inf
    %v2568 = vrot.slane %v2567, 4
    %v2569 = vmax.f32 %v2567, %v2568
    %v2570 = vrot.slane %v2569, 2
    %v2571 = vmax.f32 %v2569, %v2570
    %v2572 = vrot.slane %v2571, 1
    %v2573 = vmax.f32 %v2571, %v2572
    %v2574 = vsel %vm1817, %v1611, -inf
    %v2575 = vrot.slane %v2574, 4
    %v2576 = vmax.f32 %v2574, %v2575
    %v2577 = vrot.slane %v2576, 2
    %v2578 = vmax.f32 %v2576, %v2577
    %v2579 = vrot.slane %v2578, 1
    %v2580 = vmax.f32 %v2578, %v2579
    %v2581 = vsel %vm1817, %v1619, -inf
    %v2582 = vrot.slane %v2581, 4
    %v2583 = vmax.f32 %v2581, %v2582
    %v2584 = vrot.slane %v2583, 2
    %v2585 = vmax.f32 %v2583, %v2584
    %v2586 = vrot.slane %v2585, 1
    %v2587 = vmax.f32 %v2585, %v2586
    %v2588 = vsel %vm1817, %v1618, -inf
    %v2589 = vrot.slane %v2588, 4
    %v2590 = vmax.f32 %v2588, %v2589
    %v2591 = vrot.slane %v2590, 2
    %v2592 = vmax.f32 %v2590, %v2591
    %v2593 = vrot.slane %v2592, 1
    %v2594 = vmax.f32 %v2592, %v2593
    %v2595 = vsel %vm1817, %v1620, -inf
    %v2596 = vrot.slane %v2595, 4
    %v2597 = vmax.f32 %v2595, %v2596
    %v2598 = vrot.slane %v2597, 2
    %v2599 = vmax.f32 %v2597, %v2598
    %v2600 = vrot.slane %v2599, 1
    %v2601 = vmax.f32 %v2599, %v2600
    %v2602 = vsel %vm1817, %v1628, -inf
    %v2603 = vrot.slane %v2602, 4
    %v2604 = vmax.f32 %v2602, %v2603
    %v2605 = vrot.slane %v2604, 2
    %v2606 = vmax.f32 %v2604, %v2605
    %v2607 = vrot.slane %v2606, 1
    %v2608 = vmax.f32 %v2606, %v2607
    %v2609 = vsel %vm1817, %v1636, -inf
    %v2610 = vrot.slane %v2609, 4
    %v2611 = vmax.f32 %v2609, %v2610
    %v2612 = vrot.slane %v2611, 2
    %v2613 = vmax.f32 %v2611, %v2612
    %v2614 = vrot.slane %v2613, 1
    %v2615 = vmax.f32 %v2613, %v2614
    %v2616 = vsel %vm1817, %v1635, -inf
    %v2617 = vrot.slane %v2616, 4
    %v2618 = vmax.f32 %v2616, %v2617
    %v2619 = vrot.slane %v2618, 2
    %v2620 = vmax.f32 %v2618, %v2619
    %v2621 = vrot.slane %v2620, 1
    %v2622 = vmax.f32 %v2620, %v2621
    %v2623 = vsel %vm1817, %v1637, -inf
    %v2624 = vrot.slane %v2623, 4
    %v2625 = vmax.f32 %v2623, %v2624
    %v2626 = vrot.slane %v2625, 2
    %v2627 = vmax.f32 %v2625, %v2626
    %v2628 = vrot.slane %v2627, 1
    %v2629 = vmax.f32 %v2627, %v2628
    %v2630 = vsel %vm1817, %v1645, -inf
    %v2631 = vrot.slane %v2630, 4
    %v2632 = vmax.f32 %v2630, %v2631
    %v2633 = vrot.slane %v2632, 2
    %v2634 = vmax.f32 %v2632, %v2633
    %v2635 = vrot.slane %v2634, 1
    %v2636 = vmax.f32 %v2634, %v2635
    %v2637 = vsel %vm1817, %v1653, -inf
    %v2638 = vrot.slane %v2637, 4
    %v2639 = vmax.f32 %v2637, %v2638
    %v2640 = vrot.slane %v2639, 2
    %v2641 = vmax.f32 %v2639, %v2640
    %v2642 = vrot.slane %v2641, 1
    %v2643 = vmax.f32 %v2641, %v2642
    %v2644 = vsel %vm1817, %v1652, -inf
    %v2645 = vrot.slane %v2644, 4
    %v2646 = vmax.f32 %v2644, %v2645
    %v2647 = vrot.slane %v2646, 2
    %v2648 = vmax.f32 %v2646, %v2647
    %v2649 = vrot.slane %v2648, 1
    %v2650 = vmax.f32 %v2648, %v2649
    %v2651 = vsel %vm1817, %v1654, -inf
    %v2652 = vrot.slane %v2651, 4
    %v2653 = vmax.f32 %v2651, %v2652
    %v2654 = vrot.slane %v2653, 2
    %v2655 = vmax.f32 %v2653, %v2654
    %v2656 = vrot.slane %v2655, 1
    %v2657 = vmax.f32 %v2655, %v2656
    %v2658 = vsel %vm1817, %v1662, -inf
    %v2659 = vrot.slane %v2658, 4
    %v2660 = vmax.f32 %v2658, %v2659
    %v2661 = vrot.slane %v2660, 2
    %v2662 = vmax.f32 %v2660, %v2661
    %v2663 = vrot.slane %v2662, 1
    %v2664 = vmax.f32 %v2662, %v2663
    %v2665 = vsel %vm1817, %v1670, -inf
    %v2666 = vrot.slane %v2665, 4
    %v2667 = vmax.f32 %v2665, %v2666
    %v2668 = vrot.slane %v2667, 2
    %v2669 = vmax.f32 %v2667, %v2668
    %v2670 = vrot.slane %v2669, 1
    %v2671 = vmax.f32 %v2669, %v2670
    %v2672 = vsel %vm1817, %v1669, -inf
    %v2673 = vrot.slane %v2672, 4
    %v2674 = vmax.f32 %v2672, %v2673
    %v2675 = vrot.slane %v2674, 2
    %v2676 = vmax.f32 %v2674, %v2675
    %v2677 = vrot.slane %v2676, 1
    %v2678 = vmax.f32 %v2676, %v2677
    %v2679 = vsel %vm1817, %v1671, -inf
    %v2680 = vrot.slane %v2679, 4
    %v2681 = vmax.f32 %v2679, %v2680
    %v2682 = vrot.slane %v2681, 2
    %v2683 = vmax.f32 %v2681, %v2682
    %v2684 = vrot.slane %v2683, 1
    %v2685 = vmax.f32 %v2683, %v2684
    %v2686 = vsel %vm1817, %v1679, -inf
    %v2687 = vrot.slane %v2686, 4
    %v2688 = vmax.f32 %v2686, %v2687
    %v2689 = vrot.slane %v2688, 2
    %v2690 = vmax.f32 %v2688, %v2689
    %v2691 = vrot.slane %v2690, 1
    %v2692 = vmax.f32 %v2690, %v2691
    %v2693 = vsel %vm1817, %v1687, -inf
    %v2694 = vrot.slane %v2693, 4
    %v2695 = vmax.f32 %v2693, %v2694
    %v2696 = vrot.slane %v2695, 2
    %v2697 = vmax.f32 %v2695, %v2696
    %v2698 = vrot.slane %v2697, 1
    %v2699 = vmax.f32 %v2697, %v2698
    %v2700 = vsel %vm1817, %v1686, -inf
    %v2701 = vrot.slane %v2700, 4
    %v2702 = vmax.f32 %v2700, %v2701
    %v2703 = vrot.slane %v2702, 2
    %v2704 = vmax.f32 %v2702, %v2703
    %v2705 = vrot.slane %v2704, 1
    %v2706 = vmax.f32 %v2704, %v2705
    %v2707 = vsel %vm1817, %v1688, -inf
    %v2708 = vrot.slane %v2707, 4
    %v2709 = vmax.f32 %v2707, %v2708
    %v2710 = vrot.slane %v2709, 2
    %v2711 = vmax.f32 %v2709, %v2710
    %v2712 = vrot.slane %v2711, 1
    %v2713 = vmax.f32 %v2711, %v2712
    %vm2842 = vcmask 1041409
    %v2843 = vsel %vm2842, %v1831, %v1824
    %vm2844 = vcmask 1042434
    %v2845 = vsel %vm2844, %v1838, %v2843
    %vm2846 = vcmask 1043459
    %v2847 = vsel %vm2846, %v1845, %v2845
    %vm2848 = vcmask 1044484
    %v2849 = vsel %vm2848, %v1852, %v2847
    %vm2850 = vcmask 1045509
    %v2851 = vsel %vm2850, %v1859, %v2849
    %vm2852 = vcmask 1046534
    %v2853 = vsel %vm2852, %v1866, %v2851
    %vm2854 = vcmask 1047559
    %v2855 = vsel %vm2854, %v1873, %v2853
    %v2856 = vsel %vm2842, %v1887, %v1880
    %v2857 = vsel %vm2844, %v1894, %v2856
    %v2858 = vsel %vm2846, %v1901, %v2857
    %v2859 = vsel %vm2848, %v1908, %v2858
    %v2860 = vsel %vm2850, %v1915, %v2859
    %v2861 = vsel %vm2852, %v1922, %v2860
    %v2862 = vsel %vm2854, %v1929, %v2861
    %v2863 = vsel %vm2842, %v1943, %v1936
    %v2864 = vsel %vm2844, %v1950, %v2863
    %v2865 = vsel %vm2846, %v1957, %v2864
    %v2866 = vsel %vm2848, %v1964, %v2865
    %v2867 = vsel %vm2850, %v1971, %v2866
    %v2868 = vsel %vm2852, %v1978, %v2867
    %v2869 = vsel %vm2854, %v1985, %v2868
    %v2870 = vsel %vm2842, %v1999, %v1992
    %v2871 = vsel %vm2844, %v2006, %v2870
    %v2872 = vsel %vm2846, %v2013, %v2871
    %v2873 = vsel %vm2848, %v2020, %v2872
    %v2874 = vsel %vm2850, %v2027, %v2873
    %v2875 = vsel %vm2852, %v2034, %v2874
    %v2876 = vsel %vm2854, %v2041, %v2875
    %v2877 = vsel %vm2842, %v2055, %v2048
    %v2878 = vsel %vm2844, %v2062, %v2877
    %v2879 = vsel %vm2846, %v2069, %v2878
    %v2880 = vsel %vm2848, %v2076, %v2879
    %v2881 = vsel %vm2850, %v2083, %v2880
    %v2882 = vsel %vm2852, %v2090, %v2881
    %v2883 = vsel %vm2854, %v2097, %v2882
    %v2884 = vsel %vm2842, %v2111, %v2104
    %v2885 = vsel %vm2844, %v2118, %v2884
    %v2886 = vsel %vm2846, %v2125, %v2885
    %v2887 = vsel %vm2848, %v2132, %v2886
    %v2888 = vsel %vm2850, %v2139, %v2887
    %v2889 = vsel %vm2852, %v2146, %v2888
    %v2890 = vsel %vm2854, %v2153, %v2889
    %v2891 = vsel %vm2842, %v2167, %v2160
    %v2892 = vsel %vm2844, %v2174, %v2891
    %v2893 = vsel %vm2846, %v2181, %v2892
    %v2894 = vsel %vm2848, %v2188, %v2893
    %v2895 = vsel %vm2850, %v2195, %v2894
    %v2896 = vsel %vm2852, %v2202, %v2895
    %v2897 = vsel %vm2854, %v2209, %v2896
    %v2898 = vsel %vm2842, %v2223, %v2216
    %v2899 = vsel %vm2844, %v2230, %v2898
    %v2900 = vsel %vm2846, %v2237, %v2899
    %v2901 = vsel %vm2848, %v2244, %v2900
    %v2902 = vsel %vm2850, %v2251, %v2901
    %v2903 = vsel %vm2852, %v2258, %v2902
    %v2904 = vsel %vm2854, %v2265, %v2903
    %v2905 = vsel %vm2842, %v2279, %v2272
    %v2906 = vsel %vm2844, %v2286, %v2905
    %v2907 = vsel %vm2846, %v2293, %v2906
    %v2908 = vsel %vm2848, %v2300, %v2907
    %v2909 = vsel %vm2850, %v2307, %v2908
    %v2910 = vsel %vm2852, %v2314, %v2909
    %v2911 = vsel %vm2854, %v2321, %v2910
    %v2912 = vsel %vm2842, %v2335, %v2328
    %v2913 = vsel %vm2844, %v2342, %v2912
    %v2914 = vsel %vm2846, %v2349, %v2913
    %v2915 = vsel %vm2848, %v2356, %v2914
    %v2916 = vsel %vm2850, %v2363, %v2915
    %v2917 = vsel %vm2852, %v2370, %v2916
    %v2918 = vsel %vm2854, %v2377, %v2917
    %v2919 = vsel %vm2842, %v2391, %v2384
    %v2920 = vsel %vm2844, %v2398, %v2919
    %v2921 = vsel %vm2846, %v2405, %v2920
    %v2922 = vsel %vm2848, %v2412, %v2921
    %v2923 = vsel %vm2850, %v2419, %v2922
    %v2924 = vsel %vm2852, %v2426, %v2923
    %v2925 = vsel %vm2854, %v2433, %v2924
    %v2926 = vsel %vm2842, %v2447, %v2440
    %v2927 = vsel %vm2844, %v2454, %v2926
    %v2928 = vsel %vm2846, %v2461, %v2927
    %v2929 = vsel %vm2848, %v2468, %v2928
    %v2930 = vsel %vm2850, %v2475, %v2929
    %v2931 = vsel %vm2852, %v2482, %v2930
    %v2932 = vsel %vm2854, %v2489, %v2931
    %v2933 = vsel %vm2842, %v2503, %v2496
    %v2934 = vsel %vm2844, %v2510, %v2933
    %v2935 = vsel %vm2846, %v2517, %v2934
    %v2936 = vsel %vm2848, %v2524, %v2935
    %v2937 = vsel %vm2850, %v2531, %v2936
    %v2938 = vsel %vm2852, %v2538, %v2937
    %v2939 = vsel %vm2854, %v2545, %v2938
    %v2940 = vsel %vm2842, %v2559, %v2552
    %v2941 = vsel %vm2844, %v2566, %v2940
    %v2942 = vsel %vm2846, %v2573, %v2941
    %v2943 = vsel %vm2848, %v2580, %v2942
    %v2944 = vsel %vm2850, %v2587, %v2943
    %v2945 = vsel %vm2852, %v2594, %v2944
    %v2946 = vsel %vm2854, %v2601, %v2945
    %v2947 = vsel %vm2842, %v2615, %v2608
    %v2948 = vsel %vm2844, %v2622, %v2947
    %v2949 = vsel %vm2846, %v2629, %v2948
    %v2950 = vsel %vm2848, %v2636, %v2949
    %v2951 = vsel %vm2850, %v2643, %v2950
    %v2952 = vsel %vm2852, %v2650, %v2951
    %v2953 = vsel %vm2854, %v2657, %v2952
    %v2954 = vsel %vm2842, %v2671, %v2664
    %v2955 = vsel %vm2844, %v2678, %v2954
    %v2956 = vsel %vm2846, %v2685, %v2955
    %v2957 = vsel %vm2848, %v2692, %v2956
    %v2958 = vsel %vm2850, %v2699, %v2957
    %v2959 = vsel %vm2852, %v2706, %v2958
    %v2960 = vsel %vm2854, %v2713, %v2959
    %s2977 = scalar_lea.vmem [#allocation2], 24
    %2978 = vst.msk [vmem:[%s2977 + $0x8] sm:$0xff] %vm50, %v2855
    %2979 = vst.msk [vmem:[%s2977 + $0x20] sm:$0xff] %vm50, %v2862
    %2980 = vst.msk [vmem:[%s2977 + $0x38] sm:$0xff] %vm50, %v2869
    %2981 = vst.msk [vmem:[%s2977 + $0x50] sm:$0xff] %vm50, %v2876
    %2982 = vst.msk [vmem:[%s2977 + $0x68] sm:$0xff] %vm50, %v2883
    %2983 = vst.msk [vmem:[%s2977 + $0x80] sm:$0xff] %vm50, %v2890
    %2984 = vst.msk [vmem:[%s2977 + $0x98] sm:$0xff] %vm50, %v2897
    %2985 = vst.msk [vmem:[%s2977 + $0xb0] sm:$0xff] %vm50, %v2904
    %2986 = vst.msk [vmem:[%s2977 + $0xf8] sm:$0xff] %vm50, %v2911
    %2987 = vst.msk [vmem:[%s2977 + $0x110] sm:$0xff] %vm50, %v2918
    %2988 = vst.msk [vmem:[%s2977 + $0x128] sm:$0xff] %vm50, %v2925
    %2989 = vst.msk [vmem:[%s2977 + $0x140] sm:$0xff] %vm50, %v2932
    %2990 = vst.msk [vmem:[%s2977 + $0x158] sm:$0xff] %vm50, %v2939
    %2991 = vst.msk [vmem:[%s2977 + $0x170] sm:$0xff] %vm50, %v2946
    %2992 = vst.msk [vmem:[%s2977 + $0x188] sm:$0xff] %vm50, %v2953
    %2993 = vst.msk [vmem:[%s2977 + $0x1a0] sm:$0xff] %vm50, %v2960
    %v2994 = vld [vmem:[%s6] sm:$0x1]
    %v2995 = vld [vmem:[%s7] sm:$0x1]
    %v2996 = vld [vmem:[#allocation2 + $0x7] sm:$0xff]
    %v2997 = vld [vmem:[#allocation2 + $0x1f] sm:$0xff]
    %v2998 = vld [vmem:[#allocation2 + $0x37] sm:$0xff]
    %v2999 = vld [vmem:[#allocation2 + $0x4f] sm:$0xff]
    %v3000 = vld [vmem:[#allocation2 + $0x67] sm:$0xff]
    %v3001 = vld [vmem:[#allocation2 + $0x7f] sm:$0xff]
    %v3002 = vld [vmem:[#allocation2 + $0x97] sm:$0xff]
    %v3003 = vld [vmem:[#allocation2 + $0xaf] sm:$0xff]
    %v3004 = vld [vmem:[#allocation2 + $0xc7] sm:$0xff]
    %v3005 = vld [vmem:[#allocation2 + $0xdf] sm:$0xff]
    %v3006 = vld [vmem:[#allocation2 + $0xf7] sm:$0xff]
    %v3007 = vld [vmem:[#allocation2 + $0x10f] sm:$0xff]
    %v3008 = vld [vmem:[#allocation2 + $0x127] sm:$0xff]
    %v3009 = vld [vmem:[#allocation2 + $0x13f] sm:$0xff]
    %v3010 = vld [vmem:[#allocation2 + $0x157] sm:$0xff]
    %v3011 = vld [vmem:[#allocation2 + $0x16f] sm:$0xff]
    %v3012 = vld [vmem:[#allocation2 + $0x187] sm:$0xff]
    %v3013 = vld [vmem:[#allocation2 + $0x19f] sm:$0xff]
    %v3014 = vld [vmem:[#allocation2 + $0x1b7] sm:$0xff]
    %v3015 = vld [vmem:[#allocation2 + $0x1cf] sm:$0xff]
    %v3016 = vld [vmem:[%s2] sm:$0xff]
    %v3017 = vld [vmem:[%s2 + $0x8] sm:$0xff]
    %v3018 = vld [vmem:[%s2 + $0x10] sm:$0xff]
    %v3019 = vld [vmem:[%s2 + $0x18] sm:$0xff]
    %v3020 = vld [vmem:[%s2 + $0x20] sm:$0xff]
    %v3021 = vld [vmem:[%s2 + $0x28] sm:$0xff]
    %v3022 = vld [vmem:[%s2 + $0x30] sm:$0xff]
    %v3023 = vld [vmem:[%s2 + $0x38] sm:$0xff]
    %s3024 = scalar_lea.vmem %s2, 192
    %v3025 = vld [vmem:[%s3024] sm:$0xff]
    %v3026 = vld [vmem:[%s3024 + $0x8] sm:$0xff]
    %v3027 = vld [vmem:[%s3024 + $0x10] sm:$0xff]
    %v3028 = vld [vmem:[%s3024 + $0x18] sm:$0xff]
    %v3029 = vld [vmem:[%s3024 + $0x20] sm:$0xff]
    %v3030 = vld [vmem:[%s3024 + $0x28] sm:$0xff]
    %v3031 = vld [vmem:[%s3024 + $0x30] sm:$0xff]
    %v3032 = vld [vmem:[%s3024 + $0x38] sm:$0xff]
    %v3034 = vsel %vm50, %v2997, 0
    %v3037 = vsel %vm50, %v2998, 0
    %v3040 = vsel %vm50, %v2999, 0
    %v3043 = vsel %vm50, %v3000, 0
    %v3046 = vsel %vm50, %v3001, 0
    %v3049 = vsel %vm50, %v3002, 0
    %v3052 = vsel %vm50, %v3003, 0
    %v3055 = vsel %vm50, %v3004, 0
    %v3058 = vsel %vm50, %v3007, 0
    %v3061 = vsel %vm50, %v3008, 0
    %v3064 = vsel %vm50, %v3009, 0
    %v3067 = vsel %vm50, %v3010, 0
    %v3070 = vsel %vm50, %v3011, 0
    %v3073 = vsel %vm50, %v3012, 0
    %v3076 = vsel %vm50, %v3013, 0
    %v3079 = vsel %vm50, %v3014, 0
    %3081 = vmatprep.subr.mxu0 0.0
    %3082 = vmatpush1.msra.mxu0 0.0
    %3083 = vmatprep.subr.mxu0 0.0
    %3084 = vmatpush1.msra.mxu0 0.0
    %3085 = vmatprep.subr.mxu0 0.0
    %3086 = vmatpush1.msra.mxu0 0.0
    %3087 = vmatprep.subr.mxu0 0.0
    %3088 = vmatpush1.msra.mxu0 0.0
    %3089 = vmatprep.subr.mxu0 0.0
    %3090 = vmatpush1.msra.mxu0 0.0
    %3091 = vmatprep.subr.mxu0 0.0
    %3092 = vmatpush1.msra.mxu0 0.0
    %3093 = vmatprep.subr.mxu0 0.0
    %3094 = vmatpush1.msra.mxu0 0.0
    %3095 = vmatprep.subr.mxu0 0.0
    %3096 = vmatpush1.msra.mxu0 0.0
    %3097 = vmatprep.subr.mxu0 0.0
    %3098 = vmatpush1.msra.mxu0 %v3032
    %3099 = vmatprep.subr.mxu0 0.0
    %3100 = vmatpush1.msra.mxu0 %v3031
    %3101 = vmatprep.subr.mxu0 0.0
    %3102 = vmatpush1.msra.mxu0 %v3030
    %3103 = vmatprep.subr.mxu0 0.0
    %3104 = vmatpush1.msra.mxu0 %v3029
    %3105 = vmatprep.subr.mxu0 0.0
    %3106 = vmatpush1.msra.mxu0 %v3028
    %3107 = vmatprep.subr.mxu0 0.0
    %3108 = vmatpush1.msra.mxu0 %v3027
    %3109 = vmatprep.subr.mxu0 0.0
    %3110 = vmatpush1.msra.mxu0 %v3026
    %3111 = vmatprep.subr.mxu0 0.0
    %3112 = vmatpush1.msra.mxu0 %v3025
    %3113 = vmatprep.subr.mxu0 0.0
    %3114 = vmatpush2.msra.mxu0 0.0
    %3115 = vmatprep.subr.mxu0 0.0
    %3116 = vmatpush2.msra.mxu0 0.0
    %3117 = vmatprep.subr.mxu0 0.0
    %3118 = vmatpush2.msra.mxu0 0.0
    %3119 = vmatprep.subr.mxu0 0.0
    %3120 = vmatpush2.msra.mxu0 0.0
    %3121 = vmatprep.subr.mxu0 0.0
    %3122 = vmatpush2.msra.mxu0 0.0
    %3123 = vmatprep.subr.mxu0 0.0
    %3124 = vmatpush2.msra.mxu0 0.0
    %3125 = vmatprep.subr.mxu0 0.0
    %3126 = vmatpush2.msra.mxu0 0.0
    %3127 = vmatprep.subr.mxu0 0.0
    %3128 = vmatpush2.msra.mxu0 0.0
    %3129 = vmatprep.subr.mxu0 0.0
    %3130 = vmatpush2.msra.mxu0 0.0
    %3131 = vmatprep.subr.mxu0 0.0
    %3132 = vmatpush2.msra.mxu0 0.0
    %3133 = vmatprep.subr.mxu0 0.0
    %3134 = vmatpush2.msra.mxu0 0.0
    %3135 = vmatprep.subr.mxu0 0.0
    %3136 = vmatpush2.msra.mxu0 0.0
    %3137 = vmatprep.subr.mxu0 0.0
    %3138 = vmatpush2.msra.mxu0 0.0
    %3139 = vmatprep.subr.mxu0 0.0
    %3140 = vmatpush2.msra.mxu0 0.0
    %3141 = vmatprep.subr.mxu0 0.0
    %3142 = vmatpush2.msra.mxu0 0.0
    %3143 = vmatprep.subr.mxu0 0.0
    %3144 = vmatpush2.msra.mxu0 0.0
    %3145 = vmatprep.mubr.f32.mxu0 0.0
    %3146 = vmatmul.mubr.f32.gmra.mxu0 %v3034
    %v3147 = vpop.f32.mrf.mxu0
    %v3148 = vadd.f32 0.0, %v3147
    %v3149 = vpop.f32.mrf.mxu0
    %3150 = vmatprep.mubr.f32.mxu0 0.0
    %3151 = vmatmul.mubr.f32.gmra.mxu0 %v3037
    %v3152 = vpop.f32.mrf.mxu0
    %v3153 = vadd.f32 0.0, %v3152
    %v3154 = vpop.f32.mrf.mxu0
    %3155 = vmatprep.mubr.f32.mxu0 0.0
    %3156 = vmatmul.mubr.f32.gmra.mxu0 %v3040
    %v3157 = vpop.f32.mrf.mxu0
    %v3158 = vadd.f32 0.0, %v3157
    %v3159 = vpop.f32.mrf.mxu0
    %3160 = vmatprep.mubr.f32.mxu0 0.0
    %3161 = vmatmul.mubr.f32.gmra.mxu0 %v3043
    %v3162 = vpop.f32.mrf.mxu0
    %v3163 = vadd.f32 0.0, %v3162
    %v3164 = vpop.f32.mrf.mxu0
    %3165 = vmatprep.mubr.f32.mxu0 0.0
    %3166 = vmatmul.mubr.f32.gmra.mxu0 %v3046
    %v3167 = vpop.f32.mrf.mxu0
    %v3168 = vadd.f32 0.0, %v3167
    %v3169 = vpop.f32.mrf.mxu0
    %3170 = vmatprep.mubr.f32.mxu0 0.0
    %3171 = vmatmul.mubr.f32.gmra.mxu0 %v3049
    %v3172 = vpop.f32.mrf.mxu0
    %v3173 = vadd.f32 0.0, %v3172
    %v3174 = vpop.f32.mrf.mxu0
    %3175 = vmatprep.mubr.f32.mxu0 0.0
    %3176 = vmatmul.mubr.f32.gmra.mxu0 %v3052
    %v3177 = vpop.f32.mrf.mxu0
    %v3178 = vadd.f32 0.0, %v3177
    %v3179 = vpop.f32.mrf.mxu0
    %3180 = vmatprep.mubr.f32.mxu0 0.0
    %3181 = vmatmul.mubr.f32.gmra.mxu0 %v3055
    %v3182 = vpop.f32.mrf.mxu0
    %v3183 = vadd.f32 0.0, %v3182
    %v3184 = vpop.f32.mrf.mxu0
    %3185 = vmatprep.mubr.f32.mxu0 0.0
    %3186 = vmatmul.mubr.f32.gmra.mxu0 %v3058
    %v3187 = vpop.f32.mrf.mxu0
    %v3188 = vadd.f32 0.0, %v3187
    %v3189 = vpop.f32.mrf.mxu0
    %3190 = vmatprep.mubr.f32.mxu0 0.0
    %3191 = vmatmul.mubr.f32.gmra.mxu0 %v3061
    %v3192 = vpop.f32.mrf.mxu0
    %v3193 = vadd.f32 0.0, %v3192
    %v3194 = vpop.f32.mrf.mxu0
    %3195 = vmatprep.mubr.f32.mxu0 0.0
    %3196 = vmatmul.mubr.f32.gmra.mxu0 %v3064
    %v3197 = vpop.f32.mrf.mxu0
    %v3198 = vadd.f32 0.0, %v3197
    %v3199 = vpop.f32.mrf.mxu0
    %3200 = vmatprep.mubr.f32.mxu0 0.0
    %3201 = vmatmul.mubr.f32.gmra.mxu0 %v3067
    %v3202 = vpop.f32.mrf.mxu0
    %v3203 = vadd.f32 0.0, %v3202
    %v3204 = vpop.f32.mrf.mxu0
    %3205 = vmatprep.mubr.f32.mxu0 0.0
    %3206 = vmatmul.mubr.f32.gmra.mxu0 %v3070
    %v3207 = vpop.f32.mrf.mxu0
    %v3208 = vadd.f32 0.0, %v3207
    %v3209 = vpop.f32.mrf.mxu0
    %3210 = vmatprep.mubr.f32.mxu0 0.0
    %3211 = vmatmul.mubr.f32.gmra.mxu0 %v3073
    %v3212 = vpop.f32.mrf.mxu0
    %v3213 = vadd.f32 0.0, %v3212
    %v3214 = vpop.f32.mrf.mxu0
    %3215 = vmatprep.mubr.f32.mxu0 0.0
    %3216 = vmatmul.mubr.f32.gmra.mxu0 %v3076
    %v3217 = vpop.f32.mrf.mxu0
    %v3218 = vadd.f32 0.0, %v3217
    %v3219 = vpop.f32.mrf.mxu0
    %3220 = vmatprep.mubr.f32.mxu0 0.0
    %3221 = vmatmul.mubr.f32.gmra.mxu0 %v3079
    %v3222 = vpop.f32.mrf.mxu0
    %v3223 = vadd.f32 0.0, %v3222
    %v3224 = vpop.f32.mrf.mxu0
    %3225 = vdwg.mxu0
    %v3227 = vsel %vm50, %v2996, 0
    %v3230 = vsel %vm50, %v3006, 0
    %3232 = vmatprep.subr.mxu0 0.0
    %3233 = vmatpush1.msra.mxu0 0.0
    %3234 = vmatprep.subr.mxu0 0.0
    %3235 = vmatpush1.msra.mxu0 0.0
    %3236 = vmatprep.subr.mxu0 0.0
    %3237 = vmatpush1.msra.mxu0 0.0
    %3238 = vmatprep.subr.mxu0 0.0
    %3239 = vmatpush1.msra.mxu0 0.0
    %3240 = vmatprep.subr.mxu0 0.0
    %3241 = vmatpush1.msra.mxu0 0.0
    %3242 = vmatprep.subr.mxu0 0.0
    %3243 = vmatpush1.msra.mxu0 0.0
    %3244 = vmatprep.subr.mxu0 0.0
    %3245 = vmatpush1.msra.mxu0 0.0
    %3246 = vmatprep.subr.mxu0 0.0
    %3247 = vmatpush1.msra.mxu0 0.0
    %3248 = vmatprep.subr.mxu0 0.0
    %3249 = vmatpush1.msra.mxu0 %v3023
    %3250 = vmatprep.subr.mxu0 0.0
    %3251 = vmatpush1.msra.mxu0 %v3022
    %3252 = vmatprep.subr.mxu0 0.0
    %3253 = vmatpush1.msra.mxu0 %v3021
    %3254 = vmatprep.subr.mxu0 0.0
    %3255 = vmatpush1.msra.mxu0 %v3020
    %3256 = vmatprep.subr.mxu0 0.0
    %3257 = vmatpush1.msra.mxu0 %v3019
    %3258 = vmatprep.subr.mxu0 0.0
    %3259 = vmatpush1.msra.mxu0 %v3018
    %3260 = vmatprep.subr.mxu0 0.0
    %3261 = vmatpush1.msra.mxu0 %v3017
    %3262 = vmatprep.subr.mxu0 0.0
    %3263 = vmatpush1.msra.mxu0 %v3016
    %3264 = vmatprep.subr.mxu0 0.0
    %3265 = vmatpush2.msra.mxu0 0.0
    %3266 = vmatprep.subr.mxu0 0.0
    %3267 = vmatpush2.msra.mxu0 0.0
    %3268 = vmatprep.subr.mxu0 0.0
    %3269 = vmatpush2.msra.mxu0 0.0
    %3270 = vmatprep.subr.mxu0 0.0
    %3271 = vmatpush2.msra.mxu0 0.0
    %3272 = vmatprep.subr.mxu0 0.0
    %3273 = vmatpush2.msra.mxu0 0.0
    %3274 = vmatprep.subr.mxu0 0.0
    %3275 = vmatpush2.msra.mxu0 0.0
    %3276 = vmatprep.subr.mxu0 0.0
    %3277 = vmatpush2.msra.mxu0 0.0
    %3278 = vmatprep.subr.mxu0 0.0
    %3279 = vmatpush2.msra.mxu0 0.0
    %3280 = vmatprep.subr.mxu0 0.0
    %3281 = vmatpush2.msra.mxu0 0.0
    %3282 = vmatprep.subr.mxu0 0.0
    %3283 = vmatpush2.msra.mxu0 0.0
    %3284 = vmatprep.subr.mxu0 0.0
    %3285 = vmatpush2.msra.mxu0 0.0
    %3286 = vmatprep.subr.mxu0 0.0
    %3287 = vmatpush2.msra.mxu0 0.0
    %3288 = vmatprep.subr.mxu0 0.0
    %3289 = vmatpush2.msra.mxu0 0.0
    %3290 = vmatprep.subr.mxu0 0.0
    %3291 = vmatpush2.msra.mxu0 0.0
    %3292 = vmatprep.subr.mxu0 0.0
    %3293 = vmatpush2.msra.mxu0 0.0
    %3294 = vmatprep.subr.mxu0 0.0
    %3295 = vmatpush2.msra.mxu0 0.0
    %3296 = vmatprep.mubr.f32.mxu0 0.0
    %3297 = vmatmul.mubr.f32.gmra.mxu0 %v3227
    %v3298 = vpop.f32.mrf.mxu0
    %v3299 = vadd.f32 %v3148, %v3298
    %v3300 = vpop.f32.mrf.mxu0
    %3301 = vmatprep.mubr.f32.mxu0 0.0
    %3302 = vmatmul.mubr.f32.gmra.mxu0 %v3034
    %v3303 = vpop.f32.mrf.mxu0
    %v3304 = vadd.f32 %v3153, %v3303
    %v3305 = vpop.f32.mrf.mxu0
    %3306 = vmatprep.mubr.f32.mxu0 0.0
    %3307 = vmatmul.mubr.f32.gmra.mxu0 %v3037
    %v3308 = vpop.f32.mrf.mxu0
    %v3309 = vadd.f32 %v3158, %v3308
    %v3310 = vpop.f32.mrf.mxu0
    %3311 = vmatprep.mubr.f32.mxu0 0.0
    %3312 = vmatmul.mubr.f32.gmra.mxu0 %v3040
    %v3313 = vpop.f32.mrf.mxu0
    %v3314 = vadd.f32 %v3163, %v3313
    %v3315 = vpop.f32.mrf.mxu0
    %3316 = vmatprep.mubr.f32.mxu0 0.0
    %3317 = vmatmul.mubr.f32.gmra.mxu0 %v3043
    %v3318 = vpop.f32.mrf.mxu0
    %v3319 = vadd.f32 %v3168, %v3318
    %v3320 = vpop.f32.mrf.mxu0
    %3321 = vmatprep.mubr.f32.mxu0 0.0
    %3322 = vmatmul.mubr.f32.gmra.mxu0 %v3046
    %v3323 = vpop.f32.mrf.mxu0
    %v3324 = vadd.f32 %v3173, %v3323
    %v3325 = vpop.f32.mrf.mxu0
    %3326 = vmatprep.mubr.f32.mxu0 0.0
    %3327 = vmatmul.mubr.f32.gmra.mxu0 %v3049
    %v3328 = vpop.f32.mrf.mxu0
    %v3329 = vadd.f32 %v3178, %v3328
    %v3330 = vpop.f32.mrf.mxu0
    %3331 = vmatprep.mubr.f32.mxu0 0.0
    %3332 = vmatmul.mubr.f32.gmra.mxu0 %v3052
    %v3333 = vpop.f32.mrf.mxu0
    %v3334 = vadd.f32 %v3183, %v3333
    %v3335 = vpop.f32.mrf.mxu0
    %3336 = vmatprep.mubr.f32.mxu0 0.0
    %3337 = vmatmul.mubr.f32.gmra.mxu0 %v3230
    %v3338 = vpop.f32.mrf.mxu0
    %v3339 = vadd.f32 %v3188, %v3338
    %v3340 = vpop.f32.mrf.mxu0
    %3341 = vmatprep.mubr.f32.mxu0 0.0
    %3342 = vmatmul.mubr.f32.gmra.mxu0 %v3058
    %v3343 = vpop.f32.mrf.mxu0
    %v3344 = vadd.f32 %v3193, %v3343
    %v3345 = vpop.f32.mrf.mxu0
    %3346 = vmatprep.mubr.f32.mxu0 0.0
    %3347 = vmatmul.mubr.f32.gmra.mxu0 %v3061
    %v3348 = vpop.f32.mrf.mxu0
    %v3349 = vadd.f32 %v3198, %v3348
    %v3350 = vpop.f32.mrf.mxu0
    %3351 = vmatprep.mubr.f32.mxu0 0.0
    %3352 = vmatmul.mubr.f32.gmra.mxu0 %v3064
    %v3353 = vpop.f32.mrf.mxu0
    %v3354 = vadd.f32 %v3203, %v3353
    %v3355 = vpop.f32.mrf.mxu0
    %3356 = vmatprep.mubr.f32.mxu0 0.0
    %3357 = vmatmul.mubr.f32.gmra.mxu0 %v3067
    %v3358 = vpop.f32.mrf.mxu0
    %v3359 = vadd.f32 %v3208, %v3358
    %v3360 = vpop.f32.mrf.mxu0
    %3361 = vmatprep.mubr.f32.mxu0 0.0
    %3362 = vmatmul.mubr.f32.gmra.mxu0 %v3070
    %v3363 = vpop.f32.mrf.mxu0
    %v3364 = vadd.f32 %v3213, %v3363
    %v3365 = vpop.f32.mrf.mxu0
    %3366 = vmatprep.mubr.f32.mxu0 0.0
    %3367 = vmatmul.mubr.f32.gmra.mxu0 %v3073
    %v3368 = vpop.f32.mrf.mxu0
    %v3369 = vadd.f32 %v3218, %v3368
    %v3370 = vpop.f32.mrf.mxu0
    %3371 = vmatprep.mubr.f32.mxu0 0.0
    %3372 = vmatmul.mubr.f32.gmra.mxu0 %v3076
    %v3373 = vpop.f32.mrf.mxu0
    %v3374 = vadd.f32 %v3223, %v3373
    %v3375 = vpop.f32.mrf.mxu0
    %3376 = vdwg.mxu0
    %s3377 = scalar_lea.vmem %s2, 384
    %v3378 = vld [vmem:[%s3377] sm:$0xff]
    %v3379 = vld [vmem:[%s3377 + $0x8] sm:$0xff]
    %v3380 = vld [vmem:[%s3377 + $0x10] sm:$0xff]
    %v3381 = vld [vmem:[%s3377 + $0x18] sm:$0xff]
    %v3382 = vld [vmem:[%s3377 + $0x20] sm:$0xff]
    %v3383 = vld [vmem:[%s3377 + $0x28] sm:$0xff]
    %v3384 = vld [vmem:[%s3377 + $0x30] sm:$0xff]
    %v3385 = vld [vmem:[%s3377 + $0x38] sm:$0xff]
    %v3387 = vsel %vm50, %v3005, 0
    %v3390 = vsel %vm50, %v3015, 0
    %3392 = vmatprep.subr.mxu0 0.0
    %3393 = vmatpush1.msra.mxu0 0.0
    %3394 = vmatprep.subr.mxu0 0.0
    %3395 = vmatpush1.msra.mxu0 0.0
    %3396 = vmatprep.subr.mxu0 0.0
    %3397 = vmatpush1.msra.mxu0 0.0
    %3398 = vmatprep.subr.mxu0 0.0
    %3399 = vmatpush1.msra.mxu0 0.0
    %3400 = vmatprep.subr.mxu0 0.0
    %3401 = vmatpush1.msra.mxu0 0.0
    %3402 = vmatprep.subr.mxu0 0.0
    %3403 = vmatpush1.msra.mxu0 0.0
    %3404 = vmatprep.subr.mxu0 0.0
    %3405 = vmatpush1.msra.mxu0 0.0
    %3406 = vmatprep.subr.mxu0 0.0
    %3407 = vmatpush1.msra.mxu0 0.0
    %3408 = vmatprep.subr.mxu0 0.0
    %3409 = vmatpush1.msra.mxu0 %v3385
    %3410 = vmatprep.subr.mxu0 0.0
    %3411 = vmatpush1.msra.mxu0 %v3384
    %3412 = vmatprep.subr.mxu0 0.0
    %3413 = vmatpush1.msra.mxu0 %v3383
    %3414 = vmatprep.subr.mxu0 0.0
    %3415 = vmatpush1.msra.mxu0 %v3382
    %3416 = vmatprep.subr.mxu0 0.0
    %3417 = vmatpush1.msra.mxu0 %v3381
    %3418 = vmatprep.subr.mxu0 0.0
    %3419 = vmatpush1.msra.mxu0 %v3380
    %3420 = vmatprep.subr.mxu0 0.0
    %3421 = vmatpush1.msra.mxu0 %v3379
    %3422 = vmatprep.subr.mxu0 0.0
    %3423 = vmatpush1.msra.mxu0 %v3378
    %3424 = vmatprep.subr.mxu0 0.0
    %3425 = vmatpush2.msra.mxu0 0.0
    %3426 = vmatprep.subr.mxu0 0.0
    %3427 = vmatpush2.msra.mxu0 0.0
    %3428 = vmatprep.subr.mxu0 0.0
    %3429 = vmatpush2.msra.mxu0 0.0
    %3430 = vmatprep.subr.mxu0 0.0
    %3431 = vmatpush2.msra.mxu0 0.0
    %3432 = vmatprep.subr.mxu0 0.0
    %3433 = vmatpush2.msra.mxu0 0.0
    %3434 = vmatprep.subr.mxu0 0.0
    %3435 = vmatpush2.msra.mxu0 0.0
    %3436 = vmatprep.subr.mxu0 0.0
    %3437 = vmatpush2.msra.mxu0 0.0
    %3438 = vmatprep.subr.mxu0 0.0
    %3439 = vmatpush2.msra.mxu0 0.0
    %3440 = vmatprep.subr.mxu0 0.0
    %3441 = vmatpush2.msra.mxu0 0.0
    %3442 = vmatprep.subr.mxu0 0.0
    %3443 = vmatpush2.msra.mxu0 0.0
    %3444 = vmatprep.subr.mxu0 0.0
    %3445 = vmatpush2.msra.mxu0 0.0
    %3446 = vmatprep.subr.mxu0 0.0
    %3447 = vmatpush2.msra.mxu0 0.0
    %3448 = vmatprep.subr.mxu0 0.0
    %3449 = vmatpush2.msra.mxu0 0.0
    %3450 = vmatprep.subr.mxu0 0.0
    %3451 = vmatpush2.msra.mxu0 0.0
    %3452 = vmatprep.subr.mxu0 0.0
    %3453 = vmatpush2.msra.mxu0 0.0
    %3454 = vmatprep.subr.mxu0 0.0
    %3455 = vmatpush2.msra.mxu0 0.0
    %3456 = vmatprep.mubr.f32.mxu0 0.0
    %3457 = vmatmul.mubr.f32.gmra.mxu0 %v3037
    %v3458 = vpop.f32.mrf.mxu0
    %v3459 = vadd.f32 0.0, %v3458
    %v3460 = vpop.f32.mrf.mxu0
    %3461 = vmatprep.mubr.f32.mxu0 0.0
    %3462 = vmatmul.mubr.f32.gmra.mxu0 %v3040
    %v3463 = vpop.f32.mrf.mxu0
    %v3464 = vadd.f32 0.0, %v3463
    %v3465 = vpop.f32.mrf.mxu0
    %3466 = vmatprep.mubr.f32.mxu0 0.0
    %3467 = vmatmul.mubr.f32.gmra.mxu0 %v3043
    %v3468 = vpop.f32.mrf.mxu0
    %v3469 = vadd.f32 0.0, %v3468
    %v3470 = vpop.f32.mrf.mxu0
    %3471 = vmatprep.mubr.f32.mxu0 0.0
    %3472 = vmatmul.mubr.f32.gmra.mxu0 %v3046
    %v3473 = vpop.f32.mrf.mxu0
    %v3474 = vadd.f32 0.0, %v3473
    %v3475 = vpop.f32.mrf.mxu0
    %3476 = vmatprep.mubr.f32.mxu0 0.0
    %3477 = vmatmul.mubr.f32.gmra.mxu0 %v3049
    %v3478 = vpop.f32.mrf.mxu0
    %v3479 = vadd.f32 0.0, %v3478
    %v3480 = vpop.f32.mrf.mxu0
    %3481 = vmatprep.mubr.f32.mxu0 0.0
    %3482 = vmatmul.mubr.f32.gmra.mxu0 %v3052
    %v3483 = vpop.f32.mrf.mxu0
    %v3484 = vadd.f32 0.0, %v3483
    %v3485 = vpop.f32.mrf.mxu0
    %3486 = vmatprep.mubr.f32.mxu0 0.0
    %3487 = vmatmul.mubr.f32.gmra.mxu0 %v3055
    %v3488 = vpop.f32.mrf.mxu0
    %v3489 = vadd.f32 0.0, %v3488
    %v3490 = vpop.f32.mrf.mxu0
    %3491 = vmatprep.mubr.f32.mxu0 0.0
    %3492 = vmatmul.mubr.f32.gmra.mxu0 %v3387
    %v3493 = vpop.f32.mrf.mxu0
    %v3494 = vadd.f32 0.0, %v3493
    %v3495 = vpop.f32.mrf.mxu0
    %3496 = vmatprep.mubr.f32.mxu0 0.0
    %3497 = vmatmul.mubr.f32.gmra.mxu0 %v3061
    %v3498 = vpop.f32.mrf.mxu0
    %v3499 = vadd.f32 0.0, %v3498
    %v3500 = vpop.f32.mrf.mxu0
    %3501 = vmatprep.mubr.f32.mxu0 0.0
    %3502 = vmatmul.mubr.f32.gmra.mxu0 %v3064
    %v3503 = vpop.f32.mrf.mxu0
    %v3504 = vadd.f32 0.0, %v3503
    %v3505 = vpop.f32.mrf.mxu0
    %3506 = vmatprep.mubr.f32.mxu0 0.0
    %3507 = vmatmul.mubr.f32.gmra.mxu0 %v3067
    %v3508 = vpop.f32.mrf.mxu0
    %v3509 = vadd.f32 0.0, %v3508
    %v3510 = vpop.f32.mrf.mxu0
    %3511 = vmatprep.mubr.f32.mxu0 0.0
    %3512 = vmatmul.mubr.f32.gmra.mxu0 %v3070
    %v3513 = vpop.f32.mrf.mxu0
    %v3514 = vadd.f32 0.0, %v3513
    %v3515 = vpop.f32.mrf.mxu0
    %3516 = vmatprep.mubr.f32.mxu0 0.0
    %3517 = vmatmul.mubr.f32.gmra.mxu0 %v3073
    %v3518 = vpop.f32.mrf.mxu0
    %v3519 = vadd.f32 0.0, %v3518
    %v3520 = vpop.f32.mrf.mxu0
    %3521 = vmatprep.mubr.f32.mxu0 0.0
    %3522 = vmatmul.mubr.f32.gmra.mxu0 %v3076
    %v3523 = vpop.f32.mrf.mxu0
    %v3524 = vadd.f32 0.0, %v3523
    %v3525 = vpop.f32.mrf.mxu0
    %3526 = vmatprep.mubr.f32.mxu0 0.0
    %3527 = vmatmul.mubr.f32.gmra.mxu0 %v3079
    %v3528 = vpop.f32.mrf.mxu0
    %v3529 = vadd.f32 0.0, %v3528
    %v3530 = vpop.f32.mrf.mxu0
    %3531 = vmatprep.mubr.f32.mxu0 0.0
    %3532 = vmatmul.mubr.f32.gmra.mxu0 %v3390
    %v3533 = vpop.f32.mrf.mxu0
    %v3534 = vadd.f32 0.0, %v3533
    %v3535 = vpop.f32.mrf.mxu0
    %3536 = vdwg.mxu0
    %v3537 = vadd.f32 %v3299, %v3459
    %v3538 = vadd.f32 %v3304, %v3464
    %v3539 = vadd.f32 %v3309, %v3469
    %v3540 = vadd.f32 %v3314, %v3474
    %v3541 = vadd.f32 %v3319, %v3479
    %v3542 = vadd.f32 %v3324, %v3484
    %v3543 = vadd.f32 %v3329, %v3489
    %v3544 = vadd.f32 %v3334, %v3494
    %v3545 = vadd.f32 %v3339, %v3499
    %v3546 = vadd.f32 %v3344, %v3504
    %v3547 = vadd.f32 %v3349, %v3509
    %v3548 = vadd.f32 %v3354, %v3514
    %v3549 = vadd.f32 %v3359, %v3519
    %v3550 = vadd.f32 %v3364, %v3524
    %v3551 = vadd.f32 %v3369, %v3529
    %v3552 = vadd.f32 %v3374, %v3534
    %v3553 = vld [vmem:[#allocation2 + $0x8] sm:$0xff]
    %v3554 = vld [vmem:[#allocation2 + $0x20] sm:$0xff]
    %v3555 = vld [vmem:[#allocation2 + $0x38] sm:$0xff]
    %v3556 = vld [vmem:[#allocation2 + $0x50] sm:$0xff]
    %v3557 = vld [vmem:[#allocation2 + $0x68] sm:$0xff]
    %v3558 = vld [vmem:[#allocation2 + $0x80] sm:$0xff]
    %v3559 = vld [vmem:[#allocation2 + $0x98] sm:$0xff]
    %v3560 = vld [vmem:[#allocation2 + $0xb0] sm:$0xff]
    %v3561 = vld [vmem:[#allocation2 + $0xc8] sm:$0xff]
    %v3562 = vld [vmem:[#allocation2 + $0xe0] sm:$0xff]
    %v3563 = vld [vmem:[#allocation2 + $0xf8] sm:$0xff]
    %v3564 = vld [vmem:[#allocation2 + $0x110] sm:$0xff]
    %v3565 = vld [vmem:[#allocation2 + $0x128] sm:$0xff]
    %v3566 = vld [vmem:[#allocation2 + $0x140] sm:$0xff]
    %v3567 = vld [vmem:[#allocation2 + $0x158] sm:$0xff]
    %v3568 = vld [vmem:[#allocation2 + $0x170] sm:$0xff]
    %v3569 = vld [vmem:[#allocation2 + $0x188] sm:$0xff]
    %v3570 = vld [vmem:[#allocation2 + $0x1a0] sm:$0xff]
    %v3571 = vld [vmem:[#allocation2 + $0x1b8] sm:$0xff]
    %v3572 = vld [vmem:[#allocation2 + $0x1d0] sm:$0xff]
    %s3573 = scalar_lea.vmem %s2, 64
    %v3574 = vld [vmem:[%s3573] sm:$0xff]
    %v3575 = vld [vmem:[%s3573 + $0x8] sm:$0xff]
    %v3576 = vld [vmem:[%s3573 + $0x10] sm:$0xff]
    %v3577 = vld [vmem:[%s3573 + $0x18] sm:$0xff]
    %v3578 = vld [vmem:[%s3573 + $0x20] sm:$0xff]
    %v3579 = vld [vmem:[%s3573 + $0x28] sm:$0xff]
    %v3580 = vld [vmem:[%s3573 + $0x30] sm:$0xff]
    %v3581 = vld [vmem:[%s3573 + $0x38] sm:$0xff]
    %v3583 = vsel %vm50, %v3553, 0
    %v3586 = vsel %vm50, %v3554, 0
    %v3589 = vsel %vm50, %v3555, 0
    %v3592 = vsel %vm50, %v3556, 0
    %v3595 = vsel %vm50, %v3557, 0
    %v3598 = vsel %vm50, %v3558, 0
    %v3601 = vsel %vm50, %v3559, 0
    %v3604 = vsel %vm50, %v3560, 0
    %v3607 = vsel %vm50, %v3563, 0
    %v3610 = vsel %vm50, %v3564, 0
    %v3613 = vsel %vm50, %v3565, 0
    %v3616 = vsel %vm50, %v3566, 0
    %v3619 = vsel %vm50, %v3567, 0
    %v3622 = vsel %vm50, %v3568, 0
    %v3625 = vsel %vm50, %v3569, 0
    %v3628 = vsel %vm50, %v3570, 0
    %3630 = vmatprep.subr.mxu0 0.0
    %3631 = vmatpush1.msra.mxu0 0.0
    %3632 = vmatprep.subr.mxu0 0.0
    %3633 = vmatpush1.msra.mxu0 0.0
    %3634 = vmatprep.subr.mxu0 0.0
    %3635 = vmatpush1.msra.mxu0 0.0
    %3636 = vmatprep.subr.mxu0 0.0
    %3637 = vmatpush1.msra.mxu0 0.0
    %3638 = vmatprep.subr.mxu0 0.0
    %3639 = vmatpush1.msra.mxu0 0.0
    %3640 = vmatprep.subr.mxu0 0.0
    %3641 = vmatpush1.msra.mxu0 0.0
    %3642 = vmatprep.subr.mxu0 0.0
    %3643 = vmatpush1.msra.mxu0 0.0
    %3644 = vmatprep.subr.mxu0 0.0
    %3645 = vmatpush1.msra.mxu0 0.0
    %3646 = vmatprep.subr.mxu0 0.0
    %3647 = vmatpush1.msra.mxu0 %v3581
    %3648 = vmatprep.subr.mxu0 0.0
    %3649 = vmatpush1.msra.mxu0 %v3580
    %3650 = vmatprep.subr.mxu0 0.0
    %3651 = vmatpush1.msra.mxu0 %v3579
    %3652 = vmatprep.subr.mxu0 0.0
    %3653 = vmatpush1.msra.mxu0 %v3578
    %3654 = vmatprep.subr.mxu0 0.0
    %3655 = vmatpush1.msra.mxu0 %v3577
    %3656 = vmatprep.subr.mxu0 0.0
    %3657 = vmatpush1.msra.mxu0 %v3576
    %3658 = vmatprep.subr.mxu0 0.0
    %3659 = vmatpush1.msra.mxu0 %v3575
    %3660 = vmatprep.subr.mxu0 0.0
    %3661 = vmatpush1.msra.mxu0 %v3574
    %3662 = vmatprep.subr.mxu0 0.0
    %3663 = vmatpush2.msra.mxu0 0.0
    %3664 = vmatprep.subr.mxu0 0.0
    %3665 = vmatpush2.msra.mxu0 0.0
    %3666 = vmatprep.subr.mxu0 0.0
    %3667 = vmatpush2.msra.mxu0 0.0
    %3668 = vmatprep.subr.mxu0 0.0
    %3669 = vmatpush2.msra.mxu0 0.0
    %3670 = vmatprep.subr.mxu0 0.0
    %3671 = vmatpush2.msra.mxu0 0.0
    %3672 = vmatprep.subr.mxu0 0.0
    %3673 = vmatpush2.msra.mxu0 0.0
    %3674 = vmatprep.subr.mxu0 0.0
    %3675 = vmatpush2.msra.mxu0 0.0
    %3676 = vmatprep.subr.mxu0 0.0
    %3677 = vmatpush2.msra.mxu0 0.0
    %3678 = vmatprep.subr.mxu0 0.0
    %3679 = vmatpush2.msra.mxu0 0.0
    %3680 = vmatprep.subr.mxu0 0.0
    %3681 = vmatpush2.msra.mxu0 0.0
    %3682 = vmatprep.subr.mxu0 0.0
    %3683 = vmatpush2.msra.mxu0 0.0
    %3684 = vmatprep.subr.mxu0 0.0
    %3685 = vmatpush2.msra.mxu0 0.0
    %3686 = vmatprep.subr.mxu0 0.0
    %3687 = vmatpush2.msra.mxu0 0.0
    %3688 = vmatprep.subr.mxu0 0.0
    %3689 = vmatpush2.msra.mxu0 0.0
    %3690 = vmatprep.subr.mxu0 0.0
    %3691 = vmatpush2.msra.mxu0 0.0
    %3692 = vmatprep.subr.mxu0 0.0
    %3693 = vmatpush2.msra.mxu0 0.0
    %3694 = vmatprep.mubr.f32.mxu0 0.0
    %3695 = vmatmul.mubr.f32.gmra.mxu0 %v3583
    %v3696 = vpop.f32.mrf.mxu0
    %v3697 = vadd.f32 0.0, %v3696
    %v3698 = vpop.f32.mrf.mxu0
    %3699 = vmatprep.mubr.f32.mxu0 0.0
    %3700 = vmatmul.mubr.f32.gmra.mxu0 %v3586
    %v3701 = vpop.f32.mrf.mxu0
    %v3702 = vadd.f32 0.0, %v3701
    %v3703 = vpop.f32.mrf.mxu0
    %3704 = vmatprep.mubr.f32.mxu0 0.0
    %3705 = vmatmul.mubr.f32.gmra.mxu0 %v3589
    %v3706 = vpop.f32.mrf.mxu0
    %v3707 = vadd.f32 0.0, %v3706
    %v3708 = vpop.f32.mrf.mxu0
    %3709 = vmatprep.mubr.f32.mxu0 0.0
    %3710 = vmatmul.mubr.f32.gmra.mxu0 %v3592
    %v3711 = vpop.f32.mrf.mxu0
    %v3712 = vadd.f32 0.0, %v3711
    %v3713 = vpop.f32.mrf.mxu0
    %3714 = vmatprep.mubr.f32.mxu0 0.0
    %3715 = vmatmul.mubr.f32.gmra.mxu0 %v3595
    %v3716 = vpop.f32.mrf.mxu0
    %v3717 = vadd.f32 0.0, %v3716
    %v3718 = vpop.f32.mrf.mxu0
    %3719 = vmatprep.mubr.f32.mxu0 0.0
    %3720 = vmatmul.mubr.f32.gmra.mxu0 %v3598
    %v3721 = vpop.f32.mrf.mxu0
    %v3722 = vadd.f32 0.0, %v3721
    %v3723 = vpop.f32.mrf.mxu0
    %3724 = vmatprep.mubr.f32.mxu0 0.0
    %3725 = vmatmul.mubr.f32.gmra.mxu0 %v3601
    %v3726 = vpop.f32.mrf.mxu0
    %v3727 = vadd.f32 0.0, %v3726
    %v3728 = vpop.f32.mrf.mxu0
    %3729 = vmatprep.mubr.f32.mxu0 0.0
    %3730 = vmatmul.mubr.f32.gmra.mxu0 %v3604
    %v3731 = vpop.f32.mrf.mxu0
    %v3732 = vadd.f32 0.0, %v3731
    %v3733 = vpop.f32.mrf.mxu0
    %3734 = vmatprep.mubr.f32.mxu0 0.0
    %3735 = vmatmul.mubr.f32.gmra.mxu0 %v3607
    %v3736 = vpop.f32.mrf.mxu0
    %v3737 = vadd.f32 0.0, %v3736
    %v3738 = vpop.f32.mrf.mxu0
    %3739 = vmatprep.mubr.f32.mxu0 0.0
    %3740 = vmatmul.mubr.f32.gmra.mxu0 %v3610
    %v3741 = vpop.f32.mrf.mxu0
    %v3742 = vadd.f32 0.0, %v3741
    %v3743 = vpop.f32.mrf.mxu0
    %3744 = vmatprep.mubr.f32.mxu0 0.0
    %3745 = vmatmul.mubr.f32.gmra.mxu0 %v3613
    %v3746 = vpop.f32.mrf.mxu0
    %v3747 = vadd.f32 0.0, %v3746
    %v3748 = vpop.f32.mrf.mxu0
    %3749 = vmatprep.mubr.f32.mxu0 0.0
    %3750 = vmatmul.mubr.f32.gmra.mxu0 %v3616
    %v3751 = vpop.f32.mrf.mxu0
    %v3752 = vadd.f32 0.0, %v3751
    %v3753 = vpop.f32.mrf.mxu0
    %3754 = vmatprep.mubr.f32.mxu0 0.0
    %3755 = vmatmul.mubr.f32.gmra.mxu0 %v3619
    %v3756 = vpop.f32.mrf.mxu0
    %v3757 = vadd.f32 0.0, %v3756
    %v3758 = vpop.f32.mrf.mxu0
    %3759 = vmatprep.mubr.f32.mxu0 0.0
    %3760 = vmatmul.mubr.f32.gmra.mxu0 %v3622
    %v3761 = vpop.f32.mrf.mxu0
    %v3762 = vadd.f32 0.0, %v3761
    %v3763 = vpop.f32.mrf.mxu0
    %3764 = vmatprep.mubr.f32.mxu0 0.0
    %3765 = vmatmul.mubr.f32.gmra.mxu0 %v3625
    %v3766 = vpop.f32.mrf.mxu0
    %v3767 = vadd.f32 0.0, %v3766
    %v3768 = vpop.f32.mrf.mxu0
    %3769 = vmatprep.mubr.f32.mxu0 0.0
    %3770 = vmatmul.mubr.f32.gmra.mxu0 %v3628
    %v3771 = vpop.f32.mrf.mxu0
    %v3772 = vadd.f32 0.0, %v3771
    %v3773 = vpop.f32.mrf.mxu0
    %3774 = vdwg.mxu0
    %v3775 = vadd.f32 %v3537, %v3697
    %v3776 = vadd.f32 %v3538, %v3702
    %v3777 = vadd.f32 %v3539, %v3707
    %v3778 = vadd.f32 %v3540, %v3712
    %v3779 = vadd.f32 %v3541, %v3717
    %v3780 = vadd.f32 %v3542, %v3722
    %v3781 = vadd.f32 %v3543, %v3727
    %v3782 = vadd.f32 %v3544, %v3732
    %v3783 = vadd.f32 %v3545, %v3737
    %v3784 = vadd.f32 %v3546, %v3742
    %v3785 = vadd.f32 %v3547, %v3747
    %v3786 = vadd.f32 %v3548, %v3752
    %v3787 = vadd.f32 %v3549, %v3757
    %v3788 = vadd.f32 %v3550, %v3762
    %v3789 = vadd.f32 %v3551, %v3767
    %v3790 = vadd.f32 %v3552, %v3772
    %s3791 = scalar_lea.vmem %s2, 256
    %v3792 = vld [vmem:[%s3791] sm:$0xff]
    %v3793 = vld [vmem:[%s3791 + $0x8] sm:$0xff]
    %v3794 = vld [vmem:[%s3791 + $0x10] sm:$0xff]
    %v3795 = vld [vmem:[%s3791 + $0x18] sm:$0xff]
    %v3796 = vld [vmem:[%s3791 + $0x20] sm:$0xff]
    %v3797 = vld [vmem:[%s3791 + $0x28] sm:$0xff]
    %v3798 = vld [vmem:[%s3791 + $0x30] sm:$0xff]
    %v3799 = vld [vmem:[%s3791 + $0x38] sm:$0xff]
    %v3801 = vsel %vm50, %v3561, 0
    %v3804 = vsel %vm50, %v3571, 0
    %3806 = vmatprep.subr.mxu0 0.0
    %3807 = vmatpush1.msra.mxu0 0.0
    %3808 = vmatprep.subr.mxu0 0.0
    %3809 = vmatpush1.msra.mxu0 0.0
    %3810 = vmatprep.subr.mxu0 0.0
    %3811 = vmatpush1.msra.mxu0 0.0
    %3812 = vmatprep.subr.mxu0 0.0
    %3813 = vmatpush1.msra.mxu0 0.0
    %3814 = vmatprep.subr.mxu0 0.0
    %3815 = vmatpush1.msra.mxu0 0.0
    %3816 = vmatprep.subr.mxu0 0.0
    %3817 = vmatpush1.msra.mxu0 0.0
    %3818 = vmatprep.subr.mxu0 0.0
    %3819 = vmatpush1.msra.mxu0 0.0
    %3820 = vmatprep.subr.mxu0 0.0
    %3821 = vmatpush1.msra.mxu0 0.0
    %3822 = vmatprep.subr.mxu0 0.0
    %3823 = vmatpush1.msra.mxu0 %v3799
    %3824 = vmatprep.subr.mxu0 0.0
    %3825 = vmatpush1.msra.mxu0 %v3798
    %3826 = vmatprep.subr.mxu0 0.0
    %3827 = vmatpush1.msra.mxu0 %v3797
    %3828 = vmatprep.subr.mxu0 0.0
    %3829 = vmatpush1.msra.mxu0 %v3796
    %3830 = vmatprep.subr.mxu0 0.0
    %3831 = vmatpush1.msra.mxu0 %v3795
    %3832 = vmatprep.subr.mxu0 0.0
    %3833 = vmatpush1.msra.mxu0 %v3794
    %3834 = vmatprep.subr.mxu0 0.0
    %3835 = vmatpush1.msra.mxu0 %v3793
    %3836 = vmatprep.subr.mxu0 0.0
    %3837 = vmatpush1.msra.mxu0 %v3792
    %3838 = vmatprep.subr.mxu0 0.0
    %3839 = vmatpush2.msra.mxu0 0.0
    %3840 = vmatprep.subr.mxu0 0.0
    %3841 = vmatpush2.msra.mxu0 0.0
    %3842 = vmatprep.subr.mxu0 0.0
    %3843 = vmatpush2.msra.mxu0 0.0
    %3844 = vmatprep.subr.mxu0 0.0
    %3845 = vmatpush2.msra.mxu0 0.0
    %3846 = vmatprep.subr.mxu0 0.0
    %3847 = vmatpush2.msra.mxu0 0.0
    %3848 = vmatprep.subr.mxu0 0.0
    %3849 = vmatpush2.msra.mxu0 0.0
    %3850 = vmatprep.subr.mxu0 0.0
    %3851 = vmatpush2.msra.mxu0 0.0
    %3852 = vmatprep.subr.mxu0 0.0
    %3853 = vmatpush2.msra.mxu0 0.0
    %3854 = vmatprep.subr.mxu0 0.0
    %3855 = vmatpush2.msra.mxu0 0.0
    %3856 = vmatprep.subr.mxu0 0.0
    %3857 = vmatpush2.msra.mxu0 0.0
    %3858 = vmatprep.subr.mxu0 0.0
    %3859 = vmatpush2.msra.mxu0 0.0
    %3860 = vmatprep.subr.mxu0 0.0
    %3861 = vmatpush2.msra.mxu0 0.0
    %3862 = vmatprep.subr.mxu0 0.0
    %3863 = vmatpush2.msra.mxu0 0.0
    %3864 = vmatprep.subr.mxu0 0.0
    %3865 = vmatpush2.msra.mxu0 0.0
    %3866 = vmatprep.subr.mxu0 0.0
    %3867 = vmatpush2.msra.mxu0 0.0
    %3868 = vmatprep.subr.mxu0 0.0
    %3869 = vmatpush2.msra.mxu0 0.0
    %3870 = vmatprep.mubr.f32.mxu0 0.0
    %3871 = vmatmul.mubr.f32.gmra.mxu0 %v3586
    %v3872 = vpop.f32.mrf.mxu0
    %v3873 = vadd.f32 0.0, %v3872
    %v3874 = vpop.f32.mrf.mxu0
    %3875 = vmatprep.mubr.f32.mxu0 0.0
    %3876 = vmatmul.mubr.f32.gmra.mxu0 %v3589
    %v3877 = vpop.f32.mrf.mxu0
    %v3878 = vadd.f32 0.0, %v3877
    %v3879 = vpop.f32.mrf.mxu0
    %3880 = vmatprep.mubr.f32.mxu0 0.0
    %3881 = vmatmul.mubr.f32.gmra.mxu0 %v3592
    %v3882 = vpop.f32.mrf.mxu0
    %v3883 = vadd.f32 0.0, %v3882
    %v3884 = vpop.f32.mrf.mxu0
    %3885 = vmatprep.mubr.f32.mxu0 0.0
    %3886 = vmatmul.mubr.f32.gmra.mxu0 %v3595
    %v3887 = vpop.f32.mrf.mxu0
    %v3888 = vadd.f32 0.0, %v3887
    %v3889 = vpop.f32.mrf.mxu0
    %3890 = vmatprep.mubr.f32.mxu0 0.0
    %3891 = vmatmul.mubr.f32.gmra.mxu0 %v3598
    %v3892 = vpop.f32.mrf.mxu0
    %v3893 = vadd.f32 0.0, %v3892
    %v3894 = vpop.f32.mrf.mxu0
    %3895 = vmatprep.mubr.f32.mxu0 0.0
    %3896 = vmatmul.mubr.f32.gmra.mxu0 %v3601
    %v3897 = vpop.f32.mrf.mxu0
    %v3898 = vadd.f32 0.0, %v3897
    %v3899 = vpop.f32.mrf.mxu0
    %3900 = vmatprep.mubr.f32.mxu0 0.0
    %3901 = vmatmul.mubr.f32.gmra.mxu0 %v3604
    %v3902 = vpop.f32.mrf.mxu0
    %v3903 = vadd.f32 0.0, %v3902
    %v3904 = vpop.f32.mrf.mxu0
    %3905 = vmatprep.mubr.f32.mxu0 0.0
    %3906 = vmatmul.mubr.f32.gmra.mxu0 %v3801
    %v3907 = vpop.f32.mrf.mxu0
    %v3908 = vadd.f32 0.0, %v3907
    %v3909 = vpop.f32.mrf.mxu0
    %3910 = vmatprep.mubr.f32.mxu0 0.0
    %3911 = vmatmul.mubr.f32.gmra.mxu0 %v3610
    %v3912 = vpop.f32.mrf.mxu0
    %v3913 = vadd.f32 0.0, %v3912
    %v3914 = vpop.f32.mrf.mxu0
    %3915 = vmatprep.mubr.f32.mxu0 0.0
    %3916 = vmatmul.mubr.f32.gmra.mxu0 %v3613
    %v3917 = vpop.f32.mrf.mxu0
    %v3918 = vadd.f32 0.0, %v3917
    %v3919 = vpop.f32.mrf.mxu0
    %3920 = vmatprep.mubr.f32.mxu0 0.0
    %3921 = vmatmul.mubr.f32.gmra.mxu0 %v3616
    %v3922 = vpop.f32.mrf.mxu0
    %v3923 = vadd.f32 0.0, %v3922
    %v3924 = vpop.f32.mrf.mxu0
    %3925 = vmatprep.mubr.f32.mxu0 0.0
    %3926 = vmatmul.mubr.f32.gmra.mxu0 %v3619
    %v3927 = vpop.f32.mrf.mxu0
    %v3928 = vadd.f32 0.0, %v3927
    %v3929 = vpop.f32.mrf.mxu0
    %3930 = vmatprep.mubr.f32.mxu0 0.0
    %3931 = vmatmul.mubr.f32.gmra.mxu0 %v3622
    %v3932 = vpop.f32.mrf.mxu0
    %v3933 = vadd.f32 0.0, %v3932
    %v3934 = vpop.f32.mrf.mxu0
    %3935 = vmatprep.mubr.f32.mxu0 0.0
    %3936 = vmatmul.mubr.f32.gmra.mxu0 %v3625
    %v3937 = vpop.f32.mrf.mxu0
    %v3938 = vadd.f32 0.0, %v3937
    %v3939 = vpop.f32.mrf.mxu0
    %3940 = vmatprep.mubr.f32.mxu0 0.0
    %3941 = vmatmul.mubr.f32.gmra.mxu0 %v3628
    %v3942 = vpop.f32.mrf.mxu0
    %v3943 = vadd.f32 0.0, %v3942
    %v3944 = vpop.f32.mrf.mxu0
    %3945 = vmatprep.mubr.f32.mxu0 0.0
    %3946 = vmatmul.mubr.f32.gmra.mxu0 %v3804
    %v3947 = vpop.f32.mrf.mxu0
    %v3948 = vadd.f32 0.0, %v3947
    %v3949 = vpop.f32.mrf.mxu0
    %3950 = vdwg.mxu0
    %v3951 = vadd.f32 %v3775, %v3873
    %v3952 = vadd.f32 %v3776, %v3878
    %v3953 = vadd.f32 %v3777, %v3883
    %v3954 = vadd.f32 %v3778, %v3888
    %v3955 = vadd.f32 %v3779, %v3893
    %v3956 = vadd.f32 %v3780, %v3898
    %v3957 = vadd.f32 %v3781, %v3903
    %v3958 = vadd.f32 %v3782, %v3908
    %v3959 = vadd.f32 %v3783, %v3913
    %v3960 = vadd.f32 %v3784, %v3918
    %v3961 = vadd.f32 %v3785, %v3923
    %v3962 = vadd.f32 %v3786, %v3928
    %v3963 = vadd.f32 %v3787, %v3933
    %v3964 = vadd.f32 %v3788, %v3938
    %v3965 = vadd.f32 %v3789, %v3943
    %v3966 = vadd.f32 %v3790, %v3948
    %s3967 = scalar_lea.vmem %s2, 448
    %v3968 = vld [vmem:[%s3967] sm:$0xff]
    %v3969 = vld [vmem:[%s3967 + $0x8] sm:$0xff]
    %v3970 = vld [vmem:[%s3967 + $0x10] sm:$0xff]
    %v3971 = vld [vmem:[%s3967 + $0x18] sm:$0xff]
    %v3972 = vld [vmem:[%s3967 + $0x20] sm:$0xff]
    %v3973 = vld [vmem:[%s3967 + $0x28] sm:$0xff]
    %v3974 = vld [vmem:[%s3967 + $0x30] sm:$0xff]
    %v3975 = vld [vmem:[%s3967 + $0x38] sm:$0xff]
    %v3977 = vsel %vm50, %v3562, 0
    %v3980 = vsel %vm50, %v3572, 0
    %3982 = vmatprep.subr.mxu0 0.0
    %3983 = vmatpush1.msra.mxu0 0.0
    %3984 = vmatprep.subr.mxu0 0.0
    %3985 = vmatpush1.msra.mxu0 0.0
    %3986 = vmatprep.subr.mxu0 0.0
    %3987 = vmatpush1.msra.mxu0 0.0
    %3988 = vmatprep.subr.mxu0 0.0
    %3989 = vmatpush1.msra.mxu0 0.0
    %3990 = vmatprep.subr.mxu0 0.0
    %3991 = vmatpush1.msra.mxu0 0.0
    %3992 = vmatprep.subr.mxu0 0.0
    %3993 = vmatpush1.msra.mxu0 0.0
    %3994 = vmatprep.subr.mxu0 0.0
    %3995 = vmatpush1.msra.mxu0 0.0
    %3996 = vmatprep.subr.mxu0 0.0
    %3997 = vmatpush1.msra.mxu0 0.0
    %3998 = vmatprep.subr.mxu0 0.0
    %3999 = vmatpush1.msra.mxu0 %v3975
    %4000 = vmatprep.subr.mxu0 0.0
    %4001 = vmatpush1.msra.mxu0 %v3974
    %4002 = vmatprep.subr.mxu0 0.0
    %4003 = vmatpush1.msra.mxu0 %v3973
    %4004 = vmatprep.subr.mxu0 0.0
    %4005 = vmatpush1.msra.mxu0 %v3972
    %4006 = vmatprep.subr.mxu0 0.0
    %4007 = vmatpush1.msra.mxu0 %v3971
    %4008 = vmatprep.subr.mxu0 0.0
    %4009 = vmatpush1.msra.mxu0 %v3970
    %4010 = vmatprep.subr.mxu0 0.0
    %4011 = vmatpush1.msra.mxu0 %v3969
    %4012 = vmatprep.subr.mxu0 0.0
    %4013 = vmatpush1.msra.mxu0 %v3968
    %4014 = vmatprep.subr.mxu0 0.0
    %4015 = vmatpush2.msra.mxu0 0.0
    %4016 = vmatprep.subr.mxu0 0.0
    %4017 = vmatpush2.msra.mxu0 0.0
    %4018 = vmatprep.subr.mxu0 0.0
    %4019 = vmatpush2.msra.mxu0 0.0
    %4020 = vmatprep.subr.mxu0 0.0
    %4021 = vmatpush2.msra.mxu0 0.0
    %4022 = vmatprep.subr.mxu0 0.0
    %4023 = vmatpush2.msra.mxu0 0.0
    %4024 = vmatprep.subr.mxu0 0.0
    %4025 = vmatpush2.msra.mxu0 0.0
    %4026 = vmatprep.subr.mxu0 0.0
    %4027 = vmatpush2.msra.mxu0 0.0
    %4028 = vmatprep.subr.mxu0 0.0
    %4029 = vmatpush2.msra.mxu0 0.0
    %4030 = vmatprep.subr.mxu0 0.0
    %4031 = vmatpush2.msra.mxu0 0.0
    %4032 = vmatprep.subr.mxu0 0.0
    %4033 = vmatpush2.msra.mxu0 0.0
    %4034 = vmatprep.subr.mxu0 0.0
    %4035 = vmatpush2.msra.mxu0 0.0
    %4036 = vmatprep.subr.mxu0 0.0
    %4037 = vmatpush2.msra.mxu0 0.0
    %4038 = vmatprep.subr.mxu0 0.0
    %4039 = vmatpush2.msra.mxu0 0.0
    %4040 = vmatprep.subr.mxu0 0.0
    %4041 = vmatpush2.msra.mxu0 0.0
    %4042 = vmatprep.subr.mxu0 0.0
    %4043 = vmatpush2.msra.mxu0 0.0
    %4044 = vmatprep.subr.mxu0 0.0
    %4045 = vmatpush2.msra.mxu0 0.0
    %4046 = vmatprep.mubr.f32.mxu0 0.0
    %4047 = vmatmul.mubr.f32.gmra.mxu0 %v3589
    %v4048 = vpop.f32.mrf.mxu0
    %v4049 = vadd.f32 0.0, %v4048
    %v4050 = vpop.f32.mrf.mxu0
    %4051 = vmatprep.mubr.f32.mxu0 0.0
    %4052 = vmatmul.mubr.f32.gmra.mxu0 %v3592
    %v4053 = vpop.f32.mrf.mxu0
    %v4054 = vadd.f32 0.0, %v4053
    %v4055 = vpop.f32.mrf.mxu0
    %4056 = vmatprep.mubr.f32.mxu0 0.0
    %4057 = vmatmul.mubr.f32.gmra.mxu0 %v3595
    %v4058 = vpop.f32.mrf.mxu0
    %v4059 = vadd.f32 0.0, %v4058
    %v4060 = vpop.f32.mrf.mxu0
    %4061 = vmatprep.mubr.f32.mxu0 0.0
    %4062 = vmatmul.mubr.f32.gmra.mxu0 %v3598
    %v4063 = vpop.f32.mrf.mxu0
    %v4064 = vadd.f32 0.0, %v4063
    %v4065 = vpop.f32.mrf.mxu0
    %4066 = vmatprep.mubr.f32.mxu0 0.0
    %4067 = vmatmul.mubr.f32.gmra.mxu0 %v3601
    %v4068 = vpop.f32.mrf.mxu0
    %v4069 = vadd.f32 0.0, %v4068
    %v4070 = vpop.f32.mrf.mxu0
    %4071 = vmatprep.mubr.f32.mxu0 0.0
    %4072 = vmatmul.mubr.f32.gmra.mxu0 %v3604
    %v4073 = vpop.f32.mrf.mxu0
    %v4074 = vadd.f32 0.0, %v4073
    %v4075 = vpop.f32.mrf.mxu0
    %4076 = vmatprep.mubr.f32.mxu0 0.0
    %4077 = vmatmul.mubr.f32.gmra.mxu0 %v3801
    %v4078 = vpop.f32.mrf.mxu0
    %v4079 = vadd.f32 0.0, %v4078
    %v4080 = vpop.f32.mrf.mxu0
    %4081 = vmatprep.mubr.f32.mxu0 0.0
    %4082 = vmatmul.mubr.f32.gmra.mxu0 %v3977
    %v4083 = vpop.f32.mrf.mxu0
    %v4084 = vadd.f32 0.0, %v4083
    %v4085 = vpop.f32.mrf.mxu0
    %4086 = vmatprep.mubr.f32.mxu0 0.0
    %4087 = vmatmul.mubr.f32.gmra.mxu0 %v3613
    %v4088 = vpop.f32.mrf.mxu0
    %v4089 = vadd.f32 0.0, %v4088
    %v4090 = vpop.f32.mrf.mxu0
    %4091 = vmatprep.mubr.f32.mxu0 0.0
    %4092 = vmatmul.mubr.f32.gmra.mxu0 %v3616
    %v4093 = vpop.f32.mrf.mxu0
    %v4094 = vadd.f32 0.0, %v4093
    %v4095 = vpop.f32.mrf.mxu0
    %4096 = vmatprep.mubr.f32.mxu0 0.0
    %4097 = vmatmul.mubr.f32.gmra.mxu0 %v3619
    %v4098 = vpop.f32.mrf.mxu0
    %v4099 = vadd.f32 0.0, %v4098
    %v4100 = vpop.f32.mrf.mxu0
    %4101 = vmatprep.mubr.f32.mxu0 0.0
    %4102 = vmatmul.mubr.f32.gmra.mxu0 %v3622
    %v4103 = vpop.f32.mrf.mxu0
    %v4104 = vadd.f32 0.0, %v4103
    %v4105 = vpop.f32.mrf.mxu0
    %4106 = vmatprep.mubr.f32.mxu0 0.0
    %4107 = vmatmul.mubr.f32.gmra.mxu0 %v3625
    %v4108 = vpop.f32.mrf.mxu0
    %v4109 = vadd.f32 0.0, %v4108
    %v4110 = vpop.f32.mrf.mxu0
    %4111 = vmatprep.mubr.f32.mxu0 0.0
    %4112 = vmatmul.mubr.f32.gmra.mxu0 %v3628
    %v4113 = vpop.f32.mrf.mxu0
    %v4114 = vadd.f32 0.0, %v4113
    %v4115 = vpop.f32.mrf.mxu0
    %4116 = vmatprep.mubr.f32.mxu0 0.0
    %4117 = vmatmul.mubr.f32.gmra.mxu0 %v3804
    %v4118 = vpop.f32.mrf.mxu0
    %v4119 = vadd.f32 0.0, %v4118
    %v4120 = vpop.f32.mrf.mxu0
    %4121 = vmatprep.mubr.f32.mxu0 0.0
    %4122 = vmatmul.mubr.f32.gmra.mxu0 %v3980
    %v4123 = vpop.f32.mrf.mxu0
    %v4124 = vadd.f32 0.0, %v4123
    %v4125 = vpop.f32.mrf.mxu0
    %4126 = vdwg.mxu0
    %v4127 = vadd.f32 %v3951, %v4049
    %v4128 = vadd.f32 %v3952, %v4054
    %v4129 = vadd.f32 %v3953, %v4059
    %v4130 = vadd.f32 %v3954, %v4064
    %v4131 = vadd.f32 %v3955, %v4069
    %v4132 = vadd.f32 %v3956, %v4074
    %v4133 = vadd.f32 %v3957, %v4079
    %v4134 = vadd.f32 %v3958, %v4084
    %v4135 = vadd.f32 %v3959, %v4089
    %v4136 = vadd.f32 %v3960, %v4094
    %v4137 = vadd.f32 %v3961, %v4099
    %v4138 = vadd.f32 %v3962, %v4104
    %v4139 = vadd.f32 %v3963, %v4109
    %v4140 = vadd.f32 %v3964, %v4114
    %v4141 = vadd.f32 %v3965, %v4119
    %v4142 = vadd.f32 %v3966, %v4124
    %v4143 = vld [vmem:[#allocation2 + $0x9] sm:$0xff]
    %v4144 = vld [vmem:[#allocation2 + $0x21] sm:$0xff]
    %v4145 = vld [vmem:[#allocation2 + $0x39] sm:$0xff]
    %v4146 = vld [vmem:[#allocation2 + $0x51] sm:$0xff]
    %v4147 = vld [vmem:[#allocation2 + $0x69] sm:$0xff]
    %v4148 = vld [vmem:[#allocation2 + $0x81] sm:$0xff]
    %v4149 = vld [vmem:[#allocation2 + $0x99] sm:$0xff]
    %v4150 = vld [vmem:[#allocation2 + $0xb1] sm:$0xff]
    %v4151 = vld [vmem:[#allocation2 + $0xc9] sm:$0xff]
    %v4152 = vld [vmem:[#allocation2 + $0xe1] sm:$0xff]
    %v4153 = vld [vmem:[#allocation2 + $0xf9] sm:$0xff]
    %v4154 = vld [vmem:[#allocation2 + $0x111] sm:$0xff]
    %v4155 = vld [vmem:[#allocation2 + $0x129] sm:$0xff]
    %v4156 = vld [vmem:[#allocation2 + $0x141] sm:$0xff]
    %v4157 = vld [vmem:[#allocation2 + $0x159] sm:$0xff]
    %v4158 = vld [vmem:[#allocation2 + $0x171] sm:$0xff]
    %v4159 = vld [vmem:[#allocation2 + $0x189] sm:$0xff]
    %v4160 = vld [vmem:[#allocation2 + $0x1a1] sm:$0xff]
    %v4161 = vld [vmem:[#allocation2 + $0x1b9] sm:$0xff]
    %v4162 = vld [vmem:[#allocation2 + $0x1d1] sm:$0xff]
    %s4163 = scalar_lea.vmem %s2, 128
    %v4164 = vld [vmem:[%s4163] sm:$0xff]
    %v4165 = vld [vmem:[%s4163 + $0x8] sm:$0xff]
    %v4166 = vld [vmem:[%s4163 + $0x10] sm:$0xff]
    %v4167 = vld [vmem:[%s4163 + $0x18] sm:$0xff]
    %v4168 = vld [vmem:[%s4163 + $0x20] sm:$0xff]
    %v4169 = vld [vmem:[%s4163 + $0x28] sm:$0xff]
    %v4170 = vld [vmem:[%s4163 + $0x30] sm:$0xff]
    %v4171 = vld [vmem:[%s4163 + $0x38] sm:$0xff]
    %v4173 = vsel %vm50, %v4143, 0
    %v4176 = vsel %vm50, %v4144, 0
    %v4179 = vsel %vm50, %v4145, 0
    %v4182 = vsel %vm50, %v4146, 0
    %v4185 = vsel %vm50, %v4147, 0
    %v4188 = vsel %vm50, %v4148, 0
    %v4191 = vsel %vm50, %v4149, 0
    %v4194 = vsel %vm50, %v4150, 0
    %v4197 = vsel %vm50, %v4153, 0
    %v4200 = vsel %vm50, %v4154, 0
    %v4203 = vsel %vm50, %v4155, 0
    %v4206 = vsel %vm50, %v4156, 0
    %v4209 = vsel %vm50, %v4157, 0
    %v4212 = vsel %vm50, %v4158, 0
    %v4215 = vsel %vm50, %v4159, 0
    %v4218 = vsel %vm50, %v4160, 0
    %4220 = vmatprep.subr.mxu0 0.0
    %4221 = vmatpush1.msra.mxu0 0.0
    %4222 = vmatprep.subr.mxu0 0.0
    %4223 = vmatpush1.msra.mxu0 0.0
    %4224 = vmatprep.subr.mxu0 0.0
    %4225 = vmatpush1.msra.mxu0 0.0
    %4226 = vmatprep.subr.mxu0 0.0
    %4227 = vmatpush1.msra.mxu0 0.0
    %4228 = vmatprep.subr.mxu0 0.0
    %4229 = vmatpush1.msra.mxu0 0.0
    %4230 = vmatprep.subr.mxu0 0.0
    %4231 = vmatpush1.msra.mxu0 0.0
    %4232 = vmatprep.subr.mxu0 0.0
    %4233 = vmatpush1.msra.mxu0 0.0
    %4234 = vmatprep.subr.mxu0 0.0
    %4235 = vmatpush1.msra.mxu0 0.0
    %4236 = vmatprep.subr.mxu0 0.0
    %4237 = vmatpush1.msra.mxu0 %v4171
    %4238 = vmatprep.subr.mxu0 0.0
    %4239 = vmatpush1.msra.mxu0 %v4170
    %4240 = vmatprep.subr.mxu0 0.0
    %4241 = vmatpush1.msra.mxu0 %v4169
    %4242 = vmatprep.subr.mxu0 0.0
    %4243 = vmatpush1.msra.mxu0 %v4168
    %4244 = vmatprep.subr.mxu0 0.0
    %4245 = vmatpush1.msra.mxu0 %v4167
    %4246 = vmatprep.subr.mxu0 0.0
    %4247 = vmatpush1.msra.mxu0 %v4166
    %4248 = vmatprep.subr.mxu0 0.0
    %4249 = vmatpush1.msra.mxu0 %v4165
    %4250 = vmatprep.subr.mxu0 0.0
    %4251 = vmatpush1.msra.mxu0 %v4164
    %4252 = vmatprep.subr.mxu0 0.0
    %4253 = vmatpush2.msra.mxu0 0.0
    %4254 = vmatprep.subr.mxu0 0.0
    %4255 = vmatpush2.msra.mxu0 0.0
    %4256 = vmatprep.subr.mxu0 0.0
    %4257 = vmatpush2.msra.mxu0 0.0
    %4258 = vmatprep.subr.mxu0 0.0
    %4259 = vmatpush2.msra.mxu0 0.0
    %4260 = vmatprep.subr.mxu0 0.0
    %4261 = vmatpush2.msra.mxu0 0.0
    %4262 = vmatprep.subr.mxu0 0.0
    %4263 = vmatpush2.msra.mxu0 0.0
    %4264 = vmatprep.subr.mxu0 0.0
    %4265 = vmatpush2.msra.mxu0 0.0
    %4266 = vmatprep.subr.mxu0 0.0
    %4267 = vmatpush2.msra.mxu0 0.0
    %4268 = vmatprep.subr.mxu0 0.0
    %4269 = vmatpush2.msra.mxu0 0.0
    %4270 = vmatprep.subr.mxu0 0.0
    %4271 = vmatpush2.msra.mxu0 0.0
    %4272 = vmatprep.subr.mxu0 0.0
    %4273 = vmatpush2.msra.mxu0 0.0
    %4274 = vmatprep.subr.mxu0 0.0
    %4275 = vmatpush2.msra.mxu0 0.0
    %4276 = vmatprep.subr.mxu0 0.0
    %4277 = vmatpush2.msra.mxu0 0.0
    %4278 = vmatprep.subr.mxu0 0.0
    %4279 = vmatpush2.msra.mxu0 0.0
    %4280 = vmatprep.subr.mxu0 0.0
    %4281 = vmatpush2.msra.mxu0 0.0
    %4282 = vmatprep.subr.mxu0 0.0
    %4283 = vmatpush2.msra.mxu0 0.0
    %4284 = vmatprep.mubr.f32.mxu0 0.0
    %4285 = vmatmul.mubr.f32.gmra.mxu0 %v4173
    %v4286 = vpop.f32.mrf.mxu0
    %v4287 = vadd.f32 0.0, %v4286
    %v4288 = vpop.f32.mrf.mxu0
    %4289 = vmatprep.mubr.f32.mxu0 0.0
    %4290 = vmatmul.mubr.f32.gmra.mxu0 %v4176
    %v4291 = vpop.f32.mrf.mxu0
    %v4292 = vadd.f32 0.0, %v4291
    %v4293 = vpop.f32.mrf.mxu0
    %4294 = vmatprep.mubr.f32.mxu0 0.0
    %4295 = vmatmul.mubr.f32.gmra.mxu0 %v4179
    %v4296 = vpop.f32.mrf.mxu0
    %v4297 = vadd.f32 0.0, %v4296
    %v4298 = vpop.f32.mrf.mxu0
    %4299 = vmatprep.mubr.f32.mxu0 0.0
    %4300 = vmatmul.mubr.f32.gmra.mxu0 %v4182
    %v4301 = vpop.f32.mrf.mxu0
    %v4302 = vadd.f32 0.0, %v4301
    %v4303 = vpop.f32.mrf.mxu0
    %4304 = vmatprep.mubr.f32.mxu0 0.0
    %4305 = vmatmul.mubr.f32.gmra.mxu0 %v4185
    %v4306 = vpop.f32.mrf.mxu0
    %v4307 = vadd.f32 0.0, %v4306
    %v4308 = vpop.f32.mrf.mxu0
    %4309 = vmatprep.mubr.f32.mxu0 0.0
    %4310 = vmatmul.mubr.f32.gmra.mxu0 %v4188
    %v4311 = vpop.f32.mrf.mxu0
    %v4312 = vadd.f32 0.0, %v4311
    %v4313 = vpop.f32.mrf.mxu0
    %4314 = vmatprep.mubr.f32.mxu0 0.0
    %4315 = vmatmul.mubr.f32.gmra.mxu0 %v4191
    %v4316 = vpop.f32.mrf.mxu0
    %v4317 = vadd.f32 0.0, %v4316
    %v4318 = vpop.f32.mrf.mxu0
    %4319 = vmatprep.mubr.f32.mxu0 0.0
    %4320 = vmatmul.mubr.f32.gmra.mxu0 %v4194
    %v4321 = vpop.f32.mrf.mxu0
    %v4322 = vadd.f32 0.0, %v4321
    %v4323 = vpop.f32.mrf.mxu0
    %4324 = vmatprep.mubr.f32.mxu0 0.0
    %4325 = vmatmul.mubr.f32.gmra.mxu0 %v4197
    %v4326 = vpop.f32.mrf.mxu0
    %v4327 = vadd.f32 0.0, %v4326
    %v4328 = vpop.f32.mrf.mxu0
    %4329 = vmatprep.mubr.f32.mxu0 0.0
    %4330 = vmatmul.mubr.f32.gmra.mxu0 %v4200
    %v4331 = vpop.f32.mrf.mxu0
    %v4332 = vadd.f32 0.0, %v4331
    %v4333 = vpop.f32.mrf.mxu0
    %4334 = vmatprep.mubr.f32.mxu0 0.0
    %4335 = vmatmul.mubr.f32.gmra.mxu0 %v4203
    %v4336 = vpop.f32.mrf.mxu0
    %v4337 = vadd.f32 0.0, %v4336
    %v4338 = vpop.f32.mrf.mxu0
    %4339 = vmatprep.mubr.f32.mxu0 0.0
    %4340 = vmatmul.mubr.f32.gmra.mxu0 %v4206
    %v4341 = vpop.f32.mrf.mxu0
    %v4342 = vadd.f32 0.0, %v4341
    %v4343 = vpop.f32.mrf.mxu0
    %4344 = vmatprep.mubr.f32.mxu0 0.0
    %4345 = vmatmul.mubr.f32.gmra.mxu0 %v4209
    %v4346 = vpop.f32.mrf.mxu0
    %v4347 = vadd.f32 0.0, %v4346
    %v4348 = vpop.f32.mrf.mxu0
    %4349 = vmatprep.mubr.f32.mxu0 0.0
    %4350 = vmatmul.mubr.f32.gmra.mxu0 %v4212
    %v4351 = vpop.f32.mrf.mxu0
    %v4352 = vadd.f32 0.0, %v4351
    %v4353 = vpop.f32.mrf.mxu0
    %4354 = vmatprep.mubr.f32.mxu0 0.0
    %4355 = vmatmul.mubr.f32.gmra.mxu0 %v4215
    %v4356 = vpop.f32.mrf.mxu0
    %v4357 = vadd.f32 0.0, %v4356
    %v4358 = vpop.f32.mrf.mxu0
    %4359 = vmatprep.mubr.f32.mxu0 0.0
    %4360 = vmatmul.mubr.f32.gmra.mxu0 %v4218
    %v4361 = vpop.f32.mrf.mxu0
    %v4362 = vadd.f32 0.0, %v4361
    %v4363 = vpop.f32.mrf.mxu0
    %4364 = vdwg.mxu0
    %v4365 = vadd.f32 %v4127, %v4287
    %v4366 = vadd.f32 %v4128, %v4292
    %v4367 = vadd.f32 %v4129, %v4297
    %v4368 = vadd.f32 %v4130, %v4302
    %v4369 = vadd.f32 %v4131, %v4307
    %v4370 = vadd.f32 %v4132, %v4312
    %v4371 = vadd.f32 %v4133, %v4317
    %v4372 = vadd.f32 %v4134, %v4322
    %v4373 = vadd.f32 %v4135, %v4327
    %v4374 = vadd.f32 %v4136, %v4332
    %v4375 = vadd.f32 %v4137, %v4337
    %v4376 = vadd.f32 %v4138, %v4342
    %v4377 = vadd.f32 %v4139, %v4347
    %v4378 = vadd.f32 %v4140, %v4352
    %v4379 = vadd.f32 %v4141, %v4357
    %v4380 = vadd.f32 %v4142, %v4362
    %s4381 = scalar_lea.vmem %s2, 320
    %v4382 = vld [vmem:[%s4381] sm:$0xff]
    %v4383 = vld [vmem:[%s4381 + $0x8] sm:$0xff]
    %v4384 = vld [vmem:[%s4381 + $0x10] sm:$0xff]
    %v4385 = vld [vmem:[%s4381 + $0x18] sm:$0xff]
    %v4386 = vld [vmem:[%s4381 + $0x20] sm:$0xff]
    %v4387 = vld [vmem:[%s4381 + $0x28] sm:$0xff]
    %v4388 = vld [vmem:[%s4381 + $0x30] sm:$0xff]
    %v4389 = vld [vmem:[%s4381 + $0x38] sm:$0xff]
    %v4391 = vsel %vm50, %v4151, 0
    %v4394 = vsel %vm50, %v4161, 0
    %4396 = vmatprep.subr.mxu0 0.0
    %4397 = vmatpush1.msra.mxu0 0.0
    %4398 = vmatprep.subr.mxu0 0.0
    %4399 = vmatpush1.msra.mxu0 0.0
    %4400 = vmatprep.subr.mxu0 0.0
    %4401 = vmatpush1.msra.mxu0 0.0
    %4402 = vmatprep.subr.mxu0 0.0
    %4403 = vmatpush1.msra.mxu0 0.0
    %4404 = vmatprep.subr.mxu0 0.0
    %4405 = vmatpush1.msra.mxu0 0.0
    %4406 = vmatprep.subr.mxu0 0.0
    %4407 = vmatpush1.msra.mxu0 0.0
    %4408 = vmatprep.subr.mxu0 0.0
    %4409 = vmatpush1.msra.mxu0 0.0
    %4410 = vmatprep.subr.mxu0 0.0
    %4411 = vmatpush1.msra.mxu0 0.0
    %4412 = vmatprep.subr.mxu0 0.0
    %4413 = vmatpush1.msra.mxu0 %v4389
    %4414 = vmatprep.subr.mxu0 0.0
    %4415 = vmatpush1.msra.mxu0 %v4388
    %4416 = vmatprep.subr.mxu0 0.0
    %4417 = vmatpush1.msra.mxu0 %v4387
    %4418 = vmatprep.subr.mxu0 0.0
    %4419 = vmatpush1.msra.mxu0 %v4386
    %4420 = vmatprep.subr.mxu0 0.0
    %4421 = vmatpush1.msra.mxu0 %v4385
    %4422 = vmatprep.subr.mxu0 0.0
    %4423 = vmatpush1.msra.mxu0 %v4384
    %4424 = vmatprep.subr.mxu0 0.0
    %4425 = vmatpush1.msra.mxu0 %v4383
    %4426 = vmatprep.subr.mxu0 0.0
    %4427 = vmatpush1.msra.mxu0 %v4382
    %4428 = vmatprep.subr.mxu0 0.0
    %4429 = vmatpush2.msra.mxu0 0.0
    %4430 = vmatprep.subr.mxu0 0.0
    %4431 = vmatpush2.msra.mxu0 0.0
    %4432 = vmatprep.subr.mxu0 0.0
    %4433 = vmatpush2.msra.mxu0 0.0
    %4434 = vmatprep.subr.mxu0 0.0
    %4435 = vmatpush2.msra.mxu0 0.0
    %4436 = vmatprep.subr.mxu0 0.0
    %4437 = vmatpush2.msra.mxu0 0.0
    %4438 = vmatprep.subr.mxu0 0.0
    %4439 = vmatpush2.msra.mxu0 0.0
    %4440 = vmatprep.subr.mxu0 0.0
    %4441 = vmatpush2.msra.mxu0 0.0
    %4442 = vmatprep.subr.mxu0 0.0
    %4443 = vmatpush2.msra.mxu0 0.0
    %4444 = vmatprep.subr.mxu0 0.0
    %4445 = vmatpush2.msra.mxu0 0.0
    %4446 = vmatprep.subr.mxu0 0.0
    %4447 = vmatpush2.msra.mxu0 0.0
    %4448 = vmatprep.subr.mxu0 0.0
    %4449 = vmatpush2.msra.mxu0 0.0
    %4450 = vmatprep.subr.mxu0 0.0
    %4451 = vmatpush2.msra.mxu0 0.0
    %4452 = vmatprep.subr.mxu0 0.0
    %4453 = vmatpush2.msra.mxu0 0.0
    %4454 = vmatprep.subr.mxu0 0.0
    %4455 = vmatpush2.msra.mxu0 0.0
    %4456 = vmatprep.subr.mxu0 0.0
    %4457 = vmatpush2.msra.mxu0 0.0
    %4458 = vmatprep.subr.mxu0 0.0
    %4459 = vmatpush2.msra.mxu0 0.0
    %4460 = vmatprep.mubr.f32.mxu0 0.0
    %4461 = vmatmul.mubr.f32.gmra.mxu0 %v4176
    %v4462 = vpop.f32.mrf.mxu0
    %v4463 = vadd.f32 0.0, %v4462
    %v4464 = vpop.f32.mrf.mxu0
    %4465 = vmatprep.mubr.f32.mxu0 0.0
    %4466 = vmatmul.mubr.f32.gmra.mxu0 %v4179
    %v4467 = vpop.f32.mrf.mxu0
    %v4468 = vadd.f32 0.0, %v4467
    %v4469 = vpop.f32.mrf.mxu0
    %4470 = vmatprep.mubr.f32.mxu0 0.0
    %4471 = vmatmul.mubr.f32.gmra.mxu0 %v4182
    %v4472 = vpop.f32.mrf.mxu0
    %v4473 = vadd.f32 0.0, %v4472
    %v4474 = vpop.f32.mrf.mxu0
    %4475 = vmatprep.mubr.f32.mxu0 0.0
    %4476 = vmatmul.mubr.f32.gmra.mxu0 %v4185
    %v4477 = vpop.f32.mrf.mxu0
    %v4478 = vadd.f32 0.0, %v4477
    %v4479 = vpop.f32.mrf.mxu0
    %4480 = vmatprep.mubr.f32.mxu0 0.0
    %4481 = vmatmul.mubr.f32.gmra.mxu0 %v4188
    %v4482 = vpop.f32.mrf.mxu0
    %v4483 = vadd.f32 0.0, %v4482
    %v4484 = vpop.f32.mrf.mxu0
    %4485 = vmatprep.mubr.f32.mxu0 0.0
    %4486 = vmatmul.mubr.f32.gmra.mxu0 %v4191
    %v4487 = vpop.f32.mrf.mxu0
    %v4488 = vadd.f32 0.0, %v4487
    %v4489 = vpop.f32.mrf.mxu0
    %4490 = vmatprep.mubr.f32.mxu0 0.0
    %4491 = vmatmul.mubr.f32.gmra.mxu0 %v4194
    %v4492 = vpop.f32.mrf.mxu0
    %v4493 = vadd.f32 0.0, %v4492
    %v4494 = vpop.f32.mrf.mxu0
    %4495 = vmatprep.mubr.f32.mxu0 0.0
    %4496 = vmatmul.mubr.f32.gmra.mxu0 %v4391
    %v4497 = vpop.f32.mrf.mxu0
    %v4498 = vadd.f32 0.0, %v4497
    %v4499 = vpop.f32.mrf.mxu0
    %4500 = vmatprep.mubr.f32.mxu0 0.0
    %4501 = vmatmul.mubr.f32.gmra.mxu0 %v4200
    %v4502 = vpop.f32.mrf.mxu0
    %v4503 = vadd.f32 0.0, %v4502
    %v4504 = vpop.f32.mrf.mxu0
    %4505 = vmatprep.mubr.f32.mxu0 0.0
    %4506 = vmatmul.mubr.f32.gmra.mxu0 %v4203
    %v4507 = vpop.f32.mrf.mxu0
    %v4508 = vadd.f32 0.0, %v4507
    %v4509 = vpop.f32.mrf.mxu0
    %4510 = vmatprep.mubr.f32.mxu0 0.0
    %4511 = vmatmul.mubr.f32.gmra.mxu0 %v4206
    %v4512 = vpop.f32.mrf.mxu0
    %v4513 = vadd.f32 0.0, %v4512
    %v4514 = vpop.f32.mrf.mxu0
    %4515 = vmatprep.mubr.f32.mxu0 0.0
    %4516 = vmatmul.mubr.f32.gmra.mxu0 %v4209
    %v4517 = vpop.f32.mrf.mxu0
    %v4518 = vadd.f32 0.0, %v4517
    %v4519 = vpop.f32.mrf.mxu0
    %4520 = vmatprep.mubr.f32.mxu0 0.0
    %4521 = vmatmul.mubr.f32.gmra.mxu0 %v4212
    %v4522 = vpop.f32.mrf.mxu0
    %v4523 = vadd.f32 0.0, %v4522
    %v4524 = vpop.f32.mrf.mxu0
    %4525 = vmatprep.mubr.f32.mxu0 0.0
    %4526 = vmatmul.mubr.f32.gmra.mxu0 %v4215
    %v4527 = vpop.f32.mrf.mxu0
    %v4528 = vadd.f32 0.0, %v4527
    %v4529 = vpop.f32.mrf.mxu0
    %4530 = vmatprep.mubr.f32.mxu0 0.0
    %4531 = vmatmul.mubr.f32.gmra.mxu0 %v4218
    %v4532 = vpop.f32.mrf.mxu0
    %v4533 = vadd.f32 0.0, %v4532
    %v4534 = vpop.f32.mrf.mxu0
    %4535 = vmatprep.mubr.f32.mxu0 0.0
    %4536 = vmatmul.mubr.f32.gmra.mxu0 %v4394
    %v4537 = vpop.f32.mrf.mxu0
    %v4538 = vadd.f32 0.0, %v4537
    %v4539 = vpop.f32.mrf.mxu0
    %4540 = vdwg.mxu0
    %v4541 = vadd.f32 %v4365, %v4463
    %v4542 = vadd.f32 %v4366, %v4468
    %v4543 = vadd.f32 %v4367, %v4473
    %v4544 = vadd.f32 %v4368, %v4478
    %v4545 = vadd.f32 %v4369, %v4483
    %v4546 = vadd.f32 %v4370, %v4488
    %v4547 = vadd.f32 %v4371, %v4493
    %v4548 = vadd.f32 %v4372, %v4498
    %v4549 = vadd.f32 %v4373, %v4503
    %v4550 = vadd.f32 %v4374, %v4508
    %v4551 = vadd.f32 %v4375, %v4513
    %v4552 = vadd.f32 %v4376, %v4518
    %v4553 = vadd.f32 %v4377, %v4523
    %v4554 = vadd.f32 %v4378, %v4528
    %v4555 = vadd.f32 %v4379, %v4533
    %v4556 = vadd.f32 %v4380, %v4538
    %s4557 = scalar_lea.vmem %s2, 512
    %v4558 = vld [vmem:[%s4557] sm:$0xff]
    %v4559 = vld [vmem:[%s4557 + $0x8] sm:$0xff]
    %v4560 = vld [vmem:[%s4557 + $0x10] sm:$0xff]
    %v4561 = vld [vmem:[%s4557 + $0x18] sm:$0xff]
    %v4562 = vld [vmem:[%s4557 + $0x20] sm:$0xff]
    %v4563 = vld [vmem:[%s4557 + $0x28] sm:$0xff]
    %v4564 = vld [vmem:[%s4557 + $0x30] sm:$0xff]
    %v4565 = vld [vmem:[%s4557 + $0x38] sm:$0xff]
    %v4567 = vsel %vm50, %v4152, 0
    %v4570 = vsel %vm50, %v4162, 0
    %4572 = vmatprep.subr.mxu0 0.0
    %4573 = vmatpush1.msra.mxu0 0.0
    %4574 = vmatprep.subr.mxu0 0.0
    %4575 = vmatpush1.msra.mxu0 0.0
    %4576 = vmatprep.subr.mxu0 0.0
    %4577 = vmatpush1.msra.mxu0 0.0
    %4578 = vmatprep.subr.mxu0 0.0
    %4579 = vmatpush1.msra.mxu0 0.0
    %4580 = vmatprep.subr.mxu0 0.0
    %4581 = vmatpush1.msra.mxu0 0.0
    %4582 = vmatprep.subr.mxu0 0.0
    %4583 = vmatpush1.msra.mxu0 0.0
    %4584 = vmatprep.subr.mxu0 0.0
    %4585 = vmatpush1.msra.mxu0 0.0
    %4586 = vmatprep.subr.mxu0 0.0
    %4587 = vmatpush1.msra.mxu0 0.0
    %4588 = vmatprep.subr.mxu0 0.0
    %4589 = vmatpush1.msra.mxu0 %v4565
    %4590 = vmatprep.subr.mxu0 0.0
    %4591 = vmatpush1.msra.mxu0 %v4564
    %4592 = vmatprep.subr.mxu0 0.0
    %4593 = vmatpush1.msra.mxu0 %v4563
    %4594 = vmatprep.subr.mxu0 0.0
    %4595 = vmatpush1.msra.mxu0 %v4562
    %4596 = vmatprep.subr.mxu0 0.0
    %4597 = vmatpush1.msra.mxu0 %v4561
    %4598 = vmatprep.subr.mxu0 0.0
    %4599 = vmatpush1.msra.mxu0 %v4560
    %4600 = vmatprep.subr.mxu0 0.0
    %4601 = vmatpush1.msra.mxu0 %v4559
    %4602 = vmatprep.subr.mxu0 0.0
    %4603 = vmatpush1.msra.mxu0 %v4558
    %4604 = vmatprep.subr.mxu0 0.0
    %4605 = vmatpush2.msra.mxu0 0.0
    %4606 = vmatprep.subr.mxu0 0.0
    %4607 = vmatpush2.msra.mxu0 0.0
    %4608 = vmatprep.subr.mxu0 0.0
    %4609 = vmatpush2.msra.mxu0 0.0
    %4610 = vmatprep.subr.mxu0 0.0
    %4611 = vmatpush2.msra.mxu0 0.0
    %4612 = vmatprep.subr.mxu0 0.0
    %4613 = vmatpush2.msra.mxu0 0.0
    %4614 = vmatprep.subr.mxu0 0.0
    %4615 = vmatpush2.msra.mxu0 0.0
    %4616 = vmatprep.subr.mxu0 0.0
    %4617 = vmatpush2.msra.mxu0 0.0
    %4618 = vmatprep.subr.mxu0 0.0
    %4619 = vmatpush2.msra.mxu0 0.0
    %4620 = vmatprep.subr.mxu0 0.0
    %4621 = vmatpush2.msra.mxu0 0.0
    %4622 = vmatprep.subr.mxu0 0.0
    %4623 = vmatpush2.msra.mxu0 0.0
    %4624 = vmatprep.subr.mxu0 0.0
    %4625 = vmatpush2.msra.mxu0 0.0
    %4626 = vmatprep.subr.mxu0 0.0
    %4627 = vmatpush2.msra.mxu0 0.0
    %4628 = vmatprep.subr.mxu0 0.0
    %4629 = vmatpush2.msra.mxu0 0.0
    %4630 = vmatprep.subr.mxu0 0.0
    %4631 = vmatpush2.msra.mxu0 0.0
    %4632 = vmatprep.subr.mxu0 0.0
    %4633 = vmatpush2.msra.mxu0 0.0
    %4634 = vmatprep.subr.mxu0 0.0
    %4635 = vmatpush2.msra.mxu0 0.0
    %4636 = vmatprep.mubr.f32.mxu0 0.0
    %4637 = vmatmul.mubr.f32.gmra.mxu0 %v4179
    %v4638 = vpop.f32.mrf.mxu0
    %v4639 = vadd.f32 0.0, %v4638
    %v4640 = vpop.f32.mrf.mxu0
    %4641 = vmatprep.mubr.f32.mxu0 0.0
    %4642 = vmatmul.mubr.f32.gmra.mxu0 %v4182
    %v4643 = vpop.f32.mrf.mxu0
    %v4644 = vadd.f32 0.0, %v4643
    %v4645 = vpop.f32.mrf.mxu0
    %4646 = vmatprep.mubr.f32.mxu0 0.0
    %4647 = vmatmul.mubr.f32.gmra.mxu0 %v4185
    %v4648 = vpop.f32.mrf.mxu0
    %v4649 = vadd.f32 0.0, %v4648
    %v4650 = vpop.f32.mrf.mxu0
    %4651 = vmatprep.mubr.f32.mxu0 0.0
    %4652 = vmatmul.mubr.f32.gmra.mxu0 %v4188
    %v4653 = vpop.f32.mrf.mxu0
    %v4654 = vadd.f32 0.0, %v4653
    %v4655 = vpop.f32.mrf.mxu0
    %4656 = vmatprep.mubr.f32.mxu0 0.0
    %4657 = vmatmul.mubr.f32.gmra.mxu0 %v4191
    %v4658 = vpop.f32.mrf.mxu0
    %v4659 = vadd.f32 0.0, %v4658
    %v4660 = vpop.f32.mrf.mxu0
    %4661 = vmatprep.mubr.f32.mxu0 0.0
    %4662 = vmatmul.mubr.f32.gmra.mxu0 %v4194
    %v4663 = vpop.f32.mrf.mxu0
    %v4664 = vadd.f32 0.0, %v4663
    %v4665 = vpop.f32.mrf.mxu0
    %4666 = vmatprep.mubr.f32.mxu0 0.0
    %4667 = vmatmul.mubr.f32.gmra.mxu0 %v4391
    %v4668 = vpop.f32.mrf.mxu0
    %v4669 = vadd.f32 0.0, %v4668
    %v4670 = vpop.f32.mrf.mxu0
    %4671 = vmatprep.mubr.f32.mxu0 0.0
    %4672 = vmatmul.mubr.f32.gmra.mxu0 %v4567
    %v4673 = vpop.f32.mrf.mxu0
    %v4674 = vadd.f32 0.0, %v4673
    %v4675 = vpop.f32.mrf.mxu0
    %4676 = vmatprep.mubr.f32.mxu0 0.0
    %4677 = vmatmul.mubr.f32.gmra.mxu0 %v4203
    %v4678 = vpop.f32.mrf.mxu0
    %v4679 = vadd.f32 0.0, %v4678
    %v4680 = vpop.f32.mrf.mxu0
    %4681 = vmatprep.mubr.f32.mxu0 0.0
    %4682 = vmatmul.mubr.f32.gmra.mxu0 %v4206
    %v4683 = vpop.f32.mrf.mxu0
    %v4684 = vadd.f32 0.0, %v4683
    %v4685 = vpop.f32.mrf.mxu0
    %4686 = vmatprep.mubr.f32.mxu0 0.0
    %4687 = vmatmul.mubr.f32.gmra.mxu0 %v4209
    %v4688 = vpop.f32.mrf.mxu0
    %v4689 = vadd.f32 0.0, %v4688
    %v4690 = vpop.f32.mrf.mxu0
    %4691 = vmatprep.mubr.f32.mxu0 0.0
    %4692 = vmatmul.mubr.f32.gmra.mxu0 %v4212
    %v4693 = vpop.f32.mrf.mxu0
    %v4694 = vadd.f32 0.0, %v4693
    %v4695 = vpop.f32.mrf.mxu0
    %4696 = vmatprep.mubr.f32.mxu0 0.0
    %4697 = vmatmul.mubr.f32.gmra.mxu0 %v4215
    %v4698 = vpop.f32.mrf.mxu0
    %v4699 = vadd.f32 0.0, %v4698
    %v4700 = vpop.f32.mrf.mxu0
    %4701 = vmatprep.mubr.f32.mxu0 0.0
    %4702 = vmatmul.mubr.f32.gmra.mxu0 %v4218
    %v4703 = vpop.f32.mrf.mxu0
    %v4704 = vadd.f32 0.0, %v4703
    %v4705 = vpop.f32.mrf.mxu0
    %4706 = vmatprep.mubr.f32.mxu0 0.0
    %4707 = vmatmul.mubr.f32.gmra.mxu0 %v4394
    %v4708 = vpop.f32.mrf.mxu0
    %v4709 = vadd.f32 0.0, %v4708
    %v4710 = vpop.f32.mrf.mxu0
    %4711 = vmatprep.mubr.f32.mxu0 0.0
    %4712 = vmatmul.mubr.f32.gmra.mxu0 %v4570
    %v4713 = vpop.f32.mrf.mxu0
    %v4714 = vadd.f32 0.0, %v4713
    %v4715 = vpop.f32.mrf.mxu0
    %4716 = vdwg.mxu0
    %v4717 = vadd.f32 %v4541, %v4639
    %v4718 = vadd.f32 %v4542, %v4644
    %v4719 = vadd.f32 %v4543, %v4649
    %v4720 = vadd.f32 %v4544, %v4654
    %v4721 = vadd.f32 %v4545, %v4659
    %v4722 = vadd.f32 %v4546, %v4664
    %v4723 = vadd.f32 %v4547, %v4669
    %v4724 = vadd.f32 %v4548, %v4674
    %v4725 = vadd.f32 %v4549, %v4679
    %v4726 = vadd.f32 %v4550, %v4684
    %v4727 = vadd.f32 %v4551, %v4689
    %v4728 = vadd.f32 %v4552, %v4694
    %v4729 = vadd.f32 %v4553, %v4699
    %v4730 = vadd.f32 %v4554, %v4704
    %v4731 = vadd.f32 %v4555, %v4709
    %v4732 = vadd.f32 %v4556, %v4714
    %v4734 = vlaneseq
    %v4735 = vshrl.u32 %v4734, 7
    %v4736 = vsub.s32 0, %v4735
    %v4737 = vrot.slane %v2994, %v4736
    %v4739 = vmul.f32 %v4717, %v4737
    %v4740 = vmul.f32 %v4718, %v4737
    %v4741 = vmul.f32 %v4719, %v4737
    %v4742 = vmul.f32 %v4720, %v4737
    %v4743 = vmul.f32 %v4721, %v4737
    %v4744 = vmul.f32 %v4722, %v4737
    %v4745 = vmul.f32 %v4723, %v4737
    %v4746 = vmul.f32 %v4724, %v4737
    %v4747 = vmul.f32 %v4725, %v4737
    %v4748 = vmul.f32 %v4726, %v4737
    %v4749 = vmul.f32 %v4727, %v4737
    %v4750 = vmul.f32 %v4728, %v4737
    %v4751 = vmul.f32 %v4729, %v4737
    %v4752 = vmul.f32 %v4730, %v4737
    %v4753 = vmul.f32 %v4731, %v4737
    %v4754 = vmul.f32 %v4732, %v4737
    %v4756 = vlaneseq
    %v4757 = vshrl.u32 %v4756, 7
    %v4758 = vsub.s32 0, %v4757
    %v4759 = vrot.slane %v2995, %v4758
    %v4761 = vadd.f32 %v4739, %v4759
    %v4762 = vadd.f32 %v4740, %v4759
    %v4763 = vadd.f32 %v4741, %v4759
    %v4764 = vadd.f32 %v4742, %v4759
    %v4765 = vadd.f32 %v4743, %v4759
    %v4766 = vadd.f32 %v4744, %v4759
    %v4767 = vadd.f32 %v4745, %v4759
    %v4768 = vadd.f32 %v4746, %v4759
    %v4769 = vadd.f32 %v4747, %v4759
    %v4770 = vadd.f32 %v4748, %v4759
    %v4771 = vadd.f32 %v4749, %v4759
    %v4772 = vadd.f32 %v4750, %v4759
    %v4773 = vadd.f32 %v4751, %v4759
    %v4774 = vadd.f32 %v4752, %v4759
    %v4775 = vadd.f32 %v4753, %v4759
    %v4776 = vadd.f32 %v4754, %v4759
    %v4777 = vmax.f32 %v4761, 0.0
    %v4778 = vmax.f32 %v4762, 0.0
    %v4779 = vmax.f32 %v4763, 0.0
    %v4780 = vmax.f32 %v4764, 0.0
    %v4781 = vmax.f32 %v4765, 0.0
    %v4782 = vmax.f32 %v4766, 0.0
    %v4783 = vmax.f32 %v4767, 0.0
    %v4784 = vmax.f32 %v4768, 0.0
    %v4785 = vmax.f32 %v4769, 0.0
    %v4786 = vmax.f32 %v4770, 0.0
    %v4787 = vmax.f32 %v4771, 0.0
    %v4788 = vmax.f32 %v4772, 0.0
    %v4789 = vmax.f32 %v4773, 0.0
    %v4790 = vmax.f32 %v4774, 0.0
    %v4791 = vmax.f32 %v4775, 0.0
    %v4792 = vmax.f32 %v4776, 0.0
    %v4793 = vsel %vm50, %v4777, -inf
    %v4794 = vsel %vm50, %v4778, -inf
    %v4795 = vmax.f32 %v4793, %v4794
    %v4796 = vsel %vm50, %v4779, -inf
    %v4797 = vsel %vm50, %v4780, -inf
    %v4798 = vmax.f32 %v4796, %v4797
    %v4799 = vsel %vm50, %v4781, -inf
    %v4800 = vsel %vm50, %v4782, -inf
    %v4801 = vmax.f32 %v4799, %v4800
    %v4802 = vsel %vm50, %v4783, -inf
    %v4803 = vsel %vm50, %v4784, -inf
    %v4804 = vmax.f32 %v4802, %v4803
    %v4805 = vsel %vm50, %v4785, -inf
    %v4806 = vsel %vm50, %v4786, -inf
    %v4807 = vmax.f32 %v4805, %v4806
    %v4808 = vsel %vm50, %v4787, -inf
    %v4809 = vsel %vm50, %v4788, -inf
    %v4810 = vmax.f32 %v4808, %v4809
    %v4811 = vsel %vm50, %v4789, -inf
    %v4812 = vsel %vm50, %v4790, -inf
    %v4813 = vmax.f32 %v4811, %v4812
    %v4814 = vsel %vm50, %v4791, -inf
    %v4815 = vsel %vm50, %v4792, -inf
    %v4816 = vmax.f32 %v4814, %v4815
    %v4825 = vcombine.high %v4795, %v4795
    %v4827 = vunpack.c.l.s4 1983009808
    %v4828 = vunpack.c.0.s8 %v4827
    %v4829 = vlaneseq
    %v4830 = vshrl.u32 %v4829, 7
    %v4831 = vsub.s32 %v4828, %v4830
    %v4832 = vrot.slane %v4795, %v4831
    %v4834 = vunpack.c.l.s4 1983009808
    %v4835 = vunpack.c.0.s8 %v4834
    %v4836 = vlaneseq
    %v4837 = vshrl.u32 %v4836, 7
    %v4838 = vsub.s32 %v4835, %v4837
    %v4839 = vrot.slane %v4825, %v4838
    %v4840 = vcombine.high %v4832, %v4832
    %v4841 = vcombine.high %v4839, %v4839
    %v4842 = vcombine.high %v4798, %v4798
    %v4844 = vunpack.c.l.s4 1983009808
    %v4845 = vunpack.c.0.s8 %v4844
    %v4846 = vlaneseq
    %v4847 = vshrl.u32 %v4846, 7
    %v4848 = vsub.s32 %v4845, %v4847
    %v4849 = vrot.slane %v4798, %v4848
    %v4851 = vunpack.c.l.s4 1983009808
    %v4852 = vunpack.c.0.s8 %v4851
    %v4853 = vlaneseq
    %v4854 = vshrl.u32 %v4853, 7
    %v4855 = vsub.s32 %v4852, %v4854
    %v4856 = vrot.slane %v4842, %v4855
    %v4857 = vcombine.high %v4849, %v4849
    %v4858 = vcombine.high %v4856, %v4856
    %v4859 = vcombine.high %v4801, %v4801
    %v4861 = vunpack.c.l.s4 1983009808
    %v4862 = vunpack.c.0.s8 %v4861
    %v4863 = vlaneseq
    %v4864 = vshrl.u32 %v4863, 7
    %v4865 = vsub.s32 %v4862, %v4864
    %v4866 = vrot.slane %v4801, %v4865
    %v4868 = vunpack.c.l.s4 1983009808
    %v4869 = vunpack.c.0.s8 %v4868
    %v4870 = vlaneseq
    %v4871 = vshrl.u32 %v4870, 7
    %v4872 = vsub.s32 %v4869, %v4871
    %v4873 = vrot.slane %v4859, %v4872
    %v4874 = vcombine.high %v4866, %v4866
    %v4875 = vcombine.high %v4873, %v4873
    %v4876 = vcombine.high %v4804, %v4804
    %v4878 = vunpack.c.l.s4 1983009808
    %v4879 = vunpack.c.0.s8 %v4878
    %v4880 = vlaneseq
    %v4881 = vshrl.u32 %v4880, 7
    %v4882 = vsub.s32 %v4879, %v4881
    %v4883 = vrot.slane %v4804, %v4882
    %v4885 = vunpack.c.l.s4 1983009808
    %v4886 = vunpack.c.0.s8 %v4885
    %v4887 = vlaneseq
    %v4888 = vshrl.u32 %v4887, 7
    %v4889 = vsub.s32 %v4886, %v4888
    %v4890 = vrot.slane %v4876, %v4889
    %v4891 = vcombine.high %v4883, %v4883
    %v4892 = vcombine.high %v4890, %v4890
    %v4893 = vcombine.high %v4807, %v4807
    %v4895 = vunpack.c.l.s4 1983009808
    %v4896 = vunpack.c.0.s8 %v4895
    %v4897 = vlaneseq
    %v4898 = vshrl.u32 %v4897, 7
    %v4899 = vsub.s32 %v4896, %v4898
    %v4900 = vrot.slane %v4807, %v4899
    %v4902 = vunpack.c.l.s4 1983009808
    %v4903 = vunpack.c.0.s8 %v4902
    %v4904 = vlaneseq
    %v4905 = vshrl.u32 %v4904, 7
    %v4906 = vsub.s32 %v4903, %v4905
    %v4907 = vrot.slane %v4893, %v4906
    %v4908 = vcombine.high %v4900, %v4900
    %v4909 = vcombine.high %v4907, %v4907
    %v4910 = vcombine.high %v4810, %v4810
    %v4912 = vunpack.c.l.s4 1983009808
    %v4913 = vunpack.c.0.s8 %v4912
    %v4914 = vlaneseq
    %v4915 = vshrl.u32 %v4914, 7
    %v4916 = vsub.s32 %v4913, %v4915
    %v4917 = vrot.slane %v4810, %v4916
    %v4919 = vunpack.c.l.s4 1983009808
    %v4920 = vunpack.c.0.s8 %v4919
    %v4921 = vlaneseq
    %v4922 = vshrl.u32 %v4921, 7
    %v4923 = vsub.s32 %v4920, %v4922
    %v4924 = vrot.slane %v4910, %v4923
    %v4925 = vcombine.high %v4917, %v4917
    %v4926 = vcombine.high %v4924, %v4924
    %v4927 = vcombine.high %v4813, %v4813
    %v4929 = vunpack.c.l.s4 1983009808
    %v4930 = vunpack.c.0.s8 %v4929
    %v4931 = vlaneseq
    %v4932 = vshrl.u32 %v4931, 7
    %v4933 = vsub.s32 %v4930, %v4932
    %v4934 = vrot.slane %v4813, %v4933
    %v4936 = vunpack.c.l.s4 1983009808
    %v4937 = vunpack.c.0.s8 %v4936
    %v4938 = vlaneseq
    %v4939 = vshrl.u32 %v4938, 7
    %v4940 = vsub.s32 %v4937, %v4939
    %v4941 = vrot.slane %v4927, %v4940
    %v4942 = vcombine.high %v4934, %v4934
    %v4943 = vcombine.high %v4941, %v4941
    %v4944 = vcombine.high %v4816, %v4816
    %v4946 = vunpack.c.l.s4 1983009808
    %v4947 = vunpack.c.0.s8 %v4946
    %v4948 = vlaneseq
    %v4949 = vshrl.u32 %v4948, 7
    %v4950 = vsub.s32 %v4947, %v4949
    %v4951 = vrot.slane %v4816, %v4950
    %v4953 = vunpack.c.l.s4 1983009808
    %v4954 = vunpack.c.0.s8 %v4953
    %v4955 = vlaneseq
    %v4956 = vshrl.u32 %v4955, 7
    %v4957 = vsub.s32 %v4954, %v4956
    %v4958 = vrot.slane %v4944, %v4957
    %v4959 = vcombine.high %v4951, %v4951
    %v4960 = vcombine.high %v4958, %v4958
    %v4993 = vsel %vm1817, %v4832, -inf
    %v4994 = vrot.slane %v4993, 4
    %v4995 = vmax.f32 %v4993, %v4994
    %v4996 = vrot.slane %v4995, 2
    %v4997 = vmax.f32 %v4995, %v4996
    %v4998 = vrot.slane %v4997, 1
    %v4999 = vmax.f32 %v4997, %v4998
    %v5000 = vsel %vm1817, %v4840, -inf
    %v5001 = vrot.slane %v5000, 4
    %v5002 = vmax.f32 %v5000, %v5001
    %v5003 = vrot.slane %v5002, 2
    %v5004 = vmax.f32 %v5002, %v5003
    %v5005 = vrot.slane %v5004, 1
    %v5006 = vmax.f32 %v5004, %v5005
    %v5007 = vsel %vm1817, %v4839, -inf
    %v5008 = vrot.slane %v5007, 4
    %v5009 = vmax.f32 %v5007, %v5008
    %v5010 = vrot.slane %v5009, 2
    %v5011 = vmax.f32 %v5009, %v5010
    %v5012 = vrot.slane %v5011, 1
    %v5013 = vmax.f32 %v5011, %v5012
    %v5014 = vsel %vm1817, %v4841, -inf
    %v5015 = vrot.slane %v5014, 4
    %v5016 = vmax.f32 %v5014, %v5015
    %v5017 = vrot.slane %v5016, 2
    %v5018 = vmax.f32 %v5016, %v5017
    %v5019 = vrot.slane %v5018, 1
    %v5020 = vmax.f32 %v5018, %v5019
    %v5021 = vsel %vm1817, %v4849, -inf
    %v5022 = vrot.slane %v5021, 4
    %v5023 = vmax.f32 %v5021, %v5022
    %v5024 = vrot.slane %v5023, 2
    %v5025 = vmax.f32 %v5023, %v5024
    %v5026 = vrot.slane %v5025, 1
    %v5027 = vmax.f32 %v5025, %v5026
    %v5028 = vsel %vm1817, %v4857, -inf
    %v5029 = vrot.slane %v5028, 4
    %v5030 = vmax.f32 %v5028, %v5029
    %v5031 = vrot.slane %v5030, 2
    %v5032 = vmax.f32 %v5030, %v5031
    %v5033 = vrot.slane %v5032, 1
    %v5034 = vmax.f32 %v5032, %v5033
    %v5035 = vsel %vm1817, %v4856, -inf
    %v5036 = vrot.slane %v5035, 4
    %v5037 = vmax.f32 %v5035, %v5036
    %v5038 = vrot.slane %v5037, 2
    %v5039 = vmax.f32 %v5037, %v5038
    %v5040 = vrot.slane %v5039, 1
    %v5041 = vmax.f32 %v5039, %v5040
    %v5042 = vsel %vm1817, %v4858, -inf
    %v5043 = vrot.slane %v5042, 4
    %v5044 = vmax.f32 %v5042, %v5043
    %v5045 = vrot.slane %v5044, 2
    %v5046 = vmax.f32 %v5044, %v5045
    %v5047 = vrot.slane %v5046, 1
    %v5048 = vmax.f32 %v5046, %v5047
    %v5049 = vsel %vm1817, %v4866, -inf
    %v5050 = vrot.slane %v5049, 4
    %v5051 = vmax.f32 %v5049, %v5050
    %v5052 = vrot.slane %v5051, 2
    %v5053 = vmax.f32 %v5051, %v5052
    %v5054 = vrot.slane %v5053, 1
    %v5055 = vmax.f32 %v5053, %v5054
    %v5056 = vsel %vm1817, %v4874, -inf
    %v5057 = vrot.slane %v5056, 4
    %v5058 = vmax.f32 %v5056, %v5057
    %v5059 = vrot.slane %v5058, 2
    %v5060 = vmax.f32 %v5058, %v5059
    %v5061 = vrot.slane %v5060, 1
    %v5062 = vmax.f32 %v5060, %v5061
    %v5063 = vsel %vm1817, %v4873, -inf
    %v5064 = vrot.slane %v5063, 4
    %v5065 = vmax.f32 %v5063, %v5064
    %v5066 = vrot.slane %v5065, 2
    %v5067 = vmax.f32 %v5065, %v5066
    %v5068 = vrot.slane %v5067, 1
    %v5069 = vmax.f32 %v5067, %v5068
    %v5070 = vsel %vm1817, %v4875, -inf
    %v5071 = vrot.slane %v5070, 4
    %v5072 = vmax.f32 %v5070, %v5071
    %v5073 = vrot.slane %v5072, 2
    %v5074 = vmax.f32 %v5072, %v5073
    %v5075 = vrot.slane %v5074, 1
    %v5076 = vmax.f32 %v5074, %v5075
    %v5077 = vsel %vm1817, %v4883, -inf
    %v5078 = vrot.slane %v5077, 4
    %v5079 = vmax.f32 %v5077, %v5078
    %v5080 = vrot.slane %v5079, 2
    %v5081 = vmax.f32 %v5079, %v5080
    %v5082 = vrot.slane %v5081, 1
    %v5083 = vmax.f32 %v5081, %v5082
    %v5084 = vsel %vm1817, %v4891, -inf
    %v5085 = vrot.slane %v5084, 4
    %v5086 = vmax.f32 %v5084, %v5085
    %v5087 = vrot.slane %v5086, 2
    %v5088 = vmax.f32 %v5086, %v5087
    %v5089 = vrot.slane %v5088, 1
    %v5090 = vmax.f32 %v5088, %v5089
    %v5091 = vsel %vm1817, %v4890, -inf
    %v5092 = vrot.slane %v5091, 4
    %v5093 = vmax.f32 %v5091, %v5092
    %v5094 = vrot.slane %v5093, 2
    %v5095 = vmax.f32 %v5093, %v5094
    %v5096 = vrot.slane %v5095, 1
    %v5097 = vmax.f32 %v5095, %v5096
    %v5098 = vsel %vm1817, %v4892, -inf
    %v5099 = vrot.slane %v5098, 4
    %v5100 = vmax.f32 %v5098, %v5099
    %v5101 = vrot.slane %v5100, 2
    %v5102 = vmax.f32 %v5100, %v5101
    %v5103 = vrot.slane %v5102, 1
    %v5104 = vmax.f32 %v5102, %v5103
    %v5105 = vsel %vm1817, %v4900, -inf
    %v5106 = vrot.slane %v5105, 4
    %v5107 = vmax.f32 %v5105, %v5106
    %v5108 = vrot.slane %v5107, 2
    %v5109 = vmax.f32 %v5107, %v5108
    %v5110 = vrot.slane %v5109, 1
    %v5111 = vmax.f32 %v5109, %v5110
    %v5112 = vsel %vm1817, %v4908, -inf
    %v5113 = vrot.slane %v5112, 4
    %v5114 = vmax.f32 %v5112, %v5113
    %v5115 = vrot.slane %v5114, 2
    %v5116 = vmax.f32 %v5114, %v5115
    %v5117 = vrot.slane %v5116, 1
    %v5118 = vmax.f32 %v5116, %v5117
    %v5119 = vsel %vm1817, %v4907, -inf
    %v5120 = vrot.slane %v5119, 4
    %v5121 = vmax.f32 %v5119, %v5120
    %v5122 = vrot.slane %v5121, 2
    %v5123 = vmax.f32 %v5121, %v5122
    %v5124 = vrot.slane %v5123, 1
    %v5125 = vmax.f32 %v5123, %v5124
    %v5126 = vsel %vm1817, %v4909, -inf
    %v5127 = vrot.slane %v5126, 4
    %v5128 = vmax.f32 %v5126, %v5127
    %v5129 = vrot.slane %v5128, 2
    %v5130 = vmax.f32 %v5128, %v5129
    %v5131 = vrot.slane %v5130, 1
    %v5132 = vmax.f32 %v5130, %v5131
    %v5133 = vsel %vm1817, %v4917, -inf
    %v5134 = vrot.slane %v5133, 4
    %v5135 = vmax.f32 %v5133, %v5134
    %v5136 = vrot.slane %v5135, 2
    %v5137 = vmax.f32 %v5135, %v5136
    %v5138 = vrot.slane %v5137, 1
    %v5139 = vmax.f32 %v5137, %v5138
    %v5140 = vsel %vm1817, %v4925, -inf
    %v5141 = vrot.slane %v5140, 4
    %v5142 = vmax.f32 %v5140, %v5141
    %v5143 = vrot.slane %v5142, 2
    %v5144 = vmax.f32 %v5142, %v5143
    %v5145 = vrot.slane %v5144, 1
    %v5146 = vmax.f32 %v5144, %v5145
    %v5147 = vsel %vm1817, %v4924, -inf
    %v5148 = vrot.slane %v5147, 4
    %v5149 = vmax.f32 %v5147, %v5148
    %v5150 = vrot.slane %v5149, 2
    %v5151 = vmax.f32 %v5149, %v5150
    %v5152 = vrot.slane %v5151, 1
    %v5153 = vmax.f32 %v5151, %v5152
    %v5154 = vsel %vm1817, %v4926, -inf
    %v5155 = vrot.slane %v5154, 4
    %v5156 = vmax.f32 %v5154, %v5155
    %v5157 = vrot.slane %v5156, 2
    %v5158 = vmax.f32 %v5156, %v5157
    %v5159 = vrot.slane %v5158, 1
    %v5160 = vmax.f32 %v5158, %v5159
    %v5161 = vsel %vm1817, %v4934, -inf
    %v5162 = vrot.slane %v5161, 4
    %v5163 = vmax.f32 %v5161, %v5162
    %v5164 = vrot.slane %v5163, 2
    %v5165 = vmax.f32 %v5163, %v5164
    %v5166 = vrot.slane %v5165, 1
    %v5167 = vmax.f32 %v5165, %v5166
    %v5168 = vsel %vm1817, %v4942, -inf
    %v5169 = vrot.slane %v5168, 4
    %v5170 = vmax.f32 %v5168, %v5169
    %v5171 = vrot.slane %v5170, 2
    %v5172 = vmax.f32 %v5170, %v5171
    %v5173 = vrot.slane %v5172, 1
    %v5174 = vmax.f32 %v5172, %v5173
    %v5175 = vsel %vm1817, %v4941, -inf
    %v5176 = vrot.slane %v5175, 4
    %v5177 = vmax.f32 %v5175, %v5176
    %v5178 = vrot.slane %v5177, 2
    %v5179 = vmax.f32 %v5177, %v5178
    %v5180 = vrot.slane %v5179, 1
    %v5181 = vmax.f32 %v5179, %v5180
    %v5182 = vsel %vm1817, %v4943, -inf
    %v5183 = vrot.slane %v5182, 4
    %v5184 = vmax.f32 %v5182, %v5183
    %v5185 = vrot.slane %v5184, 2
    %v5186 = vmax.f32 %v5184, %v5185
    %v5187 = vrot.slane %v5186, 1
    %v5188 = vmax.f32 %v5186, %v5187
    %v5189 = vsel %vm1817, %v4951, -inf
    %v5190 = vrot.slane %v5189, 4
    %v5191 = vmax.f32 %v5189, %v5190
    %v5192 = vrot.slane %v5191, 2
    %v5193 = vmax.f32 %v5191, %v5192
    %v5194 = vrot.slane %v5193, 1
    %v5195 = vmax.f32 %v5193, %v5194
    %v5196 = vsel %vm1817, %v4959, -inf
    %v5197 = vrot.slane %v5196, 4
    %v5198 = vmax.f32 %v5196, %v5197
    %v5199 = vrot.slane %v5198, 2
    %v5200 = vmax.f32 %v5198, %v5199
    %v5201 = vrot.slane %v5200, 1
    %v5202 = vmax.f32 %v5200, %v5201
    %v5203 = vsel %vm1817, %v4958, -inf
    %v5204 = vrot.slane %v5203, 4
    %v5205 = vmax.f32 %v5203, %v5204
    %v5206 = vrot.slane %v5205, 2
    %v5207 = vmax.f32 %v5205, %v5206
    %v5208 = vrot.slane %v5207, 1
    %v5209 = vmax.f32 %v5207, %v5208
    %v5210 = vsel %vm1817, %v4960, -inf
    %v5211 = vrot.slane %v5210, 4
    %v5212 = vmax.f32 %v5210, %v5211
    %v5213 = vrot.slane %v5212, 2
    %v5214 = vmax.f32 %v5212, %v5213
    %v5215 = vrot.slane %v5214, 1
    %v5216 = vmax.f32 %v5214, %v5215
    %v5249 = vsel %vm2842, %v5006, %v4999
    %v5250 = vsel %vm2844, %v5013, %v5249
    %v5251 = vsel %vm2846, %v5020, %v5250
    %v5252 = vsel %vm2842, %v5034, %v5027
    %v5253 = vsel %vm2844, %v5041, %v5252
    %v5254 = vsel %vm2846, %v5048, %v5253
    %v5255 = vsel %vm2842, %v5062, %v5055
    %v5256 = vsel %vm2844, %v5069, %v5255
    %v5257 = vsel %vm2846, %v5076, %v5256
    %v5258 = vsel %vm2842, %v5090, %v5083
    %v5259 = vsel %vm2844, %v5097, %v5258
    %v5260 = vsel %vm2846, %v5104, %v5259
    %v5261 = vsel %vm2842, %v5118, %v5111
    %v5262 = vsel %vm2844, %v5125, %v5261
    %v5263 = vsel %vm2846, %v5132, %v5262
    %v5264 = vsel %vm2842, %v5146, %v5139
    %v5265 = vsel %vm2844, %v5153, %v5264
    %v5266 = vsel %vm2846, %v5160, %v5265
    %v5267 = vsel %vm2842, %v5174, %v5167
    %v5268 = vsel %vm2844, %v5181, %v5267
    %v5269 = vsel %vm2846, %v5188, %v5268
    %v5270 = vsel %vm2842, %v5202, %v5195
    %v5271 = vsel %vm2844, %v5209, %v5270
    %v5272 = vsel %vm2846, %v5216, %v5271
    %s5281 = scalar_lea.vmem [#allocation3], 16
    %vm5282 = vcmask 519168
    %5283 = vst.msk [vmem:[%s5281 + $0x8] sm:$0xf] %vm5282, %v5251
    %5284 = vst.msk [vmem:[%s5281 + $0x18] sm:$0xf] %vm5282, %v5254
    %5285 = vst.msk [vmem:[%s5281 + $0x28] sm:$0xf] %vm5282, %v5257
    %5286 = vst.msk [vmem:[%s5281 + $0x38] sm:$0xf] %vm5282, %v5260
    %5287 = vst.msk [vmem:[%s5281 + $0x68] sm:$0xf] %vm5282, %v5263
    %5288 = vst.msk [vmem:[%s5281 + $0x78] sm:$0xf] %vm5282, %v5266
    %5289 = vst.msk [vmem:[%s5281 + $0x88] sm:$0xf] %vm5282, %v5269
    %5290 = vst.msk [vmem:[%s5281 + $0x98] sm:$0xf] %vm5282, %v5272
    %v5291 = vld [vmem:[%s6] sm:$0x1]
    %v5292 = vld [vmem:[%s7] sm:$0x1]
    %v5293 = vld [vmem:[#allocation3 + $0x7] sm:$0xf]
    %v5294 = vld [vmem:[#allocation3 + $0x17] sm:$0xf]
    %v5295 = vld [vmem:[#allocation3 + $0x27] sm:$0xf]
    %v5296 = vld [vmem:[#allocation3 + $0x37] sm:$0xf]
    %v5297 = vld [vmem:[#allocation3 + $0x47] sm:$0xf]
    %v5298 = vld [vmem:[#allocation3 + $0x57] sm:$0xf]
    %v5299 = vld [vmem:[#allocation3 + $0x67] sm:$0xf]
    %v5300 = vld [vmem:[#allocation3 + $0x77] sm:$0xf]
    %v5301 = vld [vmem:[#allocation3 + $0x87] sm:$0xf]
    %v5302 = vld [vmem:[#allocation3 + $0x97] sm:$0xf]
    %v5303 = vld [vmem:[#allocation3 + $0xa7] sm:$0xf]
    %v5304 = vld [vmem:[#allocation3 + $0xb7] sm:$0xf]
    %v5305 = vld [vmem:[%s2] sm:$0xff]
    %v5306 = vld [vmem:[%s2 + $0x8] sm:$0xff]
    %v5307 = vld [vmem:[%s2 + $0x10] sm:$0xff]
    %v5308 = vld [vmem:[%s2 + $0x18] sm:$0xff]
    %v5309 = vld [vmem:[%s2 + $0x20] sm:$0xff]
    %v5310 = vld [vmem:[%s2 + $0x28] sm:$0xff]
    %v5311 = vld [vmem:[%s2 + $0x30] sm:$0xff]
    %v5312 = vld [vmem:[%s2 + $0x38] sm:$0xff]
    %v5313 = vld [vmem:[%s3024] sm:$0xff]
    %v5314 = vld [vmem:[%s3024 + $0x8] sm:$0xff]
    %v5315 = vld [vmem:[%s3024 + $0x10] sm:$0xff]
    %v5316 = vld [vmem:[%s3024 + $0x18] sm:$0xff]
    %v5317 = vld [vmem:[%s3024 + $0x20] sm:$0xff]
    %v5318 = vld [vmem:[%s3024 + $0x28] sm:$0xff]
    %v5319 = vld [vmem:[%s3024 + $0x30] sm:$0xff]
    %v5320 = vld [vmem:[%s3024 + $0x38] sm:$0xff]
    %v5329 = vcombine.low %v5294, %v5295
    %v5330 = vcombine.low %v5296, %v5297
    %v5331 = vcombine.low %v5300, %v5301
    %v5332 = vcombine.low %v5302, %v5303
    %v5333 = vsel %vm50, %v5329, 0
    %v5335 = vsel %vm50, %v5330, 0
    %v5337 = vsel %vm50, %v5331, 0
    %v5339 = vsel %vm50, %v5332, 0
    %5341 = vmatprep.subr.mxu0 0.0
    %5342 = vmatpush1.msra.mxu0 0.0
    %5343 = vmatprep.subr.mxu0 0.0
    %5344 = vmatpush1.msra.mxu0 0.0
    %5345 = vmatprep.subr.mxu0 0.0
    %5346 = vmatpush1.msra.mxu0 0.0
    %5347 = vmatprep.subr.mxu0 0.0
    %5348 = vmatpush1.msra.mxu0 0.0
    %5349 = vmatprep.subr.mxu0 0.0
    %5350 = vmatpush1.msra.mxu0 0.0
    %5351 = vmatprep.subr.mxu0 0.0
    %5352 = vmatpush1.msra.mxu0 0.0
    %5353 = vmatprep.subr.mxu0 0.0
    %5354 = vmatpush1.msra.mxu0 0.0
    %5355 = vmatprep.subr.mxu0 0.0
    %5356 = vmatpush1.msra.mxu0 0.0
    %5357 = vmatprep.subr.mxu0 0.0
    %5358 = vmatpush1.msra.mxu0 %v5320
    %5359 = vmatprep.subr.mxu0 0.0
    %5360 = vmatpush1.msra.mxu0 %v5319
    %5361 = vmatprep.subr.mxu0 0.0
    %5362 = vmatpush1.msra.mxu0 %v5318
    %5363 = vmatprep.subr.mxu0 0.0
    %5364 = vmatpush1.msra.mxu0 %v5317
    %5365 = vmatprep.subr.mxu0 0.0
    %5366 = vmatpush1.msra.mxu0 %v5316
    %5367 = vmatprep.subr.mxu0 0.0
    %5368 = vmatpush1.msra.mxu0 %v5315
    %5369 = vmatprep.subr.mxu0 0.0
    %5370 = vmatpush1.msra.mxu0 %v5314
    %5371 = vmatprep.subr.mxu0 0.0
    %5372 = vmatpush1.msra.mxu0 %v5313
    %5373 = vmatprep.subr.mxu0 0.0
    %5374 = vmatpush2.msra.mxu0 0.0
    %5375 = vmatprep.subr.mxu0 0.0
    %5376 = vmatpush2.msra.mxu0 0.0
    %5377 = vmatprep.subr.mxu0 0.0
    %5378 = vmatpush2.msra.mxu0 0.0
    %5379 = vmatprep.subr.mxu0 0.0
    %5380 = vmatpush2.msra.mxu0 0.0
    %5381 = vmatprep.subr.mxu0 0.0
    %5382 = vmatpush2.msra.mxu0 0.0
    %5383 = vmatprep.subr.mxu0 0.0
    %5384 = vmatpush2.msra.mxu0 0.0
    %5385 = vmatprep.subr.mxu0 0.0
    %5386 = vmatpush2.msra.mxu0 0.0
    %5387 = vmatprep.subr.mxu0 0.0
    %5388 = vmatpush2.msra.mxu0 0.0
    %5389 = vmatprep.subr.mxu0 0.0
    %5390 = vmatpush2.msra.mxu0 0.0
    %5391 = vmatprep.subr.mxu0 0.0
    %5392 = vmatpush2.msra.mxu0 0.0
    %5393 = vmatprep.subr.mxu0 0.0
    %5394 = vmatpush2.msra.mxu0 0.0
    %5395 = vmatprep.subr.mxu0 0.0
    %5396 = vmatpush2.msra.mxu0 0.0
    %5397 = vmatprep.subr.mxu0 0.0
    %5398 = vmatpush2.msra.mxu0 0.0
    %5399 = vmatprep.subr.mxu0 0.0
    %5400 = vmatpush2.msra.mxu0 0.0
    %5401 = vmatprep.subr.mxu0 0.0
    %5402 = vmatpush2.msra.mxu0 0.0
    %5403 = vmatprep.subr.mxu0 0.0
    %5404 = vmatpush2.msra.mxu0 0.0
    %5405 = vmatprep.mubr.f32.mxu0 0.0
    %5406 = vmatmul.mubr.f32.gmra.mxu0 %v5333
    %v5407 = vpop.f32.mrf.mxu0
    %v5408 = vadd.f32 0.0, %v5407
    %v5409 = vpop.f32.mrf.mxu0
    %5410 = vmatprep.mubr.f32.mxu0 0.0
    %5411 = vmatmul.mubr.f32.gmra.mxu0 %v5335
    %v5412 = vpop.f32.mrf.mxu0
    %v5413 = vadd.f32 0.0, %v5412
    %v5414 = vpop.f32.mrf.mxu0
    %5415 = vmatprep.mubr.f32.mxu0 0.0
    %5416 = vmatmul.mubr.f32.gmra.mxu0 %v5337
    %v5417 = vpop.f32.mrf.mxu0
    %v5418 = vadd.f32 0.0, %v5417
    %v5419 = vpop.f32.mrf.mxu0
    %5420 = vmatprep.mubr.f32.mxu0 0.0
    %5421 = vmatmul.mubr.f32.gmra.mxu0 %v5339
    %v5422 = vpop.f32.mrf.mxu0
    %v5423 = vadd.f32 0.0, %v5422
    %v5424 = vpop.f32.mrf.mxu0
    %5425 = vdwg.mxu0
    %v5428 = vcombine.low %v5293, %v5294
    %v5429 = vcombine.low %v5295, %v5296
    %v5430 = vcombine.low %v5299, %v5300
    %v5431 = vcombine.low %v5301, %v5302
    %v5432 = vsel %vm50, %v5428, 0
    %v5434 = vsel %vm50, %v5429, 0
    %v5436 = vsel %vm50, %v5430, 0
    %v5438 = vsel %vm50, %v5431, 0
    %5440 = vmatprep.subr.mxu0 0.0
    %5441 = vmatpush1.msra.mxu0 0.0
    %5442 = vmatprep.subr.mxu0 0.0
    %5443 = vmatpush1.msra.mxu0 0.0
    %5444 = vmatprep.subr.mxu0 0.0
    %5445 = vmatpush1.msra.mxu0 0.0
    %5446 = vmatprep.subr.mxu0 0.0
    %5447 = vmatpush1.msra.mxu0 0.0
    %5448 = vmatprep.subr.mxu0 0.0
    %5449 = vmatpush1.msra.mxu0 0.0
    %5450 = vmatprep.subr.mxu0 0.0
    %5451 = vmatpush1.msra.mxu0 0.0
    %5452 = vmatprep.subr.mxu0 0.0
    %5453 = vmatpush1.msra.mxu0 0.0
    %5454 = vmatprep.subr.mxu0 0.0
    %5455 = vmatpush1.msra.mxu0 0.0
    %5456 = vmatprep.subr.mxu0 0.0
    %5457 = vmatpush1.msra.mxu0 %v5312
    %5458 = vmatprep.subr.mxu0 0.0
    %5459 = vmatpush1.msra.mxu0 %v5311
    %5460 = vmatprep.subr.mxu0 0.0
    %5461 = vmatpush1.msra.mxu0 %v5310
    %5462 = vmatprep.subr.mxu0 0.0
    %5463 = vmatpush1.msra.mxu0 %v5309
    %5464 = vmatprep.subr.mxu0 0.0
    %5465 = vmatpush1.msra.mxu0 %v5308
    %5466 = vmatprep.subr.mxu0 0.0
    %5467 = vmatpush1.msra.mxu0 %v5307
    %5468 = vmatprep.subr.mxu0 0.0
    %5469 = vmatpush1.msra.mxu0 %v5306
    %5470 = vmatprep.subr.mxu0 0.0
    %5471 = vmatpush1.msra.mxu0 %v5305
    %5472 = vmatprep.subr.mxu0 0.0
    %5473 = vmatpush2.msra.mxu0 0.0
    %5474 = vmatprep.subr.mxu0 0.0
    %5475 = vmatpush2.msra.mxu0 0.0
    %5476 = vmatprep.subr.mxu0 0.0
    %5477 = vmatpush2.msra.mxu0 0.0
    %5478 = vmatprep.subr.mxu0 0.0
    %5479 = vmatpush2.msra.mxu0 0.0
    %5480 = vmatprep.subr.mxu0 0.0
    %5481 = vmatpush2.msra.mxu0 0.0
    %5482 = vmatprep.subr.mxu0 0.0
    %5483 = vmatpush2.msra.mxu0 0.0
    %5484 = vmatprep.subr.mxu0 0.0
    %5485 = vmatpush2.msra.mxu0 0.0
    %5486 = vmatprep.subr.mxu0 0.0
    %5487 = vmatpush2.msra.mxu0 0.0
    %5488 = vmatprep.subr.mxu0 0.0
    %5489 = vmatpush2.msra.mxu0 0.0
    %5490 = vmatprep.subr.mxu0 0.0
    %5491 = vmatpush2.msra.mxu0 0.0
    %5492 = vmatprep.subr.mxu0 0.0
    %5493 = vmatpush2.msra.mxu0 0.0
    %5494 = vmatprep.subr.mxu0 0.0
    %5495 = vmatpush2.msra.mxu0 0.0
    %5496 = vmatprep.subr.mxu0 0.0
    %5497 = vmatpush2.msra.mxu0 0.0
    %5498 = vmatprep.subr.mxu0 0.0
    %5499 = vmatpush2.msra.mxu0 0.0
    %5500 = vmatprep.subr.mxu0 0.0
    %5501 = vmatpush2.msra.mxu0 0.0
    %5502 = vmatprep.subr.mxu0 0.0
    %5503 = vmatpush2.msra.mxu0 0.0
    %5504 = vmatprep.mubr.f32.mxu0 0.0
    %5505 = vmatmul.mubr.f32.gmra.mxu0 %v5432
    %v5506 = vpop.f32.mrf.mxu0
    %v5507 = vadd.f32 %v5408, %v5506
    %v5508 = vpop.f32.mrf.mxu0
    %5509 = vmatprep.mubr.f32.mxu0 0.0
    %5510 = vmatmul.mubr.f32.gmra.mxu0 %v5434
    %v5511 = vpop.f32.mrf.mxu0
    %v5512 = vadd.f32 %v5413, %v5511
    %v5513 = vpop.f32.mrf.mxu0
    %5514 = vmatprep.mubr.f32.mxu0 0.0
    %5515 = vmatmul.mubr.f32.gmra.mxu0 %v5436
    %v5516 = vpop.f32.mrf.mxu0
    %v5517 = vadd.f32 %v5418, %v5516
    %v5518 = vpop.f32.mrf.mxu0
    %5519 = vmatprep.mubr.f32.mxu0 0.0
    %5520 = vmatmul.mubr.f32.gmra.mxu0 %v5438
    %v5521 = vpop.f32.mrf.mxu0
    %v5522 = vadd.f32 %v5423, %v5521
    %v5523 = vpop.f32.mrf.mxu0
    %5524 = vdwg.mxu0
    %v5525 = vld [vmem:[%s3377] sm:$0xff]
    %v5526 = vld [vmem:[%s3377 + $0x8] sm:$0xff]
    %v5527 = vld [vmem:[%s3377 + $0x10] sm:$0xff]
    %v5528 = vld [vmem:[%s3377 + $0x18] sm:$0xff]
    %v5529 = vld [vmem:[%s3377 + $0x20] sm:$0xff]
    %v5530 = vld [vmem:[%s3377 + $0x28] sm:$0xff]
    %v5531 = vld [vmem:[%s3377 + $0x30] sm:$0xff]
    %v5532 = vld [vmem:[%s3377 + $0x38] sm:$0xff]
    %v5535 = vcombine.low %v5297, %v5298
    %v5536 = vcombine.low %v5303, %v5304
    %v5537 = vsel %vm50, %v5535, 0
    %v5539 = vsel %vm50, %v5536, 0
    %5541 = vmatprep.subr.mxu0 0.0
    %5542 = vmatpush1.msra.mxu0 0.0
    %5543 = vmatprep.subr.mxu0 0.0
    %5544 = vmatpush1.msra.mxu0 0.0
    %5545 = vmatprep.subr.mxu0 0.0
    %5546 = vmatpush1.msra.mxu0 0.0
    %5547 = vmatprep.subr.mxu0 0.0
    %5548 = vmatpush1.msra.mxu0 0.0
    %5549 = vmatprep.subr.mxu0 0.0
    %5550 = vmatpush1.msra.mxu0 0.0
    %5551 = vmatprep.subr.mxu0 0.0
    %5552 = vmatpush1.msra.mxu0 0.0
    %5553 = vmatprep.subr.mxu0 0.0
    %5554 = vmatpush1.msra.mxu0 0.0
    %5555 = vmatprep.subr.mxu0 0.0
    %5556 = vmatpush1.msra.mxu0 0.0
    %5557 = vmatprep.subr.mxu0 0.0
    %5558 = vmatpush1.msra.mxu0 %v5532
    %5559 = vmatprep.subr.mxu0 0.0
    %5560 = vmatpush1.msra.mxu0 %v5531
    %5561 = vmatprep.subr.mxu0 0.0
    %5562 = vmatpush1.msra.mxu0 %v5530
    %5563 = vmatprep.subr.mxu0 0.0
    %5564 = vmatpush1.msra.mxu0 %v5529
    %5565 = vmatprep.subr.mxu0 0.0
    %5566 = vmatpush1.msra.mxu0 %v5528
    %5567 = vmatprep.subr.mxu0 0.0
    %5568 = vmatpush1.msra.mxu0 %v5527
    %5569 = vmatprep.subr.mxu0 0.0
    %5570 = vmatpush1.msra.mxu0 %v5526
    %5571 = vmatprep.subr.mxu0 0.0
    %5572 = vmatpush1.msra.mxu0 %v5525
    %5573 = vmatprep.subr.mxu0 0.0
    %5574 = vmatpush2.msra.mxu0 0.0
    %5575 = vmatprep.subr.mxu0 0.0
    %5576 = vmatpush2.msra.mxu0 0.0
    %5577 = vmatprep.subr.mxu0 0.0
    %5578 = vmatpush2.msra.mxu0 0.0
    %5579 = vmatprep.subr.mxu0 0.0
    %5580 = vmatpush2.msra.mxu0 0.0
    %5581 = vmatprep.subr.mxu0 0.0
    %5582 = vmatpush2.msra.mxu0 0.0
    %5583 = vmatprep.subr.mxu0 0.0
    %5584 = vmatpush2.msra.mxu0 0.0
    %5585 = vmatprep.subr.mxu0 0.0
    %5586 = vmatpush2.msra.mxu0 0.0
    %5587 = vmatprep.subr.mxu0 0.0
    %5588 = vmatpush2.msra.mxu0 0.0
    %5589 = vmatprep.subr.mxu0 0.0
    %5590 = vmatpush2.msra.mxu0 0.0
    %5591 = vmatprep.subr.mxu0 0.0
    %5592 = vmatpush2.msra.mxu0 0.0
    %5593 = vmatprep.subr.mxu0 0.0
    %5594 = vmatpush2.msra.mxu0 0.0
    %5595 = vmatprep.subr.mxu0 0.0
    %5596 = vmatpush2.msra.mxu0 0.0
    %5597 = vmatprep.subr.mxu0 0.0
    %5598 = vmatpush2.msra.mxu0 0.0
    %5599 = vmatprep.subr.mxu0 0.0
    %5600 = vmatpush2.msra.mxu0 0.0
    %5601 = vmatprep.subr.mxu0 0.0
    %5602 = vmatpush2.msra.mxu0 0.0
    %5603 = vmatprep.subr.mxu0 0.0
    %5604 = vmatpush2.msra.mxu0 0.0
    %5605 = vmatprep.mubr.f32.mxu0 0.0
    %5606 = vmatmul.mubr.f32.gmra.mxu0 %v5434
    %v5607 = vpop.f32.mrf.mxu0
    %v5608 = vadd.f32 0.0, %v5607
    %v5609 = vpop.f32.mrf.mxu0
    %5610 = vmatprep.mubr.f32.mxu0 0.0
    %5611 = vmatmul.mubr.f32.gmra.mxu0 %v5537
    %v5612 = vpop.f32.mrf.mxu0
    %v5613 = vadd.f32 0.0, %v5612
    %v5614 = vpop.f32.mrf.mxu0
    %5615 = vmatprep.mubr.f32.mxu0 0.0
    %5616 = vmatmul.mubr.f32.gmra.mxu0 %v5438
    %v5617 = vpop.f32.mrf.mxu0
    %v5618 = vadd.f32 0.0, %v5617
    %v5619 = vpop.f32.mrf.mxu0
    %5620 = vmatprep.mubr.f32.mxu0 0.0
    %5621 = vmatmul.mubr.f32.gmra.mxu0 %v5539
    %v5622 = vpop.f32.mrf.mxu0
    %v5623 = vadd.f32 0.0, %v5622
    %v5624 = vpop.f32.mrf.mxu0
    %5625 = vdwg.mxu0
    %v5626 = vadd.f32 %v5507, %v5608
    %v5627 = vadd.f32 %v5512, %v5613
    %v5628 = vadd.f32 %v5517, %v5618
    %v5629 = vadd.f32 %v5522, %v5623
    %v5630 = vld [vmem:[#allocation3 + $0x8] sm:$0xf]
    %v5631 = vld [vmem:[#allocation3 + $0x18] sm:$0xf]
    %v5632 = vld [vmem:[#allocation3 + $0x28] sm:$0xf]
    %v5633 = vld [vmem:[#allocation3 + $0x38] sm:$0xf]
    %v5634 = vld [vmem:[#allocation3 + $0x48] sm:$0xf]
    %v5635 = vld [vmem:[#allocation3 + $0x58] sm:$0xf]
    %v5636 = vld [vmem:[#allocation3 + $0x68] sm:$0xf]
    %v5637 = vld [vmem:[#allocation3 + $0x78] sm:$0xf]
    %v5638 = vld [vmem:[#allocation3 + $0x88] sm:$0xf]
    %v5639 = vld [vmem:[#allocation3 + $0x98] sm:$0xf]
    %v5640 = vld [vmem:[#allocation3 + $0xa8] sm:$0xf]
    %v5641 = vld [vmem:[#allocation3 + $0xb8] sm:$0xf]
    %v5642 = vld [vmem:[%s3573] sm:$0xff]
    %v5643 = vld [vmem:[%s3573 + $0x8] sm:$0xff]
    %v5644 = vld [vmem:[%s3573 + $0x10] sm:$0xff]
    %v5645 = vld [vmem:[%s3573 + $0x18] sm:$0xff]
    %v5646 = vld [vmem:[%s3573 + $0x20] sm:$0xff]
    %v5647 = vld [vmem:[%s3573 + $0x28] sm:$0xff]
    %v5648 = vld [vmem:[%s3573 + $0x30] sm:$0xff]
    %v5649 = vld [vmem:[%s3573 + $0x38] sm:$0xff]
    %v5658 = vcombine.low %v5630, %v5631
    %v5659 = vcombine.low %v5632, %v5633
    %v5660 = vcombine.low %v5636, %v5637
    %v5661 = vcombine.low %v5638, %v5639
    %v5662 = vsel %vm50, %v5658, 0
    %v5664 = vsel %vm50, %v5659, 0
    %v5666 = vsel %vm50, %v5660, 0
    %v5668 = vsel %vm50, %v5661, 0
    %5670 = vmatprep.subr.mxu0 0.0
    %5671 = vmatpush1.msra.mxu0 0.0
    %5672 = vmatprep.subr.mxu0 0.0
    %5673 = vmatpush1.msra.mxu0 0.0
    %5674 = vmatprep.subr.mxu0 0.0
    %5675 = vmatpush1.msra.mxu0 0.0
    %5676 = vmatprep.subr.mxu0 0.0
    %5677 = vmatpush1.msra.mxu0 0.0
    %5678 = vmatprep.subr.mxu0 0.0
    %5679 = vmatpush1.msra.mxu0 0.0
    %5680 = vmatprep.subr.mxu0 0.0
    %5681 = vmatpush1.msra.mxu0 0.0
    %5682 = vmatprep.subr.mxu0 0.0
    %5683 = vmatpush1.msra.mxu0 0.0
    %5684 = vmatprep.subr.mxu0 0.0
    %5685 = vmatpush1.msra.mxu0 0.0
    %5686 = vmatprep.subr.mxu0 0.0
    %5687 = vmatpush1.msra.mxu0 %v5649
    %5688 = vmatprep.subr.mxu0 0.0
    %5689 = vmatpush1.msra.mxu0 %v5648
    %5690 = vmatprep.subr.mxu0 0.0
    %5691 = vmatpush1.msra.mxu0 %v5647
    %5692 = vmatprep.subr.mxu0 0.0
    %5693 = vmatpush1.msra.mxu0 %v5646
    %5694 = vmatprep.subr.mxu0 0.0
    %5695 = vmatpush1.msra.mxu0 %v5645
    %5696 = vmatprep.subr.mxu0 0.0
    %5697 = vmatpush1.msra.mxu0 %v5644
    %5698 = vmatprep.subr.mxu0 0.0
    %5699 = vmatpush1.msra.mxu0 %v5643
    %5700 = vmatprep.subr.mxu0 0.0
    %5701 = vmatpush1.msra.mxu0 %v5642
    %5702 = vmatprep.subr.mxu0 0.0
    %5703 = vmatpush2.msra.mxu0 0.0
    %5704 = vmatprep.subr.mxu0 0.0
    %5705 = vmatpush2.msra.mxu0 0.0
    %5706 = vmatprep.subr.mxu0 0.0
    %5707 = vmatpush2.msra.mxu0 0.0
    %5708 = vmatprep.subr.mxu0 0.0
    %5709 = vmatpush2.msra.mxu0 0.0
    %5710 = vmatprep.subr.mxu0 0.0
    %5711 = vmatpush2.msra.mxu0 0.0
    %5712 = vmatprep.subr.mxu0 0.0
    %5713 = vmatpush2.msra.mxu0 0.0
    %5714 = vmatprep.subr.mxu0 0.0
    %5715 = vmatpush2.msra.mxu0 0.0
    %5716 = vmatprep.subr.mxu0 0.0
    %5717 = vmatpush2.msra.mxu0 0.0
    %5718 = vmatprep.subr.mxu0 0.0
    %5719 = vmatpush2.msra.mxu0 0.0
    %5720 = vmatprep.subr.mxu0 0.0
    %5721 = vmatpush2.msra.mxu0 0.0
    %5722 = vmatprep.subr.mxu0 0.0
    %5723 = vmatpush2.msra.mxu0 0.0
    %5724 = vmatprep.subr.mxu0 0.0
    %5725 = vmatpush2.msra.mxu0 0.0
    %5726 = vmatprep.subr.mxu0 0.0
    %5727 = vmatpush2.msra.mxu0 0.0
    %5728 = vmatprep.subr.mxu0 0.0
    %5729 = vmatpush2.msra.mxu0 0.0
    %5730 = vmatprep.subr.mxu0 0.0
    %5731 = vmatpush2.msra.mxu0 0.0
    %5732 = vmatprep.subr.mxu0 0.0
    %5733 = vmatpush2.msra.mxu0 0.0
    %5734 = vmatprep.mubr.f32.mxu0 0.0
    %5735 = vmatmul.mubr.f32.gmra.mxu0 %v5662
    %v5736 = vpop.f32.mrf.mxu0
    %v5737 = vadd.f32 0.0, %v5736
    %v5738 = vpop.f32.mrf.mxu0
    %5739 = vmatprep.mubr.f32.mxu0 0.0
    %5740 = vmatmul.mubr.f32.gmra.mxu0 %v5664
    %v5741 = vpop.f32.mrf.mxu0
    %v5742 = vadd.f32 0.0, %v5741
    %v5743 = vpop.f32.mrf.mxu0
    %5744 = vmatprep.mubr.f32.mxu0 0.0
    %5745 = vmatmul.mubr.f32.gmra.mxu0 %v5666
    %v5746 = vpop.f32.mrf.mxu0
    %v5747 = vadd.f32 0.0, %v5746
    %v5748 = vpop.f32.mrf.mxu0
    %5749 = vmatprep.mubr.f32.mxu0 0.0
    %5750 = vmatmul.mubr.f32.gmra.mxu0 %v5668
    %v5751 = vpop.f32.mrf.mxu0
    %v5752 = vadd.f32 0.0, %v5751
    %v5753 = vpop.f32.mrf.mxu0
    %5754 = vdwg.mxu0
    %v5755 = vadd.f32 %v5626, %v5737
    %v5756 = vadd.f32 %v5627, %v5742
    %v5757 = vadd.f32 %v5628, %v5747
    %v5758 = vadd.f32 %v5629, %v5752
    %v5759 = vld [vmem:[%s3791] sm:$0xff]
    %v5760 = vld [vmem:[%s3791 + $0x8] sm:$0xff]
    %v5761 = vld [vmem:[%s3791 + $0x10] sm:$0xff]
    %v5762 = vld [vmem:[%s3791 + $0x18] sm:$0xff]
    %v5763 = vld [vmem:[%s3791 + $0x20] sm:$0xff]
    %v5764 = vld [vmem:[%s3791 + $0x28] sm:$0xff]
    %v5765 = vld [vmem:[%s3791 + $0x30] sm:$0xff]
    %v5766 = vld [vmem:[%s3791 + $0x38] sm:$0xff]
    %v5769 = vcombine.low %v5631, %v5632
    %v5770 = vcombine.low %v5633, %v5634
    %v5771 = vcombine.low %v5637, %v5638
    %v5772 = vcombine.low %v5639, %v5640
    %v5773 = vsel %vm50, %v5769, 0
    %v5775 = vsel %vm50, %v5770, 0
    %v5777 = vsel %vm50, %v5771, 0
    %v5779 = vsel %vm50, %v5772, 0
    %5781 = vmatprep.subr.mxu0 0.0
    %5782 = vmatpush1.msra.mxu0 0.0
    %5783 = vmatprep.subr.mxu0 0.0
    %5784 = vmatpush1.msra.mxu0 0.0
    %5785 = vmatprep.subr.mxu0 0.0
    %5786 = vmatpush1.msra.mxu0 0.0
    %5787 = vmatprep.subr.mxu0 0.0
    %5788 = vmatpush1.msra.mxu0 0.0
    %5789 = vmatprep.subr.mxu0 0.0
    %5790 = vmatpush1.msra.mxu0 0.0
    %5791 = vmatprep.subr.mxu0 0.0
    %5792 = vmatpush1.msra.mxu0 0.0
    %5793 = vmatprep.subr.mxu0 0.0
    %5794 = vmatpush1.msra.mxu0 0.0
    %5795 = vmatprep.subr.mxu0 0.0
    %5796 = vmatpush1.msra.mxu0 0.0
    %5797 = vmatprep.subr.mxu0 0.0
    %5798 = vmatpush1.msra.mxu0 %v5766
    %5799 = vmatprep.subr.mxu0 0.0
    %5800 = vmatpush1.msra.mxu0 %v5765
    %5801 = vmatprep.subr.mxu0 0.0
    %5802 = vmatpush1.msra.mxu0 %v5764
    %5803 = vmatprep.subr.mxu0 0.0
    %5804 = vmatpush1.msra.mxu0 %v5763
    %5805 = vmatprep.subr.mxu0 0.0
    %5806 = vmatpush1.msra.mxu0 %v5762
    %5807 = vmatprep.subr.mxu0 0.0
    %5808 = vmatpush1.msra.mxu0 %v5761
    %5809 = vmatprep.subr.mxu0 0.0
    %5810 = vmatpush1.msra.mxu0 %v5760
    %5811 = vmatprep.subr.mxu0 0.0
    %5812 = vmatpush1.msra.mxu0 %v5759
    %5813 = vmatprep.subr.mxu0 0.0
    %5814 = vmatpush2.msra.mxu0 0.0
    %5815 = vmatprep.subr.mxu0 0.0
    %5816 = vmatpush2.msra.mxu0 0.0
    %5817 = vmatprep.subr.mxu0 0.0
    %5818 = vmatpush2.msra.mxu0 0.0
    %5819 = vmatprep.subr.mxu0 0.0
    %5820 = vmatpush2.msra.mxu0 0.0
    %5821 = vmatprep.subr.mxu0 0.0
    %5822 = vmatpush2.msra.mxu0 0.0
    %5823 = vmatprep.subr.mxu0 0.0
    %5824 = vmatpush2.msra.mxu0 0.0
    %5825 = vmatprep.subr.mxu0 0.0
    %5826 = vmatpush2.msra.mxu0 0.0
    %5827 = vmatprep.subr.mxu0 0.0
    %5828 = vmatpush2.msra.mxu0 0.0
    %5829 = vmatprep.subr.mxu0 0.0
    %5830 = vmatpush2.msra.mxu0 0.0
    %5831 = vmatprep.subr.mxu0 0.0
    %5832 = vmatpush2.msra.mxu0 0.0
    %5833 = vmatprep.subr.mxu0 0.0
    %5834 = vmatpush2.msra.mxu0 0.0
    %5835 = vmatprep.subr.mxu0 0.0
    %5836 = vmatpush2.msra.mxu0 0.0
    %5837 = vmatprep.subr.mxu0 0.0
    %5838 = vmatpush2.msra.mxu0 0.0
    %5839 = vmatprep.subr.mxu0 0.0
    %5840 = vmatpush2.msra.mxu0 0.0
    %5841 = vmatprep.subr.mxu0 0.0
    %5842 = vmatpush2.msra.mxu0 0.0
    %5843 = vmatprep.subr.mxu0 0.0
    %5844 = vmatpush2.msra.mxu0 0.0
    %5845 = vmatprep.mubr.f32.mxu0 0.0
    %5846 = vmatmul.mubr.f32.gmra.mxu0 %v5773
    %v5847 = vpop.f32.mrf.mxu0
    %v5848 = vadd.f32 0.0, %v5847
    %v5849 = vpop.f32.mrf.mxu0
    %5850 = vmatprep.mubr.f32.mxu0 0.0
    %5851 = vmatmul.mubr.f32.gmra.mxu0 %v5775
    %v5852 = vpop.f32.mrf.mxu0
    %v5853 = vadd.f32 0.0, %v5852
    %v5854 = vpop.f32.mrf.mxu0
    %5855 = vmatprep.mubr.f32.mxu0 0.0
    %5856 = vmatmul.mubr.f32.gmra.mxu0 %v5777
    %v5857 = vpop.f32.mrf.mxu0
    %v5858 = vadd.f32 0.0, %v5857
    %v5859 = vpop.f32.mrf.mxu0
    %5860 = vmatprep.mubr.f32.mxu0 0.0
    %5861 = vmatmul.mubr.f32.gmra.mxu0 %v5779
    %v5862 = vpop.f32.mrf.mxu0
    %v5863 = vadd.f32 0.0, %v5862
    %v5864 = vpop.f32.mrf.mxu0
    %5865 = vdwg.mxu0
    %v5866 = vadd.f32 %v5755, %v5848
    %v5867 = vadd.f32 %v5756, %v5853
    %v5868 = vadd.f32 %v5757, %v5858
    %v5869 = vadd.f32 %v5758, %v5863
    %v5870 = vld [vmem:[%s3967] sm:$0xff]
    %v5871 = vld [vmem:[%s3967 + $0x8] sm:$0xff]
    %v5872 = vld [vmem:[%s3967 + $0x10] sm:$0xff]
    %v5873 = vld [vmem:[%s3967 + $0x18] sm:$0xff]
    %v5874 = vld [vmem:[%s3967 + $0x20] sm:$0xff]
    %v5875 = vld [vmem:[%s3967 + $0x28] sm:$0xff]
    %v5876 = vld [vmem:[%s3967 + $0x30] sm:$0xff]
    %v5877 = vld [vmem:[%s3967 + $0x38] sm:$0xff]
    %v5880 = vcombine.low %v5634, %v5635
    %v5881 = vcombine.low %v5640, %v5641
    %v5882 = vsel %vm50, %v5880, 0
    %v5884 = vsel %vm50, %v5881, 0
    %5886 = vmatprep.subr.mxu0 0.0
    %5887 = vmatpush1.msra.mxu0 0.0
    %5888 = vmatprep.subr.mxu0 0.0
    %5889 = vmatpush1.msra.mxu0 0.0
    %5890 = vmatprep.subr.mxu0 0.0
    %5891 = vmatpush1.msra.mxu0 0.0
    %5892 = vmatprep.subr.mxu0 0.0
    %5893 = vmatpush1.msra.mxu0 0.0
    %5894 = vmatprep.subr.mxu0 0.0
    %5895 = vmatpush1.msra.mxu0 0.0
    %5896 = vmatprep.subr.mxu0 0.0
    %5897 = vmatpush1.msra.mxu0 0.0
    %5898 = vmatprep.subr.mxu0 0.0
    %5899 = vmatpush1.msra.mxu0 0.0
    %5900 = vmatprep.subr.mxu0 0.0
    %5901 = vmatpush1.msra.mxu0 0.0
    %5902 = vmatprep.subr.mxu0 0.0
    %5903 = vmatpush1.msra.mxu0 %v5877
    %5904 = vmatprep.subr.mxu0 0.0
    %5905 = vmatpush1.msra.mxu0 %v5876
    %5906 = vmatprep.subr.mxu0 0.0
    %5907 = vmatpush1.msra.mxu0 %v5875
    %5908 = vmatprep.subr.mxu0 0.0
    %5909 = vmatpush1.msra.mxu0 %v5874
    %5910 = vmatprep.subr.mxu0 0.0
    %5911 = vmatpush1.msra.mxu0 %v5873
    %5912 = vmatprep.subr.mxu0 0.0
    %5913 = vmatpush1.msra.mxu0 %v5872
    %5914 = vmatprep.subr.mxu0 0.0
    %5915 = vmatpush1.msra.mxu0 %v5871
    %5916 = vmatprep.subr.mxu0 0.0
    %5917 = vmatpush1.msra.mxu0 %v5870
    %5918 = vmatprep.subr.mxu0 0.0
    %5919 = vmatpush2.msra.mxu0 0.0
    %5920 = vmatprep.subr.mxu0 0.0
    %5921 = vmatpush2.msra.mxu0 0.0
    %5922 = vmatprep.subr.mxu0 0.0
    %5923 = vmatpush2.msra.mxu0 0.0
    %5924 = vmatprep.subr.mxu0 0.0
    %5925 = vmatpush2.msra.mxu0 0.0
    %5926 = vmatprep.subr.mxu0 0.0
    %5927 = vmatpush2.msra.mxu0 0.0
    %5928 = vmatprep.subr.mxu0 0.0
    %5929 = vmatpush2.msra.mxu0 0.0
    %5930 = vmatprep.subr.mxu0 0.0
    %5931 = vmatpush2.msra.mxu0 0.0
    %5932 = vmatprep.subr.mxu0 0.0
    %5933 = vmatpush2.msra.mxu0 0.0
    %5934 = vmatprep.subr.mxu0 0.0
    %5935 = vmatpush2.msra.mxu0 0.0
    %5936 = vmatprep.subr.mxu0 0.0
    %5937 = vmatpush2.msra.mxu0 0.0
    %5938 = vmatprep.subr.mxu0 0.0
    %5939 = vmatpush2.msra.mxu0 0.0
    %5940 = vmatprep.subr.mxu0 0.0
    %5941 = vmatpush2.msra.mxu0 0.0
    %5942 = vmatprep.subr.mxu0 0.0
    %5943 = vmatpush2.msra.mxu0 0.0
    %5944 = vmatprep.subr.mxu0 0.0
    %5945 = vmatpush2.msra.mxu0 0.0
    %5946 = vmatprep.subr.mxu0 0.0
    %5947 = vmatpush2.msra.mxu0 0.0
    %5948 = vmatprep.subr.mxu0 0.0
    %5949 = vmatpush2.msra.mxu0 0.0
    %5950 = vmatprep.mubr.f32.mxu0 0.0
    %5951 = vmatmul.mubr.f32.gmra.mxu0 %v5664
    %v5952 = vpop.f32.mrf.mxu0
    %v5953 = vadd.f32 0.0, %v5952
    %v5954 = vpop.f32.mrf.mxu0
    %5955 = vmatprep.mubr.f32.mxu0 0.0
    %5956 = vmatmul.mubr.f32.gmra.mxu0 %v5882
    %v5957 = vpop.f32.mrf.mxu0
    %v5958 = vadd.f32 0.0, %v5957
    %v5959 = vpop.f32.mrf.mxu0
    %5960 = vmatprep.mubr.f32.mxu0 0.0
    %5961 = vmatmul.mubr.f32.gmra.mxu0 %v5668
    %v5962 = vpop.f32.mrf.mxu0
    %v5963 = vadd.f32 0.0, %v5962
    %v5964 = vpop.f32.mrf.mxu0
    %5965 = vmatprep.mubr.f32.mxu0 0.0
    %5966 = vmatmul.mubr.f32.gmra.mxu0 %v5884
    %v5967 = vpop.f32.mrf.mxu0
    %v5968 = vadd.f32 0.0, %v5967
    %v5969 = vpop.f32.mrf.mxu0
    %5970 = vdwg.mxu0
    %v5971 = vadd.f32 %v5866, %v5953
    %v5972 = vadd.f32 %v5867, %v5958
    %v5973 = vadd.f32 %v5868, %v5963
    %v5974 = vadd.f32 %v5869, %v5968
    %v5975 = vld [vmem:[#allocation3 + $0x9] sm:$0xf]
    %v5976 = vld [vmem:[#allocation3 + $0x19] sm:$0xf]
    %v5977 = vld [vmem:[#allocation3 + $0x29] sm:$0xf]
    %v5978 = vld [vmem:[#allocation3 + $0x39] sm:$0xf]
    %v5979 = vld [vmem:[#allocation3 + $0x49] sm:$0xf]
    %v5980 = vld [vmem:[#allocation3 + $0x59] sm:$0xf]
    %v5981 = vld [vmem:[#allocation3 + $0x69] sm:$0xf]
    %v5982 = vld [vmem:[#allocation3 + $0x79] sm:$0xf]
    %v5983 = vld [vmem:[#allocation3 + $0x89] sm:$0xf]
    %v5984 = vld [vmem:[#allocation3 + $0x99] sm:$0xf]
    %v5985 = vld [vmem:[#allocation3 + $0xa9] sm:$0xf]
    %v5986 = vld [vmem:[#allocation3 + $0xb9] sm:$0xf]
    %v5987 = vld [vmem:[%s4163] sm:$0xff]
    %v5988 = vld [vmem:[%s4163 + $0x8] sm:$0xff]
    %v5989 = vld [vmem:[%s4163 + $0x10] sm:$0xff]
    %v5990 = vld [vmem:[%s4163 + $0x18] sm:$0xff]
    %v5991 = vld [vmem:[%s4163 + $0x20] sm:$0xff]
    %v5992 = vld [vmem:[%s4163 + $0x28] sm:$0xff]
    %v5993 = vld [vmem:[%s4163 + $0x30] sm:$0xff]
    %v5994 = vld [vmem:[%s4163 + $0x38] sm:$0xff]
    %v6003 = vcombine.low %v5975, %v5976
    %v6004 = vcombine.low %v5977, %v5978
    %v6005 = vcombine.low %v5981, %v5982
    %v6006 = vcombine.low %v5983, %v5984
    %v6007 = vsel %vm50, %v6003, 0
    %v6009 = vsel %vm50, %v6004, 0
    %v6011 = vsel %vm50, %v6005, 0
    %v6013 = vsel %vm50, %v6006, 0
    %6015 = vmatprep.subr.mxu0 0.0
    %6016 = vmatpush1.msra.mxu0 0.0
    %6017 = vmatprep.subr.mxu0 0.0
    %6018 = vmatpush1.msra.mxu0 0.0
    %6019 = vmatprep.subr.mxu0 0.0
    %6020 = vmatpush1.msra.mxu0 0.0
    %6021 = vmatprep.subr.mxu0 0.0
    %6022 = vmatpush1.msra.mxu0 0.0
    %6023 = vmatprep.subr.mxu0 0.0
    %6024 = vmatpush1.msra.mxu0 0.0
    %6025 = vmatprep.subr.mxu0 0.0
    %6026 = vmatpush1.msra.mxu0 0.0
    %6027 = vmatprep.subr.mxu0 0.0
    %6028 = vmatpush1.msra.mxu0 0.0
    %6029 = vmatprep.subr.mxu0 0.0
    %6030 = vmatpush1.msra.mxu0 0.0
    %6031 = vmatprep.subr.mxu0 0.0
    %6032 = vmatpush1.msra.mxu0 %v5994
    %6033 = vmatprep.subr.mxu0 0.0
    %6034 = vmatpush1.msra.mxu0 %v5993
    %6035 = vmatprep.subr.mxu0 0.0
    %6036 = vmatpush1.msra.mxu0 %v5992
    %6037 = vmatprep.subr.mxu0 0.0
    %6038 = vmatpush1.msra.mxu0 %v5991
    %6039 = vmatprep.subr.mxu0 0.0
    %6040 = vmatpush1.msra.mxu0 %v5990
    %6041 = vmatprep.subr.mxu0 0.0
    %6042 = vmatpush1.msra.mxu0 %v5989
    %6043 = vmatprep.subr.mxu0 0.0
    %6044 = vmatpush1.msra.mxu0 %v5988
    %6045 = vmatprep.subr.mxu0 0.0
    %6046 = vmatpush1.msra.mxu0 %v5987
    %6047 = vmatprep.subr.mxu0 0.0
    %6048 = vmatpush2.msra.mxu0 0.0
    %6049 = vmatprep.subr.mxu0 0.0
    %6050 = vmatpush2.msra.mxu0 0.0
    %6051 = vmatprep.subr.mxu0 0.0
    %6052 = vmatpush2.msra.mxu0 0.0
    %6053 = vmatprep.subr.mxu0 0.0
    %6054 = vmatpush2.msra.mxu0 0.0
    %6055 = vmatprep.subr.mxu0 0.0
    %6056 = vmatpush2.msra.mxu0 0.0
    %6057 = vmatprep.subr.mxu0 0.0
    %6058 = vmatpush2.msra.mxu0 0.0
    %6059 = vmatprep.subr.mxu0 0.0
    %6060 = vmatpush2.msra.mxu0 0.0
    %6061 = vmatprep.subr.mxu0 0.0
    %6062 = vmatpush2.msra.mxu0 0.0
    %6063 = vmatprep.subr.mxu0 0.0
    %6064 = vmatpush2.msra.mxu0 0.0
    %6065 = vmatprep.subr.mxu0 0.0
    %6066 = vmatpush2.msra.mxu0 0.0
    %6067 = vmatprep.subr.mxu0 0.0
    %6068 = vmatpush2.msra.mxu0 0.0
    %6069 = vmatprep.subr.mxu0 0.0
    %6070 = vmatpush2.msra.mxu0 0.0
    %6071 = vmatprep.subr.mxu0 0.0
    %6072 = vmatpush2.msra.mxu0 0.0
    %6073 = vmatprep.subr.mxu0 0.0
    %6074 = vmatpush2.msra.mxu0 0.0
    %6075 = vmatprep.subr.mxu0 0.0
    %6076 = vmatpush2.msra.mxu0 0.0
    %6077 = vmatprep.subr.mxu0 0.0
    %6078 = vmatpush2.msra.mxu0 0.0
    %6079 = vmatprep.mubr.f32.mxu0 0.0
    %6080 = vmatmul.mubr.f32.gmra.mxu0 %v6007
    %v6081 = vpop.f32.mrf.mxu0
    %v6082 = vadd.f32 0.0, %v6081
    %v6083 = vpop.f32.mrf.mxu0
    %6084 = vmatprep.mubr.f32.mxu0 0.0
    %6085 = vmatmul.mubr.f32.gmra.mxu0 %v6009
    %v6086 = vpop.f32.mrf.mxu0
    %v6087 = vadd.f32 0.0, %v6086
    %v6088 = vpop.f32.mrf.mxu0
    %6089 = vmatprep.mubr.f32.mxu0 0.0
    %6090 = vmatmul.mubr.f32.gmra.mxu0 %v6011
    %v6091 = vpop.f32.mrf.mxu0
    %v6092 = vadd.f32 0.0, %v6091
    %v6093 = vpop.f32.mrf.mxu0
    %6094 = vmatprep.mubr.f32.mxu0 0.0
    %6095 = vmatmul.mubr.f32.gmra.mxu0 %v6013
    %v6096 = vpop.f32.mrf.mxu0
    %v6097 = vadd.f32 0.0, %v6096
    %v6098 = vpop.f32.mrf.mxu0
    %6099 = vdwg.mxu0
    %v6100 = vadd.f32 %v5971, %v6082
    %v6101 = vadd.f32 %v5972, %v6087
    %v6102 = vadd.f32 %v5973, %v6092
    %v6103 = vadd.f32 %v5974, %v6097
    %v6104 = vld [vmem:[%s4381] sm:$0xff]
    %v6105 = vld [vmem:[%s4381 + $0x8] sm:$0xff]
    %v6106 = vld [vmem:[%s4381 + $0x10] sm:$0xff]
    %v6107 = vld [vmem:[%s4381 + $0x18] sm:$0xff]
    %v6108 = vld [vmem:[%s4381 + $0x20] sm:$0xff]
    %v6109 = vld [vmem:[%s4381 + $0x28] sm:$0xff]
    %v6110 = vld [vmem:[%s4381 + $0x30] sm:$0xff]
    %v6111 = vld [vmem:[%s4381 + $0x38] sm:$0xff]
    %v6114 = vcombine.low %v5976, %v5977
    %v6115 = vcombine.low %v5978, %v5979
    %v6116 = vcombine.low %v5982, %v5983
    %v6117 = vcombine.low %v5984, %v5985
    %v6118 = vsel %vm50, %v6114, 0
    %v6120 = vsel %vm50, %v6115, 0
    %v6122 = vsel %vm50, %v6116, 0
    %v6124 = vsel %vm50, %v6117, 0
    %6126 = vmatprep.subr.mxu0 0.0
    %6127 = vmatpush1.msra.mxu0 0.0
    %6128 = vmatprep.subr.mxu0 0.0
    %6129 = vmatpush1.msra.mxu0 0.0
    %6130 = vmatprep.subr.mxu0 0.0
    %6131 = vmatpush1.msra.mxu0 0.0
    %6132 = vmatprep.subr.mxu0 0.0
    %6133 = vmatpush1.msra.mxu0 0.0
    %6134 = vmatprep.subr.mxu0 0.0
    %6135 = vmatpush1.msra.mxu0 0.0
    %6136 = vmatprep.subr.mxu0 0.0
    %6137 = vmatpush1.msra.mxu0 0.0
    %6138 = vmatprep.subr.mxu0 0.0
    %6139 = vmatpush1.msra.mxu0 0.0
    %6140 = vmatprep.subr.mxu0 0.0
    %6141 = vmatpush1.msra.mxu0 0.0
    %6142 = vmatprep.subr.mxu0 0.0
    %6143 = vmatpush1.msra.mxu0 %v6111
    %6144 = vmatprep.subr.mxu0 0.0
    %6145 = vmatpush1.msra.mxu0 %v6110
    %6146 = vmatprep.subr.mxu0 0.0
    %6147 = vmatpush1.msra.mxu0 %v6109
    %6148 = vmatprep.subr.mxu0 0.0
    %6149 = vmatpush1.msra.mxu0 %v6108
    %6150 = vmatprep.subr.mxu0 0.0
    %6151 = vmatpush1.msra.mxu0 %v6107
    %6152 = vmatprep.subr.mxu0 0.0
    %6153 = vmatpush1.msra.mxu0 %v6106
    %6154 = vmatprep.subr.mxu0 0.0
    %6155 = vmatpush1.msra.mxu0 %v6105
    %6156 = vmatprep.subr.mxu0 0.0
    %6157 = vmatpush1.msra.mxu0 %v6104
    %6158 = vmatprep.subr.mxu0 0.0
    %6159 = vmatpush2.msra.mxu0 0.0
    %6160 = vmatprep.subr.mxu0 0.0
    %6161 = vmatpush2.msra.mxu0 0.0
    %6162 = vmatprep.subr.mxu0 0.0
    %6163 = vmatpush2.msra.mxu0 0.0
    %6164 = vmatprep.subr.mxu0 0.0
    %6165 = vmatpush2.msra.mxu0 0.0
    %6166 = vmatprep.subr.mxu0 0.0
    %6167 = vmatpush2.msra.mxu0 0.0
    %6168 = vmatprep.subr.mxu0 0.0
    %6169 = vmatpush2.msra.mxu0 0.0
    %6170 = vmatprep.subr.mxu0 0.0
    %6171 = vmatpush2.msra.mxu0 0.0
    %6172 = vmatprep.subr.mxu0 0.0
    %6173 = vmatpush2.msra.mxu0 0.0
    %6174 = vmatprep.subr.mxu0 0.0
    %6175 = vmatpush2.msra.mxu0 0.0
    %6176 = vmatprep.subr.mxu0 0.0
    %6177 = vmatpush2.msra.mxu0 0.0
    %6178 = vmatprep.subr.mxu0 0.0
    %6179 = vmatpush2.msra.mxu0 0.0
    %6180 = vmatprep.subr.mxu0 0.0
    %6181 = vmatpush2.msra.mxu0 0.0
    %6182 = vmatprep.subr.mxu0 0.0
    %6183 = vmatpush2.msra.mxu0 0.0
    %6184 = vmatprep.subr.mxu0 0.0
    %6185 = vmatpush2.msra.mxu0 0.0
    %6186 = vmatprep.subr.mxu0 0.0
    %6187 = vmatpush2.msra.mxu0 0.0
    %6188 = vmatprep.subr.mxu0 0.0
    %6189 = vmatpush2.msra.mxu0 0.0
    %6190 = vmatprep.mubr.f32.mxu0 0.0
    %6191 = vmatmul.mubr.f32.gmra.mxu0 %v6118
    %v6192 = vpop.f32.mrf.mxu0
    %v6193 = vadd.f32 0.0, %v6192
    %v6194 = vpop.f32.mrf.mxu0
    %6195 = vmatprep.mubr.f32.mxu0 0.0
    %6196 = vmatmul.mubr.f32.gmra.mxu0 %v6120
    %v6197 = vpop.f32.mrf.mxu0
    %v6198 = vadd.f32 0.0, %v6197
    %v6199 = vpop.f32.mrf.mxu0
    %6200 = vmatprep.mubr.f32.mxu0 0.0
    %6201 = vmatmul.mubr.f32.gmra.mxu0 %v6122
    %v6202 = vpop.f32.mrf.mxu0
    %v6203 = vadd.f32 0.0, %v6202
    %v6204 = vpop.f32.mrf.mxu0
    %6205 = vmatprep.mubr.f32.mxu0 0.0
    %6206 = vmatmul.mubr.f32.gmra.mxu0 %v6124
    %v6207 = vpop.f32.mrf.mxu0
    %v6208 = vadd.f32 0.0, %v6207
    %v6209 = vpop.f32.mrf.mxu0
    %6210 = vdwg.mxu0
    %v6211 = vadd.f32 %v6100, %v6193
    %v6212 = vadd.f32 %v6101, %v6198
    %v6213 = vadd.f32 %v6102, %v6203
    %v6214 = vadd.f32 %v6103, %v6208
    %v6215 = vld [vmem:[%s4557] sm:$0xff]
    %v6216 = vld [vmem:[%s4557 + $0x8] sm:$0xff]
    %v6217 = vld [vmem:[%s4557 + $0x10] sm:$0xff]
    %v6218 = vld [vmem:[%s4557 + $0x18] sm:$0xff]
    %v6219 = vld [vmem:[%s4557 + $0x20] sm:$0xff]
    %v6220 = vld [vmem:[%s4557 + $0x28] sm:$0xff]
    %v6221 = vld [vmem:[%s4557 + $0x30] sm:$0xff]
    %v6222 = vld [vmem:[%s4557 + $0x38] sm:$0xff]
    %v6225 = vcombine.low %v5979, %v5980
    %v6226 = vcombine.low %v5985, %v5986
    %v6227 = vsel %vm50, %v6225, 0
    %v6229 = vsel %vm50, %v6226, 0
    %6231 = vmatprep.subr.mxu0 0.0
    %6232 = vmatpush1.msra.mxu0 0.0
    %6233 = vmatprep.subr.mxu0 0.0
    %6234 = vmatpush1.msra.mxu0 0.0
    %6235 = vmatprep.subr.mxu0 0.0
    %6236 = vmatpush1.msra.mxu0 0.0
    %6237 = vmatprep.subr.mxu0 0.0
    %6238 = vmatpush1.msra.mxu0 0.0
    %6239 = vmatprep.subr.mxu0 0.0
    %6240 = vmatpush1.msra.mxu0 0.0
    %6241 = vmatprep.subr.mxu0 0.0
    %6242 = vmatpush1.msra.mxu0 0.0
    %6243 = vmatprep.subr.mxu0 0.0
    %6244 = vmatpush1.msra.mxu0 0.0
    %6245 = vmatprep.subr.mxu0 0.0
    %6246 = vmatpush1.msra.mxu0 0.0
    %6247 = vmatprep.subr.mxu0 0.0
    %6248 = vmatpush1.msra.mxu0 %v6222
    %6249 = vmatprep.subr.mxu0 0.0
    %6250 = vmatpush1.msra.mxu0 %v6221
    %6251 = vmatprep.subr.mxu0 0.0
    %6252 = vmatpush1.msra.mxu0 %v6220
    %6253 = vmatprep.subr.mxu0 0.0
    %6254 = vmatpush1.msra.mxu0 %v6219
    %6255 = vmatprep.subr.mxu0 0.0
    %6256 = vmatpush1.msra.mxu0 %v6218
    %6257 = vmatprep.subr.mxu0 0.0
    %6258 = vmatpush1.msra.mxu0 %v6217
    %6259 = vmatprep.subr.mxu0 0.0
    %6260 = vmatpush1.msra.mxu0 %v6216
    %6261 = vmatprep.subr.mxu0 0.0
    %6262 = vmatpush1.msra.mxu0 %v6215
    %6263 = vmatprep.subr.mxu0 0.0
    %6264 = vmatpush2.msra.mxu0 0.0
    %6265 = vmatprep.subr.mxu0 0.0
    %6266 = vmatpush2.msra.mxu0 0.0
    %6267 = vmatprep.subr.mxu0 0.0
    %6268 = vmatpush2.msra.mxu0 0.0
    %6269 = vmatprep.subr.mxu0 0.0
    %6270 = vmatpush2.msra.mxu0 0.0
    %6271 = vmatprep.subr.mxu0 0.0
    %6272 = vmatpush2.msra.mxu0 0.0
    %6273 = vmatprep.subr.mxu0 0.0
    %6274 = vmatpush2.msra.mxu0 0.0
    %6275 = vmatprep.subr.mxu0 0.0
    %6276 = vmatpush2.msra.mxu0 0.0
    %6277 = vmatprep.subr.mxu0 0.0
    %6278 = vmatpush2.msra.mxu0 0.0
    %6279 = vmatprep.subr.mxu0 0.0
    %6280 = vmatpush2.msra.mxu0 0.0
    %6281 = vmatprep.subr.mxu0 0.0
    %6282 = vmatpush2.msra.mxu0 0.0
    %6283 = vmatprep.subr.mxu0 0.0
    %6284 = vmatpush2.msra.mxu0 0.0
    %6285 = vmatprep.subr.mxu0 0.0
    %6286 = vmatpush2.msra.mxu0 0.0
    %6287 = vmatprep.subr.mxu0 0.0
    %6288 = vmatpush2.msra.mxu0 0.0
    %6289 = vmatprep.subr.mxu0 0.0
    %6290 = vmatpush2.msra.mxu0 0.0
    %6291 = vmatprep.subr.mxu0 0.0
    %6292 = vmatpush2.msra.mxu0 0.0
    %6293 = vmatprep.subr.mxu0 0.0
    %6294 = vmatpush2.msra.mxu0 0.0
    %6295 = vmatprep.mubr.f32.mxu0 0.0
    %6296 = vmatmul.mubr.f32.gmra.mxu0 %v6009
    %v6297 = vpop.f32.mrf.mxu0
    %v6298 = vadd.f32 0.0, %v6297
    %v6299 = vpop.f32.mrf.mxu0
    %6300 = vmatprep.mubr.f32.mxu0 0.0
    %6301 = vmatmul.mubr.f32.gmra.mxu0 %v6227
    %v6302 = vpop.f32.mrf.mxu0
    %v6303 = vadd.f32 0.0, %v6302
    %v6304 = vpop.f32.mrf.mxu0
    %6305 = vmatprep.mubr.f32.mxu0 0.0
    %6306 = vmatmul.mubr.f32.gmra.mxu0 %v6013
    %v6307 = vpop.f32.mrf.mxu0
    %v6308 = vadd.f32 0.0, %v6307
    %v6309 = vpop.f32.mrf.mxu0
    %6310 = vmatprep.mubr.f32.mxu0 0.0
    %6311 = vmatmul.mubr.f32.gmra.mxu0 %v6229
    %v6312 = vpop.f32.mrf.mxu0
    %v6313 = vadd.f32 0.0, %v6312
    %v6314 = vpop.f32.mrf.mxu0
    %6315 = vdwg.mxu0
    %v6316 = vadd.f32 %v6211, %v6298
    %v6317 = vadd.f32 %v6212, %v6303
    %v6318 = vadd.f32 %v6213, %v6308
    %v6319 = vadd.f32 %v6214, %v6313
    %v6321 = vlaneseq
    %v6322 = vshrl.u32 %v6321, 7
    %v6323 = vsub.s32 0, %v6322
    %v6324 = vrot.slane %v5291, %v6323
    %v6326 = vmul.f32 %v6316, %v6324
    %v6327 = vmul.f32 %v6317, %v6324
    %v6328 = vmul.f32 %v6318, %v6324
    %v6329 = vmul.f32 %v6319, %v6324
    %v6331 = vlaneseq
    %v6332 = vshrl.u32 %v6331, 7
    %v6333 = vsub.s32 0, %v6332
    %v6334 = vrot.slane %v5292, %v6333
    %v6336 = vadd.f32 %v6326, %v6334
    %v6337 = vadd.f32 %v6327, %v6334
    %v6338 = vadd.f32 %v6328, %v6334
    %v6339 = vadd.f32 %v6329, %v6334
    %v6340 = vmax.f32 %v6336, 0.0
    %v6341 = vmax.f32 %v6337, 0.0
    %v6342 = vmax.f32 %v6338, 0.0
    %v6343 = vmax.f32 %v6339, 0.0
    %v6348 = vcombine.high %v6340, %v6340
    %v6349 = vcombine.high %v6341, %v6341
    %v6350 = vcombine.high %v6342, %v6342
    %v6351 = vcombine.high %v6343, %v6343
    %v6356 = vsel %vm5282, %v6340, -inf
    %v6357 = vsel %vm5282, %v6348, -inf
    %v6358 = vmax.f32 %v6356, %v6357
    %v6359 = vsel %vm5282, %v6341, -inf
    %v6360 = vsel %vm5282, %v6349, -inf
    %v6361 = vmax.f32 %v6359, %v6360
    %v6362 = vsel %vm5282, %v6342, -inf
    %v6363 = vsel %vm5282, %v6350, -inf
    %v6364 = vmax.f32 %v6362, %v6363
    %v6365 = vsel %vm5282, %v6343, -inf
    %v6366 = vsel %vm5282, %v6351, -inf
    %v6367 = vmax.f32 %v6365, %v6366
    %v6373 = vunpack.c.l.s4 1983009808
    %v6374 = vunpack.c.0.s8 %v6373
    %v6375 = vlaneseq
    %v6376 = vshrl.u32 %v6375, 7
    %v6377 = vsub.s32 %v6374, %v6376
    %v6378 = vrot.slane %v6358, %v6377
    %v6379 = vcombine.high %v6378, %v6378
    %v6381 = vunpack.c.l.s4 1983009808
    %v6382 = vunpack.c.0.s8 %v6381
    %v6383 = vlaneseq
    %v6384 = vshrl.u32 %v6383, 7
    %v6385 = vsub.s32 %v6382, %v6384
    %v6386 = vrot.slane %v6361, %v6385
    %v6387 = vcombine.high %v6386, %v6386
    %v6389 = vunpack.c.l.s4 1983009808
    %v6390 = vunpack.c.0.s8 %v6389
    %v6391 = vlaneseq
    %v6392 = vshrl.u32 %v6391, 7
    %v6393 = vsub.s32 %v6390, %v6392
    %v6394 = vrot.slane %v6364, %v6393
    %v6395 = vcombine.high %v6394, %v6394
    %v6397 = vunpack.c.l.s4 1983009808
    %v6398 = vunpack.c.0.s8 %v6397
    %v6399 = vlaneseq
    %v6400 = vshrl.u32 %v6399, 7
    %v6401 = vsub.s32 %v6398, %v6400
    %v6402 = vrot.slane %v6367, %v6401
    %v6403 = vcombine.high %v6402, %v6402
    %v6412 = vsel %vm1817, %v6378, -inf
    %v6413 = vrot.slane %v6412, 4
    %v6414 = vmax.f32 %v6412, %v6413
    %v6415 = vrot.slane %v6414, 2
    %v6416 = vmax.f32 %v6414, %v6415
    %v6417 = vrot.slane %v6416, 1
    %v6418 = vmax.f32 %v6416, %v6417
    %v6419 = vsel %vm1817, %v6379, -inf
    %v6420 = vrot.slane %v6419, 4
    %v6421 = vmax.f32 %v6419, %v6420
    %v6422 = vrot.slane %v6421, 2
    %v6423 = vmax.f32 %v6421, %v6422
    %v6424 = vrot.slane %v6423, 1
    %v6425 = vmax.f32 %v6423, %v6424
    %v6426 = vsel %vm1817, %v6386, -inf
    %v6427 = vrot.slane %v6426, 4
    %v6428 = vmax.f32 %v6426, %v6427
    %v6429 = vrot.slane %v6428, 2
    %v6430 = vmax.f32 %v6428, %v6429
    %v6431 = vrot.slane %v6430, 1
    %v6432 = vmax.f32 %v6430, %v6431
    %v6433 = vsel %vm1817, %v6387, -inf
    %v6434 = vrot.slane %v6433, 4
    %v6435 = vmax.f32 %v6433, %v6434
    %v6436 = vrot.slane %v6435, 2
    %v6437 = vmax.f32 %v6435, %v6436
    %v6438 = vrot.slane %v6437, 1
    %v6439 = vmax.f32 %v6437, %v6438
    %v6440 = vsel %vm1817, %v6394, -inf
    %v6441 = vrot.slane %v6440, 4
    %v6442 = vmax.f32 %v6440, %v6441
    %v6443 = vrot.slane %v6442, 2
    %v6444 = vmax.f32 %v6442, %v6443
    %v6445 = vrot.slane %v6444, 1
    %v6446 = vmax.f32 %v6444, %v6445
    %v6447 = vsel %vm1817, %v6395, -inf
    %v6448 = vrot.slane %v6447, 4
    %v6449 = vmax.f32 %v6447, %v6448
    %v6450 = vrot.slane %v6449, 2
    %v6451 = vmax.f32 %v6449, %v6450
    %v6452 = vrot.slane %v6451, 1
    %v6453 = vmax.f32 %v6451, %v6452
    %v6454 = vsel %vm1817, %v6402, -inf
    %v6455 = vrot.slane %v6454, 4
    %v6456 = vmax.f32 %v6454, %v6455
    %v6457 = vrot.slane %v6456, 2
    %v6458 = vmax.f32 %v6456, %v6457
    %v6459 = vrot.slane %v6458, 1
    %v6460 = vmax.f32 %v6458, %v6459
    %v6461 = vsel %vm1817, %v6403, -inf
    %v6462 = vrot.slane %v6461, 4
    %v6463 = vmax.f32 %v6461, %v6462
    %v6464 = vrot.slane %v6463, 2
    %v6465 = vmax.f32 %v6463, %v6464
    %v6466 = vrot.slane %v6465, 1
    %v6467 = vmax.f32 %v6465, %v6466
    %v6476 = vsel %vm2842, %v6425, %v6418
    %v6477 = vsel %vm2842, %v6439, %v6432
    %v6478 = vsel %vm2842, %v6453, %v6446
    %v6479 = vsel %vm2842, %v6467, %v6460
    %s6484 = scalar_lea.vmem [#allocation4], 16
    %6485 = vst.msk [vmem:[%s6484 + $0x8] sm:$0x3] %vm1817, %v6476
    %6486 = vst.msk [vmem:[%s6484 + $0x18] sm:$0x3] %vm1817, %v6477
    %6487 = vst.msk [vmem:[%s6484 + $0x48] sm:$0x3] %vm1817, %v6478
    %6488 = vst.msk [vmem:[%s6484 + $0x58] sm:$0x3] %vm1817, %v6479
    %v6489 = vld [vmem:[%s8] sm:$0x1]
    %v6490 = vld [vmem:[%s9] sm:$0x1]
    %v6491 = vld [vmem:[#allocation4 + $0x7] sm:$0x3]
    %v6492 = vld [vmem:[#allocation4 + $0x17] sm:$0x3]
    %v6493 = vld [vmem:[#allocation4 + $0x27] sm:$0x3]
    %v6494 = vld [vmem:[#allocation4 + $0x37] sm:$0x3]
    %v6495 = vld [vmem:[#allocation4 + $0x47] sm:$0x3]
    %v6496 = vld [vmem:[#allocation4 + $0x57] sm:$0x3]
    %v6497 = vld [vmem:[#allocation4 + $0x67] sm:$0x3]
    %v6498 = vld [vmem:[#allocation4 + $0x77] sm:$0x3]
    %v6499 = vld [vmem:[#allocation5] sm:$0xff]
    %v6500 = vld [vmem:[#allocation5 + $0x8] sm:$0xff]
    %v6501 = vld [vmem:[#allocation5 + $0x10] sm:$0xff]
    %v6502 = vld [vmem:[#allocation5 + $0x18] sm:$0xff]
    %v6503 = vld [vmem:[#allocation5 + $0x20] sm:$0xff]
    %v6504 = vld [vmem:[#allocation5 + $0x28] sm:$0xff]
    %v6505 = vld [vmem:[#allocation5 + $0x30] sm:$0xff]
    %v6506 = vld [vmem:[#allocation5 + $0x38] sm:$0xff]
    %s6507 = scalar_lea.vmem [#allocation5], 192
    %v6508 = vld [vmem:[%s6507] sm:$0xff]
    %v6509 = vld [vmem:[%s6507 + $0x8] sm:$0xff]
    %v6510 = vld [vmem:[%s6507 + $0x10] sm:$0xff]
    %v6511 = vld [vmem:[%s6507 + $0x18] sm:$0xff]
    %v6512 = vld [vmem:[%s6507 + $0x20] sm:$0xff]
    %v6513 = vld [vmem:[%s6507 + $0x28] sm:$0xff]
    %v6514 = vld [vmem:[%s6507 + $0x30] sm:$0xff]
    %v6515 = vld [vmem:[%s6507 + $0x38] sm:$0xff]
    %v6520 = vcombine.low %v6492, %v6493
    %v6521 = vcombine.low %v6496, %v6497
    %v6523 = vunpack.c.l.s4 1983009808
    %v6524 = vunpack.c.0.s8 %v6523
    %v6525 = vlaneseq
    %v6526 = vshrl.u32 %v6525, 7
    %v6527 = vsub.s32 %v6524, %v6526
    %v6528 = vrot.slane %v6520, %v6527
    %v6530 = vunpack.c.l.s4 1983009808
    %v6531 = vunpack.c.0.s8 %v6530
    %v6532 = vlaneseq
    %v6533 = vshrl.u32 %v6532, 7
    %v6534 = vsub.s32 %v6531, %v6533
    %v6535 = vrot.slane %v6521, %v6534
    %v6536 = vcombine.low %v6528, %v6535
    %v6537 = vsel %vm50, %v6536, 0
    %6539 = vmatprep.subr.mxu0 0.0
    %6540 = vmatpush1.msra.mxu0 0.0
    %6541 = vmatprep.subr.mxu0 0.0
    %6542 = vmatpush1.msra.mxu0 0.0
    %6543 = vmatprep.subr.mxu0 0.0
    %6544 = vmatpush1.msra.mxu0 0.0
    %6545 = vmatprep.subr.mxu0 0.0
    %6546 = vmatpush1.msra.mxu0 0.0
    %6547 = vmatprep.subr.mxu0 0.0
    %6548 = vmatpush1.msra.mxu0 0.0
    %6549 = vmatprep.subr.mxu0 0.0
    %6550 = vmatpush1.msra.mxu0 0.0
    %6551 = vmatprep.subr.mxu0 0.0
    %6552 = vmatpush1.msra.mxu0 0.0
    %6553 = vmatprep.subr.mxu0 0.0
    %6554 = vmatpush1.msra.mxu0 0.0
    %6555 = vmatprep.subr.mxu0 0.0
    %6556 = vmatpush1.msra.mxu0 %v6515
    %6557 = vmatprep.subr.mxu0 0.0
    %6558 = vmatpush1.msra.mxu0 %v6514
    %6559 = vmatprep.subr.mxu0 0.0
    %6560 = vmatpush1.msra.mxu0 %v6513
    %6561 = vmatprep.subr.mxu0 0.0
    %6562 = vmatpush1.msra.mxu0 %v6512
    %6563 = vmatprep.subr.mxu0 0.0
    %6564 = vmatpush1.msra.mxu0 %v6511
    %6565 = vmatprep.subr.mxu0 0.0
    %6566 = vmatpush1.msra.mxu0 %v6510
    %6567 = vmatprep.subr.mxu0 0.0
    %6568 = vmatpush1.msra.mxu0 %v6509
    %6569 = vmatprep.subr.mxu0 0.0
    %6570 = vmatpush1.msra.mxu0 %v6508
    %6571 = vmatprep.subr.mxu0 0.0
    %6572 = vmatpush2.msra.mxu0 0.0
    %6573 = vmatprep.subr.mxu0 0.0
    %6574 = vmatpush2.msra.mxu0 0.0
    %6575 = vmatprep.subr.mxu0 0.0
    %6576 = vmatpush2.msra.mxu0 0.0
    %6577 = vmatprep.subr.mxu0 0.0
    %6578 = vmatpush2.msra.mxu0 0.0
    %6579 = vmatprep.subr.mxu0 0.0
    %6580 = vmatpush2.msra.mxu0 0.0
    %6581 = vmatprep.subr.mxu0 0.0
    %6582 = vmatpush2.msra.mxu0 0.0
    %6583 = vmatprep.subr.mxu0 0.0
    %6584 = vmatpush2.msra.mxu0 0.0
    %6585 = vmatprep.subr.mxu0 0.0
    %6586 = vmatpush2.msra.mxu0 0.0
    %6587 = vmatprep.subr.mxu0 0.0
    %6588 = vmatpush2.msra.mxu0 0.0
    %6589 = vmatprep.subr.mxu0 0.0
    %6590 = vmatpush2.msra.mxu0 0.0
    %6591 = vmatprep.subr.mxu0 0.0
    %6592 = vmatpush2.msra.mxu0 0.0
    %6593 = vmatprep.subr.mxu0 0.0
    %6594 = vmatpush2.msra.mxu0 0.0
    %6595 = vmatprep.subr.mxu0 0.0
    %6596 = vmatpush2.msra.mxu0 0.0
    %6597 = vmatprep.subr.mxu0 0.0
    %6598 = vmatpush2.msra.mxu0 0.0
    %6599 = vmatprep.subr.mxu0 0.0
    %6600 = vmatpush2.msra.mxu0 0.0
    %6601 = vmatprep.subr.mxu0 0.0
    %6602 = vmatpush2.msra.mxu0 0.0
    %6603 = vmatprep.mubr.f32.mxu0 0.0
    %6604 = vmatmul.mubr.f32.gmra.mxu0 %v6537
    %v6605 = vpop.f32.mrf.mxu0
    %v6606 = vadd.f32 0.0, %v6605
    %v6607 = vpop.f32.mrf.mxu0
    %6608 = vdwg.mxu0
    %v6611 = vcombine.low %v6491, %v6492
    %v6612 = vcombine.low %v6495, %v6496
    %v6614 = vunpack.c.l.s4 1983009808
    %v6615 = vunpack.c.0.s8 %v6614
    %v6616 = vlaneseq
    %v6617 = vshrl.u32 %v6616, 7
    %v6618 = vsub.s32 %v6615, %v6617
    %v6619 = vrot.slane %v6611, %v6618
    %v6621 = vunpack.c.l.s4 1983009808
    %v6622 = vunpack.c.0.s8 %v6621
    %v6623 = vlaneseq
    %v6624 = vshrl.u32 %v6623, 7
    %v6625 = vsub.s32 %v6622, %v6624
    %v6626 = vrot.slane %v6612, %v6625
    %v6627 = vcombine.low %v6619, %v6626
    %v6628 = vsel %vm50, %v6627, 0
    %6630 = vmatprep.subr.mxu0 0.0
    %6631 = vmatpush1.msra.mxu0 0.0
    %6632 = vmatprep.subr.mxu0 0.0
    %6633 = vmatpush1.msra.mxu0 0.0
    %6634 = vmatprep.subr.mxu0 0.0
    %6635 = vmatpush1.msra.mxu0 0.0
    %6636 = vmatprep.subr.mxu0 0.0
    %6637 = vmatpush1.msra.mxu0 0.0
    %6638 = vmatprep.subr.mxu0 0.0
    %6639 = vmatpush1.msra.mxu0 0.0
    %6640 = vmatprep.subr.mxu0 0.0
    %6641 = vmatpush1.msra.mxu0 0.0
    %6642 = vmatprep.subr.mxu0 0.0
    %6643 = vmatpush1.msra.mxu0 0.0
    %6644 = vmatprep.subr.mxu0 0.0
    %6645 = vmatpush1.msra.mxu0 0.0
    %6646 = vmatprep.subr.mxu0 0.0
    %6647 = vmatpush1.msra.mxu0 %v6506
    %6648 = vmatprep.subr.mxu0 0.0
    %6649 = vmatpush1.msra.mxu0 %v6505
    %6650 = vmatprep.subr.mxu0 0.0
    %6651 = vmatpush1.msra.mxu0 %v6504
    %6652 = vmatprep.subr.mxu0 0.0
    %6653 = vmatpush1.msra.mxu0 %v6503
    %6654 = vmatprep.subr.mxu0 0.0
    %6655 = vmatpush1.msra.mxu0 %v6502
    %6656 = vmatprep.subr.mxu0 0.0
    %6657 = vmatpush1.msra.mxu0 %v6501
    %6658 = vmatprep.subr.mxu0 0.0
    %6659 = vmatpush1.msra.mxu0 %v6500
    %6660 = vmatprep.subr.mxu0 0.0
    %6661 = vmatpush1.msra.mxu0 %v6499
    %6662 = vmatprep.subr.mxu0 0.0
    %6663 = vmatpush2.msra.mxu0 0.0
    %6664 = vmatprep.subr.mxu0 0.0
    %6665 = vmatpush2.msra.mxu0 0.0
    %6666 = vmatprep.subr.mxu0 0.0
    %6667 = vmatpush2.msra.mxu0 0.0
    %6668 = vmatprep.subr.mxu0 0.0
    %6669 = vmatpush2.msra.mxu0 0.0
    %6670 = vmatprep.subr.mxu0 0.0
    %6671 = vmatpush2.msra.mxu0 0.0
    %6672 = vmatprep.subr.mxu0 0.0
    %6673 = vmatpush2.msra.mxu0 0.0
    %6674 = vmatprep.subr.mxu0 0.0
    %6675 = vmatpush2.msra.mxu0 0.0
    %6676 = vmatprep.subr.mxu0 0.0
    %6677 = vmatpush2.msra.mxu0 0.0
    %6678 = vmatprep.subr.mxu0 0.0
    %6679 = vmatpush2.msra.mxu0 0.0
    %6680 = vmatprep.subr.mxu0 0.0
    %6681 = vmatpush2.msra.mxu0 0.0
    %6682 = vmatprep.subr.mxu0 0.0
    %6683 = vmatpush2.msra.mxu0 0.0
    %6684 = vmatprep.subr.mxu0 0.0
    %6685 = vmatpush2.msra.mxu0 0.0
    %6686 = vmatprep.subr.mxu0 0.0
    %6687 = vmatpush2.msra.mxu0 0.0
    %6688 = vmatprep.subr.mxu0 0.0
    %6689 = vmatpush2.msra.mxu0 0.0
    %6690 = vmatprep.subr.mxu0 0.0
    %6691 = vmatpush2.msra.mxu0 0.0
    %6692 = vmatprep.subr.mxu0 0.0
    %6693 = vmatpush2.msra.mxu0 0.0
    %6694 = vmatprep.mubr.f32.mxu0 0.0
    %6695 = vmatmul.mubr.f32.gmra.mxu0 %v6628
    %v6696 = vpop.f32.mrf.mxu0
    %v6697 = vadd.f32 %v6606, %v6696
    %v6698 = vpop.f32.mrf.mxu0
    %6699 = vdwg.mxu0
    %s6700 = scalar_lea.vmem [#allocation5], 384
    %v6701 = vld [vmem:[%s6700] sm:$0xff]
    %v6702 = vld [vmem:[%s6700 + $0x8] sm:$0xff]
    %v6703 = vld [vmem:[%s6700 + $0x10] sm:$0xff]
    %v6704 = vld [vmem:[%s6700 + $0x18] sm:$0xff]
    %v6705 = vld [vmem:[%s6700 + $0x20] sm:$0xff]
    %v6706 = vld [vmem:[%s6700 + $0x28] sm:$0xff]
    %v6707 = vld [vmem:[%s6700 + $0x30] sm:$0xff]
    %v6708 = vld [vmem:[%s6700 + $0x38] sm:$0xff]
    %v6711 = vcombine.low %v6493, %v6494
    %v6712 = vcombine.low %v6497, %v6498
    %v6714 = vunpack.c.l.s4 1983009808
    %v6715 = vunpack.c.0.s8 %v6714
    %v6716 = vlaneseq
    %v6717 = vshrl.u32 %v6716, 7
    %v6718 = vsub.s32 %v6715, %v6717
    %v6719 = vrot.slane %v6711, %v6718
    %v6721 = vunpack.c.l.s4 1983009808
    %v6722 = vunpack.c.0.s8 %v6721
    %v6723 = vlaneseq
    %v6724 = vshrl.u32 %v6723, 7
    %v6725 = vsub.s32 %v6722, %v6724
    %v6726 = vrot.slane %v6712, %v6725
    %v6727 = vcombine.low %v6719, %v6726
    %v6728 = vsel %vm50, %v6727, 0
    %6730 = vmatprep.subr.mxu0 0.0
    %6731 = vmatpush1.msra.mxu0 0.0
    %6732 = vmatprep.subr.mxu0 0.0
    %6733 = vmatpush1.msra.mxu0 0.0
    %6734 = vmatprep.subr.mxu0 0.0
    %6735 = vmatpush1.msra.mxu0 0.0
    %6736 = vmatprep.subr.mxu0 0.0
    %6737 = vmatpush1.msra.mxu0 0.0
    %6738 = vmatprep.subr.mxu0 0.0
    %6739 = vmatpush1.msra.mxu0 0.0
    %6740 = vmatprep.subr.mxu0 0.0
    %6741 = vmatpush1.msra.mxu0 0.0
    %6742 = vmatprep.subr.mxu0 0.0
    %6743 = vmatpush1.msra.mxu0 0.0
    %6744 = vmatprep.subr.mxu0 0.0
    %6745 = vmatpush1.msra.mxu0 0.0
    %6746 = vmatprep.subr.mxu0 0.0
    %6747 = vmatpush1.msra.mxu0 %v6708
    %6748 = vmatprep.subr.mxu0 0.0
    %6749 = vmatpush1.msra.mxu0 %v6707
    %6750 = vmatprep.subr.mxu0 0.0
    %6751 = vmatpush1.msra.mxu0 %v6706
    %6752 = vmatprep.subr.mxu0 0.0
    %6753 = vmatpush1.msra.mxu0 %v6705
    %6754 = vmatprep.subr.mxu0 0.0
    %6755 = vmatpush1.msra.mxu0 %v6704
    %6756 = vmatprep.subr.mxu0 0.0
    %6757 = vmatpush1.msra.mxu0 %v6703
    %6758 = vmatprep.subr.mxu0 0.0
    %6759 = vmatpush1.msra.mxu0 %v6702
    %6760 = vmatprep.subr.mxu0 0.0
    %6761 = vmatpush1.msra.mxu0 %v6701
    %6762 = vmatprep.subr.mxu0 0.0
    %6763 = vmatpush2.msra.mxu0 0.0
    %6764 = vmatprep.subr.mxu0 0.0
    %6765 = vmatpush2.msra.mxu0 0.0
    %6766 = vmatprep.subr.mxu0 0.0
    %6767 = vmatpush2.msra.mxu0 0.0
    %6768 = vmatprep.subr.mxu0 0.0
    %6769 = vmatpush2.msra.mxu0 0.0
    %6770 = vmatprep.subr.mxu0 0.0
    %6771 = vmatpush2.msra.mxu0 0.0
    %6772 = vmatprep.subr.mxu0 0.0
    %6773 = vmatpush2.msra.mxu0 0.0
    %6774 = vmatprep.subr.mxu0 0.0
    %6775 = vmatpush2.msra.mxu0 0.0
    %6776 = vmatprep.subr.mxu0 0.0
    %6777 = vmatpush2.msra.mxu0 0.0
    %6778 = vmatprep.subr.mxu0 0.0
    %6779 = vmatpush2.msra.mxu0 0.0
    %6780 = vmatprep.subr.mxu0 0.0
    %6781 = vmatpush2.msra.mxu0 0.0
    %6782 = vmatprep.subr.mxu0 0.0
    %6783 = vmatpush2.msra.mxu0 0.0
    %6784 = vmatprep.subr.mxu0 0.0
    %6785 = vmatpush2.msra.mxu0 0.0
    %6786 = vmatprep.subr.mxu0 0.0
    %6787 = vmatpush2.msra.mxu0 0.0
    %6788 = vmatprep.subr.mxu0 0.0
    %6789 = vmatpush2.msra.mxu0 0.0
    %6790 = vmatprep.subr.mxu0 0.0
    %6791 = vmatpush2.msra.mxu0 0.0
    %6792 = vmatprep.subr.mxu0 0.0
    %6793 = vmatpush2.msra.mxu0 0.0
    %6794 = vmatprep.mubr.f32.mxu0 0.0
    %6795 = vmatmul.mubr.f32.gmra.mxu0 %v6728
    %v6796 = vpop.f32.mrf.mxu0
    %v6797 = vadd.f32 0.0, %v6796
    %v6798 = vpop.f32.mrf.mxu0
    %6799 = vdwg.mxu0
    %v6800 = vadd.f32 %v6697, %v6797
    %v6801 = vld [vmem:[#allocation4 + $0x8] sm:$0x3]
    %v6802 = vld [vmem:[#allocation4 + $0x18] sm:$0x3]
    %v6803 = vld [vmem:[#allocation4 + $0x28] sm:$0x3]
    %v6804 = vld [vmem:[#allocation4 + $0x38] sm:$0x3]
    %v6805 = vld [vmem:[#allocation4 + $0x48] sm:$0x3]
    %v6806 = vld [vmem:[#allocation4 + $0x58] sm:$0x3]
    %v6807 = vld [vmem:[#allocation4 + $0x68] sm:$0x3]
    %v6808 = vld [vmem:[#allocation4 + $0x78] sm:$0x3]
    %s6809 = scalar_lea.vmem [#allocation5], 64
    %v6810 = vld [vmem:[%s6809] sm:$0xff]
    %v6811 = vld [vmem:[%s6809 + $0x8] sm:$0xff]
    %v6812 = vld [vmem:[%s6809 + $0x10] sm:$0xff]
    %v6813 = vld [vmem:[%s6809 + $0x18] sm:$0xff]
    %v6814 = vld [vmem:[%s6809 + $0x20] sm:$0xff]
    %v6815 = vld [vmem:[%s6809 + $0x28] sm:$0xff]
    %v6816 = vld [vmem:[%s6809 + $0x30] sm:$0xff]
    %v6817 = vld [vmem:[%s6809 + $0x38] sm:$0xff]
    %v6822 = vcombine.low %v6801, %v6802
    %v6823 = vcombine.low %v6805, %v6806
    %v6825 = vunpack.c.l.s4 1983009808
    %v6826 = vunpack.c.0.s8 %v6825
    %v6827 = vlaneseq
    %v6828 = vshrl.u32 %v6827, 7
    %v6829 = vsub.s32 %v6826, %v6828
    %v6830 = vrot.slane %v6822, %v6829
    %v6832 = vunpack.c.l.s4 1983009808
    %v6833 = vunpack.c.0.s8 %v6832
    %v6834 = vlaneseq
    %v6835 = vshrl.u32 %v6834, 7
    %v6836 = vsub.s32 %v6833, %v6835
    %v6837 = vrot.slane %v6823, %v6836
    %v6838 = vcombine.low %v6830, %v6837
    %v6839 = vsel %vm50, %v6838, 0
    %6841 = vmatprep.subr.mxu0 0.0
    %6842 = vmatpush1.msra.mxu0 0.0
    %6843 = vmatprep.subr.mxu0 0.0
    %6844 = vmatpush1.msra.mxu0 0.0
    %6845 = vmatprep.subr.mxu0 0.0
    %6846 = vmatpush1.msra.mxu0 0.0
    %6847 = vmatprep.subr.mxu0 0.0
    %6848 = vmatpush1.msra.mxu0 0.0
    %6849 = vmatprep.subr.mxu0 0.0
    %6850 = vmatpush1.msra.mxu0 0.0
    %6851 = vmatprep.subr.mxu0 0.0
    %6852 = vmatpush1.msra.mxu0 0.0
    %6853 = vmatprep.subr.mxu0 0.0
    %6854 = vmatpush1.msra.mxu0 0.0
    %6855 = vmatprep.subr.mxu0 0.0
    %6856 = vmatpush1.msra.mxu0 0.0
    %6857 = vmatprep.subr.mxu0 0.0
    %6858 = vmatpush1.msra.mxu0 %v6817
    %6859 = vmatprep.subr.mxu0 0.0
    %6860 = vmatpush1.msra.mxu0 %v6816
    %6861 = vmatprep.subr.mxu0 0.0
    %6862 = vmatpush1.msra.mxu0 %v6815
    %6863 = vmatprep.subr.mxu0 0.0
    %6864 = vmatpush1.msra.mxu0 %v6814
    %6865 = vmatprep.subr.mxu0 0.0
    %6866 = vmatpush1.msra.mxu0 %v6813
    %6867 = vmatprep.subr.mxu0 0.0
    %6868 = vmatpush1.msra.mxu0 %v6812
    %6869 = vmatprep.subr.mxu0 0.0
    %6870 = vmatpush1.msra.mxu0 %v6811
    %6871 = vmatprep.subr.mxu0 0.0
    %6872 = vmatpush1.msra.mxu0 %v6810
    %6873 = vmatprep.subr.mxu0 0.0
    %6874 = vmatpush2.msra.mxu0 0.0
    %6875 = vmatprep.subr.mxu0 0.0
    %6876 = vmatpush2.msra.mxu0 0.0
    %6877 = vmatprep.subr.mxu0 0.0
    %6878 = vmatpush2.msra.mxu0 0.0
    %6879 = vmatprep.subr.mxu0 0.0
    %6880 = vmatpush2.msra.mxu0 0.0
    %6881 = vmatprep.subr.mxu0 0.0
    %6882 = vmatpush2.msra.mxu0 0.0
    %6883 = vmatprep.subr.mxu0 0.0
    %6884 = vmatpush2.msra.mxu0 0.0
    %6885 = vmatprep.subr.mxu0 0.0
    %6886 = vmatpush2.msra.mxu0 0.0
    %6887 = vmatprep.subr.mxu0 0.0
    %6888 = vmatpush2.msra.mxu0 0.0
    %6889 = vmatprep.subr.mxu0 0.0
    %6890 = vmatpush2.msra.mxu0 0.0
    %6891 = vmatprep.subr.mxu0 0.0
    %6892 = vmatpush2.msra.mxu0 0.0
    %6893 = vmatprep.subr.mxu0 0.0
    %6894 = vmatpush2.msra.mxu0 0.0
    %6895 = vmatprep.subr.mxu0 0.0
    %6896 = vmatpush2.msra.mxu0 0.0
    %6897 = vmatprep.subr.mxu0 0.0
    %6898 = vmatpush2.msra.mxu0 0.0
    %6899 = vmatprep.subr.mxu0 0.0
    %6900 = vmatpush2.msra.mxu0 0.0
    %6901 = vmatprep.subr.mxu0 0.0
    %6902 = vmatpush2.msra.mxu0 0.0
    %6903 = vmatprep.subr.mxu0 0.0
    %6904 = vmatpush2.msra.mxu0 0.0
    %6905 = vmatprep.mubr.f32.mxu0 0.0
    %6906 = vmatmul.mubr.f32.gmra.mxu0 %v6839
    %v6907 = vpop.f32.mrf.mxu0
    %v6908 = vadd.f32 0.0, %v6907
    %v6909 = vpop.f32.mrf.mxu0
    %6910 = vdwg.mxu0
    %v6911 = vadd.f32 %v6800, %v6908
    %s6912 = scalar_lea.vmem [#allocation5], 256
    %v6913 = vld [vmem:[%s6912] sm:$0xff]
    %v6914 = vld [vmem:[%s6912 + $0x8] sm:$0xff]
    %v6915 = vld [vmem:[%s6912 + $0x10] sm:$0xff]
    %v6916 = vld [vmem:[%s6912 + $0x18] sm:$0xff]
    %v6917 = vld [vmem:[%s6912 + $0x20] sm:$0xff]
    %v6918 = vld [vmem:[%s6912 + $0x28] sm:$0xff]
    %v6919 = vld [vmem:[%s6912 + $0x30] sm:$0xff]
    %v6920 = vld [vmem:[%s6912 + $0x38] sm:$0xff]
    %v6923 = vcombine.low %v6802, %v6803
    %v6924 = vcombine.low %v6806, %v6807
    %v6926 = vunpack.c.l.s4 1983009808
    %v6927 = vunpack.c.0.s8 %v6926
    %v6928 = vlaneseq
    %v6929 = vshrl.u32 %v6928, 7
    %v6930 = vsub.s32 %v6927, %v6929
    %v6931 = vrot.slane %v6923, %v6930
    %v6933 = vunpack.c.l.s4 1983009808
    %v6934 = vunpack.c.0.s8 %v6933
    %v6935 = vlaneseq
    %v6936 = vshrl.u32 %v6935, 7
    %v6937 = vsub.s32 %v6934, %v6936
    %v6938 = vrot.slane %v6924, %v6937
    %v6939 = vcombine.low %v6931, %v6938
    %v6940 = vsel %vm50, %v6939, 0
    %6942 = vmatprep.subr.mxu0 0.0
    %6943 = vmatpush1.msra.mxu0 0.0
    %6944 = vmatprep.subr.mxu0 0.0
    %6945 = vmatpush1.msra.mxu0 0.0
    %6946 = vmatprep.subr.mxu0 0.0
    %6947 = vmatpush1.msra.mxu0 0.0
    %6948 = vmatprep.subr.mxu0 0.0
    %6949 = vmatpush1.msra.mxu0 0.0
    %6950 = vmatprep.subr.mxu0 0.0
    %6951 = vmatpush1.msra.mxu0 0.0
    %6952 = vmatprep.subr.mxu0 0.0
    %6953 = vmatpush1.msra.mxu0 0.0
    %6954 = vmatprep.subr.mxu0 0.0
    %6955 = vmatpush1.msra.mxu0 0.0
    %6956 = vmatprep.subr.mxu0 0.0
    %6957 = vmatpush1.msra.mxu0 0.0
    %6958 = vmatprep.subr.mxu0 0.0
    %6959 = vmatpush1.msra.mxu0 %v6920
    %6960 = vmatprep.subr.mxu0 0.0
    %6961 = vmatpush1.msra.mxu0 %v6919
    %6962 = vmatprep.subr.mxu0 0.0
    %6963 = vmatpush1.msra.mxu0 %v6918
    %6964 = vmatprep.subr.mxu0 0.0
    %6965 = vmatpush1.msra.mxu0 %v6917
    %6966 = vmatprep.subr.mxu0 0.0
    %6967 = vmatpush1.msra.mxu0 %v6916
    %6968 = vmatprep.subr.mxu0 0.0
    %6969 = vmatpush1.msra.mxu0 %v6915
    %6970 = vmatprep.subr.mxu0 0.0
    %6971 = vmatpush1.msra.mxu0 %v6914
    %6972 = vmatprep.subr.mxu0 0.0
    %6973 = vmatpush1.msra.mxu0 %v6913
    %6974 = vmatprep.subr.mxu0 0.0
    %6975 = vmatpush2.msra.mxu0 0.0
    %6976 = vmatprep.subr.mxu0 0.0
    %6977 = vmatpush2.msra.mxu0 0.0
    %6978 = vmatprep.subr.mxu0 0.0
    %6979 = vmatpush2.msra.mxu0 0.0
    %6980 = vmatprep.subr.mxu0 0.0
    %6981 = vmatpush2.msra.mxu0 0.0
    %6982 = vmatprep.subr.mxu0 0.0
    %6983 = vmatpush2.msra.mxu0 0.0
    %6984 = vmatprep.subr.mxu0 0.0
    %6985 = vmatpush2.msra.mxu0 0.0
    %6986 = vmatprep.subr.mxu0 0.0
    %6987 = vmatpush2.msra.mxu0 0.0
    %6988 = vmatprep.subr.mxu0 0.0
    %6989 = vmatpush2.msra.mxu0 0.0
    %6990 = vmatprep.subr.mxu0 0.0
    %6991 = vmatpush2.msra.mxu0 0.0
    %6992 = vmatprep.subr.mxu0 0.0
    %6993 = vmatpush2.msra.mxu0 0.0
    %6994 = vmatprep.subr.mxu0 0.0
    %6995 = vmatpush2.msra.mxu0 0.0
    %6996 = vmatprep.subr.mxu0 0.0
    %6997 = vmatpush2.msra.mxu0 0.0
    %6998 = vmatprep.subr.mxu0 0.0
    %6999 = vmatpush2.msra.mxu0 0.0
    %7000 = vmatprep.subr.mxu0 0.0
    %7001 = vmatpush2.msra.mxu0 0.0
    %7002 = vmatprep.subr.mxu0 0.0
    %7003 = vmatpush2.msra.mxu0 0.0
    %7004 = vmatprep.subr.mxu0 0.0
    %7005 = vmatpush2.msra.mxu0 0.0
    %7006 = vmatprep.mubr.f32.mxu0 0.0
    %7007 = vmatmul.mubr.f32.gmra.mxu0 %v6940
    %v7008 = vpop.f32.mrf.mxu0
    %v7009 = vadd.f32 0.0, %v7008
    %v7010 = vpop.f32.mrf.mxu0
    %7011 = vdwg.mxu0
    %v7012 = vadd.f32 %v6911, %v7009
    %s7013 = scalar_lea.vmem [#allocation5], 448
    %v7014 = vld [vmem:[%s7013] sm:$0xff]
    %v7015 = vld [vmem:[%s7013 + $0x8] sm:$0xff]
    %v7016 = vld [vmem:[%s7013 + $0x10] sm:$0xff]
    %v7017 = vld [vmem:[%s7013 + $0x18] sm:$0xff]
    %v7018 = vld [vmem:[%s7013 + $0x20] sm:$0xff]
    %v7019 = vld [vmem:[%s7013 + $0x28] sm:$0xff]
    %v7020 = vld [vmem:[%s7013 + $0x30] sm:$0xff]
    %v7021 = vld [vmem:[%s7013 + $0x38] sm:$0xff]
    %v7024 = vcombine.low %v6803, %v6804
    %v7025 = vcombine.low %v6807, %v6808
    %v7027 = vunpack.c.l.s4 1983009808
    %v7028 = vunpack.c.0.s8 %v7027
    %v7029 = vlaneseq
    %v7030 = vshrl.u32 %v7029, 7
    %v7031 = vsub.s32 %v7028, %v7030
    %v7032 = vrot.slane %v7024, %v7031
    %v7034 = vunpack.c.l.s4 1983009808
    %v7035 = vunpack.c.0.s8 %v7034
    %v7036 = vlaneseq
    %v7037 = vshrl.u32 %v7036, 7
    %v7038 = vsub.s32 %v7035, %v7037
    %v7039 = vrot.slane %v7025, %v7038
    %v7040 = vcombine.low %v7032, %v7039
    %v7041 = vsel %vm50, %v7040, 0
    %7043 = vmatprep.subr.mxu0 0.0
    %7044 = vmatpush1.msra.mxu0 0.0
    %7045 = vmatprep.subr.mxu0 0.0
    %7046 = vmatpush1.msra.mxu0 0.0
    %7047 = vmatprep.subr.mxu0 0.0
    %7048 = vmatpush1.msra.mxu0 0.0
    %7049 = vmatprep.subr.mxu0 0.0
    %7050 = vmatpush1.msra.mxu0 0.0
    %7051 = vmatprep.subr.mxu0 0.0
    %7052 = vmatpush1.msra.mxu0 0.0
    %7053 = vmatprep.subr.mxu0 0.0
    %7054 = vmatpush1.msra.mxu0 0.0
    %7055 = vmatprep.subr.mxu0 0.0
    %7056 = vmatpush1.msra.mxu0 0.0
    %7057 = vmatprep.subr.mxu0 0.0
    %7058 = vmatpush1.msra.mxu0 0.0
    %7059 = vmatprep.subr.mxu0 0.0
    %7060 = vmatpush1.msra.mxu0 %v7021
    %7061 = vmatprep.subr.mxu0 0.0
    %7062 = vmatpush1.msra.mxu0 %v7020
    %7063 = vmatprep.subr.mxu0 0.0
    %7064 = vmatpush1.msra.mxu0 %v7019
    %7065 = vmatprep.subr.mxu0 0.0
    %7066 = vmatpush1.msra.mxu0 %v7018
    %7067 = vmatprep.subr.mxu0 0.0
    %7068 = vmatpush1.msra.mxu0 %v7017
    %7069 = vmatprep.subr.mxu0 0.0
    %7070 = vmatpush1.msra.mxu0 %v7016
    %7071 = vmatprep.subr.mxu0 0.0
    %7072 = vmatpush1.msra.mxu0 %v7015
    %7073 = vmatprep.subr.mxu0 0.0
    %7074 = vmatpush1.msra.mxu0 %v7014
    %7075 = vmatprep.subr.mxu0 0.0
    %7076 = vmatpush2.msra.mxu0 0.0
    %7077 = vmatprep.subr.mxu0 0.0
    %7078 = vmatpush2.msra.mxu0 0.0
    %7079 = vmatprep.subr.mxu0 0.0
    %7080 = vmatpush2.msra.mxu0 0.0
    %7081 = vmatprep.subr.mxu0 0.0
    %7082 = vmatpush2.msra.mxu0 0.0
    %7083 = vmatprep.subr.mxu0 0.0
    %7084 = vmatpush2.msra.mxu0 0.0
    %7085 = vmatprep.subr.mxu0 0.0
    %7086 = vmatpush2.msra.mxu0 0.0
    %7087 = vmatprep.subr.mxu0 0.0
    %7088 = vmatpush2.msra.mxu0 0.0
    %7089 = vmatprep.subr.mxu0 0.0
    %7090 = vmatpush2.msra.mxu0 0.0
    %7091 = vmatprep.subr.mxu0 0.0
    %7092 = vmatpush2.msra.mxu0 0.0
    %7093 = vmatprep.subr.mxu0 0.0
    %7094 = vmatpush2.msra.mxu0 0.0
    %7095 = vmatprep.subr.mxu0 0.0
    %7096 = vmatpush2.msra.mxu0 0.0
    %7097 = vmatprep.subr.mxu0 0.0
    %7098 = vmatpush2.msra.mxu0 0.0
    %7099 = vmatprep.subr.mxu0 0.0
    %7100 = vmatpush2.msra.mxu0 0.0
    %7101 = vmatprep.subr.mxu0 0.0
    %7102 = vmatpush2.msra.mxu0 0.0
    %7103 = vmatprep.subr.mxu0 0.0
    %7104 = vmatpush2.msra.mxu0 0.0
    %7105 = vmatprep.subr.mxu0 0.0
    %7106 = vmatpush2.msra.mxu0 0.0
    %7107 = vmatprep.mubr.f32.mxu0 0.0
    %7108 = vmatmul.mubr.f32.gmra.mxu0 %v7041
    %v7109 = vpop.f32.mrf.mxu0
    %v7110 = vadd.f32 0.0, %v7109
    %v7111 = vpop.f32.mrf.mxu0
    %7112 = vdwg.mxu0
    %v7113 = vadd.f32 %v7012, %v7110
    %v7114 = vld [vmem:[#allocation4 + $0x9] sm:$0x3]
    %v7115 = vld [vmem:[#allocation4 + $0x19] sm:$0x3]
    %v7116 = vld [vmem:[#allocation4 + $0x29] sm:$0x3]
    %v7117 = vld [vmem:[#allocation4 + $0x39] sm:$0x3]
    %v7118 = vld [vmem:[#allocation4 + $0x49] sm:$0x3]
    %v7119 = vld [vmem:[#allocation4 + $0x59] sm:$0x3]
    %v7120 = vld [vmem:[#allocation4 + $0x69] sm:$0x3]
    %v7121 = vld [vmem:[#allocation4 + $0x79] sm:$0x3]
    %s7122 = scalar_lea.vmem [#allocation5], 128
    %v7123 = vld [vmem:[%s7122] sm:$0xff]
    %v7124 = vld [vmem:[%s7122 + $0x8] sm:$0xff]
    %v7125 = vld [vmem:[%s7122 + $0x10] sm:$0xff]
    %v7126 = vld [vmem:[%s7122 + $0x18] sm:$0xff]
    %v7127 = vld [vmem:[%s7122 + $0x20] sm:$0xff]
    %v7128 = vld [vmem:[%s7122 + $0x28] sm:$0xff]
    %v7129 = vld [vmem:[%s7122 + $0x30] sm:$0xff]
    %v7130 = vld [vmem:[%s7122 + $0x38] sm:$0xff]
    %v7135 = vcombine.low %v7114, %v7115
    %v7136 = vcombine.low %v7118, %v7119
    %v7138 = vunpack.c.l.s4 1983009808
    %v7139 = vunpack.c.0.s8 %v7138
    %v7140 = vlaneseq
    %v7141 = vshrl.u32 %v7140, 7
    %v7142 = vsub.s32 %v7139, %v7141
    %v7143 = vrot.slane %v7135, %v7142
    %v7145 = vunpack.c.l.s4 1983009808
    %v7146 = vunpack.c.0.s8 %v7145
    %v7147 = vlaneseq
    %v7148 = vshrl.u32 %v7147, 7
    %v7149 = vsub.s32 %v7146, %v7148
    %v7150 = vrot.slane %v7136, %v7149
    %v7151 = vcombine.low %v7143, %v7150
    %v7152 = vsel %vm50, %v7151, 0
    %7154 = vmatprep.subr.mxu0 0.0
    %7155 = vmatpush1.msra.mxu0 0.0
    %7156 = vmatprep.subr.mxu0 0.0
    %7157 = vmatpush1.msra.mxu0 0.0
    %7158 = vmatprep.subr.mxu0 0.0
    %7159 = vmatpush1.msra.mxu0 0.0
    %7160 = vmatprep.subr.mxu0 0.0
    %7161 = vmatpush1.msra.mxu0 0.0
    %7162 = vmatprep.subr.mxu0 0.0
    %7163 = vmatpush1.msra.mxu0 0.0
    %7164 = vmatprep.subr.mxu0 0.0
    %7165 = vmatpush1.msra.mxu0 0.0
    %7166 = vmatprep.subr.mxu0 0.0
    %7167 = vmatpush1.msra.mxu0 0.0
    %7168 = vmatprep.subr.mxu0 0.0
    %7169 = vmatpush1.msra.mxu0 0.0
    %7170 = vmatprep.subr.mxu0 0.0
    %7171 = vmatpush1.msra.mxu0 %v7130
    %7172 = vmatprep.subr.mxu0 0.0
    %7173 = vmatpush1.msra.mxu0 %v7129
    %7174 = vmatprep.subr.mxu0 0.0
    %7175 = vmatpush1.msra.mxu0 %v7128
    %7176 = vmatprep.subr.mxu0 0.0
    %7177 = vmatpush1.msra.mxu0 %v7127
    %7178 = vmatprep.subr.mxu0 0.0
    %7179 = vmatpush1.msra.mxu0 %v7126
    %7180 = vmatprep.subr.mxu0 0.0
    %7181 = vmatpush1.msra.mxu0 %v7125
    %7182 = vmatprep.subr.mxu0 0.0
    %7183 = vmatpush1.msra.mxu0 %v7124
    %7184 = vmatprep.subr.mxu0 0.0
    %7185 = vmatpush1.msra.mxu0 %v7123
    %7186 = vmatprep.subr.mxu0 0.0
    %7187 = vmatpush2.msra.mxu0 0.0
    %7188 = vmatprep.subr.mxu0 0.0
    %7189 = vmatpush2.msra.mxu0 0.0
    %7190 = vmatprep.subr.mxu0 0.0
    %7191 = vmatpush2.msra.mxu0 0.0
    %7192 = vmatprep.subr.mxu0 0.0
    %7193 = vmatpush2.msra.mxu0 0.0
    %7194 = vmatprep.subr.mxu0 0.0
    %7195 = vmatpush2.msra.mxu0 0.0
    %7196 = vmatprep.subr.mxu0 0.0
    %7197 = vmatpush2.msra.mxu0 0.0
    %7198 = vmatprep.subr.mxu0 0.0
    %7199 = vmatpush2.msra.mxu0 0.0
    %7200 = vmatprep.subr.mxu0 0.0
    %7201 = vmatpush2.msra.mxu0 0.0
    %7202 = vmatprep.subr.mxu0 0.0
    %7203 = vmatpush2.msra.mxu0 0.0
    %7204 = vmatprep.subr.mxu0 0.0
    %7205 = vmatpush2.msra.mxu0 0.0
    %7206 = vmatprep.subr.mxu0 0.0
    %7207 = vmatpush2.msra.mxu0 0.0
    %7208 = vmatprep.subr.mxu0 0.0
    %7209 = vmatpush2.msra.mxu0 0.0
    %7210 = vmatprep.subr.mxu0 0.0
    %7211 = vmatpush2.msra.mxu0 0.0
    %7212 = vmatprep.subr.mxu0 0.0
    %7213 = vmatpush2.msra.mxu0 0.0
    %7214 = vmatprep.subr.mxu0 0.0
    %7215 = vmatpush2.msra.mxu0 0.0
    %7216 = vmatprep.subr.mxu0 0.0
    %7217 = vmatpush2.msra.mxu0 0.0
    %7218 = vmatprep.mubr.f32.mxu0 0.0
    %7219 = vmatmul.mubr.f32.gmra.mxu0 %v7152
    %v7220 = vpop.f32.mrf.mxu0
    %v7221 = vadd.f32 0.0, %v7220
    %v7222 = vpop.f32.mrf.mxu0
    %7223 = vdwg.mxu0
    %v7224 = vadd.f32 %v7113, %v7221
    %s7225 = scalar_lea.vmem [#allocation5], 320
    %v7226 = vld [vmem:[%s7225] sm:$0xff]
    %v7227 = vld [vmem:[%s7225 + $0x8] sm:$0xff]
    %v7228 = vld [vmem:[%s7225 + $0x10] sm:$0xff]
    %v7229 = vld [vmem:[%s7225 + $0x18] sm:$0xff]
    %v7230 = vld [vmem:[%s7225 + $0x20] sm:$0xff]
    %v7231 = vld [vmem:[%s7225 + $0x28] sm:$0xff]
    %v7232 = vld [vmem:[%s7225 + $0x30] sm:$0xff]
    %v7233 = vld [vmem:[%s7225 + $0x38] sm:$0xff]
    %v7236 = vcombine.low %v7115, %v7116
    %v7237 = vcombine.low %v7119, %v7120
    %v7239 = vunpack.c.l.s4 1983009808
    %v7240 = vunpack.c.0.s8 %v7239
    %v7241 = vlaneseq
    %v7242 = vshrl.u32 %v7241, 7
    %v7243 = vsub.s32 %v7240, %v7242
    %v7244 = vrot.slane %v7236, %v7243
    %v7246 = vunpack.c.l.s4 1983009808
    %v7247 = vunpack.c.0.s8 %v7246
    %v7248 = vlaneseq
    %v7249 = vshrl.u32 %v7248, 7
    %v7250 = vsub.s32 %v7247, %v7249
    %v7251 = vrot.slane %v7237, %v7250
    %v7252 = vcombine.low %v7244, %v7251
    %v7253 = vsel %vm50, %v7252, 0
    %7255 = vmatprep.subr.mxu0 0.0
    %7256 = vmatpush1.msra.mxu0 0.0
    %7257 = vmatprep.subr.mxu0 0.0
    %7258 = vmatpush1.msra.mxu0 0.0
    %7259 = vmatprep.subr.mxu0 0.0
    %7260 = vmatpush1.msra.mxu0 0.0
    %7261 = vmatprep.subr.mxu0 0.0
    %7262 = vmatpush1.msra.mxu0 0.0
    %7263 = vmatprep.subr.mxu0 0.0
    %7264 = vmatpush1.msra.mxu0 0.0
    %7265 = vmatprep.subr.mxu0 0.0
    %7266 = vmatpush1.msra.mxu0 0.0
    %7267 = vmatprep.subr.mxu0 0.0
    %7268 = vmatpush1.msra.mxu0 0.0
    %7269 = vmatprep.subr.mxu0 0.0
    %7270 = vmatpush1.msra.mxu0 0.0
    %7271 = vmatprep.subr.mxu0 0.0
    %7272 = vmatpush1.msra.mxu0 %v7233
    %7273 = vmatprep.subr.mxu0 0.0
    %7274 = vmatpush1.msra.mxu0 %v7232
    %7275 = vmatprep.subr.mxu0 0.0
    %7276 = vmatpush1.msra.mxu0 %v7231
    %7277 = vmatprep.subr.mxu0 0.0
    %7278 = vmatpush1.msra.mxu0 %v7230
    %7279 = vmatprep.subr.mxu0 0.0
    %7280 = vmatpush1.msra.mxu0 %v7229
    %7281 = vmatprep.subr.mxu0 0.0
    %7282 = vmatpush1.msra.mxu0 %v7228
    %7283 = vmatprep.subr.mxu0 0.0
    %7284 = vmatpush1.msra.mxu0 %v7227
    %7285 = vmatprep.subr.mxu0 0.0
    %7286 = vmatpush1.msra.mxu0 %v7226
    %7287 = vmatprep.subr.mxu0 0.0
    %7288 = vmatpush2.msra.mxu0 0.0
    %7289 = vmatprep.subr.mxu0 0.0
    %7290 = vmatpush2.msra.mxu0 0.0
    %7291 = vmatprep.subr.mxu0 0.0
    %7292 = vmatpush2.msra.mxu0 0.0
    %7293 = vmatprep.subr.mxu0 0.0
    %7294 = vmatpush2.msra.mxu0 0.0
    %7295 = vmatprep.subr.mxu0 0.0
    %7296 = vmatpush2.msra.mxu0 0.0
    %7297 = vmatprep.subr.mxu0 0.0
    %7298 = vmatpush2.msra.mxu0 0.0
    %7299 = vmatprep.subr.mxu0 0.0
    %7300 = vmatpush2.msra.mxu0 0.0
    %7301 = vmatprep.subr.mxu0 0.0
    %7302 = vmatpush2.msra.mxu0 0.0
    %7303 = vmatprep.subr.mxu0 0.0
    %7304 = vmatpush2.msra.mxu0 0.0
    %7305 = vmatprep.subr.mxu0 0.0
    %7306 = vmatpush2.msra.mxu0 0.0
    %7307 = vmatprep.subr.mxu0 0.0
    %7308 = vmatpush2.msra.mxu0 0.0
    %7309 = vmatprep.subr.mxu0 0.0
    %7310 = vmatpush2.msra.mxu0 0.0
    %7311 = vmatprep.subr.mxu0 0.0
    %7312 = vmatpush2.msra.mxu0 0.0
    %7313 = vmatprep.subr.mxu0 0.0
    %7314 = vmatpush2.msra.mxu0 0.0
    %7315 = vmatprep.subr.mxu0 0.0
    %7316 = vmatpush2.msra.mxu0 0.0
    %7317 = vmatprep.subr.mxu0 0.0
    %7318 = vmatpush2.msra.mxu0 0.0
    %7319 = vmatprep.mubr.f32.mxu0 0.0
    %7320 = vmatmul.mubr.f32.gmra.mxu0 %v7253
    %v7321 = vpop.f32.mrf.mxu0
    %v7322 = vadd.f32 0.0, %v7321
    %v7323 = vpop.f32.mrf.mxu0
    %7324 = vdwg.mxu0
    %v7325 = vadd.f32 %v7224, %v7322
    %s7326 = scalar_lea.vmem [#allocation5], 512
    %v7327 = vld [vmem:[%s7326] sm:$0xff]
    %v7328 = vld [vmem:[%s7326 + $0x8] sm:$0xff]
    %v7329 = vld [vmem:[%s7326 + $0x10] sm:$0xff]
    %v7330 = vld [vmem:[%s7326 + $0x18] sm:$0xff]
    %v7331 = vld [vmem:[%s7326 + $0x20] sm:$0xff]
    %v7332 = vld [vmem:[%s7326 + $0x28] sm:$0xff]
    %v7333 = vld [vmem:[%s7326 + $0x30] sm:$0xff]
    %v7334 = vld [vmem:[%s7326 + $0x38] sm:$0xff]
    %v7337 = vcombine.low %v7116, %v7117
    %v7338 = vcombine.low %v7120, %v7121
    %v7340 = vunpack.c.l.s4 1983009808
    %v7341 = vunpack.c.0.s8 %v7340
    %v7342 = vlaneseq
    %v7343 = vshrl.u32 %v7342, 7
    %v7344 = vsub.s32 %v7341, %v7343
    %v7345 = vrot.slane %v7337, %v7344
    %v7347 = vunpack.c.l.s4 1983009808
    %v7348 = vunpack.c.0.s8 %v7347
    %v7349 = vlaneseq
    %v7350 = vshrl.u32 %v7349, 7
    %v7351 = vsub.s32 %v7348, %v7350
    %v7352 = vrot.slane %v7338, %v7351
    %v7353 = vcombine.low %v7345, %v7352
    %v7354 = vsel %vm50, %v7353, 0
    %7356 = vmatprep.subr.mxu0 0.0
    %7357 = vmatpush1.msra.mxu0 0.0
    %7358 = vmatprep.subr.mxu0 0.0
    %7359 = vmatpush1.msra.mxu0 0.0
    %7360 = vmatprep.subr.mxu0 0.0
    %7361 = vmatpush1.msra.mxu0 0.0
    %7362 = vmatprep.subr.mxu0 0.0
    %7363 = vmatpush1.msra.mxu0 0.0
    %7364 = vmatprep.subr.mxu0 0.0
    %7365 = vmatpush1.msra.mxu0 0.0
    %7366 = vmatprep.subr.mxu0 0.0
    %7367 = vmatpush1.msra.mxu0 0.0
    %7368 = vmatprep.subr.mxu0 0.0
    %7369 = vmatpush1.msra.mxu0 0.0
    %7370 = vmatprep.subr.mxu0 0.0
    %7371 = vmatpush1.msra.mxu0 0.0
    %7372 = vmatprep.subr.mxu0 0.0
    %7373 = vmatpush1.msra.mxu0 %v7334
    %7374 = vmatprep.subr.mxu0 0.0
    %7375 = vmatpush1.msra.mxu0 %v7333
    %7376 = vmatprep.subr.mxu0 0.0
    %7377 = vmatpush1.msra.mxu0 %v7332
    %7378 = vmatprep.subr.mxu0 0.0
    %7379 = vmatpush1.msra.mxu0 %v7331
    %7380 = vmatprep.subr.mxu0 0.0
    %7381 = vmatpush1.msra.mxu0 %v7330
    %7382 = vmatprep.subr.mxu0 0.0
    %7383 = vmatpush1.msra.mxu0 %v7329
    %7384 = vmatprep.subr.mxu0 0.0
    %7385 = vmatpush1.msra.mxu0 %v7328
    %7386 = vmatprep.subr.mxu0 0.0
    %7387 = vmatpush1.msra.mxu0 %v7327
    %7388 = vmatprep.subr.mxu0 0.0
    %7389 = vmatpush2.msra.mxu0 0.0
    %7390 = vmatprep.subr.mxu0 0.0
    %7391 = vmatpush2.msra.mxu0 0.0
    %7392 = vmatprep.subr.mxu0 0.0
    %7393 = vmatpush2.msra.mxu0 0.0
    %7394 = vmatprep.subr.mxu0 0.0
    %7395 = vmatpush2.msra.mxu0 0.0
    %7396 = vmatprep.subr.mxu0 0.0
    %7397 = vmatpush2.msra.mxu0 0.0
    %7398 = vmatprep.subr.mxu0 0.0
    %7399 = vmatpush2.msra.mxu0 0.0
    %7400 = vmatprep.subr.mxu0 0.0
    %7401 = vmatpush2.msra.mxu0 0.0
    %7402 = vmatprep.subr.mxu0 0.0
    %7403 = vmatpush2.msra.mxu0 0.0
    %7404 = vmatprep.subr.mxu0 0.0
    %7405 = vmatpush2.msra.mxu0 0.0
    %7406 = vmatprep.subr.mxu0 0.0
    %7407 = vmatpush2.msra.mxu0 0.0
    %7408 = vmatprep.subr.mxu0 0.0
    %7409 = vmatpush2.msra.mxu0 0.0
    %7410 = vmatprep.subr.mxu0 0.0
    %7411 = vmatpush2.msra.mxu0 0.0
    %7412 = vmatprep.subr.mxu0 0.0
    %7413 = vmatpush2.msra.mxu0 0.0
    %7414 = vmatprep.subr.mxu0 0.0
    %7415 = vmatpush2.msra.mxu0 0.0
    %7416 = vmatprep.subr.mxu0 0.0
    %7417 = vmatpush2.msra.mxu0 0.0
    %7418 = vmatprep.subr.mxu0 0.0
    %7419 = vmatpush2.msra.mxu0 0.0
    %7420 = vmatprep.mubr.f32.mxu0 0.0
    %7421 = vmatmul.mubr.f32.gmra.mxu0 %v7354
    %v7422 = vpop.f32.mrf.mxu0
    %v7423 = vadd.f32 0.0, %v7422
    %v7424 = vpop.f32.mrf.mxu0
    %7425 = vdwg.mxu0
    %v7426 = vadd.f32 %v7325, %v7423
    %v7428 = vlaneseq
    %v7429 = vshrl.u32 %v7428, 7
    %v7430 = vsub.s32 0, %v7429
    %v7431 = vrot.slane %v6489, %v7430
    %v7433 = vmul.f32 %v7426, %v7431
    %v7435 = vlaneseq
    %v7436 = vshrl.u32 %v7435, 7
    %v7437 = vsub.s32 0, %v7436
    %v7438 = vrot.slane %v6490, %v7437
    %v7440 = vadd.f32 %v7433, %v7438
    %v7441 = vmax.f32 %v7440, 0.0
    %v7443 = vcombine.high %v7441, %v7441
    %v7445 = vunpack.c.l.s4 1983009808
    %v7446 = vunpack.c.0.s8 %v7445
    %v7447 = vlaneseq
    %v7448 = vshrl.u32 %v7447, 7
    %v7449 = vsub.s32 %v7446, %v7448
    %v7450 = vrot.slane %v7441, %v7449
    %v7452 = vunpack.c.l.s4 1983009808
    %v7453 = vunpack.c.0.s8 %v7452
    %v7454 = vlaneseq
    %v7455 = vshrl.u32 %v7454, 7
    %v7456 = vsub.s32 %v7453, %v7455
    %v7457 = vrot.slane %v7443, %v7456
    %v7458 = vcombine.high %v7450, %v7450
    %v7459 = vcombine.high %v7457, %v7457
    %vm7464 = vcmask 1041408
    %v7465 = vsel %vm7464, %v7450, -inf
    %v7466 = vsel %vm7464, %v7458, -inf
    %v7467 = vmax.f32 %v7465, %v7466
    %v7468 = vsel %vm7464, %v7457, -inf
    %v7469 = vsel %vm7464, %v7459, -inf
    %v7470 = vmax.f32 %v7468, %v7469
    %v7471 = vsel %vm7464, %v7467, -inf
    %v7472 = vrot.slane %v7471, 4
    %v7473 = vmax.f32 %v7471, %v7472
    %v7474 = vrot.slane %v7473, 2
    %v7475 = vmax.f32 %v7473, %v7474
    %v7476 = vrot.slane %v7475, 1
    %v7477 = vmax.f32 %v7475, %v7476
    %v7478 = vsel %vm7464, %v7470, -inf
    %v7479 = vrot.slane %v7478, 4
    %v7480 = vmax.f32 %v7478, %v7479
    %v7481 = vrot.slane %v7480, 2
    %v7482 = vmax.f32 %v7480, %v7481
    %v7483 = vrot.slane %v7482, 1
    %v7484 = vmax.f32 %v7482, %v7483
    %7485 = vst [vmem:[#allocation8] sm:$0x1] %v7477
    %7486 = vst [vmem:[#allocation8 + $0x1] sm:$0x1] %v7484
    // Predicated region
    $region46: #{tpu_custom_call.1} parent=1 // pred_check
      _
    $region47: #{tpu_custom_call.1} parent=1 // pred_check_branch
      %7488 = sbr.rel (0) target = $region49
    $region48: #{tpu_custom_call.1} parent=1 // pred_region
      %s7490 = ssub.s32 32, 32
      %7491 = vsyncadd [#allocation7], %s7490
      %s7492 = sshll.u32 [#allocation8], 4
      %s7493 = int_to_ptr.vmem [resolvable:$true] %s7492
      %7498 = dma.vmem_to_hbm [thread:$0]  %s7493, 32, %s10, [#allocation7], 16, 16, 1
    $region49: #{tpu_custom_call.1} parent=1 // pred_fallthru
      _
    // Predicated region
    $region50: #{tpu_custom_call.1} parent=1 // pred_check
      _
    $region51: #{tpu_custom_call.1} parent=1 // pred_check_branch
      %7500 = sbr.rel (0) target = $region53
    $region52: #{tpu_custom_call.1} parent=1 // pred_region
      %7501 = dma.done [#allocation7], 32
    $region53: #{tpu_custom_call.1} parent=1 // pred_fallthru
      _
    %7502 = vsyncpa [#allocation6], 1
    %7503 = vsyncpa [#allocation7], 1

</llo_original>
